<compile_context>
chip_gen: v7x
topology: tpu7x:2x2x1
jax: 0.10.0
libtpu: 0.0.40
codegen_flags: <defaults>
</compile_context>

<pallas_src>
import functools

import jax
import jax.numpy as jnp
import numpy as np
from jax import lax
from jax.experimental import pallas as pl
from jax.experimental.pallas import tpu as pltpu

FEATURE_DIM = 512        # fixed by the module
CTRL_HIDDEN = 256        # DOPControllerAtari hidden size
_SEG = 128               # lane-tile width used for aligned packing


# ------------------------------ packed layouts --------------------------------

def _bias_layout(head_count):
    """128-aligned lane offsets of each bias segment inside the packed bias vector."""
    F, C, H = FEATURE_DIM, CTRL_HIDDEN, head_count
    b_tr_off = 0                      # actor|critic trunk biases      (2F)
    b_h1_off = 2 * F                  # per-head layer-1 biases        (H*F)
    b_ct_off = b_h1_off + H * F       # controller trunk biases        (2C)
    b_h2_off = b_ct_off + 2 * C       # per-head DiscreteHead biases   (H segments of 128)
    b_heads_off = b_h2_off + _SEG * H # combined heads bias            (3H+2 in one segment)
    total = b_heads_off + _SEG
    return b_tr_off, b_h1_off, b_ct_off, b_h2_off, b_heads_off, total


def _out_layout(head_count):
    """128-aligned lane offsets of each logical output inside the single output slab."""
    H = head_count
    act_off = _SEG                    # per-head one-hot actions, head i at act_off + 128*i
    prob_off = _SEG * (1 + H)         # per-head probs,            head i at prob_off + 128*i
    hact_off = _SEG * (1 + 2 * H)     # controller one-hot action
    hprob_off = _SEG * (2 + 2 * H)    # controller probs
    out_w = _SEG * (3 + 2 * H)
    return act_off, prob_off, hact_off, hprob_off, out_w


# ----------------------------- in-kernel helpers -----------------------------

def _softmax_greedy(logits):
    """Softmax + greedy (first-max) one-hot over the full last axis of `logits`."""
    Bn, L = logits.shape
    lane = lax.broadcasted_iota(jnp.int32, (Bn, L), 1)
    m = jnp.max(logits, axis=-1, keepdims=True)            # shared max reduce
    e = jnp.exp(logits - m)
    s = jnp.sum(e, axis=-1, keepdims=True)
    probs = e / s                                           # exact; kernel is DMA-bound
    cand = jnp.where(logits >= m, lane, L)                  # first-max tie break
    first = jnp.min(cand, axis=-1, keepdims=True)
    onehot = jnp.where(lane == first, 1.0, 0.0).astype(jnp.float32)
    return probs, onehot


# --------------------------------- kernel ------------------------------------

def dop_fused_kernel(x0_ref, x1_ref,
                     w_tr_ref,      # (F, 2F)   actor|critic trunks (dop_actor)
                     w_h1_ref,      # (F, H*F)  per-head ActorNHeads layer 1, concatenated
                     w_h2_ref,      # (H, F, A) per-head DiscreteHead weights
                     w_ct_ref,      # (F, 2C)   controller critic|actor trunks
                     w_heads_ref,   # (2F, 3H+2) combined [ctrl logits | Critic2Heads | Critic2NHeads]
                     b_ref,         # (1, B_TOTAL) all biases, 128-aligned segments
                     out_ref,       # (B, 128*(3+2H)) single lane-dense output slab
                     *, head_count, action_dim):
    F, C, H, A = FEATURE_DIM, CTRL_HIDDEN, head_count, action_dim
    _, b_h1_off, b_ct_off, b_h2_off, b_heads_off, _ = _bias_layout(H)
    act_off, prob_off, hact_off, hprob_off, _ = _out_layout(H)

    out_ref[...] = jnp.zeros_like(out_ref)       # deterministic padding lanes

    # ---------------- dop_actor(features0_0): trunks ----------------
    x0 = x0_ref[...].astype(jnp.bfloat16)
    trunk = jnp.maximum(
        jnp.dot(x0, w_tr_ref[...], preferred_element_type=jnp.float32)
        + b_ref[:, 0:2 * F], 0.0)
    a = trunk[:, :F].astype(jnp.bfloat16)        # actor trunk  (aligned lane slice)
    c = trunk[:, F:].astype(jnp.bfloat16)        # critic trunk

    # ---------------- dop_controller(features0_1): trunks ----------------
    x1 = x1_ref[...].astype(jnp.bfloat16)
    ct = jnp.maximum(
        jnp.dot(x1, w_ct_ref[...], preferred_element_type=jnp.float32)
        + b_ref[:, b_ct_off:b_ct_off + 2 * C], 0.0).astype(jnp.bfloat16)

    # ---- all three tiny linear heads in ONE matmul on [c | ct] ----
    #   columns: [0,H)=controller logits, [H,H+2)=head_value ext|int,
    #            [H+2,3H+2)=Critic2NHeads ext/int interleaved per head
    heads_lhs = jnp.concatenate([c, ct], axis=-1)                       # (B, 2F), aligned
    heads_out = (jnp.dot(heads_lhs, w_heads_ref[...],
                         preferred_element_type=jnp.float32)
                 + b_ref[:, b_heads_off:b_heads_off + 3 * H + 2])       # (B, 3H+2)
    out_ref[:, 0:3 * H + 2] = heads_out

    # controller DiscreteHead: softmax + greedy one-hot over the first H lanes
    hprobs, honehot = _softmax_greedy(heads_out[:, :H])
    out_ref[:, hact_off:hact_off + H] = honehot
    out_ref[:, hprob_off:hprob_off + H] = hprobs

    # ---------------- ActorNHeads ----------------
    hcat = jnp.maximum(
        jnp.dot(a, w_h1_ref[...], preferred_element_type=jnp.float32)
        + b_ref[:, b_h1_off:b_h1_off + H * F], 0.0).astype(jnp.bfloat16)   # (B, H*F)
    for i in range(H):                                    # static tiny trip count
        a_i = hcat[:, i * F:(i + 1) * F]                  # 128-aligned F-wide slice
        logits_i = (jnp.dot(a_i, w_h2_ref[i], preferred_element_type=jnp.float32)
                    + b_ref[:, b_h2_off + _SEG * i:b_h2_off + _SEG * i + A])
        probs_i, onehot_i = _softmax_greedy(logits_i)
        out_ref[:, act_off + _SEG * i:act_off + _SEG * i + A] = onehot_i
        out_ref[:, prob_off + _SEG * i:prob_off + _SEG * i + A] = probs_i


# -------------------------------- wrapper --------------------------------------

_VMEM = pl.BlockSpec(memory_space=pltpu.MemorySpace.VMEM)


def ppo_atari_dop_forward(features0_0, features0_1, params, *, head_count, action_dim):
    B = features0_0.shape[0]
    H, A = head_count, action_dim
    act_off, prob_off, hact_off, hprob_off, out_w = _out_layout(H)

    kernel = functools.partial(dop_fused_kernel, head_count=H, action_dim=A)
    out = pl.pallas_call(
        kernel,
        out_shape=jax.ShapeDtypeStruct((B, out_w), jnp.float32),
        in_specs=[_VMEM] * 8,
        out_specs=_VMEM,
    )(features0_0, features0_1,
      params["w_tr"], params["w_h1"], params["w_h2"], params["w_ct"],
      params["w_heads"], params["b_all"])

    # Only contiguous last-dim slices / row-major reshapes of the single output slab.
    head_value = out[:, H:H + 2]                                         # (B, 2)
    value = out[:, H + 2:3 * H + 2].reshape(B, H, 2)                     # (B, H, 2)
    action = out[:, act_off:act_off + H * _SEG].reshape(B, H, _SEG)[..., :A]
    probs = out[:, prob_off:prob_off + H * _SEG].reshape(B, H, _SEG)[..., :A]
    head_action = out[:, hact_off:hact_off + H]                          # (B, H)
    head_probs = out[:, hprob_off:hprob_off + H]                         # (B, H)
    return (features0_0, value, action, probs,
            features0_1, head_value, head_action, head_probs)


# ------------------------------ parameter init --------------------------------

def _linear_w(key, fan_in, fan_out, gain):
    # TODO(synk): init_orthogonal approximated by deterministic scaled Gaussian init.
    return (gain / jnp.sqrt(jnp.float32(fan_in))) * jax.random.normal(
        key, (fan_in, fan_out), dtype=jnp.float32)


def make_params(key, action_dim, head_count):
    F, C, H, A = FEATURE_DIM, CTRL_HIDDEN, head_count, action_dim
    ks = jax.random.split(key, 11)

    # dop_actor raw layers
    wa0 = _linear_w(ks[0], F, F, 0.01)                      # actor trunk Linear(512,512)
    wc0 = _linear_w(ks[1], F, F, 0.1)                       # critic trunk Linear(512,512)
    wh1 = [_linear_w(k, F, F, 0.01) for k in jax.random.split(ks[2], H)]   # per-head layer 1
    wh2 = [_linear_w(k, F, A, 0.01) for k in jax.random.split(ks[3], H)]   # per-head DiscreteHead
    wce = _linear_w(ks[4], F, H, 0.01)                      # Critic2NHeads ext
    wci = _linear_w(ks[5], F, H, 0.01)                      # Critic2NHeads int

    # dop_controller raw layers
    wc1 = _linear_w(ks[6], F, C, 0.1)                       # critic Linear(512,256)
    wa1 = _linear_w(ks[7], F, C, 0.01)                      # actor Linear(512,256)
    wce2 = _linear_w(ks[8], C, 1, 0.01)                     # Critic2Heads ext
    wci2 = _linear_w(ks[9], C, 1, 0.01)                     # Critic2Heads int
    wl = _linear_w(ks[10], C, H, 0.01)                      # DiscreteHead(256, H)

    # ---- pack for the fused kernel (weights bf16, biases f32) ----
    w_tr = jnp.concatenate([wa0, wc0], axis=1).astype(jnp.bfloat16)        # (F, 2F)
    w_h1 = jnp.concatenate(wh1, axis=1).astype(jnp.bfloat16)               # (F, H*F)
    w_h2 = jnp.stack(wh2, axis=0).astype(jnp.bfloat16)                     # (H, F, A)
    w_ct = jnp.concatenate([wc1, wa1], axis=1).astype(jnp.bfloat16)        # (F, 2C)

    # Combined heads weight applied to [c | cc | ac] (= [c | ct]); zero cross-blocks.
    w_heads = jnp.zeros((2 * F, 3 * H + 2), jnp.float32)
    w_heads = w_heads.at[F + C:, 0:H].set(wl)                              # controller logits
    w_heads = w_heads.at[F:F + C, H:H + 2].set(
        jnp.concatenate([wce2, wci2], axis=1))                             # head_value ext|int
    w_heads = w_heads.at[0:F, H + 2:].set(
        jnp.stack([wce, wci], axis=2).reshape(F, 2 * H))                   # value ext/int interleaved
    w_heads = w_heads.astype(jnp.bfloat16)

    # Single packed bias vector; init_orthogonal zeroes all biases, so it is all-zero here.
    # A real checkpoint would scatter each layer's bias into its 128-aligned segment.
    *_, b_total = _bias_layout(H)
    b_all = jnp.zeros((1, b_total), jnp.float32)

    return dict(w_tr=w_tr, w_h1=w_h1, w_h2=w_h2, w_ct=w_ct, w_heads=w_heads, b_all=b_all)


# --------------------------- pure-JAX reference -------------------------------

def dop_reference(features0_0, features0_1, params, *, head_count, action_dim):
    """Mirror of the kernel math (same packed bf16 weights, f32 accumulation)."""
    F, C, H, A = FEATURE_DIM, CTRL_HIDDEN, head_count, action_dim
    x0 = features0_0.astype(jnp.bfloat16)
    x1 = features0_1.astype(jnp.bfloat16)
    trunk = jnp.maximum(jnp.dot(x0, params["w_tr"], preferred_element_type=jnp.float32), 0.0)
    a = trunk[:, :F].astype(jnp.bfloat16)
    c = trunk[:, F:].astype(jnp.bfloat16)
    ct = jnp.maximum(jnp.dot(x1, params["w_ct"], preferred_element_type=jnp.float32),
                     0.0).astype(jnp.bfloat16)
    heads_out = jnp.dot(jnp.concatenate([c, ct], axis=-1), params["w_heads"],
                        preferred_element_type=jnp.float32)
    hlogits = heads_out[:, :H]
    head_value = heads_out[:, H:H + 2]
    value = heads_out[:, H + 2:].reshape(-1, H, 2)
    hcat = jnp.maximum(jnp.dot(a, params["w_h1"], preferred_element_type=jnp.float32),
                       0.0).astype(jnp.bfloat16)
    logits = jnp.stack(
        [jnp.dot(hcat[:, i * F:(i + 1) * F], params["w_h2"][i],
                 preferred_element_type=jnp.float32) for i in range(H)], axis=1)
    probs = jax.nn.softmax(logits, axis=-1)
    action = jax.nn.one_hot(jnp.argmax(logits, axis=-1), A, dtype=jnp.float32)
    head_probs = jax.nn.softmax(hlogits, axis=-1)
    head_action = jax.nn.one_hot(jnp.argmax(hlogits, axis=-1), H, dtype=jnp.float32)
    return value, action, probs, head_value, head_action, head_probs


# ----------------------------------- main --------------------------------------

if __name__ == "__main__":
    key = jax.random.PRNGKey(0)
    B, A, H = 8, 6, 4                     # n_env=8, action_dim=6, dop_heads=4
    k1, k2, k3 = jax.random.split(key, 3)
    features0_0 = jax.random.normal(k1, (B, FEATURE_DIM), dtype=jnp.float32)
    features0_1 = jax.random.normal(k2, (B, FEATURE_DIM), dtype=jnp.float32)
    params = make_params(k3, A, H)

    fwd = jax.jit(functools.partial(ppo_atari_dop_forward, head_count=H, action_dim=A))
    out = fwd(features0_0, features0_1, params)
    jax.block_until_ready(out)

    f0, value, action, probs, f1, head_value, head_action, head_probs = out
    assert value.shape == (B, H, 2)
    assert action.shape == (B, H, A) and probs.shape == (B, H, A)
    assert head_value.shape == (B, 2)
    assert head_action.shape == (B, H) and head_probs.shape == (B, H)
    assert bool(jnp.all(jnp.abs(jnp.sum(probs, axis=-1) - 1.0) < 1e-4))    # exact normalize
    assert bool(jnp.all(jnp.abs(jnp.sum(head_probs, axis=-1) - 1.0) < 1e-4))
    assert bool(jnp.all(jnp.sum(action, axis=-1) == 1.0))                  # exact one-hot
    assert bool(jnp.all(jnp.sum(head_action, axis=-1) == 1.0))

    r_value, r_action, r_probs, r_hval, r_hact, r_hprobs = dop_reference(
        features0_0, features0_1, params, head_count=H, action_dim=A)
    np.testing.assert_allclose(np.asarray(value), np.asarray(r_value), atol=5e-3)
    np.testing.assert_allclose(np.asarray(probs), np.asarray(r_probs), atol=5e-3)
    np.testing.assert_allclose(np.asarray(head_value), np.asarray(r_hval), atol=5e-3)
    np.testing.assert_allclose(np.asarray(head_probs), np.asarray(r_hprobs), atol=5e-3)
    np.testing.assert_allclose(np.asarray(action), np.asarray(r_action), atol=1e-6)
    np.testing.assert_allclose(np.asarray(head_action), np.asarray(r_hact), atol=1e-6)
    print("KERNEL_OK")
</pallas_src>

<mosaic_0001>
module attributes {stable_mosaic.version = 11 : i64} {
  func.func @dop_fused_kernel(%arg0: memref<8x512xf32, #tpu.memory_space<vmem>>, %arg1: memref<8x512xf32, #tpu.memory_space<vmem>>, %arg2: memref<512x1024xbf16, #tpu.memory_space<vmem>>, %arg3: memref<512x2048xbf16, #tpu.memory_space<vmem>>, %arg4: memref<4x512x6xbf16, #tpu.memory_space<vmem>>, %arg5: memref<512x512xbf16, #tpu.memory_space<vmem>>, %arg6: memref<1024x14xbf16, #tpu.memory_space<vmem>>, %arg7: memref<1x4224xf32, #tpu.memory_space<vmem>>, %arg8: memref<8x1408xf32, #tpu.memory_space<vmem>>) attributes {dimension_semantics = [], scalar_prefetch = 0 : i64, scratch_operands = 0 : i64, tpu.core_type = #tpu.core_type<tc>} {
    %cst = arith.constant 0.000000e+00 : f32
    %0 = vector.broadcast %cst : f32 to vector<8x1408xf32>
    %c0 = arith.constant 0 : index
    %c0_0 = arith.constant 0 : index
    %1 = vector.load %arg8[%c0, %c0_0] : memref<8x1408xf32, #tpu.memory_space<vmem>>, vector<8x1408xf32>
    tpu.vector_store %arg8[%c0, %c0_0], %0 {strides = array<i32>} : memref<8x1408xf32, #tpu.memory_space<vmem>>, vector<8x1408xf32>,
    %c0_1 = arith.constant 0 : index
    %c0_2 = arith.constant 0 : index
    %2 = vector.load %arg0[%c0_1, %c0_2] : memref<8x512xf32, #tpu.memory_space<vmem>>, vector<8x512xf32>
    %3 = arith.truncf %2 : vector<8x512xf32> to vector<8x512xbf16>
    %c0_3 = arith.constant 0 : index
    %c0_4 = arith.constant 0 : index
    %4 = vector.load %arg2[%c0_3, %c0_4] : memref<512x1024xbf16, #tpu.memory_space<vmem>>, vector<512x1024xbf16>
    %cst_5 = arith.constant dense<0.000000e+00> : vector<8x1024xf32>
    %5 = tpu.matmul %3, %4, %cst_5 {dimension_numbers = #tpu.dot_dimension_numbers<[1], [0], [0], [1], [0, 0, 1, 1], [], []>} : vector<8x512xbf16>, vector<512x1024xbf16>, vector<8x1024xf32> -> vector<8x1024xf32>
    %c0_6 = arith.constant 0 : index
    %c0_7 = arith.constant 0 : index
    %6 = vector.load %arg7[%c0_6, %c0_7] : memref<1x4224xf32, #tpu.memory_space<vmem>>, vector<1x1024xf32>
    %7 = vector.broadcast %6 : vector<1x1024xf32> to vector<8x1024xf32>
    %8 = arith.addf %5, %7 : vector<8x1024xf32>
    %cst_8 = arith.constant 0.000000e+00 : f32
    %9 = vector.broadcast %cst_8 : f32 to vector<8x1024xf32>
    %10 = arith.maximumf %8, %9 : vector<8x1024xf32>
    %11 = vector.extract_strided_slice %10 {offsets = [0, 0], sizes = [8, 512], strides = [1, 1]} : vector<8x1024xf32> to vector<8x512xf32>
    %12 = arith.truncf %11 : vector<8x512xf32> to vector<8x512xbf16>
    %13 = vector.extract_strided_slice %10 {offsets = [0, 512], sizes = [8, 512], strides = [1, 1]} : vector<8x1024xf32> to vector<8x512xf32>
    %14 = arith.truncf %13 : vector<8x512xf32> to vector<8x512xbf16>
    %c0_9 = arith.constant 0 : index
    %c0_10 = arith.constant 0 : index
    %15 = vector.load %arg1[%c0_9, %c0_10] : memref<8x512xf32, #tpu.memory_space<vmem>>, vector<8x512xf32>
    %16 = arith.truncf %15 : vector<8x512xf32> to vector<8x512xbf16>
    %c0_11 = arith.constant 0 : index
    %c0_12 = arith.constant 0 : index
    %17 = vector.load %arg5[%c0_11, %c0_12] : memref<512x512xbf16, #tpu.memory_space<vmem>>, vector<512x512xbf16>
    %cst_13 = arith.constant dense<0.000000e+00> : vector<8x512xf32>
    %18 = tpu.matmul %16, %17, %cst_13 {dimension_numbers = #tpu.dot_dimension_numbers<[1], [0], [0], [1], [0, 0, 1, 1], [], []>} : vector<8x512xbf16>, vector<512x512xbf16>, vector<8x512xf32> -> vector<8x512xf32>
    %c0_14 = arith.constant 0 : index
    %c3072 = arith.constant 3072 : index
    %19 = vector.load %arg7[%c0_14, %c3072] : memref<1x4224xf32, #tpu.memory_space<vmem>>, vector<1x512xf32>
    %20 = vector.broadcast %19 : vector<1x512xf32> to vector<8x512xf32>
    %21 = arith.addf %18, %20 : vector<8x512xf32>
    %cst_15 = arith.constant 0.000000e+00 : f32
    %22 = vector.broadcast %cst_15 : f32 to vector<8x512xf32>
    %23 = arith.maximumf %21, %22 : vector<8x512xf32>
    %24 = arith.truncf %23 : vector<8x512xf32> to vector<8x512xbf16>
    %25 = tpu.concatenate %14, %24 in 1 : vector<8x512xbf16>, vector<8x512xbf16> -> vector<8x1024xbf16>
    %c0_16 = arith.constant 0 : index
    %c0_17 = arith.constant 0 : index
    %26 = vector.load %arg6[%c0_16, %c0_17] : memref<1024x14xbf16, #tpu.memory_space<vmem>>, vector<1024x14xbf16>
    %cst_18 = arith.constant dense<0.000000e+00> : vector<8x14xf32>
    %27 = tpu.matmul %25, %26, %cst_18 {dimension_numbers = #tpu.dot_dimension_numbers<[1], [0], [0], [1], [0, 0, 1, 1], [], []>} : vector<8x1024xbf16>, vector<1024x14xbf16>, vector<8x14xf32> -> vector<8x14xf32>
    %c0_19 = arith.constant 0 : index
    %c4096 = arith.constant 4096 : index
    %28 = vector.load %arg7[%c0_19, %c4096] : memref<1x4224xf32, #tpu.memory_space<vmem>>, vector<1x14xf32>
    %29 = vector.broadcast %28 : vector<1x14xf32> to vector<8x14xf32>
    %30 = arith.addf %27, %29 : vector<8x14xf32>
    %c0_20 = arith.constant 0 : index
    %c0_21 = arith.constant 0 : index
    %31 = vector.load %arg8[%c0_20, %c0_21] : memref<8x1408xf32, #tpu.memory_space<vmem>>, vector<8x14xf32>
    tpu.vector_store %arg8[%c0_20, %c0_21], %30 {strides = array<i32>} : memref<8x1408xf32, #tpu.memory_space<vmem>>, vector<8x14xf32>,
    %32 = vector.extract_strided_slice %30 {offsets = [0, 0], sizes = [8, 4], strides = [1, 1]} : vector<8x14xf32> to vector<8x4xf32>
    %33 = tpu.iota {dimensions = array<i32: 1>} : vector<8x4xi32>
    %cst_22 = arith.constant dense<0xFF800000> : vector<8xf32>
    %34 = vector.multi_reduction <maximumf>, %32, %cst_22 [1] : vector<8x4xf32> to vector<8xf32>
    %35 = vector.shape_cast %34 : vector<8xf32> to vector<8x1xf32>
    %36 = vector.broadcast %35 : vector<8x1xf32> to vector<8x4xf32>
    %37 = arith.subf %32, %36 : vector<8x4xf32>
    %38 = math.exp %37 : vector<8x4xf32>
    %cst_23 = arith.constant dense<0.000000e+00> : vector<8xf32>
    %39 = vector.multi_reduction <add>, %38, %cst_23 [1] : vector<8x4xf32> to vector<8xf32>
    %40 = vector.shape_cast %39 : vector<8xf32> to vector<8x1xf32>
    %41 = vector.broadcast %40 : vector<8x1xf32> to vector<8x4xf32>
    %42 = arith.divf %38, %41 : vector<8x4xf32>
    %43 = vector.broadcast %35 : vector<8x1xf32> to vector<8x4xf32>
    %44 = arith.cmpf oge, %32, %43 : vector<8x4xf32>
    %c4_i32 = arith.constant 4 : i32
    %45 = vector.broadcast %c4_i32 : i32 to vector<8x4xi32>
    %46 = arith.select %44, %33, %45 : vector<8x4xi1>, vector<8x4xi32>
    %cst_24 = arith.constant dense<2147483647> : vector<8xi32>
    %47 = vector.multi_reduction <minsi>, %46, %cst_24 [1] : vector<8x4xi32> to vector<8xi32>
    %48 = vector.shape_cast %47 : vector<8xi32> to vector<8x1xi32>
    %49 = vector.broadcast %48 : vector<8x1xi32> to vector<8x4xi32>
    %50 = arith.cmpi eq, %33, %49 : vector<8x4xi32>
    %cst_25 = arith.constant 1.000000e+00 : f32
    %cst_26 = arith.constant 0.000000e+00 : f32
    %51 = vector.broadcast %cst_25 : f32 to vector<8x4xf32>
    %52 = vector.broadcast %cst_26 : f32 to vector<8x4xf32>
    %53 = arith.select %50, %51, %52 : vector<8x4xi1>, vector<8x4xf32>
    %c0_27 = arith.constant 0 : index
    %c1152 = arith.constant 1152 : index
    %54 = vector.load %arg8[%c0_27, %c1152] : memref<8x1408xf32, #tpu.memory_space<vmem>>, vector<8x4xf32>
    tpu.vector_store %arg8[%c0_27, %c1152], %53 {strides = array<i32>} : memref<8x1408xf32, #tpu.memory_space<vmem>>, vector<8x4xf32>,
    %c0_28 = arith.constant 0 : index
    %c1280 = arith.constant 1280 : index
    %55 = vector.load %arg8[%c0_28, %c1280] : memref<8x1408xf32, #tpu.memory_space<vmem>>, vector<8x4xf32>
    tpu.vector_store %arg8[%c0_28, %c1280], %42 {strides = array<i32>} : memref<8x1408xf32, #tpu.memory_space<vmem>>, vector<8x4xf32>,
    %c0_29 = arith.constant 0 : index
    %c0_30 = arith.constant 0 : index
    %56 = vector.load %arg3[%c0_29, %c0_30] : memref<512x2048xbf16, #tpu.memory_space<vmem>>, vector<512x2048xbf16>
    %cst_31 = arith.constant dense<0.000000e+00> : vector<8x2048xf32>
    %57 = tpu.matmul %12, %56, %cst_31 {dimension_numbers = #tpu.dot_dimension_numbers<[1], [0], [0], [1], [0, 0, 1, 1], [], []>} : vector<8x512xbf16>, vector<512x2048xbf16>, vector<8x2048xf32> -> vector<8x2048xf32>
    %c0_32 = arith.constant 0 : index
    %c1024 = arith.constant 1024 : index
    %58 = vector.load %arg7[%c0_32, %c1024] : memref<1x4224xf32, #tpu.memory_space<vmem>>, vector<1x2048xf32>
    %59 = vector.broadcast %58 : vector<1x2048xf32> to vector<8x2048xf32>
    %60 = arith.addf %57, %59 : vector<8x2048xf32>
    %cst_33 = arith.constant 0.000000e+00 : f32
    %61 = vector.broadcast %cst_33 : f32 to vector<8x2048xf32>
    %62 = arith.maximumf %60, %61 : vector<8x2048xf32>
    %63 = arith.truncf %62 : vector<8x2048xf32> to vector<8x2048xbf16>
    %64 = vector.extract_strided_slice %63 {offsets = [0, 0], sizes = [8, 512], strides = [1, 1]} : vector<8x2048xbf16> to vector<8x512xbf16>
    %c0_34 = arith.constant 0 : index
    %c0_35 = arith.constant 0 : index
    %c0_36 = arith.constant 0 : index
    %65 = vector.load %arg4[%c0_34, %c0_35, %c0_36] : memref<4x512x6xbf16, #tpu.memory_space<vmem>>, vector<1x512x6xbf16>
    %66 = vector.shape_cast %65 : vector<1x512x6xbf16> to vector<512x6xbf16>
    %cst_37 = arith.constant dense<0.000000e+00> : vector<8x6xf32>
    %67 = tpu.matmul %64, %66, %cst_37 {dimension_numbers = #tpu.dot_dimension_numbers<[1], [0], [0], [1], [0, 0, 1, 1], [], []>} : vector<8x512xbf16>, vector<512x6xbf16>, vector<8x6xf32> -> vector<8x6xf32>
    %c0_38 = arith.constant 0 : index
    %c3584 = arith.constant 3584 : index
    %68 = vector.load %arg7[%c0_38, %c3584] : memref<1x4224xf32, #tpu.memory_space<vmem>>, vector<1x6xf32>
    %69 = vector.broadcast %68 : vector<1x6xf32> to vector<8x6xf32>
    %70 = arith.addf %67, %69 : vector<8x6xf32>
    %71 = tpu.iota {dimensions = array<i32: 1>} : vector<8x6xi32>
    %cst_39 = arith.constant dense<0xFF800000> : vector<8xf32>
    %72 = vector.multi_reduction <maximumf>, %70, %cst_39 [1] : vector<8x6xf32> to vector<8xf32>
    %73 = vector.shape_cast %72 : vector<8xf32> to vector<8x1xf32>
    %74 = vector.broadcast %73 : vector<8x1xf32> to vector<8x6xf32>
    %75 = arith.subf %70, %74 : vector<8x6xf32>
    %76 = math.exp %75 : vector<8x6xf32>
    %cst_40 = arith.constant dense<0.000000e+00> : vector<8xf32>
    %77 = vector.multi_reduction <add>, %76, %cst_40 [1] : vector<8x6xf32> to vector<8xf32>
    %78 = vector.shape_cast %77 : vector<8xf32> to vector<8x1xf32>
    %79 = vector.broadcast %78 : vector<8x1xf32> to vector<8x6xf32>
    %80 = arith.divf %76, %79 : vector<8x6xf32>
    %81 = vector.broadcast %73 : vector<8x1xf32> to vector<8x6xf32>
    %82 = arith.cmpf oge, %70, %81 : vector<8x6xf32>
    %c6_i32 = arith.constant 6 : i32
    %83 = vector.broadcast %c6_i32 : i32 to vector<8x6xi32>
    %84 = arith.select %82, %71, %83 : vector<8x6xi1>, vector<8x6xi32>
    %cst_41 = arith.constant dense<2147483647> : vector<8xi32>
    %85 = vector.multi_reduction <minsi>, %84, %cst_41 [1] : vector<8x6xi32> to vector<8xi32>
    %86 = vector.shape_cast %85 : vector<8xi32> to vector<8x1xi32>
    %87 = vector.broadcast %86 : vector<8x1xi32> to vector<8x6xi32>
    %88 = arith.cmpi eq, %71, %87 : vector<8x6xi32>
    %cst_42 = arith.constant 1.000000e+00 : f32
    %cst_43 = arith.constant 0.000000e+00 : f32
    %89 = vector.broadcast %cst_42 : f32 to vector<8x6xf32>
    %90 = vector.broadcast %cst_43 : f32 to vector<8x6xf32>
    %91 = arith.select %88, %89, %90 : vector<8x6xi1>, vector<8x6xf32>
    %c0_44 = arith.constant 0 : index
    %c128 = arith.constant 128 : index
    %92 = vector.load %arg8[%c0_44, %c128] : memref<8x1408xf32, #tpu.memory_space<vmem>>, vector<8x6xf32>
    tpu.vector_store %arg8[%c0_44, %c128], %91 {strides = array<i32>} : memref<8x1408xf32, #tpu.memory_space<vmem>>, vector<8x6xf32>,
    %c0_45 = arith.constant 0 : index
    %c640 = arith.constant 640 : index
    %93 = vector.load %arg8[%c0_45, %c640] : memref<8x1408xf32, #tpu.memory_space<vmem>>, vector<8x6xf32>
    tpu.vector_store %arg8[%c0_45, %c640], %80 {strides = array<i32>} : memref<8x1408xf32, #tpu.memory_space<vmem>>, vector<8x6xf32>,
    %94 = vector.extract_strided_slice %63 {offsets = [0, 512], sizes = [8, 512], strides = [1, 1]} : vector<8x2048xbf16> to vector<8x512xbf16>
    %c1 = arith.constant 1 : index
    %c0_46 = arith.constant 0 : index
    %c0_47 = arith.constant 0 : index
    %95 = vector.load %arg4[%c1, %c0_46, %c0_47] : memref<4x512x6xbf16, #tpu.memory_space<vmem>>, vector<1x512x6xbf16>
    %96 = vector.shape_cast %95 : vector<1x512x6xbf16> to vector<512x6xbf16>
    %cst_48 = arith.constant dense<0.000000e+00> : vector<8x6xf32>
    %97 = tpu.matmul %94, %96, %cst_48 {dimension_numbers = #tpu.dot_dimension_numbers<[1], [0], [0], [1], [0, 0, 1, 1], [], []>} : vector<8x512xbf16>, vector<512x6xbf16>, vector<8x6xf32> -> vector<8x6xf32>
    %c0_49 = arith.constant 0 : index
    %c3712 = arith.constant 3712 : index
    %98 = vector.load %arg7[%c0_49, %c3712] : memref<1x4224xf32, #tpu.memory_space<vmem>>, vector<1x6xf32>
    %99 = vector.broadcast %98 : vector<1x6xf32> to vector<8x6xf32>
    %100 = arith.addf %97, %99 : vector<8x6xf32>
    %101 = tpu.iota {dimensions = array<i32: 1>} : vector<8x6xi32>
    %cst_50 = arith.constant dense<0xFF800000> : vector<8xf32>
    %102 = vector.multi_reduction <maximumf>, %100, %cst_50 [1] : vector<8x6xf32> to vector<8xf32>
    %103 = vector.shape_cast %102 : vector<8xf32> to vector<8x1xf32>
    %104 = vector.broadcast %103 : vector<8x1xf32> to vector<8x6xf32>
    %105 = arith.subf %100, %104 : vector<8x6xf32>
    %106 = math.exp %105 : vector<8x6xf32>
    %cst_51 = arith.constant dense<0.000000e+00> : vector<8xf32>
    %107 = vector.multi_reduction <add>, %106, %cst_51 [1] : vector<8x6xf32> to vector<8xf32>
    %108 = vector.shape_cast %107 : vector<8xf32> to vector<8x1xf32>
    %109 = vector.broadcast %108 : vector<8x1xf32> to vector<8x6xf32>
    %110 = arith.divf %106, %109 : vector<8x6xf32>
    %111 = vector.broadcast %103 : vector<8x1xf32> to vector<8x6xf32>
    %112 = arith.cmpf oge, %100, %111 : vector<8x6xf32>
    %c6_i32_52 = arith.constant 6 : i32
    %113 = vector.broadcast %c6_i32_52 : i32 to vector<8x6xi32>
    %114 = arith.select %112, %101, %113 : vector<8x6xi1>, vector<8x6xi32>
    %cst_53 = arith.constant dense<2147483647> : vector<8xi32>
    %115 = vector.multi_reduction <minsi>, %114, %cst_53 [1] : vector<8x6xi32> to vector<8xi32>
    %116 = vector.shape_cast %115 : vector<8xi32> to vector<8x1xi32>
    %117 = vector.broadcast %116 : vector<8x1xi32> to vector<8x6xi32>
    %118 = arith.cmpi eq, %101, %117 : vector<8x6xi32>
    %cst_54 = arith.constant 1.000000e+00 : f32
    %cst_55 = arith.constant 0.000000e+00 : f32
    %119 = vector.broadcast %cst_54 : f32 to vector<8x6xf32>
    %120 = vector.broadcast %cst_55 : f32 to vector<8x6xf32>
    %121 = arith.select %118, %119, %120 : vector<8x6xi1>, vector<8x6xf32>
    %c0_56 = arith.constant 0 : index
    %c256 = arith.constant 256 : index
    %122 = vector.load %arg8[%c0_56, %c256] : memref<8x1408xf32, #tpu.memory_space<vmem>>, vector<8x6xf32>
    tpu.vector_store %arg8[%c0_56, %c256], %121 {strides = array<i32>} : memref<8x1408xf32, #tpu.memory_space<vmem>>, vector<8x6xf32>,
    %c0_57 = arith.constant 0 : index
    %c768 = arith.constant 768 : index
    %123 = vector.load %arg8[%c0_57, %c768] : memref<8x1408xf32, #tpu.memory_space<vmem>>, vector<8x6xf32>
    tpu.vector_store %arg8[%c0_57, %c768], %110 {strides = array<i32>} : memref<8x1408xf32, #tpu.memory_space<vmem>>, vector<8x6xf32>,
    %124 = vector.extract_strided_slice %63 {offsets = [0, 1024], sizes = [8, 512], strides = [1, 1]} : vector<8x2048xbf16> to vector<8x512xbf16>
    %c2 = arith.constant 2 : index
    %c0_58 = arith.constant 0 : index
    %c0_59 = arith.constant 0 : index
    %125 = vector.load %arg4[%c2, %c0_58, %c0_59] : memref<4x512x6xbf16, #tpu.memory_space<vmem>>, vector<1x512x6xbf16>
    %126 = vector.shape_cast %125 : vector<1x512x6xbf16> to vector<512x6xbf16>
    %cst_60 = arith.constant dense<0.000000e+00> : vector<8x6xf32>
    %127 = tpu.matmul %124, %126, %cst_60 {dimension_numbers = #tpu.dot_dimension_numbers<[1], [0], [0], [1], [0, 0, 1, 1], [], []>} : vector<8x512xbf16>, vector<512x6xbf16>, vector<8x6xf32> -> vector<8x6xf32>
    %c0_61 = arith.constant 0 : index
    %c3840 = arith.constant 3840 : index
    %128 = vector.load %arg7[%c0_61, %c3840] : memref<1x4224xf32, #tpu.memory_space<vmem>>, vector<1x6xf32>
    %129 = vector.broadcast %128 : vector<1x6xf32> to vector<8x6xf32>
    %130 = arith.addf %127, %129 : vector<8x6xf32>
    %131 = tpu.iota {dimensions = array<i32: 1>} : vector<8x6xi32>
    %cst_62 = arith.constant dense<0xFF800000> : vector<8xf32>
    %132 = vector.multi_reduction <maximumf>, %130, %cst_62 [1] : vector<8x6xf32> to vector<8xf32>
    %133 = vector.shape_cast %132 : vector<8xf32> to vector<8x1xf32>
    %134 = vector.broadcast %133 : vector<8x1xf32> to vector<8x6xf32>
    %135 = arith.subf %130, %134 : vector<8x6xf32>
    %136 = math.exp %135 : vector<8x6xf32>
    %cst_63 = arith.constant dense<0.000000e+00> : vector<8xf32>
    %137 = vector.multi_reduction <add>, %136, %cst_63 [1] : vector<8x6xf32> to vector<8xf32>
    %138 = vector.shape_cast %137 : vector<8xf32> to vector<8x1xf32>
    %139 = vector.broadcast %138 : vector<8x1xf32> to vector<8x6xf32>
    %140 = arith.divf %136, %139 : vector<8x6xf32>
    %141 = vector.broadcast %133 : vector<8x1xf32> to vector<8x6xf32>
    %142 = arith.cmpf oge, %130, %141 : vector<8x6xf32>
    %c6_i32_64 = arith.constant 6 : i32
    %143 = vector.broadcast %c6_i32_64 : i32 to vector<8x6xi32>
    %144 = arith.select %142, %131, %143 : vector<8x6xi1>, vector<8x6xi32>
    %cst_65 = arith.constant dense<2147483647> : vector<8xi32>
    %145 = vector.multi_reduction <minsi>, %144, %cst_65 [1] : vector<8x6xi32> to vector<8xi32>
    %146 = vector.shape_cast %145 : vector<8xi32> to vector<8x1xi32>
    %147 = vector.broadcast %146 : vector<8x1xi32> to vector<8x6xi32>
    %148 = arith.cmpi eq, %131, %147 : vector<8x6xi32>
    %cst_66 = arith.constant 1.000000e+00 : f32
    %cst_67 = arith.constant 0.000000e+00 : f32
    %149 = vector.broadcast %cst_66 : f32 to vector<8x6xf32>
    %150 = vector.broadcast %cst_67 : f32 to vector<8x6xf32>
    %151 = arith.select %148, %149, %150 : vector<8x6xi1>, vector<8x6xf32>
    %c0_68 = arith.constant 0 : index
    %c384 = arith.constant 384 : index
    %152 = vector.load %arg8[%c0_68, %c384] : memref<8x1408xf32, #tpu.memory_space<vmem>>, vector<8x6xf32>
    tpu.vector_store %arg8[%c0_68, %c384], %151 {strides = array<i32>} : memref<8x1408xf32, #tpu.memory_space<vmem>>, vector<8x6xf32>,
    %c0_69 = arith.constant 0 : index
    %c896 = arith.constant 896 : index
    %153 = vector.load %arg8[%c0_69, %c896] : memref<8x1408xf32, #tpu.memory_space<vmem>>, vector<8x6xf32>
    tpu.vector_store %arg8[%c0_69, %c896], %140 {strides = array<i32>} : memref<8x1408xf32, #tpu.memory_space<vmem>>, vector<8x6xf32>,
    %154 = vector.extract_strided_slice %63 {offsets = [0, 1536], sizes = [8, 512], strides = [1, 1]} : vector<8x2048xbf16> to vector<8x512xbf16>
    %c3 = arith.constant 3 : index
    %c0_70 = arith.constant 0 : index
    %c0_71 = arith.constant 0 : index
    %155 = vector.load %arg4[%c3, %c0_70, %c0_71] : memref<4x512x6xbf16, #tpu.memory_space<vmem>>, vector<1x512x6xbf16>
    %156 = vector.shape_cast %155 : vector<1x512x6xbf16> to vector<512x6xbf16>
    %cst_72 = arith.constant dense<0.000000e+00> : vector<8x6xf32>
    %157 = tpu.matmul %154, %156, %cst_72 {dimension_numbers = #tpu.dot_dimension_numbers<[1], [0], [0], [1], [0, 0, 1, 1], [], []>} : vector<8x512xbf16>, vector<512x6xbf16>, vector<8x6xf32> -> vector<8x6xf32>
    %c0_73 = arith.constant 0 : index
    %c3968 = arith.constant 3968 : index
    %158 = vector.load %arg7[%c0_73, %c3968] : memref<1x4224xf32, #tpu.memory_space<vmem>>, vector<1x6xf32>
    %159 = vector.broadcast %158 : vector<1x6xf32> to vector<8x6xf32>
    %160 = arith.addf %157, %159 : vector<8x6xf32>
    %161 = tpu.iota {dimensions = array<i32: 1>} : vector<8x6xi32>
    %cst_74 = arith.constant dense<0xFF800000> : vector<8xf32>
    %162 = vector.multi_reduction <maximumf>, %160, %cst_74 [1] : vector<8x6xf32> to vector<8xf32>
    %163 = vector.shape_cast %162 : vector<8xf32> to vector<8x1xf32>
    %164 = vector.broadcast %163 : vector<8x1xf32> to vector<8x6xf32>
    %165 = arith.subf %160, %164 : vector<8x6xf32>
    %166 = math.exp %165 : vector<8x6xf32>
    %cst_75 = arith.constant dense<0.000000e+00> : vector<8xf32>
    %167 = vector.multi_reduction <add>, %166, %cst_75 [1] : vector<8x6xf32> to vector<8xf32>
    %168 = vector.shape_cast %167 : vector<8xf32> to vector<8x1xf32>
    %169 = vector.broadcast %168 : vector<8x1xf32> to vector<8x6xf32>
    %170 = arith.divf %166, %169 : vector<8x6xf32>
    %171 = vector.broadcast %163 : vector<8x1xf32> to vector<8x6xf32>
    %172 = arith.cmpf oge, %160, %171 : vector<8x6xf32>
    %c6_i32_76 = arith.constant 6 : i32
    %173 = vector.broadcast %c6_i32_76 : i32 to vector<8x6xi32>
    %174 = arith.select %172, %161, %173 : vector<8x6xi1>, vector<8x6xi32>
    %cst_77 = arith.constant dense<2147483647> : vector<8xi32>
    %175 = vector.multi_reduction <minsi>, %174, %cst_77 [1] : vector<8x6xi32> to vector<8xi32>
    %176 = vector.shape_cast %175 : vector<8xi32> to vector<8x1xi32>
    %177 = vector.broadcast %176 : vector<8x1xi32> to vector<8x6xi32>
    %178 = arith.cmpi eq, %161, %177 : vector<8x6xi32>
    %cst_78 = arith.constant 1.000000e+00 : f32
    %cst_79 = arith.constant 0.000000e+00 : f32
    %179 = vector.broadcast %cst_78 : f32 to vector<8x6xf32>
    %180 = vector.broadcast %cst_79 : f32 to vector<8x6xf32>
    %181 = arith.select %178, %179, %180 : vector<8x6xi1>, vector<8x6xf32>
    %c0_80 = arith.constant 0 : index
    %c512 = arith.constant 512 : index
    %182 = vector.load %arg8[%c0_80, %c512] : memref<8x1408xf32, #tpu.memory_space<vmem>>, vector<8x6xf32>
    tpu.vector_store %arg8[%c0_80, %c512], %181 {strides = array<i32>} : memref<8x1408xf32, #tpu.memory_space<vmem>>, vector<8x6xf32>,
    %c0_81 = arith.constant 0 : index
    %c1024_82 = arith.constant 1024 : index
    %183 = vector.load %arg8[%c0_81, %c1024_82] : memref<8x1408xf32, #tpu.memory_space<vmem>>, vector<8x6xf32>
    tpu.vector_store %arg8[%c0_81, %c1024_82], %170 {strides = array<i32>} : memref<8x1408xf32, #tpu.memory_space<vmem>>, vector<8x6xf32>,
    return
  }
}

</mosaic_0001>

<llo_original>
// kernel: ppo_atari_dop_forward.1
$region0: #{ppo_atari_dop_forward.1}
  #allocation0 [shape = 'u32[]', space=smem, size = 0x4, offset = 0x4, fixed_abs, tag = 'smem constant byte address 0x4 - core index']
  #allocation1 [shape = 'u32[144,128]{1,0:T(1,128)}', space=vmem, size = 0x12000, scoped, tag = 'internal scratch']
  %s0 = inlined_call_operand.hbm [shape: f32[8,512], index: 0, kind: input, shape index: {}]
  %s1 = inlined_call_operand.hbm [shape: f32[8,512], index: 1, kind: input, shape index: {}]
  %s2 = inlined_call_operand.hbm [shape: bf16[512,1024], index: 2, kind: input, shape index: {}]
  %s3 = inlined_call_operand.hbm [shape: bf16[512,2048], index: 3, kind: input, shape index: {}]
  %s4 = inlined_call_operand.vmem [shape: bf16[4,512,6], index: 4, kind: input, shape index: {}]
  %s5 = inlined_call_operand.hbm [shape: bf16[512,512], index: 5, kind: input, shape index: {}]
  %s6 = inlined_call_operand.vmem [shape: bf16[1024,14], index: 6, kind: input, shape index: {}]
  %s7 = inlined_call_operand.hbm [shape: f32[1,4224], index: 7, kind: input, shape index: {}]
  %s8 = inlined_call_operand.vmem [shape: f32[8,1408], index: 8, kind: output, shape index: {}]
  %s9 = sld [smem:[#allocation0]]
  $region66: #{ppo_atari_dop_forward.1} parent=0
    _
  %s11 = ssub.s32 1, %s9
  %s12 = scalar_select 0, %s11, %s9
  $region1: #{ppo_atari_dop_forward.1} parent=0
    #allocation2 [shape = 'u8[16384]{0}', space=vmem, size = 0x4000, scoped, tag = 'input window, operand 0, single buffered']
    #allocation3 [shape = 's32[1]{0}', space=sflag, size = 0x4, scoped, tag = 'scoped memory for ppo_atari_dop_forward.1']
    #allocation4 [shape = 'u8[16384]{0}', space=vmem, size = 0x4000, scoped, tag = 'input window, operand 1, single buffered']
    #allocation5 [shape = 's32[1]{0}', space=sflag, size = 0x4, scoped, tag = 'scoped memory for ppo_atari_dop_forward.1']
    #allocation6 [shape = 'u8[1048576]{0}', space=vmem, size = 0x100000, scoped, tag = 'input window, operand 2, single buffered']
    #allocation7 [shape = 'u8[2097152]{0}', space=vmem, size = 0x200000, scoped, tag = 'input window, operand 3, single buffered']
    #allocation8 [shape = 's32[1]{0}', space=sflag, size = 0x4, scoped, tag = 'scoped memory for ppo_atari_dop_forward.1']
    #allocation9 [shape = 'u8[524288]{0}', space=vmem, size = 0x80000, scoped, tag = 'input window, operand 5, single buffered']
    #allocation10 [shape = 'u8[16896]{0}', space=vmem, size = 0x4400, scoped, tag = 'input window, operand 7, single buffered']
    #allocation11 [shape = 's32[1]{0}', space=sflag, size = 0x4, scoped, tag = 'scoped memory for ppo_atari_dop_forward.1']
    %13 = vsyncpa [#allocation3], 0
    %14 = vsyncpa [#allocation5], 0
    %15 = vsyncpa [#allocation8], 0
    %16 = vsyncpa [#allocation11], 0
    // Predicated region
    $region2: #{ppo_atari_dop_forward.1} parent=1 // pred_check
      _
    $region3: #{ppo_atari_dop_forward.1} parent=1 // pred_check_branch
      %18 = sbr.rel (0) target = $region5
    $region4: #{ppo_atari_dop_forward.1} parent=1 // pred_region
      %s20 = ssub.s32 512, 512
      %21 = vsyncadd [#allocation3], %s20
      %s23 = sshll.u32 [#allocation2], 4
      %s24 = int_to_ptr.vmem [resolvable:$true] %s23
      %26 = dma.hbm_to_vmem [thread:$0]  %s0, 512, %s24, [#allocation3]
    $region5: #{ppo_atari_dop_forward.1} parent=1 // pred_fallthru
      _
    // Predicated region
    $region6: #{ppo_atari_dop_forward.1} parent=1 // pred_check
      _
    $region7: #{ppo_atari_dop_forward.1} parent=1 // pred_check_branch
      %28 = sbr.rel (0) target = $region9
    $region8: #{ppo_atari_dop_forward.1} parent=1 // pred_region
      %s30 = ssub.s32 512, 512
      %31 = vsyncadd [#allocation5], %s30
      %s33 = sshll.u32 [#allocation4], 4
      %s34 = int_to_ptr.vmem [resolvable:$true] %s33
      %36 = dma.hbm_to_vmem [thread:$0]  %s1, 512, %s34, [#allocation5]
    $region9: #{ppo_atari_dop_forward.1} parent=1 // pred_fallthru
      _
    // Predicated region
    $region10: #{ppo_atari_dop_forward.1} parent=1 // pred_check
      _
    $region11: #{ppo_atari_dop_forward.1} parent=1 // pred_check_branch
      %38 = sbr.rel (0) target = $region13
    $region12: #{ppo_atari_dop_forward.1} parent=1 // pred_region
      %s40 = ssub.s32 32768, 32768
      %41 = vsyncadd [#allocation5], %s40
      %s42 = sshll.u32 [#allocation6], 4
      %s43 = int_to_ptr.vmem [resolvable:$true] %s42
      %48 = dma.hbm_to_vmem [thread:$0]  %s2, 32768, %s43, [#allocation5], 512, 512, 32
    $region13: #{ppo_atari_dop_forward.1} parent=1 // pred_fallthru
      _
    // Predicated region
    $region14: #{ppo_atari_dop_forward.1} parent=1 // pred_check
      _
    $region15: #{ppo_atari_dop_forward.1} parent=1 // pred_check_branch
      %50 = sbr.rel (0) target = $region17
    $region16: #{ppo_atari_dop_forward.1} parent=1 // pred_region
      %s52 = ssub.s32 65536, 65536
      %53 = vsyncadd [#allocation8], %s52
      %s54 = sshll.u32 [#allocation7], 4
      %s55 = int_to_ptr.vmem [resolvable:$true] %s54
      %60 = dma.hbm_to_vmem [thread:$0]  %s3, 65536, %s55, [#allocation8], 1024, 1024, 64
    $region17: #{ppo_atari_dop_forward.1} parent=1 // pred_fallthru
      _
    // Predicated region
    $region18: #{ppo_atari_dop_forward.1} parent=1 // pred_check
      _
    $region19: #{ppo_atari_dop_forward.1} parent=1 // pred_check_branch
      %62 = sbr.rel (0) target = $region21
    $region20: #{ppo_atari_dop_forward.1} parent=1 // pred_region
      _
    $region21: #{ppo_atari_dop_forward.1} parent=1 // pred_fallthru
      _
    // Predicated region
    $region22: #{ppo_atari_dop_forward.1} parent=1 // pred_check
      _
    $region23: #{ppo_atari_dop_forward.1} parent=1 // pred_check_branch
      %64 = sbr.rel (0) target = $region25
    $region24: #{ppo_atari_dop_forward.1} parent=1 // pred_region
      %s66 = ssub.s32 16384, 16384
      %67 = vsyncadd [#allocation8], %s66
      %s68 = sshll.u32 [#allocation9], 4
      %s69 = int_to_ptr.vmem [resolvable:$true] %s68
      %74 = dma.hbm_to_vmem [thread:$0]  %s5, 16384, %s69, [#allocation8], 256, 256, 16
    $region25: #{ppo_atari_dop_forward.1} parent=1 // pred_fallthru
      _
    // Predicated region
    $region26: #{ppo_atari_dop_forward.1} parent=1 // pred_check
      _
    $region27: #{ppo_atari_dop_forward.1} parent=1 // pred_check_branch
      %76 = sbr.rel (0) target = $region29
    $region28: #{ppo_atari_dop_forward.1} parent=1 // pred_region
      _
    $region29: #{ppo_atari_dop_forward.1} parent=1 // pred_fallthru
      _
    // Predicated region
    $region30: #{ppo_atari_dop_forward.1} parent=1 // pred_check
      _
    $region31: #{ppo_atari_dop_forward.1} parent=1 // pred_check_branch
      %78 = sbr.rel (0) target = $region33
    $region32: #{ppo_atari_dop_forward.1} parent=1 // pred_region
      %s80 = ssub.s32 528, 528
      %81 = vsyncadd [#allocation11], %s80
      %s83 = sshll.u32 [#allocation10], 4
      %s84 = int_to_ptr.vmem [resolvable:$true] %s83
      %86 = dma.hbm_to_vmem [thread:$0]  %s7, 528, %s84, [#allocation11]
    $region33: #{ppo_atari_dop_forward.1} parent=1 // pred_fallthru
      _
    // Predicated region
    $region34: #{ppo_atari_dop_forward.1} parent=1 // pred_check
      _
    $region35: #{ppo_atari_dop_forward.1} parent=1 // pred_check_branch
      %88 = sbr.rel (0) target = $region37
    $region36: #{ppo_atari_dop_forward.1} parent=1 // pred_region
      %89 = dma.done [#allocation3], 512
    $region37: #{ppo_atari_dop_forward.1} parent=1 // pred_fallthru
      _
    // Predicated region
    $region38: #{ppo_atari_dop_forward.1} parent=1 // pred_check
      _
    $region39: #{ppo_atari_dop_forward.1} parent=1 // pred_check_branch
      %91 = sbr.rel (0) target = $region41
    $region40: #{ppo_atari_dop_forward.1} parent=1 // pred_region
      %92 = dma.done [#allocation5], 512
    $region41: #{ppo_atari_dop_forward.1} parent=1 // pred_fallthru
      _
    // Predicated region
    $region42: #{ppo_atari_dop_forward.1} parent=1 // pred_check
      _
    $region43: #{ppo_atari_dop_forward.1} parent=1 // pred_check_branch
      %94 = sbr.rel (0) target = $region45
    $region44: #{ppo_atari_dop_forward.1} parent=1 // pred_region
      %95 = dma.done [#allocation5], 32768
    $region45: #{ppo_atari_dop_forward.1} parent=1 // pred_fallthru
      _
    // Predicated region
    $region46: #{ppo_atari_dop_forward.1} parent=1 // pred_check
      _
    $region47: #{ppo_atari_dop_forward.1} parent=1 // pred_check_branch
      %97 = sbr.rel (0) target = $region49
    $region48: #{ppo_atari_dop_forward.1} parent=1 // pred_region
      %98 = dma.done [#allocation8], 65536
    $region49: #{ppo_atari_dop_forward.1} parent=1 // pred_fallthru
      _
    // Predicated region
    $region50: #{ppo_atari_dop_forward.1} parent=1 // pred_check
      _
    $region51: #{ppo_atari_dop_forward.1} parent=1 // pred_check_branch
      %100 = sbr.rel (0) target = $region53
    $region52: #{ppo_atari_dop_forward.1} parent=1 // pred_region
      %101 = dma.done [#allocation8], 16384
    $region53: #{ppo_atari_dop_forward.1} parent=1 // pred_fallthru
      _
    // Predicated region
    $region54: #{ppo_atari_dop_forward.1} parent=1 // pred_check
      _
    $region55: #{ppo_atari_dop_forward.1} parent=1 // pred_check_branch
      %103 = sbr.rel (0) target = $region57
    $region56: #{ppo_atari_dop_forward.1} parent=1 // pred_region
      %104 = dma.done [#allocation11], 528
    $region57: #{ppo_atari_dop_forward.1} parent=1 // pred_fallthru
      _
    %106 = vst [vmem:[%s8] sm:$0xff] 0.0
    %107 = vst [vmem:[%s8 + $0x8] sm:$0xff] 0.0
    %108 = vst [vmem:[%s8 + $0x10] sm:$0xff] 0.0
    %109 = vst [vmem:[%s8 + $0x18] sm:$0xff] 0.0
    %110 = vst [vmem:[%s8 + $0x20] sm:$0xff] 0.0
    %111 = vst [vmem:[%s8 + $0x28] sm:$0xff] 0.0
    %112 = vst [vmem:[%s8 + $0x30] sm:$0xff] 0.0
    %113 = vst [vmem:[%s8 + $0x38] sm:$0xff] 0.0
    %114 = vst [vmem:[%s8 + $0x40] sm:$0xff] 0.0
    %115 = vst [vmem:[%s8 + $0x48] sm:$0xff] 0.0
    %116 = vst [vmem:[%s8 + $0x50] sm:$0xff] 0.0
    %v117 = vld [vmem:[#allocation2] sm:$0xff]
    %v118 = vld [vmem:[#allocation2 + $0x8] sm:$0xff]
    %v119 = vld [vmem:[#allocation2 + $0x10] sm:$0xff]
    %v120 = vld [vmem:[#allocation2 + $0x18] sm:$0xff]
    %v121 = vpack.c.bf16 %v117, %v117
    %v122 = vpack.c.bf16 %v118, %v118
    %v123 = vpack.c.bf16 %v119, %v119
    %v124 = vpack.c.bf16 %v120, %v120
    %v125 = vld [vmem:[#allocation6] sm:$0xff]
    %v126 = vld [vmem:[#allocation6 + $0x8] sm:$0xff]
    %v127 = vld [vmem:[#allocation6 + $0x10] sm:$0xff]
    %v128 = vld [vmem:[#allocation6 + $0x18] sm:$0xff]
    %v129 = vld [vmem:[#allocation6 + $0x20] sm:$0xff]
    %v130 = vld [vmem:[#allocation6 + $0x28] sm:$0xff]
    %v131 = vld [vmem:[#allocation6 + $0x30] sm:$0xff]
    %v132 = vld [vmem:[#allocation6 + $0x38] sm:$0xff]
    %v133 = vld [vmem:[#allocation6 + $0x40] sm:$0xff]
    %v134 = vld [vmem:[#allocation6 + $0x48] sm:$0xff]
    %v135 = vld [vmem:[#allocation6 + $0x50] sm:$0xff]
    %v136 = vld [vmem:[#allocation6 + $0x58] sm:$0xff]
    %v137 = vld [vmem:[#allocation6 + $0x60] sm:$0xff]
    %v138 = vld [vmem:[#allocation6 + $0x68] sm:$0xff]
    %v139 = vld [vmem:[#allocation6 + $0x70] sm:$0xff]
    %v140 = vld [vmem:[#allocation6 + $0x78] sm:$0xff]
    %v141 = vld [vmem:[#allocation6 + $0x80] sm:$0xff]
    %v142 = vld [vmem:[#allocation6 + $0x88] sm:$0xff]
    %v143 = vld [vmem:[#allocation6 + $0x90] sm:$0xff]
    %v144 = vld [vmem:[#allocation6 + $0x98] sm:$0xff]
    %v145 = vld [vmem:[#allocation6 + $0xa0] sm:$0xff]
    %v146 = vld [vmem:[#allocation6 + $0xa8] sm:$0xff]
    %v147 = vld [vmem:[#allocation6 + $0xb0] sm:$0xff]
    %v148 = vld [vmem:[#allocation6 + $0xb8] sm:$0xff]
    %v149 = vld [vmem:[#allocation6 + $0xc0] sm:$0xff]
    %v150 = vld [vmem:[#allocation6 + $0xc8] sm:$0xff]
    %v151 = vld [vmem:[#allocation6 + $0xd0] sm:$0xff]
    %v152 = vld [vmem:[#allocation6 + $0xd8] sm:$0xff]
    %v153 = vld [vmem:[#allocation6 + $0xe0] sm:$0xff]
    %v154 = vld [vmem:[#allocation6 + $0xe8] sm:$0xff]
    %v155 = vld [vmem:[#allocation6 + $0xf0] sm:$0xff]
    %v156 = vld [vmem:[#allocation6 + $0xf8] sm:$0xff]
    %v157 = vld [vmem:[#allocation6 + $0x100] sm:$0xff]
    %v158 = vld [vmem:[#allocation6 + $0x108] sm:$0xff]
    %v159 = vld [vmem:[#allocation6 + $0x110] sm:$0xff]
    %v160 = vld [vmem:[#allocation6 + $0x118] sm:$0xff]
    %v161 = vld [vmem:[#allocation6 + $0x120] sm:$0xff]
    %v162 = vld [vmem:[#allocation6 + $0x128] sm:$0xff]
    %v163 = vld [vmem:[#allocation6 + $0x130] sm:$0xff]
    %v164 = vld [vmem:[#allocation6 + $0x138] sm:$0xff]
    %v165 = vld [vmem:[#allocation6 + $0x140] sm:$0xff]
    %v166 = vld [vmem:[#allocation6 + $0x148] sm:$0xff]
    %v167 = vld [vmem:[#allocation6 + $0x150] sm:$0xff]
    %v168 = vld [vmem:[#allocation6 + $0x158] sm:$0xff]
    %v169 = vld [vmem:[#allocation6 + $0x160] sm:$0xff]
    %v170 = vld [vmem:[#allocation6 + $0x168] sm:$0xff]
    %v171 = vld [vmem:[#allocation6 + $0x170] sm:$0xff]
    %v172 = vld [vmem:[#allocation6 + $0x178] sm:$0xff]
    %v173 = vld [vmem:[#allocation6 + $0x180] sm:$0xff]
    %v174 = vld [vmem:[#allocation6 + $0x188] sm:$0xff]
    %v175 = vld [vmem:[#allocation6 + $0x190] sm:$0xff]
    %v176 = vld [vmem:[#allocation6 + $0x198] sm:$0xff]
    %v177 = vld [vmem:[#allocation6 + $0x1a0] sm:$0xff]
    %v178 = vld [vmem:[#allocation6 + $0x1a8] sm:$0xff]
    %v179 = vld [vmem:[#allocation6 + $0x1b0] sm:$0xff]
    %v180 = vld [vmem:[#allocation6 + $0x1b8] sm:$0xff]
    %v181 = vld [vmem:[#allocation6 + $0x1c0] sm:$0xff]
    %v182 = vld [vmem:[#allocation6 + $0x1c8] sm:$0xff]
    %v183 = vld [vmem:[#allocation6 + $0x1d0] sm:$0xff]
    %v184 = vld [vmem:[#allocation6 + $0x1d8] sm:$0xff]
    %v185 = vld [vmem:[#allocation6 + $0x1e0] sm:$0xff]
    %v186 = vld [vmem:[#allocation6 + $0x1e8] sm:$0xff]
    %v187 = vld [vmem:[#allocation6 + $0x1f0] sm:$0xff]
    %v188 = vld [vmem:[#allocation6 + $0x1f8] sm:$0xff]
    %v189 = vld [vmem:[#allocation6 + $0x200] sm:$0xff]
    %v190 = vld [vmem:[#allocation6 + $0x208] sm:$0xff]
    %v191 = vld [vmem:[#allocation6 + $0x210] sm:$0xff]
    %v192 = vld [vmem:[#allocation6 + $0x218] sm:$0xff]
    %v193 = vld [vmem:[#allocation6 + $0x220] sm:$0xff]
    %v194 = vld [vmem:[#allocation6 + $0x228] sm:$0xff]
    %v195 = vld [vmem:[#allocation6 + $0x230] sm:$0xff]
    %v196 = vld [vmem:[#allocation6 + $0x238] sm:$0xff]
    %v197 = vld [vmem:[#allocation6 + $0x240] sm:$0xff]
    %v198 = vld [vmem:[#allocation6 + $0x248] sm:$0xff]
    %v199 = vld [vmem:[#allocation6 + $0x250] sm:$0xff]
    %v200 = vld [vmem:[#allocation6 + $0x258] sm:$0xff]
    %v201 = vld [vmem:[#allocation6 + $0x260] sm:$0xff]
    %v202 = vld [vmem:[#allocation6 + $0x268] sm:$0xff]
    %v203 = vld [vmem:[#allocation6 + $0x270] sm:$0xff]
    %v204 = vld [vmem:[#allocation6 + $0x278] sm:$0xff]
    %v205 = vld [vmem:[#allocation6 + $0x280] sm:$0xff]
    %v206 = vld [vmem:[#allocation6 + $0x288] sm:$0xff]
    %v207 = vld [vmem:[#allocation6 + $0x290] sm:$0xff]
    %v208 = vld [vmem:[#allocation6 + $0x298] sm:$0xff]
    %v209 = vld [vmem:[#allocation6 + $0x2a0] sm:$0xff]
    %v210 = vld [vmem:[#allocation6 + $0x2a8] sm:$0xff]
    %v211 = vld [vmem:[#allocation6 + $0x2b0] sm:$0xff]
    %v212 = vld [vmem:[#allocation6 + $0x2b8] sm:$0xff]
    %v213 = vld [vmem:[#allocation6 + $0x2c0] sm:$0xff]
    %v214 = vld [vmem:[#allocation6 + $0x2c8] sm:$0xff]
    %v215 = vld [vmem:[#allocation6 + $0x2d0] sm:$0xff]
    %v216 = vld [vmem:[#allocation6 + $0x2d8] sm:$0xff]
    %v217 = vld [vmem:[#allocation6 + $0x2e0] sm:$0xff]
    %v218 = vld [vmem:[#allocation6 + $0x2e8] sm:$0xff]
    %v219 = vld [vmem:[#allocation6 + $0x2f0] sm:$0xff]
    %v220 = vld [vmem:[#allocation6 + $0x2f8] sm:$0xff]
    %v221 = vld [vmem:[#allocation6 + $0x300] sm:$0xff]
    %v222 = vld [vmem:[#allocation6 + $0x308] sm:$0xff]
    %v223 = vld [vmem:[#allocation6 + $0x310] sm:$0xff]
    %v224 = vld [vmem:[#allocation6 + $0x318] sm:$0xff]
    %v225 = vld [vmem:[#allocation6 + $0x320] sm:$0xff]
    %v226 = vld [vmem:[#allocation6 + $0x328] sm:$0xff]
    %v227 = vld [vmem:[#allocation6 + $0x330] sm:$0xff]
    %v228 = vld [vmem:[#allocation6 + $0x338] sm:$0xff]
    %v229 = vld [vmem:[#allocation6 + $0x340] sm:$0xff]
    %v230 = vld [vmem:[#allocation6 + $0x348] sm:$0xff]
    %v231 = vld [vmem:[#allocation6 + $0x350] sm:$0xff]
    %v232 = vld [vmem:[#allocation6 + $0x358] sm:$0xff]
    %v233 = vld [vmem:[#allocation6 + $0x360] sm:$0xff]
    %v234 = vld [vmem:[#allocation6 + $0x368] sm:$0xff]
    %v235 = vld [vmem:[#allocation6 + $0x370] sm:$0xff]
    %v236 = vld [vmem:[#allocation6 + $0x378] sm:$0xff]
    %v237 = vld [vmem:[#allocation6 + $0x380] sm:$0xff]
    %v238 = vld [vmem:[#allocation6 + $0x388] sm:$0xff]
    %v239 = vld [vmem:[#allocation6 + $0x390] sm:$0xff]
    %v240 = vld [vmem:[#allocation6 + $0x398] sm:$0xff]
    %v241 = vld [vmem:[#allocation6 + $0x3a0] sm:$0xff]
    %v242 = vld [vmem:[#allocation6 + $0x3a8] sm:$0xff]
    %v243 = vld [vmem:[#allocation6 + $0x3b0] sm:$0xff]
    %v244 = vld [vmem:[#allocation6 + $0x3b8] sm:$0xff]
    %v245 = vld [vmem:[#allocation6 + $0x3c0] sm:$0xff]
    %v246 = vld [vmem:[#allocation6 + $0x3c8] sm:$0xff]
    %v247 = vld [vmem:[#allocation6 + $0x3d0] sm:$0xff]
    %v248 = vld [vmem:[#allocation6 + $0x3d8] sm:$0xff]
    %v249 = vld [vmem:[#allocation6 + $0x3e0] sm:$0xff]
    %v250 = vld [vmem:[#allocation6 + $0x3e8] sm:$0xff]
    %v251 = vld [vmem:[#allocation6 + $0x3f0] sm:$0xff]
    %v252 = vld [vmem:[#allocation6 + $0x3f8] sm:$0xff]
    %v253 = vld [vmem:[#allocation6 + $0x400] sm:$0xff]
    %v254 = vld [vmem:[#allocation6 + $0x408] sm:$0xff]
    %v255 = vld [vmem:[#allocation6 + $0x410] sm:$0xff]
    %v256 = vld [vmem:[#allocation6 + $0x418] sm:$0xff]
    %v257 = vld [vmem:[#allocation6 + $0x420] sm:$0xff]
    %v258 = vld [vmem:[#allocation6 + $0x428] sm:$0xff]
    %v259 = vld [vmem:[#allocation6 + $0x430] sm:$0xff]
    %v260 = vld [vmem:[#allocation6 + $0x438] sm:$0xff]
    %v261 = vld [vmem:[#allocation6 + $0x440] sm:$0xff]
    %v262 = vld [vmem:[#allocation6 + $0x448] sm:$0xff]
    %v263 = vld [vmem:[#allocation6 + $0x450] sm:$0xff]
    %v264 = vld [vmem:[#allocation6 + $0x458] sm:$0xff]
    %v265 = vld [vmem:[#allocation6 + $0x460] sm:$0xff]
    %v266 = vld [vmem:[#allocation6 + $0x468] sm:$0xff]
    %v267 = vld [vmem:[#allocation6 + $0x470] sm:$0xff]
    %v268 = vld [vmem:[#allocation6 + $0x478] sm:$0xff]
    %v269 = vld [vmem:[#allocation6 + $0x480] sm:$0xff]
    %v270 = vld [vmem:[#allocation6 + $0x488] sm:$0xff]
    %v271 = vld [vmem:[#allocation6 + $0x490] sm:$0xff]
    %v272 = vld [vmem:[#allocation6 + $0x498] sm:$0xff]
    %v273 = vld [vmem:[#allocation6 + $0x4a0] sm:$0xff]
    %v274 = vld [vmem:[#allocation6 + $0x4a8] sm:$0xff]
    %v275 = vld [vmem:[#allocation6 + $0x4b0] sm:$0xff]
    %v276 = vld [vmem:[#allocation6 + $0x4b8] sm:$0xff]
    %v277 = vld [vmem:[#allocation6 + $0x4c0] sm:$0xff]
    %v278 = vld [vmem:[#allocation6 + $0x4c8] sm:$0xff]
    %v279 = vld [vmem:[#allocation6 + $0x4d0] sm:$0xff]
    %v280 = vld [vmem:[#allocation6 + $0x4d8] sm:$0xff]
    %v281 = vld [vmem:[#allocation6 + $0x4e0] sm:$0xff]
    %v282 = vld [vmem:[#allocation6 + $0x4e8] sm:$0xff]
    %v283 = vld [vmem:[#allocation6 + $0x4f0] sm:$0xff]
    %v284 = vld [vmem:[#allocation6 + $0x4f8] sm:$0xff]
    %v285 = vld [vmem:[#allocation6 + $0x500] sm:$0xff]
    %v286 = vld [vmem:[#allocation6 + $0x508] sm:$0xff]
    %v287 = vld [vmem:[#allocation6 + $0x510] sm:$0xff]
    %v288 = vld [vmem:[#allocation6 + $0x518] sm:$0xff]
    %v289 = vld [vmem:[#allocation6 + $0x520] sm:$0xff]
    %v290 = vld [vmem:[#allocation6 + $0x528] sm:$0xff]
    %v291 = vld [vmem:[#allocation6 + $0x530] sm:$0xff]
    %v292 = vld [vmem:[#allocation6 + $0x538] sm:$0xff]
    %v293 = vld [vmem:[#allocation6 + $0x540] sm:$0xff]
    %v294 = vld [vmem:[#allocation6 + $0x548] sm:$0xff]
    %v295 = vld [vmem:[#allocation6 + $0x550] sm:$0xff]
    %v296 = vld [vmem:[#allocation6 + $0x558] sm:$0xff]
    %v297 = vld [vmem:[#allocation6 + $0x560] sm:$0xff]
    %v298 = vld [vmem:[#allocation6 + $0x568] sm:$0xff]
    %v299 = vld [vmem:[#allocation6 + $0x570] sm:$0xff]
    %v300 = vld [vmem:[#allocation6 + $0x578] sm:$0xff]
    %v301 = vld [vmem:[#allocation6 + $0x580] sm:$0xff]
    %v302 = vld [vmem:[#allocation6 + $0x588] sm:$0xff]
    %v303 = vld [vmem:[#allocation6 + $0x590] sm:$0xff]
    %v304 = vld [vmem:[#allocation6 + $0x598] sm:$0xff]
    %v305 = vld [vmem:[#allocation6 + $0x5a0] sm:$0xff]
    %v306 = vld [vmem:[#allocation6 + $0x5a8] sm:$0xff]
    %v307 = vld [vmem:[#allocation6 + $0x5b0] sm:$0xff]
    %v308 = vld [vmem:[#allocation6 + $0x5b8] sm:$0xff]
    %v309 = vld [vmem:[#allocation6 + $0x5c0] sm:$0xff]
    %v310 = vld [vmem:[#allocation6 + $0x5c8] sm:$0xff]
    %v311 = vld [vmem:[#allocation6 + $0x5d0] sm:$0xff]
    %v312 = vld [vmem:[#allocation6 + $0x5d8] sm:$0xff]
    %v313 = vld [vmem:[#allocation6 + $0x5e0] sm:$0xff]
    %v314 = vld [vmem:[#allocation6 + $0x5e8] sm:$0xff]
    %v315 = vld [vmem:[#allocation6 + $0x5f0] sm:$0xff]
    %v316 = vld [vmem:[#allocation6 + $0x5f8] sm:$0xff]
    %v317 = vld [vmem:[#allocation6 + $0x600] sm:$0xff]
    %v318 = vld [vmem:[#allocation6 + $0x608] sm:$0xff]
    %v319 = vld [vmem:[#allocation6 + $0x610] sm:$0xff]
    %v320 = vld [vmem:[#allocation6 + $0x618] sm:$0xff]
    %v321 = vld [vmem:[#allocation6 + $0x620] sm:$0xff]
    %v322 = vld [vmem:[#allocation6 + $0x628] sm:$0xff]
    %v323 = vld [vmem:[#allocation6 + $0x630] sm:$0xff]
    %v324 = vld [vmem:[#allocation6 + $0x638] sm:$0xff]
    %v325 = vld [vmem:[#allocation6 + $0x640] sm:$0xff]
    %v326 = vld [vmem:[#allocation6 + $0x648] sm:$0xff]
    %v327 = vld [vmem:[#allocation6 + $0x650] sm:$0xff]
    %v328 = vld [vmem:[#allocation6 + $0x658] sm:$0xff]
    %v329 = vld [vmem:[#allocation6 + $0x660] sm:$0xff]
    %v330 = vld [vmem:[#allocation6 + $0x668] sm:$0xff]
    %v331 = vld [vmem:[#allocation6 + $0x670] sm:$0xff]
    %v332 = vld [vmem:[#allocation6 + $0x678] sm:$0xff]
    %v333 = vld [vmem:[#allocation6 + $0x680] sm:$0xff]
    %v334 = vld [vmem:[#allocation6 + $0x688] sm:$0xff]
    %v335 = vld [vmem:[#allocation6 + $0x690] sm:$0xff]
    %v336 = vld [vmem:[#allocation6 + $0x698] sm:$0xff]
    %v337 = vld [vmem:[#allocation6 + $0x6a0] sm:$0xff]
    %v338 = vld [vmem:[#allocation6 + $0x6a8] sm:$0xff]
    %v339 = vld [vmem:[#allocation6 + $0x6b0] sm:$0xff]
    %v340 = vld [vmem:[#allocation6 + $0x6b8] sm:$0xff]
    %v341 = vld [vmem:[#allocation6 + $0x6c0] sm:$0xff]
    %v342 = vld [vmem:[#allocation6 + $0x6c8] sm:$0xff]
    %v343 = vld [vmem:[#allocation6 + $0x6d0] sm:$0xff]
    %v344 = vld [vmem:[#allocation6 + $0x6d8] sm:$0xff]
    %v345 = vld [vmem:[#allocation6 + $0x6e0] sm:$0xff]
    %v346 = vld [vmem:[#allocation6 + $0x6e8] sm:$0xff]
    %v347 = vld [vmem:[#allocation6 + $0x6f0] sm:$0xff]
    %v348 = vld [vmem:[#allocation6 + $0x6f8] sm:$0xff]
    %v349 = vld [vmem:[#allocation6 + $0x700] sm:$0xff]
    %v350 = vld [vmem:[#allocation6 + $0x708] sm:$0xff]
    %v351 = vld [vmem:[#allocation6 + $0x710] sm:$0xff]
    %v352 = vld [vmem:[#allocation6 + $0x718] sm:$0xff]
    %v353 = vld [vmem:[#allocation6 + $0x720] sm:$0xff]
    %v354 = vld [vmem:[#allocation6 + $0x728] sm:$0xff]
    %v355 = vld [vmem:[#allocation6 + $0x730] sm:$0xff]
    %v356 = vld [vmem:[#allocation6 + $0x738] sm:$0xff]
    %v357 = vld [vmem:[#allocation6 + $0x740] sm:$0xff]
    %v358 = vld [vmem:[#allocation6 + $0x748] sm:$0xff]
    %v359 = vld [vmem:[#allocation6 + $0x750] sm:$0xff]
    %v360 = vld [vmem:[#allocation6 + $0x758] sm:$0xff]
    %v361 = vld [vmem:[#allocation6 + $0x760] sm:$0xff]
    %v362 = vld [vmem:[#allocation6 + $0x768] sm:$0xff]
    %v363 = vld [vmem:[#allocation6 + $0x770] sm:$0xff]
    %v364 = vld [vmem:[#allocation6 + $0x778] sm:$0xff]
    %v365 = vld [vmem:[#allocation6 + $0x780] sm:$0xff]
    %v366 = vld [vmem:[#allocation6 + $0x788] sm:$0xff]
    %v367 = vld [vmem:[#allocation6 + $0x790] sm:$0xff]
    %v368 = vld [vmem:[#allocation6 + $0x798] sm:$0xff]
    %v369 = vld [vmem:[#allocation6 + $0x7a0] sm:$0xff]
    %v370 = vld [vmem:[#allocation6 + $0x7a8] sm:$0xff]
    %v371 = vld [vmem:[#allocation6 + $0x7b0] sm:$0xff]
    %v372 = vld [vmem:[#allocation6 + $0x7b8] sm:$0xff]
    %v373 = vld [vmem:[#allocation6 + $0x7c0] sm:$0xff]
    %v374 = vld [vmem:[#allocation6 + $0x7c8] sm:$0xff]
    %v375 = vld [vmem:[#allocation6 + $0x7d0] sm:$0xff]
    %v376 = vld [vmem:[#allocation6 + $0x7d8] sm:$0xff]
    %v377 = vld [vmem:[#allocation6 + $0x7e0] sm:$0xff]
    %v378 = vld [vmem:[#allocation6 + $0x7e8] sm:$0xff]
    %v379 = vld [vmem:[#allocation6 + $0x7f0] sm:$0xff]
    %v380 = vld [vmem:[#allocation6 + $0x7f8] sm:$0xff]
    %v381 = vld [vmem:[#allocation10] sm:$0xff]
    %v383 = vlaneseq
    %v384 = vshrl.u32 %v383, 7
    %v385 = vsub.s32 0, %v384
    %v386 = vrot.slane %v381, %v385
    %v387 = vlaneseq
    %v388 = vshrl.u32 %v387, 7
    %v389 = vsub.s32 1, %v388
    %v390 = vrot.slane %v381, %v389
    %v391 = vlaneseq
    %v392 = vshrl.u32 %v391, 7
    %v393 = vsub.s32 2, %v392
    %v394 = vrot.slane %v381, %v393
    %v395 = vlaneseq
    %v396 = vshrl.u32 %v395, 7
    %v397 = vsub.s32 3, %v396
    %v398 = vrot.slane %v381, %v397
    %v399 = vlaneseq
    %v400 = vshrl.u32 %v399, 7
    %v401 = vsub.s32 4, %v400
    %v402 = vrot.slane %v381, %v401
    %v403 = vlaneseq
    %v404 = vshrl.u32 %v403, 7
    %v405 = vsub.s32 5, %v404
    %v406 = vrot.slane %v381, %v405
    %v407 = vlaneseq
    %v408 = vshrl.u32 %v407, 7
    %v409 = vsub.s32 6, %v408
    %v410 = vrot.slane %v381, %v409
    %v411 = vlaneseq
    %v412 = vshrl.u32 %v411, 7
    %v413 = vsub.s32 7, %v412
    %v414 = vrot.slane %v381, %v413
    %v679 = vunpack.c.l.b16 %v125
    %v680 = vunpack.c.h.b16 %v125
    %v681 = vunpack.c.l.b16 %v126
    %v682 = vunpack.c.h.b16 %v126
    %v683 = vunpack.c.l.b16 %v127
    %v684 = vunpack.c.h.b16 %v127
    %v685 = vunpack.c.l.b16 %v128
    %v686 = vunpack.c.h.b16 %v128
    %v687 = vunpack.c.l.b16 %v129
    %v688 = vunpack.c.h.b16 %v129
    %v689 = vunpack.c.l.b16 %v130
    %v690 = vunpack.c.h.b16 %v130
    %v691 = vunpack.c.l.b16 %v131
    %v692 = vunpack.c.h.b16 %v131
    %v693 = vunpack.c.l.b16 %v132
    %v694 = vunpack.c.h.b16 %v132
    %v695 = vunpack.c.l.b16 %v133
    %v696 = vunpack.c.h.b16 %v133
    %v697 = vunpack.c.l.b16 %v134
    %v698 = vunpack.c.h.b16 %v134
    %v699 = vunpack.c.l.b16 %v135
    %v700 = vunpack.c.h.b16 %v135
    %v701 = vunpack.c.l.b16 %v136
    %v702 = vunpack.c.h.b16 %v136
    %v703 = vunpack.c.l.b16 %v137
    %v704 = vunpack.c.h.b16 %v137
    %v705 = vunpack.c.l.b16 %v138
    %v706 = vunpack.c.h.b16 %v138
    %v707 = vunpack.c.l.b16 %v139
    %v708 = vunpack.c.h.b16 %v139
    %v709 = vunpack.c.l.b16 %v140
    %v710 = vunpack.c.h.b16 %v140
    %v711 = vunpack.c.l.b16 %v141
    %v712 = vunpack.c.h.b16 %v141
    %v713 = vunpack.c.l.b16 %v142
    %v714 = vunpack.c.h.b16 %v142
    %v715 = vunpack.c.l.b16 %v143
    %v716 = vunpack.c.h.b16 %v143
    %v717 = vunpack.c.l.b16 %v144
    %v718 = vunpack.c.h.b16 %v144
    %v719 = vunpack.c.l.b16 %v145
    %v720 = vunpack.c.h.b16 %v145
    %v721 = vunpack.c.l.b16 %v146
    %v722 = vunpack.c.h.b16 %v146
    %v723 = vunpack.c.l.b16 %v147
    %v724 = vunpack.c.h.b16 %v147
    %v725 = vunpack.c.l.b16 %v148
    %v726 = vunpack.c.h.b16 %v148
    %v727 = vunpack.c.l.b16 %v149
    %v728 = vunpack.c.h.b16 %v149
    %v729 = vunpack.c.l.b16 %v150
    %v730 = vunpack.c.h.b16 %v150
    %v731 = vunpack.c.l.b16 %v151
    %v732 = vunpack.c.h.b16 %v151
    %v733 = vunpack.c.l.b16 %v152
    %v734 = vunpack.c.h.b16 %v152
    %v735 = vunpack.c.l.b16 %v153
    %v736 = vunpack.c.h.b16 %v153
    %v737 = vunpack.c.l.b16 %v154
    %v738 = vunpack.c.h.b16 %v154
    %v739 = vunpack.c.l.b16 %v155
    %v740 = vunpack.c.h.b16 %v155
    %v741 = vunpack.c.l.b16 %v156
    %v742 = vunpack.c.h.b16 %v156
    %v743 = vunpack.c.l.b16 %v157
    %v744 = vunpack.c.h.b16 %v157
    %v745 = vunpack.c.l.b16 %v158
    %v746 = vunpack.c.h.b16 %v158
    %v747 = vunpack.c.l.b16 %v159
    %v748 = vunpack.c.h.b16 %v159
    %v749 = vunpack.c.l.b16 %v160
    %v750 = vunpack.c.h.b16 %v160
    %v751 = vunpack.c.l.b16 %v161
    %v752 = vunpack.c.h.b16 %v161
    %v753 = vunpack.c.l.b16 %v162
    %v754 = vunpack.c.h.b16 %v162
    %v755 = vunpack.c.l.b16 %v163
    %v756 = vunpack.c.h.b16 %v163
    %v757 = vunpack.c.l.b16 %v164
    %v758 = vunpack.c.h.b16 %v164
    %v759 = vunpack.c.l.b16 %v165
    %v760 = vunpack.c.h.b16 %v165
    %v761 = vunpack.c.l.b16 %v166
    %v762 = vunpack.c.h.b16 %v166
    %v763 = vunpack.c.l.b16 %v167
    %v764 = vunpack.c.h.b16 %v167
    %v765 = vunpack.c.l.b16 %v168
    %v766 = vunpack.c.h.b16 %v168
    %v767 = vunpack.c.l.b16 %v169
    %v768 = vunpack.c.h.b16 %v169
    %v769 = vunpack.c.l.b16 %v170
    %v770 = vunpack.c.h.b16 %v170
    %v771 = vunpack.c.l.b16 %v171
    %v772 = vunpack.c.h.b16 %v171
    %v773 = vunpack.c.l.b16 %v172
    %v774 = vunpack.c.h.b16 %v172
    %v775 = vunpack.c.l.b16 %v173
    %v776 = vunpack.c.h.b16 %v173
    %v777 = vunpack.c.l.b16 %v174
    %v778 = vunpack.c.h.b16 %v174
    %v779 = vunpack.c.l.b16 %v175
    %v780 = vunpack.c.h.b16 %v175
    %v781 = vunpack.c.l.b16 %v176
    %v782 = vunpack.c.h.b16 %v176
    %v783 = vunpack.c.l.b16 %v177
    %v784 = vunpack.c.h.b16 %v177
    %v785 = vunpack.c.l.b16 %v178
    %v786 = vunpack.c.h.b16 %v178
    %v787 = vunpack.c.l.b16 %v179
    %v788 = vunpack.c.h.b16 %v179
    %v789 = vunpack.c.l.b16 %v180
    %v790 = vunpack.c.h.b16 %v180
    %v791 = vunpack.c.l.b16 %v181
    %v792 = vunpack.c.h.b16 %v181
    %v793 = vunpack.c.l.b16 %v182
    %v794 = vunpack.c.h.b16 %v182
    %v795 = vunpack.c.l.b16 %v183
    %v796 = vunpack.c.h.b16 %v183
    %v797 = vunpack.c.l.b16 %v184
    %v798 = vunpack.c.h.b16 %v184
    %v799 = vunpack.c.l.b16 %v185
    %v800 = vunpack.c.h.b16 %v185
    %v801 = vunpack.c.l.b16 %v186
    %v802 = vunpack.c.h.b16 %v186
    %v803 = vunpack.c.l.b16 %v187
    %v804 = vunpack.c.h.b16 %v187
    %v805 = vunpack.c.l.b16 %v188
    %v806 = vunpack.c.h.b16 %v188
    %v807 = vunpack.c.l.b16 %v189
    %v808 = vunpack.c.h.b16 %v189
    %v809 = vunpack.c.l.b16 %v190
    %v810 = vunpack.c.h.b16 %v190
    %v811 = vunpack.c.l.b16 %v191
    %v812 = vunpack.c.h.b16 %v191
    %v813 = vunpack.c.l.b16 %v192
    %v814 = vunpack.c.h.b16 %v192
    %v815 = vunpack.c.l.b16 %v193
    %v816 = vunpack.c.h.b16 %v193
    %v817 = vunpack.c.l.b16 %v194
    %v818 = vunpack.c.h.b16 %v194
    %v819 = vunpack.c.l.b16 %v195
    %v820 = vunpack.c.h.b16 %v195
    %v821 = vunpack.c.l.b16 %v196
    %v822 = vunpack.c.h.b16 %v196
    %v823 = vunpack.c.l.b16 %v197
    %v824 = vunpack.c.h.b16 %v197
    %v825 = vunpack.c.l.b16 %v198
    %v826 = vunpack.c.h.b16 %v198
    %v827 = vunpack.c.l.b16 %v199
    %v828 = vunpack.c.h.b16 %v199
    %v829 = vunpack.c.l.b16 %v200
    %v830 = vunpack.c.h.b16 %v200
    %v831 = vunpack.c.l.b16 %v201
    %v832 = vunpack.c.h.b16 %v201
    %v833 = vunpack.c.l.b16 %v202
    %v834 = vunpack.c.h.b16 %v202
    %v835 = vunpack.c.l.b16 %v203
    %v836 = vunpack.c.h.b16 %v203
    %v837 = vunpack.c.l.b16 %v204
    %v838 = vunpack.c.h.b16 %v204
    %v839 = vunpack.c.l.b16 %v205
    %v840 = vunpack.c.h.b16 %v205
    %v841 = vunpack.c.l.b16 %v206
    %v842 = vunpack.c.h.b16 %v206
    %v843 = vunpack.c.l.b16 %v207
    %v844 = vunpack.c.h.b16 %v207
    %v845 = vunpack.c.l.b16 %v208
    %v846 = vunpack.c.h.b16 %v208
    %v847 = vunpack.c.l.b16 %v209
    %v848 = vunpack.c.h.b16 %v209
    %v849 = vunpack.c.l.b16 %v210
    %v850 = vunpack.c.h.b16 %v210
    %v851 = vunpack.c.l.b16 %v211
    %v852 = vunpack.c.h.b16 %v211
    %v853 = vunpack.c.l.b16 %v212
    %v854 = vunpack.c.h.b16 %v212
    %v855 = vunpack.c.l.b16 %v213
    %v856 = vunpack.c.h.b16 %v213
    %v857 = vunpack.c.l.b16 %v214
    %v858 = vunpack.c.h.b16 %v214
    %v859 = vunpack.c.l.b16 %v215
    %v860 = vunpack.c.h.b16 %v215
    %v861 = vunpack.c.l.b16 %v216
    %v862 = vunpack.c.h.b16 %v216
    %v863 = vunpack.c.l.b16 %v217
    %v864 = vunpack.c.h.b16 %v217
    %v865 = vunpack.c.l.b16 %v218
    %v866 = vunpack.c.h.b16 %v218
    %v867 = vunpack.c.l.b16 %v219
    %v868 = vunpack.c.h.b16 %v219
    %v869 = vunpack.c.l.b16 %v220
    %v870 = vunpack.c.h.b16 %v220
    %v871 = vunpack.c.l.b16 %v221
    %v872 = vunpack.c.h.b16 %v221
    %v873 = vunpack.c.l.b16 %v222
    %v874 = vunpack.c.h.b16 %v222
    %v875 = vunpack.c.l.b16 %v223
    %v876 = vunpack.c.h.b16 %v223
    %v877 = vunpack.c.l.b16 %v224
    %v878 = vunpack.c.h.b16 %v224
    %v879 = vunpack.c.l.b16 %v225
    %v880 = vunpack.c.h.b16 %v225
    %v881 = vunpack.c.l.b16 %v226
    %v882 = vunpack.c.h.b16 %v226
    %v883 = vunpack.c.l.b16 %v227
    %v884 = vunpack.c.h.b16 %v227
    %v885 = vunpack.c.l.b16 %v228
    %v886 = vunpack.c.h.b16 %v228
    %v887 = vunpack.c.l.b16 %v229
    %v888 = vunpack.c.h.b16 %v229
    %v889 = vunpack.c.l.b16 %v230
    %v890 = vunpack.c.h.b16 %v230
    %v891 = vunpack.c.l.b16 %v231
    %v892 = vunpack.c.h.b16 %v231
    %v893 = vunpack.c.l.b16 %v232
    %v894 = vunpack.c.h.b16 %v232
    %v895 = vunpack.c.l.b16 %v233
    %v896 = vunpack.c.h.b16 %v233
    %v897 = vunpack.c.l.b16 %v234
    %v898 = vunpack.c.h.b16 %v234
    %v899 = vunpack.c.l.b16 %v235
    %v900 = vunpack.c.h.b16 %v235
    %v901 = vunpack.c.l.b16 %v236
    %v902 = vunpack.c.h.b16 %v236
    %v903 = vunpack.c.l.b16 %v237
    %v904 = vunpack.c.h.b16 %v237
    %v905 = vunpack.c.l.b16 %v238
    %v906 = vunpack.c.h.b16 %v238
    %v907 = vunpack.c.l.b16 %v239
    %v908 = vunpack.c.h.b16 %v239
    %v909 = vunpack.c.l.b16 %v240
    %v910 = vunpack.c.h.b16 %v240
    %v911 = vunpack.c.l.b16 %v241
    %v912 = vunpack.c.h.b16 %v241
    %v913 = vunpack.c.l.b16 %v242
    %v914 = vunpack.c.h.b16 %v242
    %v915 = vunpack.c.l.b16 %v243
    %v916 = vunpack.c.h.b16 %v243
    %v917 = vunpack.c.l.b16 %v244
    %v918 = vunpack.c.h.b16 %v244
    %v919 = vunpack.c.l.b16 %v245
    %v920 = vunpack.c.h.b16 %v245
    %v921 = vunpack.c.l.b16 %v246
    %v922 = vunpack.c.h.b16 %v246
    %v923 = vunpack.c.l.b16 %v247
    %v924 = vunpack.c.h.b16 %v247
    %v925 = vunpack.c.l.b16 %v248
    %v926 = vunpack.c.h.b16 %v248
    %v927 = vunpack.c.l.b16 %v249
    %v928 = vunpack.c.h.b16 %v249
    %v929 = vunpack.c.l.b16 %v250
    %v930 = vunpack.c.h.b16 %v250
    %v931 = vunpack.c.l.b16 %v251
    %v932 = vunpack.c.h.b16 %v251
    %v933 = vunpack.c.l.b16 %v252
    %v934 = vunpack.c.h.b16 %v252
    %v935 = vunpack.c.l.b16 %v253
    %v936 = vunpack.c.h.b16 %v253
    %v937 = vunpack.c.l.b16 %v254
    %v938 = vunpack.c.h.b16 %v254
    %v939 = vunpack.c.l.b16 %v255
    %v940 = vunpack.c.h.b16 %v255
    %v941 = vunpack.c.l.b16 %v256
    %v942 = vunpack.c.h.b16 %v256
    %v943 = vunpack.c.l.b16 %v257
    %v944 = vunpack.c.h.b16 %v257
    %v945 = vunpack.c.l.b16 %v258
    %v946 = vunpack.c.h.b16 %v258
    %v947 = vunpack.c.l.b16 %v259
    %v948 = vunpack.c.h.b16 %v259
    %v949 = vunpack.c.l.b16 %v260
    %v950 = vunpack.c.h.b16 %v260
    %v951 = vunpack.c.l.b16 %v261
    %v952 = vunpack.c.h.b16 %v261
    %v953 = vunpack.c.l.b16 %v262
    %v954 = vunpack.c.h.b16 %v262
    %v955 = vunpack.c.l.b16 %v263
    %v956 = vunpack.c.h.b16 %v263
    %v957 = vunpack.c.l.b16 %v264
    %v958 = vunpack.c.h.b16 %v264
    %v959 = vunpack.c.l.b16 %v265
    %v960 = vunpack.c.h.b16 %v265
    %v961 = vunpack.c.l.b16 %v266
    %v962 = vunpack.c.h.b16 %v266
    %v963 = vunpack.c.l.b16 %v267
    %v964 = vunpack.c.h.b16 %v267
    %v965 = vunpack.c.l.b16 %v268
    %v966 = vunpack.c.h.b16 %v268
    %v967 = vunpack.c.l.b16 %v269
    %v968 = vunpack.c.h.b16 %v269
    %v969 = vunpack.c.l.b16 %v270
    %v970 = vunpack.c.h.b16 %v270
    %v971 = vunpack.c.l.b16 %v271
    %v972 = vunpack.c.h.b16 %v271
    %v973 = vunpack.c.l.b16 %v272
    %v974 = vunpack.c.h.b16 %v272
    %v975 = vunpack.c.l.b16 %v273
    %v976 = vunpack.c.h.b16 %v273
    %v977 = vunpack.c.l.b16 %v274
    %v978 = vunpack.c.h.b16 %v274
    %v979 = vunpack.c.l.b16 %v275
    %v980 = vunpack.c.h.b16 %v275
    %v981 = vunpack.c.l.b16 %v276
    %v982 = vunpack.c.h.b16 %v276
    %v983 = vunpack.c.l.b16 %v277
    %v984 = vunpack.c.h.b16 %v277
    %v985 = vunpack.c.l.b16 %v278
    %v986 = vunpack.c.h.b16 %v278
    %v987 = vunpack.c.l.b16 %v279
    %v988 = vunpack.c.h.b16 %v279
    %v989 = vunpack.c.l.b16 %v280
    %v990 = vunpack.c.h.b16 %v280
    %v991 = vunpack.c.l.b16 %v281
    %v992 = vunpack.c.h.b16 %v281
    %v993 = vunpack.c.l.b16 %v282
    %v994 = vunpack.c.h.b16 %v282
    %v995 = vunpack.c.l.b16 %v283
    %v996 = vunpack.c.h.b16 %v283
    %v997 = vunpack.c.l.b16 %v284
    %v998 = vunpack.c.h.b16 %v284
    %v999 = vunpack.c.l.b16 %v285
    %v1000 = vunpack.c.h.b16 %v285
    %v1001 = vunpack.c.l.b16 %v286
    %v1002 = vunpack.c.h.b16 %v286
    %v1003 = vunpack.c.l.b16 %v287
    %v1004 = vunpack.c.h.b16 %v287
    %v1005 = vunpack.c.l.b16 %v288
    %v1006 = vunpack.c.h.b16 %v288
    %v1007 = vunpack.c.l.b16 %v289
    %v1008 = vunpack.c.h.b16 %v289
    %v1009 = vunpack.c.l.b16 %v290
    %v1010 = vunpack.c.h.b16 %v290
    %v1011 = vunpack.c.l.b16 %v291
    %v1012 = vunpack.c.h.b16 %v291
    %v1013 = vunpack.c.l.b16 %v292
    %v1014 = vunpack.c.h.b16 %v292
    %v1015 = vunpack.c.l.b16 %v293
    %v1016 = vunpack.c.h.b16 %v293
    %v1017 = vunpack.c.l.b16 %v294
    %v1018 = vunpack.c.h.b16 %v294
    %v1019 = vunpack.c.l.b16 %v295
    %v1020 = vunpack.c.h.b16 %v295
    %v1021 = vunpack.c.l.b16 %v296
    %v1022 = vunpack.c.h.b16 %v296
    %v1023 = vunpack.c.l.b16 %v297
    %v1024 = vunpack.c.h.b16 %v297
    %v1025 = vunpack.c.l.b16 %v298
    %v1026 = vunpack.c.h.b16 %v298
    %v1027 = vunpack.c.l.b16 %v299
    %v1028 = vunpack.c.h.b16 %v299
    %v1029 = vunpack.c.l.b16 %v300
    %v1030 = vunpack.c.h.b16 %v300
    %v1031 = vunpack.c.l.b16 %v301
    %v1032 = vunpack.c.h.b16 %v301
    %v1033 = vunpack.c.l.b16 %v302
    %v1034 = vunpack.c.h.b16 %v302
    %v1035 = vunpack.c.l.b16 %v303
    %v1036 = vunpack.c.h.b16 %v303
    %v1037 = vunpack.c.l.b16 %v304
    %v1038 = vunpack.c.h.b16 %v304
    %v1039 = vunpack.c.l.b16 %v305
    %v1040 = vunpack.c.h.b16 %v305
    %v1041 = vunpack.c.l.b16 %v306
    %v1042 = vunpack.c.h.b16 %v306
    %v1043 = vunpack.c.l.b16 %v307
    %v1044 = vunpack.c.h.b16 %v307
    %v1045 = vunpack.c.l.b16 %v308
    %v1046 = vunpack.c.h.b16 %v308
    %v1047 = vunpack.c.l.b16 %v309
    %v1048 = vunpack.c.h.b16 %v309
    %v1049 = vunpack.c.l.b16 %v310
    %v1050 = vunpack.c.h.b16 %v310
    %v1051 = vunpack.c.l.b16 %v311
    %v1052 = vunpack.c.h.b16 %v311
    %v1053 = vunpack.c.l.b16 %v312
    %v1054 = vunpack.c.h.b16 %v312
    %v1055 = vunpack.c.l.b16 %v313
    %v1056 = vunpack.c.h.b16 %v313
    %v1057 = vunpack.c.l.b16 %v314
    %v1058 = vunpack.c.h.b16 %v314
    %v1059 = vunpack.c.l.b16 %v315
    %v1060 = vunpack.c.h.b16 %v315
    %v1061 = vunpack.c.l.b16 %v316
    %v1062 = vunpack.c.h.b16 %v316
    %v1063 = vunpack.c.l.b16 %v317
    %v1064 = vunpack.c.h.b16 %v317
    %v1065 = vunpack.c.l.b16 %v318
    %v1066 = vunpack.c.h.b16 %v318
    %v1067 = vunpack.c.l.b16 %v319
    %v1068 = vunpack.c.h.b16 %v319
    %v1069 = vunpack.c.l.b16 %v320
    %v1070 = vunpack.c.h.b16 %v320
    %v1071 = vunpack.c.l.b16 %v321
    %v1072 = vunpack.c.h.b16 %v321
    %v1073 = vunpack.c.l.b16 %v322
    %v1074 = vunpack.c.h.b16 %v322
    %v1075 = vunpack.c.l.b16 %v323
    %v1076 = vunpack.c.h.b16 %v323
    %v1077 = vunpack.c.l.b16 %v324
    %v1078 = vunpack.c.h.b16 %v324
    %v1079 = vunpack.c.l.b16 %v325
    %v1080 = vunpack.c.h.b16 %v325
    %v1081 = vunpack.c.l.b16 %v326
    %v1082 = vunpack.c.h.b16 %v326
    %v1083 = vunpack.c.l.b16 %v327
    %v1084 = vunpack.c.h.b16 %v327
    %v1085 = vunpack.c.l.b16 %v328
    %v1086 = vunpack.c.h.b16 %v328
    %v1087 = vunpack.c.l.b16 %v329
    %v1088 = vunpack.c.h.b16 %v329
    %v1089 = vunpack.c.l.b16 %v330
    %v1090 = vunpack.c.h.b16 %v330
    %v1091 = vunpack.c.l.b16 %v331
    %v1092 = vunpack.c.h.b16 %v331
    %v1093 = vunpack.c.l.b16 %v332
    %v1094 = vunpack.c.h.b16 %v332
    %v1095 = vunpack.c.l.b16 %v333
    %v1096 = vunpack.c.h.b16 %v333
    %v1097 = vunpack.c.l.b16 %v334
    %v1098 = vunpack.c.h.b16 %v334
    %v1099 = vunpack.c.l.b16 %v335
    %v1100 = vunpack.c.h.b16 %v335
    %v1101 = vunpack.c.l.b16 %v336
    %v1102 = vunpack.c.h.b16 %v336
    %v1103 = vunpack.c.l.b16 %v337
    %v1104 = vunpack.c.h.b16 %v337
    %v1105 = vunpack.c.l.b16 %v338
    %v1106 = vunpack.c.h.b16 %v338
    %v1107 = vunpack.c.l.b16 %v339
    %v1108 = vunpack.c.h.b16 %v339
    %v1109 = vunpack.c.l.b16 %v340
    %v1110 = vunpack.c.h.b16 %v340
    %v1111 = vunpack.c.l.b16 %v341
    %v1112 = vunpack.c.h.b16 %v341
    %v1113 = vunpack.c.l.b16 %v342
    %v1114 = vunpack.c.h.b16 %v342
    %v1115 = vunpack.c.l.b16 %v343
    %v1116 = vunpack.c.h.b16 %v343
    %v1117 = vunpack.c.l.b16 %v344
    %v1118 = vunpack.c.h.b16 %v344
    %v1119 = vunpack.c.l.b16 %v345
    %v1120 = vunpack.c.h.b16 %v345
    %v1121 = vunpack.c.l.b16 %v346
    %v1122 = vunpack.c.h.b16 %v346
    %v1123 = vunpack.c.l.b16 %v347
    %v1124 = vunpack.c.h.b16 %v347
    %v1125 = vunpack.c.l.b16 %v348
    %v1126 = vunpack.c.h.b16 %v348
    %v1127 = vunpack.c.l.b16 %v349
    %v1128 = vunpack.c.h.b16 %v349
    %v1129 = vunpack.c.l.b16 %v350
    %v1130 = vunpack.c.h.b16 %v350
    %v1131 = vunpack.c.l.b16 %v351
    %v1132 = vunpack.c.h.b16 %v351
    %v1133 = vunpack.c.l.b16 %v352
    %v1134 = vunpack.c.h.b16 %v352
    %v1135 = vunpack.c.l.b16 %v353
    %v1136 = vunpack.c.h.b16 %v353
    %v1137 = vunpack.c.l.b16 %v354
    %v1138 = vunpack.c.h.b16 %v354
    %v1139 = vunpack.c.l.b16 %v355
    %v1140 = vunpack.c.h.b16 %v355
    %v1141 = vunpack.c.l.b16 %v356
    %v1142 = vunpack.c.h.b16 %v356
    %v1143 = vunpack.c.l.b16 %v357
    %v1144 = vunpack.c.h.b16 %v357
    %v1145 = vunpack.c.l.b16 %v358
    %v1146 = vunpack.c.h.b16 %v358
    %v1147 = vunpack.c.l.b16 %v359
    %v1148 = vunpack.c.h.b16 %v359
    %v1149 = vunpack.c.l.b16 %v360
    %v1150 = vunpack.c.h.b16 %v360
    %v1151 = vunpack.c.l.b16 %v361
    %v1152 = vunpack.c.h.b16 %v361
    %v1153 = vunpack.c.l.b16 %v362
    %v1154 = vunpack.c.h.b16 %v362
    %v1155 = vunpack.c.l.b16 %v363
    %v1156 = vunpack.c.h.b16 %v363
    %v1157 = vunpack.c.l.b16 %v364
    %v1158 = vunpack.c.h.b16 %v364
    %v1159 = vunpack.c.l.b16 %v365
    %v1160 = vunpack.c.h.b16 %v365
    %v1161 = vunpack.c.l.b16 %v366
    %v1162 = vunpack.c.h.b16 %v366
    %v1163 = vunpack.c.l.b16 %v367
    %v1164 = vunpack.c.h.b16 %v367
    %v1165 = vunpack.c.l.b16 %v368
    %v1166 = vunpack.c.h.b16 %v368
    %v1167 = vunpack.c.l.b16 %v369
    %v1168 = vunpack.c.h.b16 %v369
    %v1169 = vunpack.c.l.b16 %v370
    %v1170 = vunpack.c.h.b16 %v370
    %v1171 = vunpack.c.l.b16 %v371
    %v1172 = vunpack.c.h.b16 %v371
    %v1173 = vunpack.c.l.b16 %v372
    %v1174 = vunpack.c.h.b16 %v372
    %v1175 = vunpack.c.l.b16 %v373
    %v1176 = vunpack.c.h.b16 %v373
    %v1177 = vunpack.c.l.b16 %v374
    %v1178 = vunpack.c.h.b16 %v374
    %v1179 = vunpack.c.l.b16 %v375
    %v1180 = vunpack.c.h.b16 %v375
    %v1181 = vunpack.c.l.b16 %v376
    %v1182 = vunpack.c.h.b16 %v376
    %v1183 = vunpack.c.l.b16 %v377
    %v1184 = vunpack.c.h.b16 %v377
    %v1185 = vunpack.c.l.b16 %v378
    %v1186 = vunpack.c.h.b16 %v378
    %v1187 = vunpack.c.l.b16 %v379
    %v1188 = vunpack.c.h.b16 %v379
    %v1189 = vunpack.c.l.b16 %v380
    %v1190 = vunpack.c.h.b16 %v380
    %v1191 = vpack.c.b16 %v687, %v679
    %v1192 = vpack.c.b16 %v688, %v680
    %v1193 = vpack.c.b16 %v689, %v681
    %v1194 = vpack.c.b16 %v690, %v682
    %v1195 = vpack.c.b16 %v691, %v683
    %v1196 = vpack.c.b16 %v692, %v684
    %v1197 = vpack.c.b16 %v693, %v685
    %v1198 = vpack.c.b16 %v694, %v686
    %v1199 = vpack.c.b16 %v703, %v695
    %v1200 = vpack.c.b16 %v704, %v696
    %v1201 = vpack.c.b16 %v705, %v697
    %v1202 = vpack.c.b16 %v706, %v698
    %v1203 = vpack.c.b16 %v707, %v699
    %v1204 = vpack.c.b16 %v708, %v700
    %v1205 = vpack.c.b16 %v709, %v701
    %v1206 = vpack.c.b16 %v710, %v702
    %v1207 = vpack.c.b16 %v719, %v711
    %v1208 = vpack.c.b16 %v720, %v712
    %v1209 = vpack.c.b16 %v721, %v713
    %v1210 = vpack.c.b16 %v722, %v714
    %v1211 = vpack.c.b16 %v723, %v715
    %v1212 = vpack.c.b16 %v724, %v716
    %v1213 = vpack.c.b16 %v725, %v717
    %v1214 = vpack.c.b16 %v726, %v718
    %v1215 = vpack.c.b16 %v735, %v727
    %v1216 = vpack.c.b16 %v736, %v728
    %v1217 = vpack.c.b16 %v737, %v729
    %v1218 = vpack.c.b16 %v738, %v730
    %v1219 = vpack.c.b16 %v739, %v731
    %v1220 = vpack.c.b16 %v740, %v732
    %v1221 = vpack.c.b16 %v741, %v733
    %v1222 = vpack.c.b16 %v742, %v734
    %v1223 = vpack.c.b16 %v751, %v743
    %v1224 = vpack.c.b16 %v752, %v744
    %v1225 = vpack.c.b16 %v753, %v745
    %v1226 = vpack.c.b16 %v754, %v746
    %v1227 = vpack.c.b16 %v755, %v747
    %v1228 = vpack.c.b16 %v756, %v748
    %v1229 = vpack.c.b16 %v757, %v749
    %v1230 = vpack.c.b16 %v758, %v750
    %v1231 = vpack.c.b16 %v767, %v759
    %v1232 = vpack.c.b16 %v768, %v760
    %v1233 = vpack.c.b16 %v769, %v761
    %v1234 = vpack.c.b16 %v770, %v762
    %v1235 = vpack.c.b16 %v771, %v763
    %v1236 = vpack.c.b16 %v772, %v764
    %v1237 = vpack.c.b16 %v773, %v765
    %v1238 = vpack.c.b16 %v774, %v766
    %v1239 = vpack.c.b16 %v783, %v775
    %v1240 = vpack.c.b16 %v784, %v776
    %v1241 = vpack.c.b16 %v785, %v777
    %v1242 = vpack.c.b16 %v786, %v778
    %v1243 = vpack.c.b16 %v787, %v779
    %v1244 = vpack.c.b16 %v788, %v780
    %v1245 = vpack.c.b16 %v789, %v781
    %v1246 = vpack.c.b16 %v790, %v782
    %v1247 = vpack.c.b16 %v799, %v791
    %v1248 = vpack.c.b16 %v800, %v792
    %v1249 = vpack.c.b16 %v801, %v793
    %v1250 = vpack.c.b16 %v802, %v794
    %v1251 = vpack.c.b16 %v803, %v795
    %v1252 = vpack.c.b16 %v804, %v796
    %v1253 = vpack.c.b16 %v805, %v797
    %v1254 = vpack.c.b16 %v806, %v798
    %v1255 = vpack.c.b16 %v815, %v807
    %v1256 = vpack.c.b16 %v816, %v808
    %v1257 = vpack.c.b16 %v817, %v809
    %v1258 = vpack.c.b16 %v818, %v810
    %v1259 = vpack.c.b16 %v819, %v811
    %v1260 = vpack.c.b16 %v820, %v812
    %v1261 = vpack.c.b16 %v821, %v813
    %v1262 = vpack.c.b16 %v822, %v814
    %v1263 = vpack.c.b16 %v831, %v823
    %v1264 = vpack.c.b16 %v832, %v824
    %v1265 = vpack.c.b16 %v833, %v825
    %v1266 = vpack.c.b16 %v834, %v826
    %v1267 = vpack.c.b16 %v835, %v827
    %v1268 = vpack.c.b16 %v836, %v828
    %v1269 = vpack.c.b16 %v837, %v829
    %v1270 = vpack.c.b16 %v838, %v830
    %v1271 = vpack.c.b16 %v847, %v839
    %v1272 = vpack.c.b16 %v848, %v840
    %v1273 = vpack.c.b16 %v849, %v841
    %v1274 = vpack.c.b16 %v850, %v842
    %v1275 = vpack.c.b16 %v851, %v843
    %v1276 = vpack.c.b16 %v852, %v844
    %v1277 = vpack.c.b16 %v853, %v845
    %v1278 = vpack.c.b16 %v854, %v846
    %v1279 = vpack.c.b16 %v863, %v855
    %v1280 = vpack.c.b16 %v864, %v856
    %v1281 = vpack.c.b16 %v865, %v857
    %v1282 = vpack.c.b16 %v866, %v858
    %v1283 = vpack.c.b16 %v867, %v859
    %v1284 = vpack.c.b16 %v868, %v860
    %v1285 = vpack.c.b16 %v869, %v861
    %v1286 = vpack.c.b16 %v870, %v862
    %v1287 = vpack.c.b16 %v879, %v871
    %v1288 = vpack.c.b16 %v880, %v872
    %v1289 = vpack.c.b16 %v881, %v873
    %v1290 = vpack.c.b16 %v882, %v874
    %v1291 = vpack.c.b16 %v883, %v875
    %v1292 = vpack.c.b16 %v884, %v876
    %v1293 = vpack.c.b16 %v885, %v877
    %v1294 = vpack.c.b16 %v886, %v878
    %v1295 = vpack.c.b16 %v895, %v887
    %v1296 = vpack.c.b16 %v896, %v888
    %v1297 = vpack.c.b16 %v897, %v889
    %v1298 = vpack.c.b16 %v898, %v890
    %v1299 = vpack.c.b16 %v899, %v891
    %v1300 = vpack.c.b16 %v900, %v892
    %v1301 = vpack.c.b16 %v901, %v893
    %v1302 = vpack.c.b16 %v902, %v894
    %v1303 = vpack.c.b16 %v911, %v903
    %v1304 = vpack.c.b16 %v912, %v904
    %v1305 = vpack.c.b16 %v913, %v905
    %v1306 = vpack.c.b16 %v914, %v906
    %v1307 = vpack.c.b16 %v915, %v907
    %v1308 = vpack.c.b16 %v916, %v908
    %v1309 = vpack.c.b16 %v917, %v909
    %v1310 = vpack.c.b16 %v918, %v910
    %v1311 = vpack.c.b16 %v927, %v919
    %v1312 = vpack.c.b16 %v928, %v920
    %v1313 = vpack.c.b16 %v929, %v921
    %v1314 = vpack.c.b16 %v930, %v922
    %v1315 = vpack.c.b16 %v931, %v923
    %v1316 = vpack.c.b16 %v932, %v924
    %v1317 = vpack.c.b16 %v933, %v925
    %v1318 = vpack.c.b16 %v934, %v926
    %v1319 = vpack.c.b16 %v943, %v935
    %v1320 = vpack.c.b16 %v944, %v936
    %v1321 = vpack.c.b16 %v945, %v937
    %v1322 = vpack.c.b16 %v946, %v938
    %v1323 = vpack.c.b16 %v947, %v939
    %v1324 = vpack.c.b16 %v948, %v940
    %v1325 = vpack.c.b16 %v949, %v941
    %v1326 = vpack.c.b16 %v950, %v942
    %v1327 = vpack.c.b16 %v959, %v951
    %v1328 = vpack.c.b16 %v960, %v952
    %v1329 = vpack.c.b16 %v961, %v953
    %v1330 = vpack.c.b16 %v962, %v954
    %v1331 = vpack.c.b16 %v963, %v955
    %v1332 = vpack.c.b16 %v964, %v956
    %v1333 = vpack.c.b16 %v965, %v957
    %v1334 = vpack.c.b16 %v966, %v958
    %v1335 = vpack.c.b16 %v975, %v967
    %v1336 = vpack.c.b16 %v976, %v968
    %v1337 = vpack.c.b16 %v977, %v969
    %v1338 = vpack.c.b16 %v978, %v970
    %v1339 = vpack.c.b16 %v979, %v971
    %v1340 = vpack.c.b16 %v980, %v972
    %v1341 = vpack.c.b16 %v981, %v973
    %v1342 = vpack.c.b16 %v982, %v974
    %v1343 = vpack.c.b16 %v991, %v983
    %v1344 = vpack.c.b16 %v992, %v984
    %v1345 = vpack.c.b16 %v993, %v985
    %v1346 = vpack.c.b16 %v994, %v986
    %v1347 = vpack.c.b16 %v995, %v987
    %v1348 = vpack.c.b16 %v996, %v988
    %v1349 = vpack.c.b16 %v997, %v989
    %v1350 = vpack.c.b16 %v998, %v990
    %v1351 = vpack.c.b16 %v1007, %v999
    %v1352 = vpack.c.b16 %v1008, %v1000
    %v1353 = vpack.c.b16 %v1009, %v1001
    %v1354 = vpack.c.b16 %v1010, %v1002
    %v1355 = vpack.c.b16 %v1011, %v1003
    %v1356 = vpack.c.b16 %v1012, %v1004
    %v1357 = vpack.c.b16 %v1013, %v1005
    %v1358 = vpack.c.b16 %v1014, %v1006
    %v1359 = vpack.c.b16 %v1023, %v1015
    %v1360 = vpack.c.b16 %v1024, %v1016
    %v1361 = vpack.c.b16 %v1025, %v1017
    %v1362 = vpack.c.b16 %v1026, %v1018
    %v1363 = vpack.c.b16 %v1027, %v1019
    %v1364 = vpack.c.b16 %v1028, %v1020
    %v1365 = vpack.c.b16 %v1029, %v1021
    %v1366 = vpack.c.b16 %v1030, %v1022
    %v1367 = vpack.c.b16 %v1039, %v1031
    %v1368 = vpack.c.b16 %v1040, %v1032
    %v1369 = vpack.c.b16 %v1041, %v1033
    %v1370 = vpack.c.b16 %v1042, %v1034
    %v1371 = vpack.c.b16 %v1043, %v1035
    %v1372 = vpack.c.b16 %v1044, %v1036
    %v1373 = vpack.c.b16 %v1045, %v1037
    %v1374 = vpack.c.b16 %v1046, %v1038
    %v1375 = vpack.c.b16 %v1055, %v1047
    %v1376 = vpack.c.b16 %v1056, %v1048
    %v1377 = vpack.c.b16 %v1057, %v1049
    %v1378 = vpack.c.b16 %v1058, %v1050
    %v1379 = vpack.c.b16 %v1059, %v1051
    %v1380 = vpack.c.b16 %v1060, %v1052
    %v1381 = vpack.c.b16 %v1061, %v1053
    %v1382 = vpack.c.b16 %v1062, %v1054
    %v1383 = vpack.c.b16 %v1071, %v1063
    %v1384 = vpack.c.b16 %v1072, %v1064
    %v1385 = vpack.c.b16 %v1073, %v1065
    %v1386 = vpack.c.b16 %v1074, %v1066
    %v1387 = vpack.c.b16 %v1075, %v1067
    %v1388 = vpack.c.b16 %v1076, %v1068
    %v1389 = vpack.c.b16 %v1077, %v1069
    %v1390 = vpack.c.b16 %v1078, %v1070
    %v1391 = vpack.c.b16 %v1087, %v1079
    %v1392 = vpack.c.b16 %v1088, %v1080
    %v1393 = vpack.c.b16 %v1089, %v1081
    %v1394 = vpack.c.b16 %v1090, %v1082
    %v1395 = vpack.c.b16 %v1091, %v1083
    %v1396 = vpack.c.b16 %v1092, %v1084
    %v1397 = vpack.c.b16 %v1093, %v1085
    %v1398 = vpack.c.b16 %v1094, %v1086
    %v1399 = vpack.c.b16 %v1103, %v1095
    %v1400 = vpack.c.b16 %v1104, %v1096
    %v1401 = vpack.c.b16 %v1105, %v1097
    %v1402 = vpack.c.b16 %v1106, %v1098
    %v1403 = vpack.c.b16 %v1107, %v1099
    %v1404 = vpack.c.b16 %v1108, %v1100
    %v1405 = vpack.c.b16 %v1109, %v1101
    %v1406 = vpack.c.b16 %v1110, %v1102
    %v1407 = vpack.c.b16 %v1119, %v1111
    %v1408 = vpack.c.b16 %v1120, %v1112
    %v1409 = vpack.c.b16 %v1121, %v1113
    %v1410 = vpack.c.b16 %v1122, %v1114
    %v1411 = vpack.c.b16 %v1123, %v1115
    %v1412 = vpack.c.b16 %v1124, %v1116
    %v1413 = vpack.c.b16 %v1125, %v1117
    %v1414 = vpack.c.b16 %v1126, %v1118
    %v1415 = vpack.c.b16 %v1135, %v1127
    %v1416 = vpack.c.b16 %v1136, %v1128
    %v1417 = vpack.c.b16 %v1137, %v1129
    %v1418 = vpack.c.b16 %v1138, %v1130
    %v1419 = vpack.c.b16 %v1139, %v1131
    %v1420 = vpack.c.b16 %v1140, %v1132
    %v1421 = vpack.c.b16 %v1141, %v1133
    %v1422 = vpack.c.b16 %v1142, %v1134
    %v1423 = vpack.c.b16 %v1151, %v1143
    %v1424 = vpack.c.b16 %v1152, %v1144
    %v1425 = vpack.c.b16 %v1153, %v1145
    %v1426 = vpack.c.b16 %v1154, %v1146
    %v1427 = vpack.c.b16 %v1155, %v1147
    %v1428 = vpack.c.b16 %v1156, %v1148
    %v1429 = vpack.c.b16 %v1157, %v1149
    %v1430 = vpack.c.b16 %v1158, %v1150
    %v1431 = vpack.c.b16 %v1167, %v1159
    %v1432 = vpack.c.b16 %v1168, %v1160
    %v1433 = vpack.c.b16 %v1169, %v1161
    %v1434 = vpack.c.b16 %v1170, %v1162
    %v1435 = vpack.c.b16 %v1171, %v1163
    %v1436 = vpack.c.b16 %v1172, %v1164
    %v1437 = vpack.c.b16 %v1173, %v1165
    %v1438 = vpack.c.b16 %v1174, %v1166
    %v1439 = vpack.c.b16 %v1183, %v1175
    %v1440 = vpack.c.b16 %v1184, %v1176
    %v1441 = vpack.c.b16 %v1185, %v1177
    %v1442 = vpack.c.b16 %v1186, %v1178
    %v1443 = vpack.c.b16 %v1187, %v1179
    %v1444 = vpack.c.b16 %v1188, %v1180
    %v1445 = vpack.c.b16 %v1189, %v1181
    %v1446 = vpack.c.b16 %v1190, %v1182
    %1703 = vmatprep.subr.bf16.mxu0 %v1192
    %1704 = vmatpush1.bf16.msra.mxu0 %v1191
    %1705 = vmatprep.subr.bf16.mxu0 %v1200
    %1706 = vmatpush1.bf16.msra.mxu0 %v1199
    %1707 = vmatprep.subr.bf16.mxu0 %v1208
    %1708 = vmatpush1.bf16.msra.mxu0 %v1207
    %1709 = vmatprep.subr.bf16.mxu0 %v1216
    %1710 = vmatpush1.bf16.msra.mxu0 %v1215
    %1711 = vmatprep.subr.bf16.mxu0 %v1224
    %1712 = vmatpush1.bf16.msra.mxu0 %v1223
    %1713 = vmatprep.subr.bf16.mxu0 %v1232
    %1714 = vmatpush1.bf16.msra.mxu0 %v1231
    %1715 = vmatprep.subr.bf16.mxu0 %v1240
    %1716 = vmatpush1.bf16.msra.mxu0 %v1239
    %1717 = vmatprep.subr.bf16.mxu0 %v1248
    %1718 = vmatpush1.bf16.msra.mxu0 %v1247
    %1719 = vmatprep.subr.bf16.mxu0 %v1256
    %1720 = vmatpush1.bf16.msra.mxu0 %v1255
    %1721 = vmatprep.subr.bf16.mxu0 %v1264
    %1722 = vmatpush1.bf16.msra.mxu0 %v1263
    %1723 = vmatprep.subr.bf16.mxu0 %v1272
    %1724 = vmatpush1.bf16.msra.mxu0 %v1271
    %1725 = vmatprep.subr.bf16.mxu0 %v1280
    %1726 = vmatpush1.bf16.msra.mxu0 %v1279
    %1727 = vmatprep.subr.bf16.mxu0 %v1288
    %1728 = vmatpush1.bf16.msra.mxu0 %v1287
    %1729 = vmatprep.subr.bf16.mxu0 %v1296
    %1730 = vmatpush1.bf16.msra.mxu0 %v1295
    %1731 = vmatprep.subr.bf16.mxu0 %v1304
    %1732 = vmatpush1.bf16.msra.mxu0 %v1303
    %1733 = vmatprep.subr.bf16.mxu0 %v1312
    %1734 = vmatpush1.bf16.msra.mxu0 %v1311
    %1735 = vmatprep.mubr.bf16.mxu0 %v122
    %1736 = vmatmul.mubr.bf16.gmra.mrb[0].mxu0 %v121
    %v1737 = vpop.f32.mrb[0].mxu0
    %v1738 = vadd.f32 %v386, %v1737
    %v1739 = vpop.f32.mrb[0].mxu0
    %v1740 = vadd.f32 %v390, %v1739
    %v1741 = vpop.f32.mrb[0].mxu0
    %v1742 = vpop.f32.mrb[0].mxu0
    %1743 = vdwg.mxu0
    %1744 = vmatprep.subr.bf16.mxu0 %v1320
    %1745 = vmatpush1.bf16.msra.mxu0 %v1319
    %1746 = vmatprep.subr.bf16.mxu0 %v1328
    %1747 = vmatpush1.bf16.msra.mxu0 %v1327
    %1748 = vmatprep.subr.bf16.mxu0 %v1336
    %1749 = vmatpush1.bf16.msra.mxu0 %v1335
    %1750 = vmatprep.subr.bf16.mxu0 %v1344
    %1751 = vmatpush1.bf16.msra.mxu0 %v1343
    %1752 = vmatprep.subr.bf16.mxu0 %v1352
    %1753 = vmatpush1.bf16.msra.mxu0 %v1351
    %1754 = vmatprep.subr.bf16.mxu0 %v1360
    %1755 = vmatpush1.bf16.msra.mxu0 %v1359
    %1756 = vmatprep.subr.bf16.mxu0 %v1368
    %1757 = vmatpush1.bf16.msra.mxu0 %v1367
    %1758 = vmatprep.subr.bf16.mxu0 %v1376
    %1759 = vmatpush1.bf16.msra.mxu0 %v1375
    %1760 = vmatprep.subr.bf16.mxu0 %v1384
    %1761 = vmatpush1.bf16.msra.mxu0 %v1383
    %1762 = vmatprep.subr.bf16.mxu0 %v1392
    %1763 = vmatpush1.bf16.msra.mxu0 %v1391
    %1764 = vmatprep.subr.bf16.mxu0 %v1400
    %1765 = vmatpush1.bf16.msra.mxu0 %v1399
    %1766 = vmatprep.subr.bf16.mxu0 %v1408
    %1767 = vmatpush1.bf16.msra.mxu0 %v1407
    %1768 = vmatprep.subr.bf16.mxu0 %v1416
    %1769 = vmatpush1.bf16.msra.mxu0 %v1415
    %1770 = vmatprep.subr.bf16.mxu0 %v1424
    %1771 = vmatpush1.bf16.msra.mxu0 %v1423
    %1772 = vmatprep.subr.bf16.mxu0 %v1432
    %1773 = vmatpush1.bf16.msra.mxu0 %v1431
    %1774 = vmatprep.subr.bf16.mxu0 %v1440
    %1775 = vmatpush1.bf16.msra.mxu0 %v1439
    %1776 = vmatprep.mubr.bf16.mxu0 %v124
    %1777 = vmatmul.mubr.bf16.gmra.mrb[0].mxu0 %v123
    %v1778 = vpop.f32.mrb[0].mxu0
    %v1779 = vadd.f32 %v1738, %v1778
    %v1780 = vpop.f32.mrb[0].mxu0
    %v1781 = vadd.f32 %v1740, %v1780
    %v1782 = vpop.f32.mrb[0].mxu0
    %v1783 = vpop.f32.mrb[0].mxu0
    %1784 = vdwg.mxu0
    %1785 = vmatprep.subr.bf16.mxu0 %v1194
    %1786 = vmatpush1.bf16.msra.mxu0 %v1193
    %1787 = vmatprep.subr.bf16.mxu0 %v1202
    %1788 = vmatpush1.bf16.msra.mxu0 %v1201
    %1789 = vmatprep.subr.bf16.mxu0 %v1210
    %1790 = vmatpush1.bf16.msra.mxu0 %v1209
    %1791 = vmatprep.subr.bf16.mxu0 %v1218
    %1792 = vmatpush1.bf16.msra.mxu0 %v1217
    %1793 = vmatprep.subr.bf16.mxu0 %v1226
    %1794 = vmatpush1.bf16.msra.mxu0 %v1225
    %1795 = vmatprep.subr.bf16.mxu0 %v1234
    %1796 = vmatpush1.bf16.msra.mxu0 %v1233
    %1797 = vmatprep.subr.bf16.mxu0 %v1242
    %1798 = vmatpush1.bf16.msra.mxu0 %v1241
    %1799 = vmatprep.subr.bf16.mxu0 %v1250
    %1800 = vmatpush1.bf16.msra.mxu0 %v1249
    %1801 = vmatprep.subr.bf16.mxu0 %v1258
    %1802 = vmatpush1.bf16.msra.mxu0 %v1257
    %1803 = vmatprep.subr.bf16.mxu0 %v1266
    %1804 = vmatpush1.bf16.msra.mxu0 %v1265
    %1805 = vmatprep.subr.bf16.mxu0 %v1274
    %1806 = vmatpush1.bf16.msra.mxu0 %v1273
    %1807 = vmatprep.subr.bf16.mxu0 %v1282
    %1808 = vmatpush1.bf16.msra.mxu0 %v1281
    %1809 = vmatprep.subr.bf16.mxu0 %v1290
    %1810 = vmatpush1.bf16.msra.mxu0 %v1289
    %1811 = vmatprep.subr.bf16.mxu0 %v1298
    %1812 = vmatpush1.bf16.msra.mxu0 %v1297
    %1813 = vmatprep.subr.bf16.mxu0 %v1306
    %1814 = vmatpush1.bf16.msra.mxu0 %v1305
    %1815 = vmatprep.subr.bf16.mxu0 %v1314
    %1816 = vmatpush1.bf16.msra.mxu0 %v1313
    %1817 = vmatprep.mubr.bf16.mxu0 %v122
    %1818 = vmatmul.mubr.bf16.gmra.mrb[0].mxu0 %v121
    %v1819 = vpop.f32.mrb[0].mxu0
    %v1820 = vadd.f32 %v394, %v1819
    %v1821 = vpop.f32.mrb[0].mxu0
    %v1822 = vadd.f32 %v398, %v1821
    %v1823 = vpop.f32.mrb[0].mxu0
    %v1824 = vpop.f32.mrb[0].mxu0
    %1825 = vdwg.mxu0
    %1826 = vmatprep.subr.bf16.mxu0 %v1322
    %1827 = vmatpush1.bf16.msra.mxu0 %v1321
    %1828 = vmatprep.subr.bf16.mxu0 %v1330
    %1829 = vmatpush1.bf16.msra.mxu0 %v1329
    %1830 = vmatprep.subr.bf16.mxu0 %v1338
    %1831 = vmatpush1.bf16.msra.mxu0 %v1337
    %1832 = vmatprep.subr.bf16.mxu0 %v1346
    %1833 = vmatpush1.bf16.msra.mxu0 %v1345
    %1834 = vmatprep.subr.bf16.mxu0 %v1354
    %1835 = vmatpush1.bf16.msra.mxu0 %v1353
    %1836 = vmatprep.subr.bf16.mxu0 %v1362
    %1837 = vmatpush1.bf16.msra.mxu0 %v1361
    %1838 = vmatprep.subr.bf16.mxu0 %v1370
    %1839 = vmatpush1.bf16.msra.mxu0 %v1369
    %1840 = vmatprep.subr.bf16.mxu0 %v1378
    %1841 = vmatpush1.bf16.msra.mxu0 %v1377
    %1842 = vmatprep.subr.bf16.mxu0 %v1386
    %1843 = vmatpush1.bf16.msra.mxu0 %v1385
    %1844 = vmatprep.subr.bf16.mxu0 %v1394
    %1845 = vmatpush1.bf16.msra.mxu0 %v1393
    %1846 = vmatprep.subr.bf16.mxu0 %v1402
    %1847 = vmatpush1.bf16.msra.mxu0 %v1401
    %1848 = vmatprep.subr.bf16.mxu0 %v1410
    %1849 = vmatpush1.bf16.msra.mxu0 %v1409
    %1850 = vmatprep.subr.bf16.mxu0 %v1418
    %1851 = vmatpush1.bf16.msra.mxu0 %v1417
    %1852 = vmatprep.subr.bf16.mxu0 %v1426
    %1853 = vmatpush1.bf16.msra.mxu0 %v1425
    %1854 = vmatprep.subr.bf16.mxu0 %v1434
    %1855 = vmatpush1.bf16.msra.mxu0 %v1433
    %1856 = vmatprep.subr.bf16.mxu0 %v1442
    %1857 = vmatpush1.bf16.msra.mxu0 %v1441
    %1858 = vmatprep.mubr.bf16.mxu0 %v124
    %1859 = vmatmul.mubr.bf16.gmra.mrb[0].mxu0 %v123
    %v1860 = vpop.f32.mrb[0].mxu0
    %v1861 = vadd.f32 %v1820, %v1860
    %v1862 = vpop.f32.mrb[0].mxu0
    %v1863 = vadd.f32 %v1822, %v1862
    %v1864 = vpop.f32.mrb[0].mxu0
    %v1865 = vpop.f32.mrb[0].mxu0
    %1866 = vdwg.mxu0
    %1867 = vmatprep.subr.bf16.mxu0 %v1196
    %1868 = vmatpush1.bf16.msra.mxu0 %v1195
    %1869 = vmatprep.subr.bf16.mxu0 %v1204
    %1870 = vmatpush1.bf16.msra.mxu0 %v1203
    %1871 = vmatprep.subr.bf16.mxu0 %v1212
    %1872 = vmatpush1.bf16.msra.mxu0 %v1211
    %1873 = vmatprep.subr.bf16.mxu0 %v1220
    %1874 = vmatpush1.bf16.msra.mxu0 %v1219
    %1875 = vmatprep.subr.bf16.mxu0 %v1228
    %1876 = vmatpush1.bf16.msra.mxu0 %v1227
    %1877 = vmatprep.subr.bf16.mxu0 %v1236
    %1878 = vmatpush1.bf16.msra.mxu0 %v1235
    %1879 = vmatprep.subr.bf16.mxu0 %v1244
    %1880 = vmatpush1.bf16.msra.mxu0 %v1243
    %1881 = vmatprep.subr.bf16.mxu0 %v1252
    %1882 = vmatpush1.bf16.msra.mxu0 %v1251
    %1883 = vmatprep.subr.bf16.mxu0 %v1260
    %1884 = vmatpush1.bf16.msra.mxu0 %v1259
    %1885 = vmatprep.subr.bf16.mxu0 %v1268
    %1886 = vmatpush1.bf16.msra.mxu0 %v1267
    %1887 = vmatprep.subr.bf16.mxu0 %v1276
    %1888 = vmatpush1.bf16.msra.mxu0 %v1275
    %1889 = vmatprep.subr.bf16.mxu0 %v1284
    %1890 = vmatpush1.bf16.msra.mxu0 %v1283
    %1891 = vmatprep.subr.bf16.mxu0 %v1292
    %1892 = vmatpush1.bf16.msra.mxu0 %v1291
    %1893 = vmatprep.subr.bf16.mxu0 %v1300
    %1894 = vmatpush1.bf16.msra.mxu0 %v1299
    %1895 = vmatprep.subr.bf16.mxu0 %v1308
    %1896 = vmatpush1.bf16.msra.mxu0 %v1307
    %1897 = vmatprep.subr.bf16.mxu0 %v1316
    %1898 = vmatpush1.bf16.msra.mxu0 %v1315
    %1899 = vmatprep.mubr.bf16.mxu0 %v122
    %1900 = vmatmul.mubr.bf16.gmra.mrb[0].mxu0 %v121
    %v1901 = vpop.f32.mrb[0].mxu0
    %v1902 = vadd.f32 %v402, %v1901
    %v1903 = vpop.f32.mrb[0].mxu0
    %v1904 = vadd.f32 %v406, %v1903
    %v1905 = vpop.f32.mrb[0].mxu0
    %v1906 = vpop.f32.mrb[0].mxu0
    %1907 = vdwg.mxu0
    %1908 = vmatprep.subr.bf16.mxu0 %v1324
    %1909 = vmatpush1.bf16.msra.mxu0 %v1323
    %1910 = vmatprep.subr.bf16.mxu0 %v1332
    %1911 = vmatpush1.bf16.msra.mxu0 %v1331
    %1912 = vmatprep.subr.bf16.mxu0 %v1340
    %1913 = vmatpush1.bf16.msra.mxu0 %v1339
    %1914 = vmatprep.subr.bf16.mxu0 %v1348
    %1915 = vmatpush1.bf16.msra.mxu0 %v1347
    %1916 = vmatprep.subr.bf16.mxu0 %v1356
    %1917 = vmatpush1.bf16.msra.mxu0 %v1355
    %1918 = vmatprep.subr.bf16.mxu0 %v1364
    %1919 = vmatpush1.bf16.msra.mxu0 %v1363
    %1920 = vmatprep.subr.bf16.mxu0 %v1372
    %1921 = vmatpush1.bf16.msra.mxu0 %v1371
    %1922 = vmatprep.subr.bf16.mxu0 %v1380
    %1923 = vmatpush1.bf16.msra.mxu0 %v1379
    %1924 = vmatprep.subr.bf16.mxu0 %v1388
    %1925 = vmatpush1.bf16.msra.mxu0 %v1387
    %1926 = vmatprep.subr.bf16.mxu0 %v1396
    %1927 = vmatpush1.bf16.msra.mxu0 %v1395
    %1928 = vmatprep.subr.bf16.mxu0 %v1404
    %1929 = vmatpush1.bf16.msra.mxu0 %v1403
    %1930 = vmatprep.subr.bf16.mxu0 %v1412
    %1931 = vmatpush1.bf16.msra.mxu0 %v1411
    %1932 = vmatprep.subr.bf16.mxu0 %v1420
    %1933 = vmatpush1.bf16.msra.mxu0 %v1419
    %1934 = vmatprep.subr.bf16.mxu0 %v1428
    %1935 = vmatpush1.bf16.msra.mxu0 %v1427
    %1936 = vmatprep.subr.bf16.mxu0 %v1436
    %1937 = vmatpush1.bf16.msra.mxu0 %v1435
    %1938 = vmatprep.subr.bf16.mxu0 %v1444
    %1939 = vmatpush1.bf16.msra.mxu0 %v1443
    %1940 = vmatprep.mubr.bf16.mxu0 %v124
    %1941 = vmatmul.mubr.bf16.gmra.mrb[0].mxu0 %v123
    %v1942 = vpop.f32.mrb[0].mxu0
    %v1943 = vadd.f32 %v1902, %v1942
    %v1944 = vpop.f32.mrb[0].mxu0
    %v1945 = vadd.f32 %v1904, %v1944
    %v1946 = vpop.f32.mrb[0].mxu0
    %v1947 = vpop.f32.mrb[0].mxu0
    %1948 = vdwg.mxu0
    %1949 = vmatprep.subr.bf16.mxu0 %v1198
    %1950 = vmatpush1.bf16.msra.mxu0 %v1197
    %1951 = vmatprep.subr.bf16.mxu0 %v1206
    %1952 = vmatpush1.bf16.msra.mxu0 %v1205
    %1953 = vmatprep.subr.bf16.mxu0 %v1214
    %1954 = vmatpush1.bf16.msra.mxu0 %v1213
    %1955 = vmatprep.subr.bf16.mxu0 %v1222
    %1956 = vmatpush1.bf16.msra.mxu0 %v1221
    %1957 = vmatprep.subr.bf16.mxu0 %v1230
    %1958 = vmatpush1.bf16.msra.mxu0 %v1229
    %1959 = vmatprep.subr.bf16.mxu0 %v1238
    %1960 = vmatpush1.bf16.msra.mxu0 %v1237
    %1961 = vmatprep.subr.bf16.mxu0 %v1246
    %1962 = vmatpush1.bf16.msra.mxu0 %v1245
    %1963 = vmatprep.subr.bf16.mxu0 %v1254
    %1964 = vmatpush1.bf16.msra.mxu0 %v1253
    %1965 = vmatprep.subr.bf16.mxu0 %v1262
    %1966 = vmatpush1.bf16.msra.mxu0 %v1261
    %1967 = vmatprep.subr.bf16.mxu0 %v1270
    %1968 = vmatpush1.bf16.msra.mxu0 %v1269
    %1969 = vmatprep.subr.bf16.mxu0 %v1278
    %1970 = vmatpush1.bf16.msra.mxu0 %v1277
    %1971 = vmatprep.subr.bf16.mxu0 %v1286
    %1972 = vmatpush1.bf16.msra.mxu0 %v1285
    %1973 = vmatprep.subr.bf16.mxu0 %v1294
    %1974 = vmatpush1.bf16.msra.mxu0 %v1293
    %1975 = vmatprep.subr.bf16.mxu0 %v1302
    %1976 = vmatpush1.bf16.msra.mxu0 %v1301
    %1977 = vmatprep.subr.bf16.mxu0 %v1310
    %1978 = vmatpush1.bf16.msra.mxu0 %v1309
    %1979 = vmatprep.subr.bf16.mxu0 %v1318
    %1980 = vmatpush1.bf16.msra.mxu0 %v1317
    %1981 = vmatprep.mubr.bf16.mxu0 %v122
    %1982 = vmatmul.mubr.bf16.gmra.mrb[0].mxu0 %v121
    %v1983 = vpop.f32.mrb[0].mxu0
    %v1984 = vadd.f32 %v410, %v1983
    %v1985 = vpop.f32.mrb[0].mxu0
    %v1986 = vadd.f32 %v414, %v1985
    %v1987 = vpop.f32.mrb[0].mxu0
    %v1988 = vpop.f32.mrb[0].mxu0
    %1989 = vdwg.mxu0
    %1990 = vmatprep.subr.bf16.mxu0 %v1326
    %1991 = vmatpush1.bf16.msra.mxu0 %v1325
    %1992 = vmatprep.subr.bf16.mxu0 %v1334
    %1993 = vmatpush1.bf16.msra.mxu0 %v1333
    %1994 = vmatprep.subr.bf16.mxu0 %v1342
    %1995 = vmatpush1.bf16.msra.mxu0 %v1341
    %1996 = vmatprep.subr.bf16.mxu0 %v1350
    %1997 = vmatpush1.bf16.msra.mxu0 %v1349
    %1998 = vmatprep.subr.bf16.mxu0 %v1358
    %1999 = vmatpush1.bf16.msra.mxu0 %v1357
    %2000 = vmatprep.subr.bf16.mxu0 %v1366
    %2001 = vmatpush1.bf16.msra.mxu0 %v1365
    %2002 = vmatprep.subr.bf16.mxu0 %v1374
    %2003 = vmatpush1.bf16.msra.mxu0 %v1373
    %2004 = vmatprep.subr.bf16.mxu0 %v1382
    %2005 = vmatpush1.bf16.msra.mxu0 %v1381
    %2006 = vmatprep.subr.bf16.mxu0 %v1390
    %2007 = vmatpush1.bf16.msra.mxu0 %v1389
    %2008 = vmatprep.subr.bf16.mxu0 %v1398
    %2009 = vmatpush1.bf16.msra.mxu0 %v1397
    %2010 = vmatprep.subr.bf16.mxu0 %v1406
    %2011 = vmatpush1.bf16.msra.mxu0 %v1405
    %2012 = vmatprep.subr.bf16.mxu0 %v1414
    %2013 = vmatpush1.bf16.msra.mxu0 %v1413
    %2014 = vmatprep.subr.bf16.mxu0 %v1422
    %2015 = vmatpush1.bf16.msra.mxu0 %v1421
    %2016 = vmatprep.subr.bf16.mxu0 %v1430
    %2017 = vmatpush1.bf16.msra.mxu0 %v1429
    %2018 = vmatprep.subr.bf16.mxu0 %v1438
    %2019 = vmatpush1.bf16.msra.mxu0 %v1437
    %2020 = vmatprep.subr.bf16.mxu0 %v1446
    %2021 = vmatpush1.bf16.msra.mxu0 %v1445
    %2022 = vmatprep.mubr.bf16.mxu0 %v124
    %2023 = vmatmul.mubr.bf16.gmra.mrb[0].mxu0 %v123
    %v2024 = vpop.f32.mrb[0].mxu0
    %v2025 = vadd.f32 %v1984, %v2024
    %v2026 = vpop.f32.mrb[0].mxu0
    %v2027 = vadd.f32 %v1986, %v2026
    %v2028 = vpop.f32.mrb[0].mxu0
    %v2029 = vpop.f32.mrb[0].mxu0
    %2030 = vdwg.mxu0
    %v2031 = vmax.f32 %v1779, 0.0
    %v2032 = vmax.f32 %v1781, 0.0
    %v2033 = vmax.f32 %v1861, 0.0
    %v2034 = vmax.f32 %v1863, 0.0
    %v2035 = vmax.f32 %v1943, 0.0
    %v2036 = vmax.f32 %v1945, 0.0
    %v2037 = vmax.f32 %v2025, 0.0
    %v2038 = vmax.f32 %v2027, 0.0
    %v2039 = vpack.c.bf16 %v2031, %v2031
    %v2040 = vpack.c.bf16 %v2032, %v2032
    %v2041 = vpack.c.bf16 %v2033, %v2033
    %v2042 = vpack.c.bf16 %v2034, %v2034
    %v2043 = vpack.c.bf16 %v2035, %v2035
    %v2044 = vpack.c.bf16 %v2036, %v2036
    %v2045 = vpack.c.bf16 %v2037, %v2037
    %v2046 = vpack.c.bf16 %v2038, %v2038
    %v2047 = vld [vmem:[#allocation4] sm:$0xff]
    %v2048 = vld [vmem:[#allocation4 + $0x8] sm:$0xff]
    %v2049 = vld [vmem:[#allocation4 + $0x10] sm:$0xff]
    %v2050 = vld [vmem:[#allocation4 + $0x18] sm:$0xff]
    %v2051 = vpack.c.bf16 %v2047, %v2047
    %v2052 = vpack.c.bf16 %v2048, %v2048
    %v2053 = vpack.c.bf16 %v2049, %v2049
    %v2054 = vpack.c.bf16 %v2050, %v2050
    %v2055 = vld [vmem:[#allocation9] sm:$0xff]
    %v2056 = vld [vmem:[#allocation9 + $0x8] sm:$0xff]
    %v2057 = vld [vmem:[#allocation9 + $0x10] sm:$0xff]
    %v2058 = vld [vmem:[#allocation9 + $0x18] sm:$0xff]
    %v2059 = vld [vmem:[#allocation9 + $0x20] sm:$0xff]
    %v2060 = vld [vmem:[#allocation9 + $0x28] sm:$0xff]
    %v2061 = vld [vmem:[#allocation9 + $0x30] sm:$0xff]
    %v2062 = vld [vmem:[#allocation9 + $0x38] sm:$0xff]
    %v2063 = vld [vmem:[#allocation9 + $0x40] sm:$0xff]
    %v2064 = vld [vmem:[#allocation9 + $0x48] sm:$0xff]
    %v2065 = vld [vmem:[#allocation9 + $0x50] sm:$0xff]
    %v2066 = vld [vmem:[#allocation9 + $0x58] sm:$0xff]
    %v2067 = vld [vmem:[#allocation9 + $0x60] sm:$0xff]
    %v2068 = vld [vmem:[#allocation9 + $0x68] sm:$0xff]
    %v2069 = vld [vmem:[#allocation9 + $0x70] sm:$0xff]
    %v2070 = vld [vmem:[#allocation9 + $0x78] sm:$0xff]
    %v2071 = vld [vmem:[#allocation9 + $0x80] sm:$0xff]
    %v2072 = vld [vmem:[#allocation9 + $0x88] sm:$0xff]
    %v2073 = vld [vmem:[#allocation9 + $0x90] sm:$0xff]
    %v2074 = vld [vmem:[#allocation9 + $0x98] sm:$0xff]
    %v2075 = vld [vmem:[#allocation9 + $0xa0] sm:$0xff]
    %v2076 = vld [vmem:[#allocation9 + $0xa8] sm:$0xff]
    %v2077 = vld [vmem:[#allocation9 + $0xb0] sm:$0xff]
    %v2078 = vld [vmem:[#allocation9 + $0xb8] sm:$0xff]
    %v2079 = vld [vmem:[#allocation9 + $0xc0] sm:$0xff]
    %v2080 = vld [vmem:[#allocation9 + $0xc8] sm:$0xff]
    %v2081 = vld [vmem:[#allocation9 + $0xd0] sm:$0xff]
    %v2082 = vld [vmem:[#allocation9 + $0xd8] sm:$0xff]
    %v2083 = vld [vmem:[#allocation9 + $0xe0] sm:$0xff]
    %v2084 = vld [vmem:[#allocation9 + $0xe8] sm:$0xff]
    %v2085 = vld [vmem:[#allocation9 + $0xf0] sm:$0xff]
    %v2086 = vld [vmem:[#allocation9 + $0xf8] sm:$0xff]
    %v2087 = vld [vmem:[#allocation9 + $0x100] sm:$0xff]
    %v2088 = vld [vmem:[#allocation9 + $0x108] sm:$0xff]
    %v2089 = vld [vmem:[#allocation9 + $0x110] sm:$0xff]
    %v2090 = vld [vmem:[#allocation9 + $0x118] sm:$0xff]
    %v2091 = vld [vmem:[#allocation9 + $0x120] sm:$0xff]
    %v2092 = vld [vmem:[#allocation9 + $0x128] sm:$0xff]
    %v2093 = vld [vmem:[#allocation9 + $0x130] sm:$0xff]
    %v2094 = vld [vmem:[#allocation9 + $0x138] sm:$0xff]
    %v2095 = vld [vmem:[#allocation9 + $0x140] sm:$0xff]
    %v2096 = vld [vmem:[#allocation9 + $0x148] sm:$0xff]
    %v2097 = vld [vmem:[#allocation9 + $0x150] sm:$0xff]
    %v2098 = vld [vmem:[#allocation9 + $0x158] sm:$0xff]
    %v2099 = vld [vmem:[#allocation9 + $0x160] sm:$0xff]
    %v2100 = vld [vmem:[#allocation9 + $0x168] sm:$0xff]
    %v2101 = vld [vmem:[#allocation9 + $0x170] sm:$0xff]
    %v2102 = vld [vmem:[#allocation9 + $0x178] sm:$0xff]
    %v2103 = vld [vmem:[#allocation9 + $0x180] sm:$0xff]
    %v2104 = vld [vmem:[#allocation9 + $0x188] sm:$0xff]
    %v2105 = vld [vmem:[#allocation9 + $0x190] sm:$0xff]
    %v2106 = vld [vmem:[#allocation9 + $0x198] sm:$0xff]
    %v2107 = vld [vmem:[#allocation9 + $0x1a0] sm:$0xff]
    %v2108 = vld [vmem:[#allocation9 + $0x1a8] sm:$0xff]
    %v2109 = vld [vmem:[#allocation9 + $0x1b0] sm:$0xff]
    %v2110 = vld [vmem:[#allocation9 + $0x1b8] sm:$0xff]
    %v2111 = vld [vmem:[#allocation9 + $0x1c0] sm:$0xff]
    %v2112 = vld [vmem:[#allocation9 + $0x1c8] sm:$0xff]
    %v2113 = vld [vmem:[#allocation9 + $0x1d0] sm:$0xff]
    %v2114 = vld [vmem:[#allocation9 + $0x1d8] sm:$0xff]
    %v2115 = vld [vmem:[#allocation9 + $0x1e0] sm:$0xff]
    %v2116 = vld [vmem:[#allocation9 + $0x1e8] sm:$0xff]
    %v2117 = vld [vmem:[#allocation9 + $0x1f0] sm:$0xff]
    %v2118 = vld [vmem:[#allocation9 + $0x1f8] sm:$0xff]
    %v2119 = vld [vmem:[#allocation9 + $0x200] sm:$0xff]
    %v2120 = vld [vmem:[#allocation9 + $0x208] sm:$0xff]
    %v2121 = vld [vmem:[#allocation9 + $0x210] sm:$0xff]
    %v2122 = vld [vmem:[#allocation9 + $0x218] sm:$0xff]
    %v2123 = vld [vmem:[#allocation9 + $0x220] sm:$0xff]
    %v2124 = vld [vmem:[#allocation9 + $0x228] sm:$0xff]
    %v2125 = vld [vmem:[#allocation9 + $0x230] sm:$0xff]
    %v2126 = vld [vmem:[#allocation9 + $0x238] sm:$0xff]
    %v2127 = vld [vmem:[#allocation9 + $0x240] sm:$0xff]
    %v2128 = vld [vmem:[#allocation9 + $0x248] sm:$0xff]
    %v2129 = vld [vmem:[#allocation9 + $0x250] sm:$0xff]
    %v2130 = vld [vmem:[#allocation9 + $0x258] sm:$0xff]
    %v2131 = vld [vmem:[#allocation9 + $0x260] sm:$0xff]
    %v2132 = vld [vmem:[#allocation9 + $0x268] sm:$0xff]
    %v2133 = vld [vmem:[#allocation9 + $0x270] sm:$0xff]
    %v2134 = vld [vmem:[#allocation9 + $0x278] sm:$0xff]
    %v2135 = vld [vmem:[#allocation9 + $0x280] sm:$0xff]
    %v2136 = vld [vmem:[#allocation9 + $0x288] sm:$0xff]
    %v2137 = vld [vmem:[#allocation9 + $0x290] sm:$0xff]
    %v2138 = vld [vmem:[#allocation9 + $0x298] sm:$0xff]
    %v2139 = vld [vmem:[#allocation9 + $0x2a0] sm:$0xff]
    %v2140 = vld [vmem:[#allocation9 + $0x2a8] sm:$0xff]
    %v2141 = vld [vmem:[#allocation9 + $0x2b0] sm:$0xff]
    %v2142 = vld [vmem:[#allocation9 + $0x2b8] sm:$0xff]
    %v2143 = vld [vmem:[#allocation9 + $0x2c0] sm:$0xff]
    %v2144 = vld [vmem:[#allocation9 + $0x2c8] sm:$0xff]
    %v2145 = vld [vmem:[#allocation9 + $0x2d0] sm:$0xff]
    %v2146 = vld [vmem:[#allocation9 + $0x2d8] sm:$0xff]
    %v2147 = vld [vmem:[#allocation9 + $0x2e0] sm:$0xff]
    %v2148 = vld [vmem:[#allocation9 + $0x2e8] sm:$0xff]
    %v2149 = vld [vmem:[#allocation9 + $0x2f0] sm:$0xff]
    %v2150 = vld [vmem:[#allocation9 + $0x2f8] sm:$0xff]
    %v2151 = vld [vmem:[#allocation9 + $0x300] sm:$0xff]
    %v2152 = vld [vmem:[#allocation9 + $0x308] sm:$0xff]
    %v2153 = vld [vmem:[#allocation9 + $0x310] sm:$0xff]
    %v2154 = vld [vmem:[#allocation9 + $0x318] sm:$0xff]
    %v2155 = vld [vmem:[#allocation9 + $0x320] sm:$0xff]
    %v2156 = vld [vmem:[#allocation9 + $0x328] sm:$0xff]
    %v2157 = vld [vmem:[#allocation9 + $0x330] sm:$0xff]
    %v2158 = vld [vmem:[#allocation9 + $0x338] sm:$0xff]
    %v2159 = vld [vmem:[#allocation9 + $0x340] sm:$0xff]
    %v2160 = vld [vmem:[#allocation9 + $0x348] sm:$0xff]
    %v2161 = vld [vmem:[#allocation9 + $0x350] sm:$0xff]
    %v2162 = vld [vmem:[#allocation9 + $0x358] sm:$0xff]
    %v2163 = vld [vmem:[#allocation9 + $0x360] sm:$0xff]
    %v2164 = vld [vmem:[#allocation9 + $0x368] sm:$0xff]
    %v2165 = vld [vmem:[#allocation9 + $0x370] sm:$0xff]
    %v2166 = vld [vmem:[#allocation9 + $0x378] sm:$0xff]
    %v2167 = vld [vmem:[#allocation9 + $0x380] sm:$0xff]
    %v2168 = vld [vmem:[#allocation9 + $0x388] sm:$0xff]
    %v2169 = vld [vmem:[#allocation9 + $0x390] sm:$0xff]
    %v2170 = vld [vmem:[#allocation9 + $0x398] sm:$0xff]
    %v2171 = vld [vmem:[#allocation9 + $0x3a0] sm:$0xff]
    %v2172 = vld [vmem:[#allocation9 + $0x3a8] sm:$0xff]
    %v2173 = vld [vmem:[#allocation9 + $0x3b0] sm:$0xff]
    %v2174 = vld [vmem:[#allocation9 + $0x3b8] sm:$0xff]
    %v2175 = vld [vmem:[#allocation9 + $0x3c0] sm:$0xff]
    %v2176 = vld [vmem:[#allocation9 + $0x3c8] sm:$0xff]
    %v2177 = vld [vmem:[#allocation9 + $0x3d0] sm:$0xff]
    %v2178 = vld [vmem:[#allocation9 + $0x3d8] sm:$0xff]
    %v2179 = vld [vmem:[#allocation9 + $0x3e0] sm:$0xff]
    %v2180 = vld [vmem:[#allocation9 + $0x3e8] sm:$0xff]
    %v2181 = vld [vmem:[#allocation9 + $0x3f0] sm:$0xff]
    %v2182 = vld [vmem:[#allocation9 + $0x3f8] sm:$0xff]
    %v2183 = vld [vmem:[#allocation10 + $0x18] sm:$0xf]
    %v2185 = vlaneseq
    %v2186 = vshrl.u32 %v2185, 7
    %v2187 = vsub.s32 0, %v2186
    %v2188 = vrot.slane %v2183, %v2187
    %v2189 = vlaneseq
    %v2190 = vshrl.u32 %v2189, 7
    %v2191 = vsub.s32 1, %v2190
    %v2192 = vrot.slane %v2183, %v2191
    %v2193 = vlaneseq
    %v2194 = vshrl.u32 %v2193, 7
    %v2195 = vsub.s32 2, %v2194
    %v2196 = vrot.slane %v2183, %v2195
    %v2197 = vlaneseq
    %v2198 = vshrl.u32 %v2197, 7
    %v2199 = vsub.s32 3, %v2198
    %v2200 = vrot.slane %v2183, %v2199
    %v2333 = vunpack.c.l.b16 %v2055
    %v2334 = vunpack.c.h.b16 %v2055
    %v2335 = vunpack.c.l.b16 %v2056
    %v2336 = vunpack.c.h.b16 %v2056
    %v2337 = vunpack.c.l.b16 %v2057
    %v2338 = vunpack.c.h.b16 %v2057
    %v2339 = vunpack.c.l.b16 %v2058
    %v2340 = vunpack.c.h.b16 %v2058
    %v2341 = vunpack.c.l.b16 %v2059
    %v2342 = vunpack.c.h.b16 %v2059
    %v2343 = vunpack.c.l.b16 %v2060
    %v2344 = vunpack.c.h.b16 %v2060
    %v2345 = vunpack.c.l.b16 %v2061
    %v2346 = vunpack.c.h.b16 %v2061
    %v2347 = vunpack.c.l.b16 %v2062
    %v2348 = vunpack.c.h.b16 %v2062
    %v2349 = vunpack.c.l.b16 %v2063
    %v2350 = vunpack.c.h.b16 %v2063
    %v2351 = vunpack.c.l.b16 %v2064
    %v2352 = vunpack.c.h.b16 %v2064
    %v2353 = vunpack.c.l.b16 %v2065
    %v2354 = vunpack.c.h.b16 %v2065
    %v2355 = vunpack.c.l.b16 %v2066
    %v2356 = vunpack.c.h.b16 %v2066
    %v2357 = vunpack.c.l.b16 %v2067
    %v2358 = vunpack.c.h.b16 %v2067
    %v2359 = vunpack.c.l.b16 %v2068
    %v2360 = vunpack.c.h.b16 %v2068
    %v2361 = vunpack.c.l.b16 %v2069
    %v2362 = vunpack.c.h.b16 %v2069
    %v2363 = vunpack.c.l.b16 %v2070
    %v2364 = vunpack.c.h.b16 %v2070
    %v2365 = vunpack.c.l.b16 %v2071
    %v2366 = vunpack.c.h.b16 %v2071
    %v2367 = vunpack.c.l.b16 %v2072
    %v2368 = vunpack.c.h.b16 %v2072
    %v2369 = vunpack.c.l.b16 %v2073
    %v2370 = vunpack.c.h.b16 %v2073
    %v2371 = vunpack.c.l.b16 %v2074
    %v2372 = vunpack.c.h.b16 %v2074
    %v2373 = vunpack.c.l.b16 %v2075
    %v2374 = vunpack.c.h.b16 %v2075
    %v2375 = vunpack.c.l.b16 %v2076
    %v2376 = vunpack.c.h.b16 %v2076
    %v2377 = vunpack.c.l.b16 %v2077
    %v2378 = vunpack.c.h.b16 %v2077
    %v2379 = vunpack.c.l.b16 %v2078
    %v2380 = vunpack.c.h.b16 %v2078
    %v2381 = vunpack.c.l.b16 %v2079
    %v2382 = vunpack.c.h.b16 %v2079
    %v2383 = vunpack.c.l.b16 %v2080
    %v2384 = vunpack.c.h.b16 %v2080
    %v2385 = vunpack.c.l.b16 %v2081
    %v2386 = vunpack.c.h.b16 %v2081
    %v2387 = vunpack.c.l.b16 %v2082
    %v2388 = vunpack.c.h.b16 %v2082
    %v2389 = vunpack.c.l.b16 %v2083
    %v2390 = vunpack.c.h.b16 %v2083
    %v2391 = vunpack.c.l.b16 %v2084
    %v2392 = vunpack.c.h.b16 %v2084
    %v2393 = vunpack.c.l.b16 %v2085
    %v2394 = vunpack.c.h.b16 %v2085
    %v2395 = vunpack.c.l.b16 %v2086
    %v2396 = vunpack.c.h.b16 %v2086
    %v2397 = vunpack.c.l.b16 %v2087
    %v2398 = vunpack.c.h.b16 %v2087
    %v2399 = vunpack.c.l.b16 %v2088
    %v2400 = vunpack.c.h.b16 %v2088
    %v2401 = vunpack.c.l.b16 %v2089
    %v2402 = vunpack.c.h.b16 %v2089
    %v2403 = vunpack.c.l.b16 %v2090
    %v2404 = vunpack.c.h.b16 %v2090
    %v2405 = vunpack.c.l.b16 %v2091
    %v2406 = vunpack.c.h.b16 %v2091
    %v2407 = vunpack.c.l.b16 %v2092
    %v2408 = vunpack.c.h.b16 %v2092
    %v2409 = vunpack.c.l.b16 %v2093
    %v2410 = vunpack.c.h.b16 %v2093
    %v2411 = vunpack.c.l.b16 %v2094
    %v2412 = vunpack.c.h.b16 %v2094
    %v2413 = vunpack.c.l.b16 %v2095
    %v2414 = vunpack.c.h.b16 %v2095
    %v2415 = vunpack.c.l.b16 %v2096
    %v2416 = vunpack.c.h.b16 %v2096
    %v2417 = vunpack.c.l.b16 %v2097
    %v2418 = vunpack.c.h.b16 %v2097
    %v2419 = vunpack.c.l.b16 %v2098
    %v2420 = vunpack.c.h.b16 %v2098
    %v2421 = vunpack.c.l.b16 %v2099
    %v2422 = vunpack.c.h.b16 %v2099
    %v2423 = vunpack.c.l.b16 %v2100
    %v2424 = vunpack.c.h.b16 %v2100
    %v2425 = vunpack.c.l.b16 %v2101
    %v2426 = vunpack.c.h.b16 %v2101
    %v2427 = vunpack.c.l.b16 %v2102
    %v2428 = vunpack.c.h.b16 %v2102
    %v2429 = vunpack.c.l.b16 %v2103
    %v2430 = vunpack.c.h.b16 %v2103
    %v2431 = vunpack.c.l.b16 %v2104
    %v2432 = vunpack.c.h.b16 %v2104
    %v2433 = vunpack.c.l.b16 %v2105
    %v2434 = vunpack.c.h.b16 %v2105
    %v2435 = vunpack.c.l.b16 %v2106
    %v2436 = vunpack.c.h.b16 %v2106
    %v2437 = vunpack.c.l.b16 %v2107
    %v2438 = vunpack.c.h.b16 %v2107
    %v2439 = vunpack.c.l.b16 %v2108
    %v2440 = vunpack.c.h.b16 %v2108
    %v2441 = vunpack.c.l.b16 %v2109
    %v2442 = vunpack.c.h.b16 %v2109
    %v2443 = vunpack.c.l.b16 %v2110
    %v2444 = vunpack.c.h.b16 %v2110
    %v2445 = vunpack.c.l.b16 %v2111
    %v2446 = vunpack.c.h.b16 %v2111
    %v2447 = vunpack.c.l.b16 %v2112
    %v2448 = vunpack.c.h.b16 %v2112
    %v2449 = vunpack.c.l.b16 %v2113
    %v2450 = vunpack.c.h.b16 %v2113
    %v2451 = vunpack.c.l.b16 %v2114
    %v2452 = vunpack.c.h.b16 %v2114
    %v2453 = vunpack.c.l.b16 %v2115
    %v2454 = vunpack.c.h.b16 %v2115
    %v2455 = vunpack.c.l.b16 %v2116
    %v2456 = vunpack.c.h.b16 %v2116
    %v2457 = vunpack.c.l.b16 %v2117
    %v2458 = vunpack.c.h.b16 %v2117
    %v2459 = vunpack.c.l.b16 %v2118
    %v2460 = vunpack.c.h.b16 %v2118
    %v2461 = vunpack.c.l.b16 %v2119
    %v2462 = vunpack.c.h.b16 %v2119
    %v2463 = vunpack.c.l.b16 %v2120
    %v2464 = vunpack.c.h.b16 %v2120
    %v2465 = vunpack.c.l.b16 %v2121
    %v2466 = vunpack.c.h.b16 %v2121
    %v2467 = vunpack.c.l.b16 %v2122
    %v2468 = vunpack.c.h.b16 %v2122
    %v2469 = vunpack.c.l.b16 %v2123
    %v2470 = vunpack.c.h.b16 %v2123
    %v2471 = vunpack.c.l.b16 %v2124
    %v2472 = vunpack.c.h.b16 %v2124
    %v2473 = vunpack.c.l.b16 %v2125
    %v2474 = vunpack.c.h.b16 %v2125
    %v2475 = vunpack.c.l.b16 %v2126
    %v2476 = vunpack.c.h.b16 %v2126
    %v2477 = vunpack.c.l.b16 %v2127
    %v2478 = vunpack.c.h.b16 %v2127
    %v2479 = vunpack.c.l.b16 %v2128
    %v2480 = vunpack.c.h.b16 %v2128
    %v2481 = vunpack.c.l.b16 %v2129
    %v2482 = vunpack.c.h.b16 %v2129
    %v2483 = vunpack.c.l.b16 %v2130
    %v2484 = vunpack.c.h.b16 %v2130
    %v2485 = vunpack.c.l.b16 %v2131
    %v2486 = vunpack.c.h.b16 %v2131
    %v2487 = vunpack.c.l.b16 %v2132
    %v2488 = vunpack.c.h.b16 %v2132
    %v2489 = vunpack.c.l.b16 %v2133
    %v2490 = vunpack.c.h.b16 %v2133
    %v2491 = vunpack.c.l.b16 %v2134
    %v2492 = vunpack.c.h.b16 %v2134
    %v2493 = vunpack.c.l.b16 %v2135
    %v2494 = vunpack.c.h.b16 %v2135
    %v2495 = vunpack.c.l.b16 %v2136
    %v2496 = vunpack.c.h.b16 %v2136
    %v2497 = vunpack.c.l.b16 %v2137
    %v2498 = vunpack.c.h.b16 %v2137
    %v2499 = vunpack.c.l.b16 %v2138
    %v2500 = vunpack.c.h.b16 %v2138
    %v2501 = vunpack.c.l.b16 %v2139
    %v2502 = vunpack.c.h.b16 %v2139
    %v2503 = vunpack.c.l.b16 %v2140
    %v2504 = vunpack.c.h.b16 %v2140
    %v2505 = vunpack.c.l.b16 %v2141
    %v2506 = vunpack.c.h.b16 %v2141
    %v2507 = vunpack.c.l.b16 %v2142
    %v2508 = vunpack.c.h.b16 %v2142
    %v2509 = vunpack.c.l.b16 %v2143
    %v2510 = vunpack.c.h.b16 %v2143
    %v2511 = vunpack.c.l.b16 %v2144
    %v2512 = vunpack.c.h.b16 %v2144
    %v2513 = vunpack.c.l.b16 %v2145
    %v2514 = vunpack.c.h.b16 %v2145
    %v2515 = vunpack.c.l.b16 %v2146
    %v2516 = vunpack.c.h.b16 %v2146
    %v2517 = vunpack.c.l.b16 %v2147
    %v2518 = vunpack.c.h.b16 %v2147
    %v2519 = vunpack.c.l.b16 %v2148
    %v2520 = vunpack.c.h.b16 %v2148
    %v2521 = vunpack.c.l.b16 %v2149
    %v2522 = vunpack.c.h.b16 %v2149
    %v2523 = vunpack.c.l.b16 %v2150
    %v2524 = vunpack.c.h.b16 %v2150
    %v2525 = vunpack.c.l.b16 %v2151
    %v2526 = vunpack.c.h.b16 %v2151
    %v2527 = vunpack.c.l.b16 %v2152
    %v2528 = vunpack.c.h.b16 %v2152
    %v2529 = vunpack.c.l.b16 %v2153
    %v2530 = vunpack.c.h.b16 %v2153
    %v2531 = vunpack.c.l.b16 %v2154
    %v2532 = vunpack.c.h.b16 %v2154
    %v2533 = vunpack.c.l.b16 %v2155
    %v2534 = vunpack.c.h.b16 %v2155
    %v2535 = vunpack.c.l.b16 %v2156
    %v2536 = vunpack.c.h.b16 %v2156
    %v2537 = vunpack.c.l.b16 %v2157
    %v2538 = vunpack.c.h.b16 %v2157
    %v2539 = vunpack.c.l.b16 %v2158
    %v2540 = vunpack.c.h.b16 %v2158
    %v2541 = vunpack.c.l.b16 %v2159
    %v2542 = vunpack.c.h.b16 %v2159
    %v2543 = vunpack.c.l.b16 %v2160
    %v2544 = vunpack.c.h.b16 %v2160
    %v2545 = vunpack.c.l.b16 %v2161
    %v2546 = vunpack.c.h.b16 %v2161
    %v2547 = vunpack.c.l.b16 %v2162
    %v2548 = vunpack.c.h.b16 %v2162
    %v2549 = vunpack.c.l.b16 %v2163
    %v2550 = vunpack.c.h.b16 %v2163
    %v2551 = vunpack.c.l.b16 %v2164
    %v2552 = vunpack.c.h.b16 %v2164
    %v2553 = vunpack.c.l.b16 %v2165
    %v2554 = vunpack.c.h.b16 %v2165
    %v2555 = vunpack.c.l.b16 %v2166
    %v2556 = vunpack.c.h.b16 %v2166
    %v2557 = vunpack.c.l.b16 %v2167
    %v2558 = vunpack.c.h.b16 %v2167
    %v2559 = vunpack.c.l.b16 %v2168
    %v2560 = vunpack.c.h.b16 %v2168
    %v2561 = vunpack.c.l.b16 %v2169
    %v2562 = vunpack.c.h.b16 %v2169
    %v2563 = vunpack.c.l.b16 %v2170
    %v2564 = vunpack.c.h.b16 %v2170
    %v2565 = vunpack.c.l.b16 %v2171
    %v2566 = vunpack.c.h.b16 %v2171
    %v2567 = vunpack.c.l.b16 %v2172
    %v2568 = vunpack.c.h.b16 %v2172
    %v2569 = vunpack.c.l.b16 %v2173
    %v2570 = vunpack.c.h.b16 %v2173
    %v2571 = vunpack.c.l.b16 %v2174
    %v2572 = vunpack.c.h.b16 %v2174
    %v2573 = vunpack.c.l.b16 %v2175
    %v2574 = vunpack.c.h.b16 %v2175
    %v2575 = vunpack.c.l.b16 %v2176
    %v2576 = vunpack.c.h.b16 %v2176
    %v2577 = vunpack.c.l.b16 %v2177
    %v2578 = vunpack.c.h.b16 %v2177
    %v2579 = vunpack.c.l.b16 %v2178
    %v2580 = vunpack.c.h.b16 %v2178
    %v2581 = vunpack.c.l.b16 %v2179
    %v2582 = vunpack.c.h.b16 %v2179
    %v2583 = vunpack.c.l.b16 %v2180
    %v2584 = vunpack.c.h.b16 %v2180
    %v2585 = vunpack.c.l.b16 %v2181
    %v2586 = vunpack.c.h.b16 %v2181
    %v2587 = vunpack.c.l.b16 %v2182
    %v2588 = vunpack.c.h.b16 %v2182
    %v2589 = vpack.c.b16 %v2337, %v2333
    %v2590 = vpack.c.b16 %v2338, %v2334
    %v2591 = vpack.c.b16 %v2339, %v2335
    %v2592 = vpack.c.b16 %v2340, %v2336
    %v2593 = vpack.c.b16 %v2345, %v2341
    %v2594 = vpack.c.b16 %v2346, %v2342
    %v2595 = vpack.c.b16 %v2347, %v2343
    %v2596 = vpack.c.b16 %v2348, %v2344
    %v2597 = vpack.c.b16 %v2353, %v2349
    %v2598 = vpack.c.b16 %v2354, %v2350
    %v2599 = vpack.c.b16 %v2355, %v2351
    %v2600 = vpack.c.b16 %v2356, %v2352
    %v2601 = vpack.c.b16 %v2361, %v2357
    %v2602 = vpack.c.b16 %v2362, %v2358
    %v2603 = vpack.c.b16 %v2363, %v2359
    %v2604 = vpack.c.b16 %v2364, %v2360
    %v2605 = vpack.c.b16 %v2369, %v2365
    %v2606 = vpack.c.b16 %v2370, %v2366
    %v2607 = vpack.c.b16 %v2371, %v2367
    %v2608 = vpack.c.b16 %v2372, %v2368
    %v2609 = vpack.c.b16 %v2377, %v2373
    %v2610 = vpack.c.b16 %v2378, %v2374
    %v2611 = vpack.c.b16 %v2379, %v2375
    %v2612 = vpack.c.b16 %v2380, %v2376
    %v2613 = vpack.c.b16 %v2385, %v2381
    %v2614 = vpack.c.b16 %v2386, %v2382
    %v2615 = vpack.c.b16 %v2387, %v2383
    %v2616 = vpack.c.b16 %v2388, %v2384
    %v2617 = vpack.c.b16 %v2393, %v2389
    %v2618 = vpack.c.b16 %v2394, %v2390
    %v2619 = vpack.c.b16 %v2395, %v2391
    %v2620 = vpack.c.b16 %v2396, %v2392
    %v2621 = vpack.c.b16 %v2401, %v2397
    %v2622 = vpack.c.b16 %v2402, %v2398
    %v2623 = vpack.c.b16 %v2403, %v2399
    %v2624 = vpack.c.b16 %v2404, %v2400
    %v2625 = vpack.c.b16 %v2409, %v2405
    %v2626 = vpack.c.b16 %v2410, %v2406
    %v2627 = vpack.c.b16 %v2411, %v2407
    %v2628 = vpack.c.b16 %v2412, %v2408
    %v2629 = vpack.c.b16 %v2417, %v2413
    %v2630 = vpack.c.b16 %v2418, %v2414
    %v2631 = vpack.c.b16 %v2419, %v2415
    %v2632 = vpack.c.b16 %v2420, %v2416
    %v2633 = vpack.c.b16 %v2425, %v2421
    %v2634 = vpack.c.b16 %v2426, %v2422
    %v2635 = vpack.c.b16 %v2427, %v2423
    %v2636 = vpack.c.b16 %v2428, %v2424
    %v2637 = vpack.c.b16 %v2433, %v2429
    %v2638 = vpack.c.b16 %v2434, %v2430
    %v2639 = vpack.c.b16 %v2435, %v2431
    %v2640 = vpack.c.b16 %v2436, %v2432
    %v2641 = vpack.c.b16 %v2441, %v2437
    %v2642 = vpack.c.b16 %v2442, %v2438
    %v2643 = vpack.c.b16 %v2443, %v2439
    %v2644 = vpack.c.b16 %v2444, %v2440
    %v2645 = vpack.c.b16 %v2449, %v2445
    %v2646 = vpack.c.b16 %v2450, %v2446
    %v2647 = vpack.c.b16 %v2451, %v2447
    %v2648 = vpack.c.b16 %v2452, %v2448
    %v2649 = vpack.c.b16 %v2457, %v2453
    %v2650 = vpack.c.b16 %v2458, %v2454
    %v2651 = vpack.c.b16 %v2459, %v2455
    %v2652 = vpack.c.b16 %v2460, %v2456
    %v2653 = vpack.c.b16 %v2465, %v2461
    %v2654 = vpack.c.b16 %v2466, %v2462
    %v2655 = vpack.c.b16 %v2467, %v2463
    %v2656 = vpack.c.b16 %v2468, %v2464
    %v2657 = vpack.c.b16 %v2473, %v2469
    %v2658 = vpack.c.b16 %v2474, %v2470
    %v2659 = vpack.c.b16 %v2475, %v2471
    %v2660 = vpack.c.b16 %v2476, %v2472
    %v2661 = vpack.c.b16 %v2481, %v2477
    %v2662 = vpack.c.b16 %v2482, %v2478
    %v2663 = vpack.c.b16 %v2483, %v2479
    %v2664 = vpack.c.b16 %v2484, %v2480
    %v2665 = vpack.c.b16 %v2489, %v2485
    %v2666 = vpack.c.b16 %v2490, %v2486
    %v2667 = vpack.c.b16 %v2491, %v2487
    %v2668 = vpack.c.b16 %v2492, %v2488
    %v2669 = vpack.c.b16 %v2497, %v2493
    %v2670 = vpack.c.b16 %v2498, %v2494
    %v2671 = vpack.c.b16 %v2499, %v2495
    %v2672 = vpack.c.b16 %v2500, %v2496
    %v2673 = vpack.c.b16 %v2505, %v2501
    %v2674 = vpack.c.b16 %v2506, %v2502
    %v2675 = vpack.c.b16 %v2507, %v2503
    %v2676 = vpack.c.b16 %v2508, %v2504
    %v2677 = vpack.c.b16 %v2513, %v2509
    %v2678 = vpack.c.b16 %v2514, %v2510
    %v2679 = vpack.c.b16 %v2515, %v2511
    %v2680 = vpack.c.b16 %v2516, %v2512
    %v2681 = vpack.c.b16 %v2521, %v2517
    %v2682 = vpack.c.b16 %v2522, %v2518
    %v2683 = vpack.c.b16 %v2523, %v2519
    %v2684 = vpack.c.b16 %v2524, %v2520
    %v2685 = vpack.c.b16 %v2529, %v2525
    %v2686 = vpack.c.b16 %v2530, %v2526
    %v2687 = vpack.c.b16 %v2531, %v2527
    %v2688 = vpack.c.b16 %v2532, %v2528
    %v2689 = vpack.c.b16 %v2537, %v2533
    %v2690 = vpack.c.b16 %v2538, %v2534
    %v2691 = vpack.c.b16 %v2539, %v2535
    %v2692 = vpack.c.b16 %v2540, %v2536
    %v2693 = vpack.c.b16 %v2545, %v2541
    %v2694 = vpack.c.b16 %v2546, %v2542
    %v2695 = vpack.c.b16 %v2547, %v2543
    %v2696 = vpack.c.b16 %v2548, %v2544
    %v2697 = vpack.c.b16 %v2553, %v2549
    %v2698 = vpack.c.b16 %v2554, %v2550
    %v2699 = vpack.c.b16 %v2555, %v2551
    %v2700 = vpack.c.b16 %v2556, %v2552
    %v2701 = vpack.c.b16 %v2561, %v2557
    %v2702 = vpack.c.b16 %v2562, %v2558
    %v2703 = vpack.c.b16 %v2563, %v2559
    %v2704 = vpack.c.b16 %v2564, %v2560
    %v2705 = vpack.c.b16 %v2569, %v2565
    %v2706 = vpack.c.b16 %v2570, %v2566
    %v2707 = vpack.c.b16 %v2571, %v2567
    %v2708 = vpack.c.b16 %v2572, %v2568
    %v2709 = vpack.c.b16 %v2577, %v2573
    %v2710 = vpack.c.b16 %v2578, %v2574
    %v2711 = vpack.c.b16 %v2579, %v2575
    %v2712 = vpack.c.b16 %v2580, %v2576
    %v2713 = vpack.c.b16 %v2585, %v2581
    %v2714 = vpack.c.b16 %v2586, %v2582
    %v2715 = vpack.c.b16 %v2587, %v2583
    %v2716 = vpack.c.b16 %v2588, %v2584
    %2845 = vmatprep.subr.bf16.mxu0 %v2590
    %2846 = vmatpush1.bf16.msra.mxu0 %v2589
    %2847 = vmatprep.subr.bf16.mxu0 %v2594
    %2848 = vmatpush1.bf16.msra.mxu0 %v2593
    %2849 = vmatprep.subr.bf16.mxu0 %v2598
    %2850 = vmatpush1.bf16.msra.mxu0 %v2597
    %2851 = vmatprep.subr.bf16.mxu0 %v2602
    %2852 = vmatpush1.bf16.msra.mxu0 %v2601
    %2853 = vmatprep.subr.bf16.mxu0 %v2606
    %2854 = vmatpush1.bf16.msra.mxu0 %v2605
    %2855 = vmatprep.subr.bf16.mxu0 %v2610
    %2856 = vmatpush1.bf16.msra.mxu0 %v2609
    %2857 = vmatprep.subr.bf16.mxu0 %v2614
    %2858 = vmatpush1.bf16.msra.mxu0 %v2613
    %2859 = vmatprep.subr.bf16.mxu0 %v2618
    %2860 = vmatpush1.bf16.msra.mxu0 %v2617
    %2861 = vmatprep.subr.bf16.mxu0 %v2622
    %2862 = vmatpush1.bf16.msra.mxu0 %v2621
    %2863 = vmatprep.subr.bf16.mxu0 %v2626
    %2864 = vmatpush1.bf16.msra.mxu0 %v2625
    %2865 = vmatprep.subr.bf16.mxu0 %v2630
    %2866 = vmatpush1.bf16.msra.mxu0 %v2629
    %2867 = vmatprep.subr.bf16.mxu0 %v2634
    %2868 = vmatpush1.bf16.msra.mxu0 %v2633
    %2869 = vmatprep.subr.bf16.mxu0 %v2638
    %2870 = vmatpush1.bf16.msra.mxu0 %v2637
    %2871 = vmatprep.subr.bf16.mxu0 %v2642
    %2872 = vmatpush1.bf16.msra.mxu0 %v2641
    %2873 = vmatprep.subr.bf16.mxu0 %v2646
    %2874 = vmatpush1.bf16.msra.mxu0 %v2645
    %2875 = vmatprep.subr.bf16.mxu0 %v2650
    %2876 = vmatpush1.bf16.msra.mxu0 %v2649
    %2877 = vmatprep.mubr.bf16.mxu0 %v2052
    %2878 = vmatmul.mubr.bf16.gmra.mrb[0].mxu0 %v2051
    %v2879 = vpop.f32.mrb[0].mxu0
    %v2880 = vadd.f32 %v2188, %v2879
    %v2881 = vpop.f32.mrb[0].mxu0
    %v2882 = vadd.f32 %v2192, %v2881
    %v2883 = vpop.f32.mrb[0].mxu0
    %v2884 = vpop.f32.mrb[0].mxu0
    %2885 = vdwg.mxu0
    %2886 = vmatprep.subr.bf16.mxu0 %v2654
    %2887 = vmatpush1.bf16.msra.mxu0 %v2653
    %2888 = vmatprep.subr.bf16.mxu0 %v2658
    %2889 = vmatpush1.bf16.msra.mxu0 %v2657
    %2890 = vmatprep.subr.bf16.mxu0 %v2662
    %2891 = vmatpush1.bf16.msra.mxu0 %v2661
    %2892 = vmatprep.subr.bf16.mxu0 %v2666
    %2893 = vmatpush1.bf16.msra.mxu0 %v2665
    %2894 = vmatprep.subr.bf16.mxu0 %v2670
    %2895 = vmatpush1.bf16.msra.mxu0 %v2669
    %2896 = vmatprep.subr.bf16.mxu0 %v2674
    %2897 = vmatpush1.bf16.msra.mxu0 %v2673
    %2898 = vmatprep.subr.bf16.mxu0 %v2678
    %2899 = vmatpush1.bf16.msra.mxu0 %v2677
    %2900 = vmatprep.subr.bf16.mxu0 %v2682
    %2901 = vmatpush1.bf16.msra.mxu0 %v2681
    %2902 = vmatprep.subr.bf16.mxu0 %v2686
    %2903 = vmatpush1.bf16.msra.mxu0 %v2685
    %2904 = vmatprep.subr.bf16.mxu0 %v2690
    %2905 = vmatpush1.bf16.msra.mxu0 %v2689
    %2906 = vmatprep.subr.bf16.mxu0 %v2694
    %2907 = vmatpush1.bf16.msra.mxu0 %v2693
    %2908 = vmatprep.subr.bf16.mxu0 %v2698
    %2909 = vmatpush1.bf16.msra.mxu0 %v2697
    %2910 = vmatprep.subr.bf16.mxu0 %v2702
    %2911 = vmatpush1.bf16.msra.mxu0 %v2701
    %2912 = vmatprep.subr.bf16.mxu0 %v2706
    %2913 = vmatpush1.bf16.msra.mxu0 %v2705
    %2914 = vmatprep.subr.bf16.mxu0 %v2710
    %2915 = vmatpush1.bf16.msra.mxu0 %v2709
    %2916 = vmatprep.subr.bf16.mxu0 %v2714
    %2917 = vmatpush1.bf16.msra.mxu0 %v2713
    %2918 = vmatprep.mubr.bf16.mxu0 %v2054
    %2919 = vmatmul.mubr.bf16.gmra.mrb[0].mxu0 %v2053
    %v2920 = vpop.f32.mrb[0].mxu0
    %v2921 = vadd.f32 %v2880, %v2920
    %v2922 = vpop.f32.mrb[0].mxu0
    %v2923 = vadd.f32 %v2882, %v2922
    %v2924 = vpop.f32.mrb[0].mxu0
    %v2925 = vpop.f32.mrb[0].mxu0
    %2926 = vdwg.mxu0
    %2927 = vmatprep.subr.bf16.mxu0 %v2592
    %2928 = vmatpush1.bf16.msra.mxu0 %v2591
    %2929 = vmatprep.subr.bf16.mxu0 %v2596
    %2930 = vmatpush1.bf16.msra.mxu0 %v2595
    %2931 = vmatprep.subr.bf16.mxu0 %v2600
    %2932 = vmatpush1.bf16.msra.mxu0 %v2599
    %2933 = vmatprep.subr.bf16.mxu0 %v2604
    %2934 = vmatpush1.bf16.msra.mxu0 %v2603
    %2935 = vmatprep.subr.bf16.mxu0 %v2608
    %2936 = vmatpush1.bf16.msra.mxu0 %v2607
    %2937 = vmatprep.subr.bf16.mxu0 %v2612
    %2938 = vmatpush1.bf16.msra.mxu0 %v2611
    %2939 = vmatprep.subr.bf16.mxu0 %v2616
    %2940 = vmatpush1.bf16.msra.mxu0 %v2615
    %2941 = vmatprep.subr.bf16.mxu0 %v2620
    %2942 = vmatpush1.bf16.msra.mxu0 %v2619
    %2943 = vmatprep.subr.bf16.mxu0 %v2624
    %2944 = vmatpush1.bf16.msra.mxu0 %v2623
    %2945 = vmatprep.subr.bf16.mxu0 %v2628
    %2946 = vmatpush1.bf16.msra.mxu0 %v2627
    %2947 = vmatprep.subr.bf16.mxu0 %v2632
    %2948 = vmatpush1.bf16.msra.mxu0 %v2631
    %2949 = vmatprep.subr.bf16.mxu0 %v2636
    %2950 = vmatpush1.bf16.msra.mxu0 %v2635
    %2951 = vmatprep.subr.bf16.mxu0 %v2640
    %2952 = vmatpush1.bf16.msra.mxu0 %v2639
    %2953 = vmatprep.subr.bf16.mxu0 %v2644
    %2954 = vmatpush1.bf16.msra.mxu0 %v2643
    %2955 = vmatprep.subr.bf16.mxu0 %v2648
    %2956 = vmatpush1.bf16.msra.mxu0 %v2647
    %2957 = vmatprep.subr.bf16.mxu0 %v2652
    %2958 = vmatpush1.bf16.msra.mxu0 %v2651
    %2959 = vmatprep.mubr.bf16.mxu0 %v2052
    %2960 = vmatmul.mubr.bf16.gmra.mrb[0].mxu0 %v2051
    %v2961 = vpop.f32.mrb[0].mxu0
    %v2962 = vadd.f32 %v2196, %v2961
    %v2963 = vpop.f32.mrb[0].mxu0
    %v2964 = vadd.f32 %v2200, %v2963
    %v2965 = vpop.f32.mrb[0].mxu0
    %v2966 = vpop.f32.mrb[0].mxu0
    %2967 = vdwg.mxu0
    %2968 = vmatprep.subr.bf16.mxu0 %v2656
    %2969 = vmatpush1.bf16.msra.mxu0 %v2655
    %2970 = vmatprep.subr.bf16.mxu0 %v2660
    %2971 = vmatpush1.bf16.msra.mxu0 %v2659
    %2972 = vmatprep.subr.bf16.mxu0 %v2664
    %2973 = vmatpush1.bf16.msra.mxu0 %v2663
    %2974 = vmatprep.subr.bf16.mxu0 %v2668
    %2975 = vmatpush1.bf16.msra.mxu0 %v2667
    %2976 = vmatprep.subr.bf16.mxu0 %v2672
    %2977 = vmatpush1.bf16.msra.mxu0 %v2671
    %2978 = vmatprep.subr.bf16.mxu0 %v2676
    %2979 = vmatpush1.bf16.msra.mxu0 %v2675
    %2980 = vmatprep.subr.bf16.mxu0 %v2680
    %2981 = vmatpush1.bf16.msra.mxu0 %v2679
    %2982 = vmatprep.subr.bf16.mxu0 %v2684
    %2983 = vmatpush1.bf16.msra.mxu0 %v2683
    %2984 = vmatprep.subr.bf16.mxu0 %v2688
    %2985 = vmatpush1.bf16.msra.mxu0 %v2687
    %2986 = vmatprep.subr.bf16.mxu0 %v2692
    %2987 = vmatpush1.bf16.msra.mxu0 %v2691
    %2988 = vmatprep.subr.bf16.mxu0 %v2696
    %2989 = vmatpush1.bf16.msra.mxu0 %v2695
    %2990 = vmatprep.subr.bf16.mxu0 %v2700
    %2991 = vmatpush1.bf16.msra.mxu0 %v2699
    %2992 = vmatprep.subr.bf16.mxu0 %v2704
    %2993 = vmatpush1.bf16.msra.mxu0 %v2703
    %2994 = vmatprep.subr.bf16.mxu0 %v2708
    %2995 = vmatpush1.bf16.msra.mxu0 %v2707
    %2996 = vmatprep.subr.bf16.mxu0 %v2712
    %2997 = vmatpush1.bf16.msra.mxu0 %v2711
    %2998 = vmatprep.subr.bf16.mxu0 %v2716
    %2999 = vmatpush1.bf16.msra.mxu0 %v2715
    %3000 = vmatprep.mubr.bf16.mxu0 %v2054
    %3001 = vmatmul.mubr.bf16.gmra.mrb[0].mxu0 %v2053
    %v3002 = vpop.f32.mrb[0].mxu0
    %v3003 = vadd.f32 %v2962, %v3002
    %v3004 = vpop.f32.mrb[0].mxu0
    %v3005 = vadd.f32 %v2964, %v3004
    %v3006 = vpop.f32.mrb[0].mxu0
    %v3007 = vpop.f32.mrb[0].mxu0
    %3008 = vdwg.mxu0
    %v3009 = vmax.f32 %v2921, 0.0
    %v3010 = vmax.f32 %v2923, 0.0
    %v3011 = vmax.f32 %v3003, 0.0
    %v3012 = vmax.f32 %v3005, 0.0
    %v3013 = vpack.c.bf16 %v3009, %v3009
    %v3014 = vpack.c.bf16 %v3010, %v3010
    %v3015 = vpack.c.bf16 %v3011, %v3011
    %v3016 = vpack.c.bf16 %v3012, %v3012
    %v3017 = vld [vmem:[%s6] sm:$0xf]
    %v3018 = vld [vmem:[%s6 + $0x4] sm:$0xf]
    %v3019 = vld [vmem:[%s6 + $0x8] sm:$0xf]
    %v3020 = vld [vmem:[%s6 + $0xc] sm:$0xf]
    %v3021 = vld [vmem:[%s6 + $0x10] sm:$0xf]
    %v3022 = vld [vmem:[%s6 + $0x14] sm:$0xf]
    %v3023 = vld [vmem:[%s6 + $0x18] sm:$0xf]
    %v3024 = vld [vmem:[%s6 + $0x1c] sm:$0xf]
    %v3025 = vld [vmem:[%s6 + $0x20] sm:$0xf]
    %v3026 = vld [vmem:[%s6 + $0x24] sm:$0xf]
    %v3027 = vld [vmem:[%s6 + $0x28] sm:$0xf]
    %v3028 = vld [vmem:[%s6 + $0x2c] sm:$0xf]
    %v3029 = vld [vmem:[%s6 + $0x30] sm:$0xf]
    %v3030 = vld [vmem:[%s6 + $0x34] sm:$0xf]
    %v3031 = vld [vmem:[%s6 + $0x38] sm:$0xf]
    %v3032 = vld [vmem:[%s6 + $0x3c] sm:$0xf]
    %v3033 = vld [vmem:[%s6 + $0x40] sm:$0xf]
    %v3034 = vld [vmem:[%s6 + $0x44] sm:$0xf]
    %v3035 = vld [vmem:[%s6 + $0x48] sm:$0xf]
    %v3036 = vld [vmem:[%s6 + $0x4c] sm:$0xf]
    %v3037 = vld [vmem:[%s6 + $0x50] sm:$0xf]
    %v3038 = vld [vmem:[%s6 + $0x54] sm:$0xf]
    %v3039 = vld [vmem:[%s6 + $0x58] sm:$0xf]
    %v3040 = vld [vmem:[%s6 + $0x5c] sm:$0xf]
    %v3041 = vld [vmem:[%s6 + $0x60] sm:$0xf]
    %v3042 = vld [vmem:[%s6 + $0x64] sm:$0xf]
    %v3043 = vld [vmem:[%s6 + $0x68] sm:$0xf]
    %v3044 = vld [vmem:[%s6 + $0x6c] sm:$0xf]
    %v3045 = vld [vmem:[%s6 + $0x70] sm:$0xf]
    %v3046 = vld [vmem:[%s6 + $0x74] sm:$0xf]
    %v3047 = vld [vmem:[%s6 + $0x78] sm:$0xf]
    %v3048 = vld [vmem:[%s6 + $0x7c] sm:$0xf]
    %v3049 = vld [vmem:[%s6 + $0x80] sm:$0xf]
    %v3050 = vld [vmem:[%s6 + $0x84] sm:$0xf]
    %v3051 = vld [vmem:[%s6 + $0x88] sm:$0xf]
    %v3052 = vld [vmem:[%s6 + $0x8c] sm:$0xf]
    %v3053 = vld [vmem:[%s6 + $0x90] sm:$0xf]
    %v3054 = vld [vmem:[%s6 + $0x94] sm:$0xf]
    %v3055 = vld [vmem:[%s6 + $0x98] sm:$0xf]
    %v3056 = vld [vmem:[%s6 + $0x9c] sm:$0xf]
    %v3057 = vld [vmem:[%s6 + $0xa0] sm:$0xf]
    %v3058 = vld [vmem:[%s6 + $0xa4] sm:$0xf]
    %v3059 = vld [vmem:[%s6 + $0xa8] sm:$0xf]
    %v3060 = vld [vmem:[%s6 + $0xac] sm:$0xf]
    %v3061 = vld [vmem:[%s6 + $0xb0] sm:$0xf]
    %v3062 = vld [vmem:[%s6 + $0xb4] sm:$0xf]
    %v3063 = vld [vmem:[%s6 + $0xb8] sm:$0xf]
    %v3064 = vld [vmem:[%s6 + $0xbc] sm:$0xf]
    %v3065 = vld [vmem:[%s6 + $0xc0] sm:$0xf]
    %v3066 = vld [vmem:[%s6 + $0xc4] sm:$0xf]
    %v3067 = vld [vmem:[%s6 + $0xc8] sm:$0xf]
    %v3068 = vld [vmem:[%s6 + $0xcc] sm:$0xf]
    %v3069 = vld [vmem:[%s6 + $0xd0] sm:$0xf]
    %v3070 = vld [vmem:[%s6 + $0xd4] sm:$0xf]
    %v3071 = vld [vmem:[%s6 + $0xd8] sm:$0xf]
    %v3072 = vld [vmem:[%s6 + $0xdc] sm:$0xf]
    %v3073 = vld [vmem:[%s6 + $0xe0] sm:$0xf]
    %v3074 = vld [vmem:[%s6 + $0xe4] sm:$0xf]
    %v3075 = vld [vmem:[%s6 + $0xe8] sm:$0xf]
    %v3076 = vld [vmem:[%s6 + $0xec] sm:$0xf]
    %v3077 = vld [vmem:[%s6 + $0xf0] sm:$0xf]
    %v3078 = vld [vmem:[%s6 + $0xf4] sm:$0xf]
    %v3079 = vld [vmem:[%s6 + $0xf8] sm:$0xf]
    %v3080 = vld [vmem:[%s6 + $0xfc] sm:$0xf]
    %v3081 = vld [vmem:[%s6 + $0x100] sm:$0xf]
    %v3082 = vld [vmem:[%s6 + $0x104] sm:$0xf]
    %v3083 = vld [vmem:[%s6 + $0x108] sm:$0xf]
    %v3084 = vld [vmem:[%s6 + $0x10c] sm:$0xf]
    %v3085 = vld [vmem:[%s6 + $0x110] sm:$0xf]
    %v3086 = vld [vmem:[%s6 + $0x114] sm:$0xf]
    %v3087 = vld [vmem:[%s6 + $0x118] sm:$0xf]
    %v3088 = vld [vmem:[%s6 + $0x11c] sm:$0xf]
    %v3089 = vld [vmem:[%s6 + $0x120] sm:$0xf]
    %v3090 = vld [vmem:[%s6 + $0x124] sm:$0xf]
    %v3091 = vld [vmem:[%s6 + $0x128] sm:$0xf]
    %v3092 = vld [vmem:[%s6 + $0x12c] sm:$0xf]
    %v3093 = vld [vmem:[%s6 + $0x130] sm:$0xf]
    %v3094 = vld [vmem:[%s6 + $0x134] sm:$0xf]
    %v3095 = vld [vmem:[%s6 + $0x138] sm:$0xf]
    %v3096 = vld [vmem:[%s6 + $0x13c] sm:$0xf]
    %v3097 = vld [vmem:[%s6 + $0x140] sm:$0xf]
    %v3098 = vld [vmem:[%s6 + $0x144] sm:$0xf]
    %v3099 = vld [vmem:[%s6 + $0x148] sm:$0xf]
    %v3100 = vld [vmem:[%s6 + $0x14c] sm:$0xf]
    %v3101 = vld [vmem:[%s6 + $0x150] sm:$0xf]
    %v3102 = vld [vmem:[%s6 + $0x154] sm:$0xf]
    %v3103 = vld [vmem:[%s6 + $0x158] sm:$0xf]
    %v3104 = vld [vmem:[%s6 + $0x15c] sm:$0xf]
    %v3105 = vld [vmem:[%s6 + $0x160] sm:$0xf]
    %v3106 = vld [vmem:[%s6 + $0x164] sm:$0xf]
    %v3107 = vld [vmem:[%s6 + $0x168] sm:$0xf]
    %v3108 = vld [vmem:[%s6 + $0x16c] sm:$0xf]
    %v3109 = vld [vmem:[%s6 + $0x170] sm:$0xf]
    %v3110 = vld [vmem:[%s6 + $0x174] sm:$0xf]
    %v3111 = vld [vmem:[%s6 + $0x178] sm:$0xf]
    %v3112 = vld [vmem:[%s6 + $0x17c] sm:$0xf]
    %v3113 = vld [vmem:[%s6 + $0x180] sm:$0xf]
    %v3114 = vld [vmem:[%s6 + $0x184] sm:$0xf]
    %v3115 = vld [vmem:[%s6 + $0x188] sm:$0xf]
    %v3116 = vld [vmem:[%s6 + $0x18c] sm:$0xf]
    %v3117 = vld [vmem:[%s6 + $0x190] sm:$0xf]
    %v3118 = vld [vmem:[%s6 + $0x194] sm:$0xf]
    %v3119 = vld [vmem:[%s6 + $0x198] sm:$0xf]
    %v3120 = vld [vmem:[%s6 + $0x19c] sm:$0xf]
    %v3121 = vld [vmem:[%s6 + $0x1a0] sm:$0xf]
    %v3122 = vld [vmem:[%s6 + $0x1a4] sm:$0xf]
    %v3123 = vld [vmem:[%s6 + $0x1a8] sm:$0xf]
    %v3124 = vld [vmem:[%s6 + $0x1ac] sm:$0xf]
    %v3125 = vld [vmem:[%s6 + $0x1b0] sm:$0xf]
    %v3126 = vld [vmem:[%s6 + $0x1b4] sm:$0xf]
    %v3127 = vld [vmem:[%s6 + $0x1b8] sm:$0xf]
    %v3128 = vld [vmem:[%s6 + $0x1bc] sm:$0xf]
    %v3129 = vld [vmem:[%s6 + $0x1c0] sm:$0xf]
    %v3130 = vld [vmem:[%s6 + $0x1c4] sm:$0xf]
    %v3131 = vld [vmem:[%s6 + $0x1c8] sm:$0xf]
    %v3132 = vld [vmem:[%s6 + $0x1cc] sm:$0xf]
    %v3133 = vld [vmem:[%s6 + $0x1d0] sm:$0xf]
    %v3134 = vld [vmem:[%s6 + $0x1d4] sm:$0xf]
    %v3135 = vld [vmem:[%s6 + $0x1d8] sm:$0xf]
    %v3136 = vld [vmem:[%s6 + $0x1dc] sm:$0xf]
    %v3137 = vld [vmem:[%s6 + $0x1e0] sm:$0xf]
    %v3138 = vld [vmem:[%s6 + $0x1e4] sm:$0xf]
    %v3139 = vld [vmem:[%s6 + $0x1e8] sm:$0xf]
    %v3140 = vld [vmem:[%s6 + $0x1ec] sm:$0xf]
    %v3141 = vld [vmem:[%s6 + $0x1f0] sm:$0xf]
    %v3142 = vld [vmem:[%s6 + $0x1f4] sm:$0xf]
    %v3143 = vld [vmem:[%s6 + $0x1f8] sm:$0xf]
    %v3144 = vld [vmem:[%s6 + $0x1fc] sm:$0xf]
    %v3145 = vld [vmem:[#allocation10 + $0x20] sm:$0x1]
    %v3147 = vlaneseq
    %v3148 = vshrl.u32 %v3147, 7
    %v3149 = vsub.s32 0, %v3148
    %v3150 = vrot.slane %v3145, %v3149
    %v3280 = vunpack.c.l.b16 %v3017
    %v3281 = vunpack.c.l.b16 %v3018
    %v3282 = vunpack.c.l.b16 %v3019
    %v3283 = vunpack.c.l.b16 %v3020
    %v3284 = vunpack.c.l.b16 %v3021
    %v3285 = vunpack.c.l.b16 %v3022
    %v3286 = vunpack.c.l.b16 %v3023
    %v3287 = vunpack.c.l.b16 %v3024
    %v3288 = vunpack.c.l.b16 %v3025
    %v3289 = vunpack.c.l.b16 %v3026
    %v3290 = vunpack.c.l.b16 %v3027
    %v3291 = vunpack.c.l.b16 %v3028
    %v3292 = vunpack.c.l.b16 %v3029
    %v3293 = vunpack.c.l.b16 %v3030
    %v3294 = vunpack.c.l.b16 %v3031
    %v3295 = vunpack.c.l.b16 %v3032
    %v3296 = vunpack.c.l.b16 %v3033
    %v3297 = vunpack.c.l.b16 %v3034
    %v3298 = vunpack.c.l.b16 %v3035
    %v3299 = vunpack.c.l.b16 %v3036
    %v3300 = vunpack.c.l.b16 %v3037
    %v3301 = vunpack.c.l.b16 %v3038
    %v3302 = vunpack.c.l.b16 %v3039
    %v3303 = vunpack.c.l.b16 %v3040
    %v3304 = vunpack.c.l.b16 %v3041
    %v3305 = vunpack.c.l.b16 %v3042
    %v3306 = vunpack.c.l.b16 %v3043
    %v3307 = vunpack.c.l.b16 %v3044
    %v3308 = vunpack.c.l.b16 %v3045
    %v3309 = vunpack.c.l.b16 %v3046
    %v3310 = vunpack.c.l.b16 %v3047
    %v3311 = vunpack.c.l.b16 %v3048
    %v3312 = vunpack.c.l.b16 %v3049
    %v3313 = vunpack.c.l.b16 %v3050
    %v3314 = vunpack.c.l.b16 %v3051
    %v3315 = vunpack.c.l.b16 %v3052
    %v3316 = vunpack.c.l.b16 %v3053
    %v3317 = vunpack.c.l.b16 %v3054
    %v3318 = vunpack.c.l.b16 %v3055
    %v3319 = vunpack.c.l.b16 %v3056
    %v3320 = vunpack.c.l.b16 %v3057
    %v3321 = vunpack.c.l.b16 %v3058
    %v3322 = vunpack.c.l.b16 %v3059
    %v3323 = vunpack.c.l.b16 %v3060
    %v3324 = vunpack.c.l.b16 %v3061
    %v3325 = vunpack.c.l.b16 %v3062
    %v3326 = vunpack.c.l.b16 %v3063
    %v3327 = vunpack.c.l.b16 %v3064
    %v3328 = vunpack.c.l.b16 %v3065
    %v3329 = vunpack.c.l.b16 %v3066
    %v3330 = vunpack.c.l.b16 %v3067
    %v3331 = vunpack.c.l.b16 %v3068
    %v3332 = vunpack.c.l.b16 %v3069
    %v3333 = vunpack.c.l.b16 %v3070
    %v3334 = vunpack.c.l.b16 %v3071
    %v3335 = vunpack.c.l.b16 %v3072
    %v3336 = vunpack.c.l.b16 %v3073
    %v3337 = vunpack.c.l.b16 %v3074
    %v3338 = vunpack.c.l.b16 %v3075
    %v3339 = vunpack.c.l.b16 %v3076
    %v3340 = vunpack.c.l.b16 %v3077
    %v3341 = vunpack.c.l.b16 %v3078
    %v3342 = vunpack.c.l.b16 %v3079
    %v3343 = vunpack.c.l.b16 %v3080
    %v3344 = vunpack.c.l.b16 %v3081
    %v3345 = vunpack.c.l.b16 %v3082
    %v3346 = vunpack.c.l.b16 %v3083
    %v3347 = vunpack.c.l.b16 %v3084
    %v3348 = vunpack.c.l.b16 %v3085
    %v3349 = vunpack.c.l.b16 %v3086
    %v3350 = vunpack.c.l.b16 %v3087
    %v3351 = vunpack.c.l.b16 %v3088
    %v3352 = vunpack.c.l.b16 %v3089
    %v3353 = vunpack.c.l.b16 %v3090
    %v3354 = vunpack.c.l.b16 %v3091
    %v3355 = vunpack.c.l.b16 %v3092
    %v3356 = vunpack.c.l.b16 %v3093
    %v3357 = vunpack.c.l.b16 %v3094
    %v3358 = vunpack.c.l.b16 %v3095
    %v3359 = vunpack.c.l.b16 %v3096
    %v3360 = vunpack.c.l.b16 %v3097
    %v3361 = vunpack.c.l.b16 %v3098
    %v3362 = vunpack.c.l.b16 %v3099
    %v3363 = vunpack.c.l.b16 %v3100
    %v3364 = vunpack.c.l.b16 %v3101
    %v3365 = vunpack.c.l.b16 %v3102
    %v3366 = vunpack.c.l.b16 %v3103
    %v3367 = vunpack.c.l.b16 %v3104
    %v3368 = vunpack.c.l.b16 %v3105
    %v3369 = vunpack.c.l.b16 %v3106
    %v3370 = vunpack.c.l.b16 %v3107
    %v3371 = vunpack.c.l.b16 %v3108
    %v3372 = vunpack.c.l.b16 %v3109
    %v3373 = vunpack.c.l.b16 %v3110
    %v3374 = vunpack.c.l.b16 %v3111
    %v3375 = vunpack.c.l.b16 %v3112
    %v3376 = vunpack.c.l.b16 %v3113
    %v3377 = vunpack.c.l.b16 %v3114
    %v3378 = vunpack.c.l.b16 %v3115
    %v3379 = vunpack.c.l.b16 %v3116
    %v3380 = vunpack.c.l.b16 %v3117
    %v3381 = vunpack.c.l.b16 %v3118
    %v3382 = vunpack.c.l.b16 %v3119
    %v3383 = vunpack.c.l.b16 %v3120
    %v3384 = vunpack.c.l.b16 %v3121
    %v3385 = vunpack.c.l.b16 %v3122
    %v3386 = vunpack.c.l.b16 %v3123
    %v3387 = vunpack.c.l.b16 %v3124
    %v3388 = vunpack.c.l.b16 %v3125
    %v3389 = vunpack.c.l.b16 %v3126
    %v3390 = vunpack.c.l.b16 %v3127
    %v3391 = vunpack.c.l.b16 %v3128
    %v3392 = vunpack.c.l.b16 %v3129
    %v3393 = vunpack.c.l.b16 %v3130
    %v3394 = vunpack.c.l.b16 %v3131
    %v3395 = vunpack.c.l.b16 %v3132
    %v3396 = vunpack.c.l.b16 %v3133
    %v3397 = vunpack.c.l.b16 %v3134
    %v3398 = vunpack.c.l.b16 %v3135
    %v3399 = vunpack.c.l.b16 %v3136
    %v3400 = vunpack.c.l.b16 %v3137
    %v3401 = vunpack.c.l.b16 %v3138
    %v3402 = vunpack.c.l.b16 %v3139
    %v3403 = vunpack.c.l.b16 %v3140
    %v3404 = vunpack.c.l.b16 %v3141
    %v3405 = vunpack.c.l.b16 %v3142
    %v3406 = vunpack.c.l.b16 %v3143
    %v3407 = vunpack.c.l.b16 %v3144
    %v3408 = vpack.c.b16 %v3281, %v3280
    %v3409 = vpack.c.b16 %v3283, %v3282
    %v3410 = vpack.c.b16 %v3285, %v3284
    %v3411 = vpack.c.b16 %v3287, %v3286
    %v3412 = vpack.c.b16 %v3289, %v3288
    %v3413 = vpack.c.b16 %v3291, %v3290
    %v3414 = vpack.c.b16 %v3293, %v3292
    %v3415 = vpack.c.b16 %v3295, %v3294
    %v3416 = vpack.c.b16 %v3297, %v3296
    %v3417 = vpack.c.b16 %v3299, %v3298
    %v3418 = vpack.c.b16 %v3301, %v3300
    %v3419 = vpack.c.b16 %v3303, %v3302
    %v3420 = vpack.c.b16 %v3305, %v3304
    %v3421 = vpack.c.b16 %v3307, %v3306
    %v3422 = vpack.c.b16 %v3309, %v3308
    %v3423 = vpack.c.b16 %v3311, %v3310
    %v3424 = vpack.c.b16 %v3313, %v3312
    %v3425 = vpack.c.b16 %v3315, %v3314
    %v3426 = vpack.c.b16 %v3317, %v3316
    %v3427 = vpack.c.b16 %v3319, %v3318
    %v3428 = vpack.c.b16 %v3321, %v3320
    %v3429 = vpack.c.b16 %v3323, %v3322
    %v3430 = vpack.c.b16 %v3325, %v3324
    %v3431 = vpack.c.b16 %v3327, %v3326
    %v3432 = vpack.c.b16 %v3329, %v3328
    %v3433 = vpack.c.b16 %v3331, %v3330
    %v3434 = vpack.c.b16 %v3333, %v3332
    %v3435 = vpack.c.b16 %v3335, %v3334
    %v3436 = vpack.c.b16 %v3337, %v3336
    %v3437 = vpack.c.b16 %v3339, %v3338
    %v3438 = vpack.c.b16 %v3341, %v3340
    %v3439 = vpack.c.b16 %v3343, %v3342
    %v3440 = vpack.c.b16 %v3345, %v3344
    %v3441 = vpack.c.b16 %v3347, %v3346
    %v3442 = vpack.c.b16 %v3349, %v3348
    %v3443 = vpack.c.b16 %v3351, %v3350
    %v3444 = vpack.c.b16 %v3353, %v3352
    %v3445 = vpack.c.b16 %v3355, %v3354
    %v3446 = vpack.c.b16 %v3357, %v3356
    %v3447 = vpack.c.b16 %v3359, %v3358
    %v3448 = vpack.c.b16 %v3361, %v3360
    %v3449 = vpack.c.b16 %v3363, %v3362
    %v3450 = vpack.c.b16 %v3365, %v3364
    %v3451 = vpack.c.b16 %v3367, %v3366
    %v3452 = vpack.c.b16 %v3369, %v3368
    %v3453 = vpack.c.b16 %v3371, %v3370
    %v3454 = vpack.c.b16 %v3373, %v3372
    %v3455 = vpack.c.b16 %v3375, %v3374
    %v3456 = vpack.c.b16 %v3377, %v3376
    %v3457 = vpack.c.b16 %v3379, %v3378
    %v3458 = vpack.c.b16 %v3381, %v3380
    %v3459 = vpack.c.b16 %v3383, %v3382
    %v3460 = vpack.c.b16 %v3385, %v3384
    %v3461 = vpack.c.b16 %v3387, %v3386
    %v3462 = vpack.c.b16 %v3389, %v3388
    %v3463 = vpack.c.b16 %v3391, %v3390
    %v3464 = vpack.c.b16 %v3393, %v3392
    %v3465 = vpack.c.b16 %v3395, %v3394
    %v3466 = vpack.c.b16 %v3397, %v3396
    %v3467 = vpack.c.b16 %v3399, %v3398
    %v3468 = vpack.c.b16 %v3401, %v3400
    %v3469 = vpack.c.b16 %v3403, %v3402
    %v3470 = vpack.c.b16 %v3405, %v3404
    %v3471 = vpack.c.b16 %v3407, %v3406
    %3536 = vmatprep.subr.bf16.mxu0 0
    %3537 = vmatpush1.bf16.msra.mxu0 %v3408
    %3538 = vmatprep.subr.bf16.mxu0 0
    %3539 = vmatpush1.bf16.msra.mxu0 %v3409
    %3540 = vmatprep.subr.bf16.mxu0 0
    %3541 = vmatpush1.bf16.msra.mxu0 %v3410
    %3542 = vmatprep.subr.bf16.mxu0 0
    %3543 = vmatpush1.bf16.msra.mxu0 %v3411
    %3544 = vmatprep.subr.bf16.mxu0 0
    %3545 = vmatpush1.bf16.msra.mxu0 %v3412
    %3546 = vmatprep.subr.bf16.mxu0 0
    %3547 = vmatpush1.bf16.msra.mxu0 %v3413
    %3548 = vmatprep.subr.bf16.mxu0 0
    %3549 = vmatpush1.bf16.msra.mxu0 %v3414
    %3550 = vmatprep.subr.bf16.mxu0 0
    %3551 = vmatpush1.bf16.msra.mxu0 %v3415
    %3552 = vmatprep.subr.bf16.mxu0 0
    %3553 = vmatpush1.bf16.msra.mxu0 %v3416
    %3554 = vmatprep.subr.bf16.mxu0 0
    %3555 = vmatpush1.bf16.msra.mxu0 %v3417
    %3556 = vmatprep.subr.bf16.mxu0 0
    %3557 = vmatpush1.bf16.msra.mxu0 %v3418
    %3558 = vmatprep.subr.bf16.mxu0 0
    %3559 = vmatpush1.bf16.msra.mxu0 %v3419
    %3560 = vmatprep.subr.bf16.mxu0 0
    %3561 = vmatpush1.bf16.msra.mxu0 %v3420
    %3562 = vmatprep.subr.bf16.mxu0 0
    %3563 = vmatpush1.bf16.msra.mxu0 %v3421
    %3564 = vmatprep.subr.bf16.mxu0 0
    %3565 = vmatpush1.bf16.msra.mxu0 %v3422
    %3566 = vmatprep.subr.bf16.mxu0 0
    %3567 = vmatpush1.bf16.msra.mxu0 %v3423
    %3568 = vmatprep.mubr.bf16.mxu0 %v2044
    %3569 = vmatmul.mubr.bf16.gmra.mrb[0].mxu0 %v2043
    %v3570 = vpop.f32.mrb[0].mxu0
    %v3571 = vadd.f32 %v3150, %v3570
    %v3572 = vpop.f32.mrb[0].mxu0
    %v3573 = vpop.f32.mrb[0].mxu0
    %v3574 = vpop.f32.mrb[0].mxu0
    %3575 = vdwg.mxu0
    %3576 = vmatprep.subr.bf16.mxu0 0
    %3577 = vmatpush1.bf16.msra.mxu0 %v3424
    %3578 = vmatprep.subr.bf16.mxu0 0
    %3579 = vmatpush1.bf16.msra.mxu0 %v3425
    %3580 = vmatprep.subr.bf16.mxu0 0
    %3581 = vmatpush1.bf16.msra.mxu0 %v3426
    %3582 = vmatprep.subr.bf16.mxu0 0
    %3583 = vmatpush1.bf16.msra.mxu0 %v3427
    %3584 = vmatprep.subr.bf16.mxu0 0
    %3585 = vmatpush1.bf16.msra.mxu0 %v3428
    %3586 = vmatprep.subr.bf16.mxu0 0
    %3587 = vmatpush1.bf16.msra.mxu0 %v3429
    %3588 = vmatprep.subr.bf16.mxu0 0
    %3589 = vmatpush1.bf16.msra.mxu0 %v3430
    %3590 = vmatprep.subr.bf16.mxu0 0
    %3591 = vmatpush1.bf16.msra.mxu0 %v3431
    %3592 = vmatprep.subr.bf16.mxu0 0
    %3593 = vmatpush1.bf16.msra.mxu0 %v3432
    %3594 = vmatprep.subr.bf16.mxu0 0
    %3595 = vmatpush1.bf16.msra.mxu0 %v3433
    %3596 = vmatprep.subr.bf16.mxu0 0
    %3597 = vmatpush1.bf16.msra.mxu0 %v3434
    %3598 = vmatprep.subr.bf16.mxu0 0
    %3599 = vmatpush1.bf16.msra.mxu0 %v3435
    %3600 = vmatprep.subr.bf16.mxu0 0
    %3601 = vmatpush1.bf16.msra.mxu0 %v3436
    %3602 = vmatprep.subr.bf16.mxu0 0
    %3603 = vmatpush1.bf16.msra.mxu0 %v3437
    %3604 = vmatprep.subr.bf16.mxu0 0
    %3605 = vmatpush1.bf16.msra.mxu0 %v3438
    %3606 = vmatprep.subr.bf16.mxu0 0
    %3607 = vmatpush1.bf16.msra.mxu0 %v3439
    %3608 = vmatprep.mubr.bf16.mxu0 %v2046
    %3609 = vmatmul.mubr.bf16.gmra.mrb[0].mxu0 %v2045
    %v3610 = vpop.f32.mrb[0].mxu0
    %v3611 = vadd.f32 %v3571, %v3610
    %v3612 = vpop.f32.mrb[0].mxu0
    %v3613 = vpop.f32.mrb[0].mxu0
    %v3614 = vpop.f32.mrb[0].mxu0
    %3615 = vdwg.mxu0
    %3616 = vmatprep.subr.bf16.mxu0 0
    %3617 = vmatpush1.bf16.msra.mxu0 %v3440
    %3618 = vmatprep.subr.bf16.mxu0 0
    %3619 = vmatpush1.bf16.msra.mxu0 %v3441
    %3620 = vmatprep.subr.bf16.mxu0 0
    %3621 = vmatpush1.bf16.msra.mxu0 %v3442
    %3622 = vmatprep.subr.bf16.mxu0 0
    %3623 = vmatpush1.bf16.msra.mxu0 %v3443
    %3624 = vmatprep.subr.bf16.mxu0 0
    %3625 = vmatpush1.bf16.msra.mxu0 %v3444
    %3626 = vmatprep.subr.bf16.mxu0 0
    %3627 = vmatpush1.bf16.msra.mxu0 %v3445
    %3628 = vmatprep.subr.bf16.mxu0 0
    %3629 = vmatpush1.bf16.msra.mxu0 %v3446
    %3630 = vmatprep.subr.bf16.mxu0 0
    %3631 = vmatpush1.bf16.msra.mxu0 %v3447
    %3632 = vmatprep.subr.bf16.mxu0 0
    %3633 = vmatpush1.bf16.msra.mxu0 %v3448
    %3634 = vmatprep.subr.bf16.mxu0 0
    %3635 = vmatpush1.bf16.msra.mxu0 %v3449
    %3636 = vmatprep.subr.bf16.mxu0 0
    %3637 = vmatpush1.bf16.msra.mxu0 %v3450
    %3638 = vmatprep.subr.bf16.mxu0 0
    %3639 = vmatpush1.bf16.msra.mxu0 %v3451
    %3640 = vmatprep.subr.bf16.mxu0 0
    %3641 = vmatpush1.bf16.msra.mxu0 %v3452
    %3642 = vmatprep.subr.bf16.mxu0 0
    %3643 = vmatpush1.bf16.msra.mxu0 %v3453
    %3644 = vmatprep.subr.bf16.mxu0 0
    %3645 = vmatpush1.bf16.msra.mxu0 %v3454
    %3646 = vmatprep.subr.bf16.mxu0 0
    %3647 = vmatpush1.bf16.msra.mxu0 %v3455
    %3648 = vmatprep.mubr.bf16.mxu0 %v3014
    %3649 = vmatmul.mubr.bf16.gmra.mrb[0].mxu0 %v3013
    %v3650 = vpop.f32.mrb[0].mxu0
    %v3651 = vadd.f32 %v3611, %v3650
    %v3652 = vpop.f32.mrb[0].mxu0
    %v3653 = vpop.f32.mrb[0].mxu0
    %v3654 = vpop.f32.mrb[0].mxu0
    %3655 = vdwg.mxu0
    %3656 = vmatprep.subr.bf16.mxu0 0
    %3657 = vmatpush1.bf16.msra.mxu0 %v3456
    %3658 = vmatprep.subr.bf16.mxu0 0
    %3659 = vmatpush1.bf16.msra.mxu0 %v3457
    %3660 = vmatprep.subr.bf16.mxu0 0
    %3661 = vmatpush1.bf16.msra.mxu0 %v3458
    %3662 = vmatprep.subr.bf16.mxu0 0
    %3663 = vmatpush1.bf16.msra.mxu0 %v3459
    %3664 = vmatprep.subr.bf16.mxu0 0
    %3665 = vmatpush1.bf16.msra.mxu0 %v3460
    %3666 = vmatprep.subr.bf16.mxu0 0
    %3667 = vmatpush1.bf16.msra.mxu0 %v3461
    %3668 = vmatprep.subr.bf16.mxu0 0
    %3669 = vmatpush1.bf16.msra.mxu0 %v3462
    %3670 = vmatprep.subr.bf16.mxu0 0
    %3671 = vmatpush1.bf16.msra.mxu0 %v3463
    %3672 = vmatprep.subr.bf16.mxu0 0
    %3673 = vmatpush1.bf16.msra.mxu0 %v3464
    %3674 = vmatprep.subr.bf16.mxu0 0
    %3675 = vmatpush1.bf16.msra.mxu0 %v3465
    %3676 = vmatprep.subr.bf16.mxu0 0
    %3677 = vmatpush1.bf16.msra.mxu0 %v3466
    %3678 = vmatprep.subr.bf16.mxu0 0
    %3679 = vmatpush1.bf16.msra.mxu0 %v3467
    %3680 = vmatprep.subr.bf16.mxu0 0
    %3681 = vmatpush1.bf16.msra.mxu0 %v3468
    %3682 = vmatprep.subr.bf16.mxu0 0
    %3683 = vmatpush1.bf16.msra.mxu0 %v3469
    %3684 = vmatprep.subr.bf16.mxu0 0
    %3685 = vmatpush1.bf16.msra.mxu0 %v3470
    %3686 = vmatprep.subr.bf16.mxu0 0
    %3687 = vmatpush1.bf16.msra.mxu0 %v3471
    %3688 = vmatprep.mubr.bf16.mxu0 %v3016
    %3689 = vmatmul.mubr.bf16.gmra.mrb[0].mxu0 %v3015
    %v3690 = vpop.f32.mrb[0].mxu0
    %v3691 = vadd.f32 %v3651, %v3690
    %v3692 = vpop.f32.mrb[0].mxu0
    %v3693 = vpop.f32.mrb[0].mxu0
    %v3694 = vpop.f32.mrb[0].mxu0
    %3695 = vdwg.mxu0
    %vm3696 = vcmask 113664
    %3697 = vst.msk [vmem:[%s8] sm:$0xff] %vm3696, %v3691
    %v3698 = vlaneseq
    %v3699 = vand.u32 %v3698, 127
    %vm3700 = vcmask 31744
    %v3701 = vsel %vm3700, %v3691, -inf
    %3702 = vmax.xlane.f32.xlu0 %v3701
    %v3703 = vpop.xlane.xlu0 %3702
    %v3704 = vsub.f32 %v3691, %v3703
    %v3705 = vmul.f32 %v3704, 1.442695
    %v3706 = vpow.pop %v3705
    %v3707 = vsel %vm3700, %v3706, 0.0
    %3708 = vadd.xlane.f32.xlu0 %v3707
    %v3709 = vpop.xlane.xlu0 %3708
    %v3710 = vrcp.pop %v3709
    %v3711 = vmul.f32 %v3706, %v3710
    %vm3712 = vcmp.ge.f32.partialorder %v3691, %v3703
    %v3713 = vsel %vm3712, %v3699, 4
    %v3714 = vsel %vm3700, %v3713, 2147483647
    %v3715 = vand.u32 %v3714, 65535
    %v3716 = vshra.s32 %v3714, 16
    %v3717 = vcvt.s32.f32 %v3715
    %v3718 = vcvt.s32.f32 %v3716
    %3719 = vmin.xlane.f32.xlu0 %v3718
    %v3720 = vpop.xlane.xlu0 %3719
    %vm3721 = vcmp.eq.f32.partialorder %v3718, %v3720
    %v3722 = vsel %vm3721, %v3717, inf
    %3723 = vmin.xlane.f32.xlu0 %v3722
    %v3724 = vpop.xlane.xlu0 %3723
    %v3725 = vcvt.f32.s32 %v3724
    %v3726 = vcvt.f32.s32 %v3720
    %v3727 = vshll.u32 %v3726, 16
    %v3728 = vadd.s32 %v3727, %v3725
    %vm3729 = vcmp.eq.s32.totalorder %v3699, %v3728
    %v3730 = vsel %vm3729, 1.0, 0.0
    %3731 = vst.msk [vmem:[%s8 + $0x48] sm:$0xff] %vm3700, %v3730
    %3732 = vst.msk [vmem:[%s8 + $0x50] sm:$0xff] %vm3700, %v3711
    %v3733 = vld [vmem:[#allocation7] sm:$0xff]
    %v3734 = vld [vmem:[#allocation7 + $0x8] sm:$0xff]
    %v3735 = vld [vmem:[#allocation7 + $0x10] sm:$0xff]
    %v3736 = vld [vmem:[#allocation7 + $0x18] sm:$0xff]
    %v3737 = vld [vmem:[#allocation7 + $0x20] sm:$0xff]
    %v3738 = vld [vmem:[#allocation7 + $0x28] sm:$0xff]
    %v3739 = vld [vmem:[#allocation7 + $0x30] sm:$0xff]
    %v3740 = vld [vmem:[#allocation7 + $0x38] sm:$0xff]
    %v3741 = vld [vmem:[#allocation7 + $0x40] sm:$0xff]
    %v3742 = vld [vmem:[#allocation7 + $0x48] sm:$0xff]
    %v3743 = vld [vmem:[#allocation7 + $0x50] sm:$0xff]
    %v3744 = vld [vmem:[#allocation7 + $0x58] sm:$0xff]
    %v3745 = vld [vmem:[#allocation7 + $0x60] sm:$0xff]
    %v3746 = vld [vmem:[#allocation7 + $0x68] sm:$0xff]
    %v3747 = vld [vmem:[#allocation7 + $0x70] sm:$0xff]
    %v3748 = vld [vmem:[#allocation7 + $0x78] sm:$0xff]
    %v3749 = vld [vmem:[#allocation7 + $0x80] sm:$0xff]
    %v3750 = vld [vmem:[#allocation7 + $0x88] sm:$0xff]
    %v3751 = vld [vmem:[#allocation7 + $0x90] sm:$0xff]
    %v3752 = vld [vmem:[#allocation7 + $0x98] sm:$0xff]
    %v3753 = vld [vmem:[#allocation7 + $0xa0] sm:$0xff]
    %v3754 = vld [vmem:[#allocation7 + $0xa8] sm:$0xff]
    %v3755 = vld [vmem:[#allocation7 + $0xb0] sm:$0xff]
    %v3756 = vld [vmem:[#allocation7 + $0xb8] sm:$0xff]
    %v3757 = vld [vmem:[#allocation7 + $0xc0] sm:$0xff]
    %v3758 = vld [vmem:[#allocation7 + $0xc8] sm:$0xff]
    %v3759 = vld [vmem:[#allocation7 + $0xd0] sm:$0xff]
    %v3760 = vld [vmem:[#allocation7 + $0xd8] sm:$0xff]
    %v3761 = vld [vmem:[#allocation7 + $0xe0] sm:$0xff]
    %v3762 = vld [vmem:[#allocation7 + $0xe8] sm:$0xff]
    %v3763 = vld [vmem:[#allocation7 + $0xf0] sm:$0xff]
    %v3764 = vld [vmem:[#allocation7 + $0xf8] sm:$0xff]
    %v3765 = vld [vmem:[#allocation7 + $0x100] sm:$0xff]
    %v3766 = vld [vmem:[#allocation7 + $0x108] sm:$0xff]
    %v3767 = vld [vmem:[#allocation7 + $0x110] sm:$0xff]
    %v3768 = vld [vmem:[#allocation7 + $0x118] sm:$0xff]
    %v3769 = vld [vmem:[#allocation7 + $0x120] sm:$0xff]
    %v3770 = vld [vmem:[#allocation7 + $0x128] sm:$0xff]
    %v3771 = vld [vmem:[#allocation7 + $0x130] sm:$0xff]
    %v3772 = vld [vmem:[#allocation7 + $0x138] sm:$0xff]
    %v3773 = vld [vmem:[#allocation7 + $0x140] sm:$0xff]
    %v3774 = vld [vmem:[#allocation7 + $0x148] sm:$0xff]
    %v3775 = vld [vmem:[#allocation7 + $0x150] sm:$0xff]
    %v3776 = vld [vmem:[#allocation7 + $0x158] sm:$0xff]
    %v3777 = vld [vmem:[#allocation7 + $0x160] sm:$0xff]
    %v3778 = vld [vmem:[#allocation7 + $0x168] sm:$0xff]
    %v3779 = vld [vmem:[#allocation7 + $0x170] sm:$0xff]
    %v3780 = vld [vmem:[#allocation7 + $0x178] sm:$0xff]
    %v3781 = vld [vmem:[#allocation7 + $0x180] sm:$0xff]
    %v3782 = vld [vmem:[#allocation7 + $0x188] sm:$0xff]
    %v3783 = vld [vmem:[#allocation7 + $0x190] sm:$0xff]
    %v3784 = vld [vmem:[#allocation7 + $0x198] sm:$0xff]
    %v3785 = vld [vmem:[#allocation7 + $0x1a0] sm:$0xff]
    %v3786 = vld [vmem:[#allocation7 + $0x1a8] sm:$0xff]
    %v3787 = vld [vmem:[#allocation7 + $0x1b0] sm:$0xff]
    %v3788 = vld [vmem:[#allocation7 + $0x1b8] sm:$0xff]
    %v3789 = vld [vmem:[#allocation7 + $0x1c0] sm:$0xff]
    %v3790 = vld [vmem:[#allocation7 + $0x1c8] sm:$0xff]
    %v3791 = vld [vmem:[#allocation7 + $0x1d0] sm:$0xff]
    %v3792 = vld [vmem:[#allocation7 + $0x1d8] sm:$0xff]
    %v3793 = vld [vmem:[#allocation7 + $0x1e0] sm:$0xff]
    %v3794 = vld [vmem:[#allocation7 + $0x1e8] sm:$0xff]
    %v3795 = vld [vmem:[#allocation7 + $0x1f0] sm:$0xff]
    %v3796 = vld [vmem:[#allocation7 + $0x1f8] sm:$0xff]
    %v3797 = vld [vmem:[#allocation7 + $0x200] sm:$0xff]
    %v3798 = vld [vmem:[#allocation7 + $0x208] sm:$0xff]
    %v3799 = vld [vmem:[#allocation7 + $0x210] sm:$0xff]
    %v3800 = vld [vmem:[#allocation7 + $0x218] sm:$0xff]
    %v3801 = vld [vmem:[#allocation7 + $0x220] sm:$0xff]
    %v3802 = vld [vmem:[#allocation7 + $0x228] sm:$0xff]
    %v3803 = vld [vmem:[#allocation7 + $0x230] sm:$0xff]
    %v3804 = vld [vmem:[#allocation7 + $0x238] sm:$0xff]
    %v3805 = vld [vmem:[#allocation7 + $0x240] sm:$0xff]
    %v3806 = vld [vmem:[#allocation7 + $0x248] sm:$0xff]
    %v3807 = vld [vmem:[#allocation7 + $0x250] sm:$0xff]
    %v3808 = vld [vmem:[#allocation7 + $0x258] sm:$0xff]
    %v3809 = vld [vmem:[#allocation7 + $0x260] sm:$0xff]
    %v3810 = vld [vmem:[#allocation7 + $0x268] sm:$0xff]
    %v3811 = vld [vmem:[#allocation7 + $0x270] sm:$0xff]
    %v3812 = vld [vmem:[#allocation7 + $0x278] sm:$0xff]
    %v3813 = vld [vmem:[#allocation7 + $0x280] sm:$0xff]
    %v3814 = vld [vmem:[#allocation7 + $0x288] sm:$0xff]
    %v3815 = vld [vmem:[#allocation7 + $0x290] sm:$0xff]
    %v3816 = vld [vmem:[#allocation7 + $0x298] sm:$0xff]
    %v3817 = vld [vmem:[#allocation7 + $0x2a0] sm:$0xff]
    %v3818 = vld [vmem:[#allocation7 + $0x2a8] sm:$0xff]
    %v3819 = vld [vmem:[#allocation7 + $0x2b0] sm:$0xff]
    %v3820 = vld [vmem:[#allocation7 + $0x2b8] sm:$0xff]
    %v3821 = vld [vmem:[#allocation7 + $0x2c0] sm:$0xff]
    %v3822 = vld [vmem:[#allocation7 + $0x2c8] sm:$0xff]
    %v3823 = vld [vmem:[#allocation7 + $0x2d0] sm:$0xff]
    %v3824 = vld [vmem:[#allocation7 + $0x2d8] sm:$0xff]
    %v3825 = vld [vmem:[#allocation7 + $0x2e0] sm:$0xff]
    %v3826 = vld [vmem:[#allocation7 + $0x2e8] sm:$0xff]
    %v3827 = vld [vmem:[#allocation7 + $0x2f0] sm:$0xff]
    %v3828 = vld [vmem:[#allocation7 + $0x2f8] sm:$0xff]
    %v3829 = vld [vmem:[#allocation7 + $0x300] sm:$0xff]
    %v3830 = vld [vmem:[#allocation7 + $0x308] sm:$0xff]
    %v3831 = vld [vmem:[#allocation7 + $0x310] sm:$0xff]
    %v3832 = vld [vmem:[#allocation7 + $0x318] sm:$0xff]
    %v3833 = vld [vmem:[#allocation7 + $0x320] sm:$0xff]
    %v3834 = vld [vmem:[#allocation7 + $0x328] sm:$0xff]
    %v3835 = vld [vmem:[#allocation7 + $0x330] sm:$0xff]
    %v3836 = vld [vmem:[#allocation7 + $0x338] sm:$0xff]
    %v3837 = vld [vmem:[#allocation7 + $0x340] sm:$0xff]
    %v3838 = vld [vmem:[#allocation7 + $0x348] sm:$0xff]
    %v3839 = vld [vmem:[#allocation7 + $0x350] sm:$0xff]
    %v3840 = vld [vmem:[#allocation7 + $0x358] sm:$0xff]
    %v3841 = vld [vmem:[#allocation7 + $0x360] sm:$0xff]
    %v3842 = vld [vmem:[#allocation7 + $0x368] sm:$0xff]
    %v3843 = vld [vmem:[#allocation7 + $0x370] sm:$0xff]
    %v3844 = vld [vmem:[#allocation7 + $0x378] sm:$0xff]
    %v3845 = vld [vmem:[#allocation7 + $0x380] sm:$0xff]
    %v3846 = vld [vmem:[#allocation7 + $0x388] sm:$0xff]
    %v3847 = vld [vmem:[#allocation7 + $0x390] sm:$0xff]
    %v3848 = vld [vmem:[#allocation7 + $0x398] sm:$0xff]
    %v3849 = vld [vmem:[#allocation7 + $0x3a0] sm:$0xff]
    %v3850 = vld [vmem:[#allocation7 + $0x3a8] sm:$0xff]
    %v3851 = vld [vmem:[#allocation7 + $0x3b0] sm:$0xff]
    %v3852 = vld [vmem:[#allocation7 + $0x3b8] sm:$0xff]
    %v3853 = vld [vmem:[#allocation7 + $0x3c0] sm:$0xff]
    %v3854 = vld [vmem:[#allocation7 + $0x3c8] sm:$0xff]
    %v3855 = vld [vmem:[#allocation7 + $0x3d0] sm:$0xff]
    %v3856 = vld [vmem:[#allocation7 + $0x3d8] sm:$0xff]
    %v3857 = vld [vmem:[#allocation7 + $0x3e0] sm:$0xff]
    %v3858 = vld [vmem:[#allocation7 + $0x3e8] sm:$0xff]
    %v3859 = vld [vmem:[#allocation7 + $0x3f0] sm:$0xff]
    %v3860 = vld [vmem:[#allocation7 + $0x3f8] sm:$0xff]
    %v3861 = vld [vmem:[#allocation7 + $0x400] sm:$0xff]
    %v3862 = vld [vmem:[#allocation7 + $0x408] sm:$0xff]
    %v3863 = vld [vmem:[#allocation7 + $0x410] sm:$0xff]
    %v3864 = vld [vmem:[#allocation7 + $0x418] sm:$0xff]
    %v3865 = vld [vmem:[#allocation7 + $0x420] sm:$0xff]
    %v3866 = vld [vmem:[#allocation7 + $0x428] sm:$0xff]
    %v3867 = vld [vmem:[#allocation7 + $0x430] sm:$0xff]
    %v3868 = vld [vmem:[#allocation7 + $0x438] sm:$0xff]
    %v3869 = vld [vmem:[#allocation7 + $0x440] sm:$0xff]
    %v3870 = vld [vmem:[#allocation7 + $0x448] sm:$0xff]
    %v3871 = vld [vmem:[#allocation7 + $0x450] sm:$0xff]
    %v3872 = vld [vmem:[#allocation7 + $0x458] sm:$0xff]
    %v3873 = vld [vmem:[#allocation7 + $0x460] sm:$0xff]
    %v3874 = vld [vmem:[#allocation7 + $0x468] sm:$0xff]
    %v3875 = vld [vmem:[#allocation7 + $0x470] sm:$0xff]
    %v3876 = vld [vmem:[#allocation7 + $0x478] sm:$0xff]
    %v3877 = vld [vmem:[#allocation7 + $0x480] sm:$0xff]
    %v3878 = vld [vmem:[#allocation7 + $0x488] sm:$0xff]
    %v3879 = vld [vmem:[#allocation7 + $0x490] sm:$0xff]
    %v3880 = vld [vmem:[#allocation7 + $0x498] sm:$0xff]
    %v3881 = vld [vmem:[#allocation7 + $0x4a0] sm:$0xff]
    %v3882 = vld [vmem:[#allocation7 + $0x4a8] sm:$0xff]
    %v3883 = vld [vmem:[#allocation7 + $0x4b0] sm:$0xff]
    %v3884 = vld [vmem:[#allocation7 + $0x4b8] sm:$0xff]
    %v3885 = vld [vmem:[#allocation7 + $0x4c0] sm:$0xff]
    %v3886 = vld [vmem:[#allocation7 + $0x4c8] sm:$0xff]
    %v3887 = vld [vmem:[#allocation7 + $0x4d0] sm:$0xff]
    %v3888 = vld [vmem:[#allocation7 + $0x4d8] sm:$0xff]
    %v3889 = vld [vmem:[#allocation7 + $0x4e0] sm:$0xff]
    %v3890 = vld [vmem:[#allocation7 + $0x4e8] sm:$0xff]
    %v3891 = vld [vmem:[#allocation7 + $0x4f0] sm:$0xff]
    %v3892 = vld [vmem:[#allocation7 + $0x4f8] sm:$0xff]
    %v3893 = vld [vmem:[#allocation7 + $0x500] sm:$0xff]
    %v3894 = vld [vmem:[#allocation7 + $0x508] sm:$0xff]
    %v3895 = vld [vmem:[#allocation7 + $0x510] sm:$0xff]
    %v3896 = vld [vmem:[#allocation7 + $0x518] sm:$0xff]
    %v3897 = vld [vmem:[#allocation7 + $0x520] sm:$0xff]
    %v3898 = vld [vmem:[#allocation7 + $0x528] sm:$0xff]
    %v3899 = vld [vmem:[#allocation7 + $0x530] sm:$0xff]
    %v3900 = vld [vmem:[#allocation7 + $0x538] sm:$0xff]
    %v3901 = vld [vmem:[#allocation7 + $0x540] sm:$0xff]
    %v3902 = vld [vmem:[#allocation7 + $0x548] sm:$0xff]
    %v3903 = vld [vmem:[#allocation7 + $0x550] sm:$0xff]
    %v3904 = vld [vmem:[#allocation7 + $0x558] sm:$0xff]
    %v3905 = vld [vmem:[#allocation7 + $0x560] sm:$0xff]
    %v3906 = vld [vmem:[#allocation7 + $0x568] sm:$0xff]
    %v3907 = vld [vmem:[#allocation7 + $0x570] sm:$0xff]
    %v3908 = vld [vmem:[#allocation7 + $0x578] sm:$0xff]
    %v3909 = vld [vmem:[#allocation7 + $0x580] sm:$0xff]
    %v3910 = vld [vmem:[#allocation7 + $0x588] sm:$0xff]
    %v3911 = vld [vmem:[#allocation7 + $0x590] sm:$0xff]
    %v3912 = vld [vmem:[#allocation7 + $0x598] sm:$0xff]
    %v3913 = vld [vmem:[#allocation7 + $0x5a0] sm:$0xff]
    %v3914 = vld [vmem:[#allocation7 + $0x5a8] sm:$0xff]
    %v3915 = vld [vmem:[#allocation7 + $0x5b0] sm:$0xff]
    %v3916 = vld [vmem:[#allocation7 + $0x5b8] sm:$0xff]
    %v3917 = vld [vmem:[#allocation7 + $0x5c0] sm:$0xff]
    %v3918 = vld [vmem:[#allocation7 + $0x5c8] sm:$0xff]
    %v3919 = vld [vmem:[#allocation7 + $0x5d0] sm:$0xff]
    %v3920 = vld [vmem:[#allocation7 + $0x5d8] sm:$0xff]
    %v3921 = vld [vmem:[#allocation7 + $0x5e0] sm:$0xff]
    %v3922 = vld [vmem:[#allocation7 + $0x5e8] sm:$0xff]
    %v3923 = vld [vmem:[#allocation7 + $0x5f0] sm:$0xff]
    %v3924 = vld [vmem:[#allocation7 + $0x5f8] sm:$0xff]
    %v3925 = vld [vmem:[#allocation7 + $0x600] sm:$0xff]
    %v3926 = vld [vmem:[#allocation7 + $0x608] sm:$0xff]
    %v3927 = vld [vmem:[#allocation7 + $0x610] sm:$0xff]
    %v3928 = vld [vmem:[#allocation7 + $0x618] sm:$0xff]
    %v3929 = vld [vmem:[#allocation7 + $0x620] sm:$0xff]
    %v3930 = vld [vmem:[#allocation7 + $0x628] sm:$0xff]
    %v3931 = vld [vmem:[#allocation7 + $0x630] sm:$0xff]
    %v3932 = vld [vmem:[#allocation7 + $0x638] sm:$0xff]
    %v3933 = vld [vmem:[#allocation7 + $0x640] sm:$0xff]
    %v3934 = vld [vmem:[#allocation7 + $0x648] sm:$0xff]
    %v3935 = vld [vmem:[#allocation7 + $0x650] sm:$0xff]
    %v3936 = vld [vmem:[#allocation7 + $0x658] sm:$0xff]
    %v3937 = vld [vmem:[#allocation7 + $0x660] sm:$0xff]
    %v3938 = vld [vmem:[#allocation7 + $0x668] sm:$0xff]
    %v3939 = vld [vmem:[#allocation7 + $0x670] sm:$0xff]
    %v3940 = vld [vmem:[#allocation7 + $0x678] sm:$0xff]
    %v3941 = vld [vmem:[#allocation7 + $0x680] sm:$0xff]
    %v3942 = vld [vmem:[#allocation7 + $0x688] sm:$0xff]
    %v3943 = vld [vmem:[#allocation7 + $0x690] sm:$0xff]
    %v3944 = vld [vmem:[#allocation7 + $0x698] sm:$0xff]
    %v3945 = vld [vmem:[#allocation7 + $0x6a0] sm:$0xff]
    %v3946 = vld [vmem:[#allocation7 + $0x6a8] sm:$0xff]
    %v3947 = vld [vmem:[#allocation7 + $0x6b0] sm:$0xff]
    %v3948 = vld [vmem:[#allocation7 + $0x6b8] sm:$0xff]
    %v3949 = vld [vmem:[#allocation7 + $0x6c0] sm:$0xff]
    %v3950 = vld [vmem:[#allocation7 + $0x6c8] sm:$0xff]
    %v3951 = vld [vmem:[#allocation7 + $0x6d0] sm:$0xff]
    %v3952 = vld [vmem:[#allocation7 + $0x6d8] sm:$0xff]
    %v3953 = vld [vmem:[#allocation7 + $0x6e0] sm:$0xff]
    %v3954 = vld [vmem:[#allocation7 + $0x6e8] sm:$0xff]
    %v3955 = vld [vmem:[#allocation7 + $0x6f0] sm:$0xff]
    %v3956 = vld [vmem:[#allocation7 + $0x6f8] sm:$0xff]
    %v3957 = vld [vmem:[#allocation7 + $0x700] sm:$0xff]
    %v3958 = vld [vmem:[#allocation7 + $0x708] sm:$0xff]
    %v3959 = vld [vmem:[#allocation7 + $0x710] sm:$0xff]
    %v3960 = vld [vmem:[#allocation7 + $0x718] sm:$0xff]
    %v3961 = vld [vmem:[#allocation7 + $0x720] sm:$0xff]
    %v3962 = vld [vmem:[#allocation7 + $0x728] sm:$0xff]
    %v3963 = vld [vmem:[#allocation7 + $0x730] sm:$0xff]
    %v3964 = vld [vmem:[#allocation7 + $0x738] sm:$0xff]
    %v3965 = vld [vmem:[#allocation7 + $0x740] sm:$0xff]
    %v3966 = vld [vmem:[#allocation7 + $0x748] sm:$0xff]
    %v3967 = vld [vmem:[#allocation7 + $0x750] sm:$0xff]
    %v3968 = vld [vmem:[#allocation7 + $0x758] sm:$0xff]
    %v3969 = vld [vmem:[#allocation7 + $0x760] sm:$0xff]
    %v3970 = vld [vmem:[#allocation7 + $0x768] sm:$0xff]
    %v3971 = vld [vmem:[#allocation7 + $0x770] sm:$0xff]
    %v3972 = vld [vmem:[#allocation7 + $0x778] sm:$0xff]
    %v3973 = vld [vmem:[#allocation7 + $0x780] sm:$0xff]
    %v3974 = vld [vmem:[#allocation7 + $0x788] sm:$0xff]
    %v3975 = vld [vmem:[#allocation7 + $0x790] sm:$0xff]
    %v3976 = vld [vmem:[#allocation7 + $0x798] sm:$0xff]
    %v3977 = vld [vmem:[#allocation7 + $0x7a0] sm:$0xff]
    %v3978 = vld [vmem:[#allocation7 + $0x7a8] sm:$0xff]
    %v3979 = vld [vmem:[#allocation7 + $0x7b0] sm:$0xff]
    %v3980 = vld [vmem:[#allocation7 + $0x7b8] sm:$0xff]
    %v3981 = vld [vmem:[#allocation7 + $0x7c0] sm:$0xff]
    %v3982 = vld [vmem:[#allocation7 + $0x7c8] sm:$0xff]
    %v3983 = vld [vmem:[#allocation7 + $0x7d0] sm:$0xff]
    %v3984 = vld [vmem:[#allocation7 + $0x7d8] sm:$0xff]
    %v3985 = vld [vmem:[#allocation7 + $0x7e0] sm:$0xff]
    %v3986 = vld [vmem:[#allocation7 + $0x7e8] sm:$0xff]
    %v3987 = vld [vmem:[#allocation7 + $0x7f0] sm:$0xff]
    %v3988 = vld [vmem:[#allocation7 + $0x7f8] sm:$0xff]
    %v3989 = vld [vmem:[#allocation7 + $0x800] sm:$0xff]
    %v3990 = vld [vmem:[#allocation7 + $0x808] sm:$0xff]
    %v3991 = vld [vmem:[#allocation7 + $0x810] sm:$0xff]
    %v3992 = vld [vmem:[#allocation7 + $0x818] sm:$0xff]
    %v3993 = vld [vmem:[#allocation7 + $0x820] sm:$0xff]
    %v3994 = vld [vmem:[#allocation7 + $0x828] sm:$0xff]
    %v3995 = vld [vmem:[#allocation7 + $0x830] sm:$0xff]
    %v3996 = vld [vmem:[#allocation7 + $0x838] sm:$0xff]
    %v3997 = vld [vmem:[#allocation7 + $0x840] sm:$0xff]
    %v3998 = vld [vmem:[#allocation7 + $0x848] sm:$0xff]
    %v3999 = vld [vmem:[#allocation7 + $0x850] sm:$0xff]
    %v4000 = vld [vmem:[#allocation7 + $0x858] sm:$0xff]
    %v4001 = vld [vmem:[#allocation7 + $0x860] sm:$0xff]
    %v4002 = vld [vmem:[#allocation7 + $0x868] sm:$0xff]
    %v4003 = vld [vmem:[#allocation7 + $0x870] sm:$0xff]
    %v4004 = vld [vmem:[#allocation7 + $0x878] sm:$0xff]
    %v4005 = vld [vmem:[#allocation7 + $0x880] sm:$0xff]
    %v4006 = vld [vmem:[#allocation7 + $0x888] sm:$0xff]
    %v4007 = vld [vmem:[#allocation7 + $0x890] sm:$0xff]
    %v4008 = vld [vmem:[#allocation7 + $0x898] sm:$0xff]
    %v4009 = vld [vmem:[#allocation7 + $0x8a0] sm:$0xff]
    %v4010 = vld [vmem:[#allocation7 + $0x8a8] sm:$0xff]
    %v4011 = vld [vmem:[#allocation7 + $0x8b0] sm:$0xff]
    %v4012 = vld [vmem:[#allocation7 + $0x8b8] sm:$0xff]
    %v4013 = vld [vmem:[#allocation7 + $0x8c0] sm:$0xff]
    %v4014 = vld [vmem:[#allocation7 + $0x8c8] sm:$0xff]
    %v4015 = vld [vmem:[#allocation7 + $0x8d0] sm:$0xff]
    %v4016 = vld [vmem:[#allocation7 + $0x8d8] sm:$0xff]
    %v4017 = vld [vmem:[#allocation7 + $0x8e0] sm:$0xff]
    %v4018 = vld [vmem:[#allocation7 + $0x8e8] sm:$0xff]
    %v4019 = vld [vmem:[#allocation7 + $0x8f0] sm:$0xff]
    %v4020 = vld [vmem:[#allocation7 + $0x8f8] sm:$0xff]
    %v4021 = vld [vmem:[#allocation7 + $0x900] sm:$0xff]
    %v4022 = vld [vmem:[#allocation7 + $0x908] sm:$0xff]
    %v4023 = vld [vmem:[#allocation7 + $0x910] sm:$0xff]
    %v4024 = vld [vmem:[#allocation7 + $0x918] sm:$0xff]
    %v4025 = vld [vmem:[#allocation7 + $0x920] sm:$0xff]
    %v4026 = vld [vmem:[#allocation7 + $0x928] sm:$0xff]
    %v4027 = vld [vmem:[#allocation7 + $0x930] sm:$0xff]
    %v4028 = vld [vmem:[#allocation7 + $0x938] sm:$0xff]
    %v4029 = vld [vmem:[#allocation7 + $0x940] sm:$0xff]
    %v4030 = vld [vmem:[#allocation7 + $0x948] sm:$0xff]
    %v4031 = vld [vmem:[#allocation7 + $0x950] sm:$0xff]
    %v4032 = vld [vmem:[#allocation7 + $0x958] sm:$0xff]
    %v4033 = vld [vmem:[#allocation7 + $0x960] sm:$0xff]
    %v4034 = vld [vmem:[#allocation7 + $0x968] sm:$0xff]
    %v4035 = vld [vmem:[#allocation7 + $0x970] sm:$0xff]
    %v4036 = vld [vmem:[#allocation7 + $0x978] sm:$0xff]
    %v4037 = vld [vmem:[#allocation7 + $0x980] sm:$0xff]
    %v4038 = vld [vmem:[#allocation7 + $0x988] sm:$0xff]
    %v4039 = vld [vmem:[#allocation7 + $0x990] sm:$0xff]
    %v4040 = vld [vmem:[#allocation7 + $0x998] sm:$0xff]
    %v4041 = vld [vmem:[#allocation7 + $0x9a0] sm:$0xff]
    %v4042 = vld [vmem:[#allocation7 + $0x9a8] sm:$0xff]
    %v4043 = vld [vmem:[#allocation7 + $0x9b0] sm:$0xff]
    %v4044 = vld [vmem:[#allocation7 + $0x9b8] sm:$0xff]
    %v4045 = vld [vmem:[#allocation7 + $0x9c0] sm:$0xff]
    %v4046 = vld [vmem:[#allocation7 + $0x9c8] sm:$0xff]
    %v4047 = vld [vmem:[#allocation7 + $0x9d0] sm:$0xff]
    %v4048 = vld [vmem:[#allocation7 + $0x9d8] sm:$0xff]
    %v4049 = vld [vmem:[#allocation7 + $0x9e0] sm:$0xff]
    %v4050 = vld [vmem:[#allocation7 + $0x9e8] sm:$0xff]
    %v4051 = vld [vmem:[#allocation7 + $0x9f0] sm:$0xff]
    %v4052 = vld [vmem:[#allocation7 + $0x9f8] sm:$0xff]
    %v4053 = vld [vmem:[#allocation7 + $0xa00] sm:$0xff]
    %v4054 = vld [vmem:[#allocation7 + $0xa08] sm:$0xff]
    %v4055 = vld [vmem:[#allocation7 + $0xa10] sm:$0xff]
    %v4056 = vld [vmem:[#allocation7 + $0xa18] sm:$0xff]
    %v4057 = vld [vmem:[#allocation7 + $0xa20] sm:$0xff]
    %v4058 = vld [vmem:[#allocation7 + $0xa28] sm:$0xff]
    %v4059 = vld [vmem:[#allocation7 + $0xa30] sm:$0xff]
    %v4060 = vld [vmem:[#allocation7 + $0xa38] sm:$0xff]
    %v4061 = vld [vmem:[#allocation7 + $0xa40] sm:$0xff]
    %v4062 = vld [vmem:[#allocation7 + $0xa48] sm:$0xff]
    %v4063 = vld [vmem:[#allocation7 + $0xa50] sm:$0xff]
    %v4064 = vld [vmem:[#allocation7 + $0xa58] sm:$0xff]
    %v4065 = vld [vmem:[#allocation7 + $0xa60] sm:$0xff]
    %v4066 = vld [vmem:[#allocation7 + $0xa68] sm:$0xff]
    %v4067 = vld [vmem:[#allocation7 + $0xa70] sm:$0xff]
    %v4068 = vld [vmem:[#allocation7 + $0xa78] sm:$0xff]
    %v4069 = vld [vmem:[#allocation7 + $0xa80] sm:$0xff]
    %v4070 = vld [vmem:[#allocation7 + $0xa88] sm:$0xff]
    %v4071 = vld [vmem:[#allocation7 + $0xa90] sm:$0xff]
    %v4072 = vld [vmem:[#allocation7 + $0xa98] sm:$0xff]
    %v4073 = vld [vmem:[#allocation7 + $0xaa0] sm:$0xff]
    %v4074 = vld [vmem:[#allocation7 + $0xaa8] sm:$0xff]
    %v4075 = vld [vmem:[#allocation7 + $0xab0] sm:$0xff]
    %v4076 = vld [vmem:[#allocation7 + $0xab8] sm:$0xff]
    %v4077 = vld [vmem:[#allocation7 + $0xac0] sm:$0xff]
    %v4078 = vld [vmem:[#allocation7 + $0xac8] sm:$0xff]
    %v4079 = vld [vmem:[#allocation7 + $0xad0] sm:$0xff]
    %v4080 = vld [vmem:[#allocation7 + $0xad8] sm:$0xff]
    %v4081 = vld [vmem:[#allocation7 + $0xae0] sm:$0xff]
    %v4082 = vld [vmem:[#allocation7 + $0xae8] sm:$0xff]
    %v4083 = vld [vmem:[#allocation7 + $0xaf0] sm:$0xff]
    %v4084 = vld [vmem:[#allocation7 + $0xaf8] sm:$0xff]
    %v4085 = vld [vmem:[#allocation7 + $0xb00] sm:$0xff]
    %v4086 = vld [vmem:[#allocation7 + $0xb08] sm:$0xff]
    %v4087 = vld [vmem:[#allocation7 + $0xb10] sm:$0xff]
    %v4088 = vld [vmem:[#allocation7 + $0xb18] sm:$0xff]
    %v4089 = vld [vmem:[#allocation7 + $0xb20] sm:$0xff]
    %v4090 = vld [vmem:[#allocation7 + $0xb28] sm:$0xff]
    %v4091 = vld [vmem:[#allocation7 + $0xb30] sm:$0xff]
    %v4092 = vld [vmem:[#allocation7 + $0xb38] sm:$0xff]
    %v4093 = vld [vmem:[#allocation7 + $0xb40] sm:$0xff]
    %v4094 = vld [vmem:[#allocation7 + $0xb48] sm:$0xff]
    %v4095 = vld [vmem:[#allocation7 + $0xb50] sm:$0xff]
    %v4096 = vld [vmem:[#allocation7 + $0xb58] sm:$0xff]
    %v4097 = vld [vmem:[#allocation7 + $0xb60] sm:$0xff]
    %v4098 = vld [vmem:[#allocation7 + $0xb68] sm:$0xff]
    %v4099 = vld [vmem:[#allocation7 + $0xb70] sm:$0xff]
    %v4100 = vld [vmem:[#allocation7 + $0xb78] sm:$0xff]
    %v4101 = vld [vmem:[#allocation7 + $0xb80] sm:$0xff]
    %v4102 = vld [vmem:[#allocation7 + $0xb88] sm:$0xff]
    %v4103 = vld [vmem:[#allocation7 + $0xb90] sm:$0xff]
    %v4104 = vld [vmem:[#allocation7 + $0xb98] sm:$0xff]
    %v4105 = vld [vmem:[#allocation7 + $0xba0] sm:$0xff]
    %v4106 = vld [vmem:[#allocation7 + $0xba8] sm:$0xff]
    %v4107 = vld [vmem:[#allocation7 + $0xbb0] sm:$0xff]
    %v4108 = vld [vmem:[#allocation7 + $0xbb8] sm:$0xff]
    %v4109 = vld [vmem:[#allocation7 + $0xbc0] sm:$0xff]
    %v4110 = vld [vmem:[#allocation7 + $0xbc8] sm:$0xff]
    %v4111 = vld [vmem:[#allocation7 + $0xbd0] sm:$0xff]
    %v4112 = vld [vmem:[#allocation7 + $0xbd8] sm:$0xff]
    %v4113 = vld [vmem:[#allocation7 + $0xbe0] sm:$0xff]
    %v4114 = vld [vmem:[#allocation7 + $0xbe8] sm:$0xff]
    %v4115 = vld [vmem:[#allocation7 + $0xbf0] sm:$0xff]
    %v4116 = vld [vmem:[#allocation7 + $0xbf8] sm:$0xff]
    %v4117 = vld [vmem:[#allocation7 + $0xc00] sm:$0xff]
    %v4118 = vld [vmem:[#allocation7 + $0xc08] sm:$0xff]
    %v4119 = vld [vmem:[#allocation7 + $0xc10] sm:$0xff]
    %v4120 = vld [vmem:[#allocation7 + $0xc18] sm:$0xff]
    %v4121 = vld [vmem:[#allocation7 + $0xc20] sm:$0xff]
    %v4122 = vld [vmem:[#allocation7 + $0xc28] sm:$0xff]
    %v4123 = vld [vmem:[#allocation7 + $0xc30] sm:$0xff]
    %v4124 = vld [vmem:[#allocation7 + $0xc38] sm:$0xff]
    %v4125 = vld [vmem:[#allocation7 + $0xc40] sm:$0xff]
    %v4126 = vld [vmem:[#allocation7 + $0xc48] sm:$0xff]
    %v4127 = vld [vmem:[#allocation7 + $0xc50] sm:$0xff]
    %v4128 = vld [vmem:[#allocation7 + $0xc58] sm:$0xff]
    %v4129 = vld [vmem:[#allocation7 + $0xc60] sm:$0xff]
    %v4130 = vld [vmem:[#allocation7 + $0xc68] sm:$0xff]
    %v4131 = vld [vmem:[#allocation7 + $0xc70] sm:$0xff]
    %v4132 = vld [vmem:[#allocation7 + $0xc78] sm:$0xff]
    %v4133 = vld [vmem:[#allocation7 + $0xc80] sm:$0xff]
    %v4134 = vld [vmem:[#allocation7 + $0xc88] sm:$0xff]
    %v4135 = vld [vmem:[#allocation7 + $0xc90] sm:$0xff]
    %v4136 = vld [vmem:[#allocation7 + $0xc98] sm:$0xff]
    %v4137 = vld [vmem:[#allocation7 + $0xca0] sm:$0xff]
    %v4138 = vld [vmem:[#allocation7 + $0xca8] sm:$0xff]
    %v4139 = vld [vmem:[#allocation7 + $0xcb0] sm:$0xff]
    %v4140 = vld [vmem:[#allocation7 + $0xcb8] sm:$0xff]
    %v4141 = vld [vmem:[#allocation7 + $0xcc0] sm:$0xff]
    %v4142 = vld [vmem:[#allocation7 + $0xcc8] sm:$0xff]
    %v4143 = vld [vmem:[#allocation7 + $0xcd0] sm:$0xff]
    %v4144 = vld [vmem:[#allocation7 + $0xcd8] sm:$0xff]
    %v4145 = vld [vmem:[#allocation7 + $0xce0] sm:$0xff]
    %v4146 = vld [vmem:[#allocation7 + $0xce8] sm:$0xff]
    %v4147 = vld [vmem:[#allocation7 + $0xcf0] sm:$0xff]
    %v4148 = vld [vmem:[#allocation7 + $0xcf8] sm:$0xff]
    %v4149 = vld [vmem:[#allocation7 + $0xd00] sm:$0xff]
    %v4150 = vld [vmem:[#allocation7 + $0xd08] sm:$0xff]
    %v4151 = vld [vmem:[#allocation7 + $0xd10] sm:$0xff]
    %v4152 = vld [vmem:[#allocation7 + $0xd18] sm:$0xff]
    %v4153 = vld [vmem:[#allocation7 + $0xd20] sm:$0xff]
    %v4154 = vld [vmem:[#allocation7 + $0xd28] sm:$0xff]
    %v4155 = vld [vmem:[#allocation7 + $0xd30] sm:$0xff]
    %v4156 = vld [vmem:[#allocation7 + $0xd38] sm:$0xff]
    %v4157 = vld [vmem:[#allocation7 + $0xd40] sm:$0xff]
    %v4158 = vld [vmem:[#allocation7 + $0xd48] sm:$0xff]
    %v4159 = vld [vmem:[#allocation7 + $0xd50] sm:$0xff]
    %v4160 = vld [vmem:[#allocation7 + $0xd58] sm:$0xff]
    %v4161 = vld [vmem:[#allocation7 + $0xd60] sm:$0xff]
    %v4162 = vld [vmem:[#allocation7 + $0xd68] sm:$0xff]
    %v4163 = vld [vmem:[#allocation7 + $0xd70] sm:$0xff]
    %v4164 = vld [vmem:[#allocation7 + $0xd78] sm:$0xff]
    %v4165 = vld [vmem:[#allocation7 + $0xd80] sm:$0xff]
    %v4166 = vld [vmem:[#allocation7 + $0xd88] sm:$0xff]
    %v4167 = vld [vmem:[#allocation7 + $0xd90] sm:$0xff]
    %v4168 = vld [vmem:[#allocation7 + $0xd98] sm:$0xff]
    %v4169 = vld [vmem:[#allocation7 + $0xda0] sm:$0xff]
    %v4170 = vld [vmem:[#allocation7 + $0xda8] sm:$0xff]
    %v4171 = vld [vmem:[#allocation7 + $0xdb0] sm:$0xff]
    %v4172 = vld [vmem:[#allocation7 + $0xdb8] sm:$0xff]
    %v4173 = vld [vmem:[#allocation7 + $0xdc0] sm:$0xff]
    %v4174 = vld [vmem:[#allocation7 + $0xdc8] sm:$0xff]
    %v4175 = vld [vmem:[#allocation7 + $0xdd0] sm:$0xff]
    %v4176 = vld [vmem:[#allocation7 + $0xdd8] sm:$0xff]
    %v4177 = vld [vmem:[#allocation7 + $0xde0] sm:$0xff]
    %v4178 = vld [vmem:[#allocation7 + $0xde8] sm:$0xff]
    %v4179 = vld [vmem:[#allocation7 + $0xdf0] sm:$0xff]
    %v4180 = vld [vmem:[#allocation7 + $0xdf8] sm:$0xff]
    %v4181 = vld [vmem:[#allocation7 + $0xe00] sm:$0xff]
    %v4182 = vld [vmem:[#allocation7 + $0xe08] sm:$0xff]
    %v4183 = vld [vmem:[#allocation7 + $0xe10] sm:$0xff]
    %v4184 = vld [vmem:[#allocation7 + $0xe18] sm:$0xff]
    %v4185 = vld [vmem:[#allocation7 + $0xe20] sm:$0xff]
    %v4186 = vld [vmem:[#allocation7 + $0xe28] sm:$0xff]
    %v4187 = vld [vmem:[#allocation7 + $0xe30] sm:$0xff]
    %v4188 = vld [vmem:[#allocation7 + $0xe38] sm:$0xff]
    %v4189 = vld [vmem:[#allocation7 + $0xe40] sm:$0xff]
    %v4190 = vld [vmem:[#allocation7 + $0xe48] sm:$0xff]
    %v4191 = vld [vmem:[#allocation7 + $0xe50] sm:$0xff]
    %v4192 = vld [vmem:[#allocation7 + $0xe58] sm:$0xff]
    %v4193 = vld [vmem:[#allocation7 + $0xe60] sm:$0xff]
    %v4194 = vld [vmem:[#allocation7 + $0xe68] sm:$0xff]
    %v4195 = vld [vmem:[#allocation7 + $0xe70] sm:$0xff]
    %v4196 = vld [vmem:[#allocation7 + $0xe78] sm:$0xff]
    %v4197 = vld [vmem:[#allocation7 + $0xe80] sm:$0xff]
    %v4198 = vld [vmem:[#allocation7 + $0xe88] sm:$0xff]
    %v4199 = vld [vmem:[#allocation7 + $0xe90] sm:$0xff]
    %v4200 = vld [vmem:[#allocation7 + $0xe98] sm:$0xff]
    %v4201 = vld [vmem:[#allocation7 + $0xea0] sm:$0xff]
    %v4202 = vld [vmem:[#allocation7 + $0xea8] sm:$0xff]
    %v4203 = vld [vmem:[#allocation7 + $0xeb0] sm:$0xff]
    %v4204 = vld [vmem:[#allocation7 + $0xeb8] sm:$0xff]
    %v4205 = vld [vmem:[#allocation7 + $0xec0] sm:$0xff]
    %v4206 = vld [vmem:[#allocation7 + $0xec8] sm:$0xff]
    %v4207 = vld [vmem:[#allocation7 + $0xed0] sm:$0xff]
    %v4208 = vld [vmem:[#allocation7 + $0xed8] sm:$0xff]
    %v4209 = vld [vmem:[#allocation7 + $0xee0] sm:$0xff]
    %v4210 = vld [vmem:[#allocation7 + $0xee8] sm:$0xff]
    %v4211 = vld [vmem:[#allocation7 + $0xef0] sm:$0xff]
    %v4212 = vld [vmem:[#allocation7 + $0xef8] sm:$0xff]
    %v4213 = vld [vmem:[#allocation7 + $0xf00] sm:$0xff]
    %v4214 = vld [vmem:[#allocation7 + $0xf08] sm:$0xff]
    %v4215 = vld [vmem:[#allocation7 + $0xf10] sm:$0xff]
    %v4216 = vld [vmem:[#allocation7 + $0xf18] sm:$0xff]
    %v4217 = vld [vmem:[#allocation7 + $0xf20] sm:$0xff]
    %v4218 = vld [vmem:[#allocation7 + $0xf28] sm:$0xff]
    %v4219 = vld [vmem:[#allocation7 + $0xf30] sm:$0xff]
    %v4220 = vld [vmem:[#allocation7 + $0xf38] sm:$0xff]
    %v4221 = vld [vmem:[#allocation7 + $0xf40] sm:$0xff]
    %v4222 = vld [vmem:[#allocation7 + $0xf48] sm:$0xff]
    %v4223 = vld [vmem:[#allocation7 + $0xf50] sm:$0xff]
    %v4224 = vld [vmem:[#allocation7 + $0xf58] sm:$0xff]
    %v4225 = vld [vmem:[#allocation7 + $0xf60] sm:$0xff]
    %v4226 = vld [vmem:[#allocation7 + $0xf68] sm:$0xff]
    %v4227 = vld [vmem:[#allocation7 + $0xf70] sm:$0xff]
    %v4228 = vld [vmem:[#allocation7 + $0xf78] sm:$0xff]
    %v4229 = vld [vmem:[#allocation7 + $0xf80] sm:$0xff]
    %v4230 = vld [vmem:[#allocation7 + $0xf88] sm:$0xff]
    %v4231 = vld [vmem:[#allocation7 + $0xf90] sm:$0xff]
    %v4232 = vld [vmem:[#allocation7 + $0xf98] sm:$0xff]
    %v4233 = vld [vmem:[#allocation7 + $0xfa0] sm:$0xff]
    %v4234 = vld [vmem:[#allocation7 + $0xfa8] sm:$0xff]
    %v4235 = vld [vmem:[#allocation7 + $0xfb0] sm:$0xff]
    %v4236 = vld [vmem:[#allocation7 + $0xfb8] sm:$0xff]
    %v4237 = vld [vmem:[#allocation7 + $0xfc0] sm:$0xff]
    %v4238 = vld [vmem:[#allocation7 + $0xfc8] sm:$0xff]
    %v4239 = vld [vmem:[#allocation7 + $0xfd0] sm:$0xff]
    %v4240 = vld [vmem:[#allocation7 + $0xfd8] sm:$0xff]
    %v4241 = vld [vmem:[#allocation7 + $0xfe0] sm:$0xff]
    %v4242 = vld [vmem:[#allocation7 + $0xfe8] sm:$0xff]
    %v4243 = vld [vmem:[#allocation7 + $0xff0] sm:$0xff]
    %v4244 = vld [vmem:[#allocation7 + $0xff8] sm:$0xff]
    %v4245 = vld [vmem:[#allocation10 + $0x8] sm:$0xff]
    %v4246 = vld [vmem:[#allocation10 + $0x10] sm:$0xff]
    %v4249 = vlaneseq
    %v4250 = vshrl.u32 %v4249, 7
    %v4251 = vsub.s32 0, %v4250
    %v4252 = vrot.slane %v4245, %v4251
    %v4253 = vlaneseq
    %v4254 = vshrl.u32 %v4253, 7
    %v4255 = vsub.s32 1, %v4254
    %v4256 = vrot.slane %v4245, %v4255
    %v4257 = vlaneseq
    %v4258 = vshrl.u32 %v4257, 7
    %v4259 = vsub.s32 2, %v4258
    %v4260 = vrot.slane %v4245, %v4259
    %v4261 = vlaneseq
    %v4262 = vshrl.u32 %v4261, 7
    %v4263 = vsub.s32 3, %v4262
    %v4264 = vrot.slane %v4245, %v4263
    %v4265 = vlaneseq
    %v4266 = vshrl.u32 %v4265, 7
    %v4267 = vsub.s32 4, %v4266
    %v4268 = vrot.slane %v4245, %v4267
    %v4269 = vlaneseq
    %v4270 = vshrl.u32 %v4269, 7
    %v4271 = vsub.s32 5, %v4270
    %v4272 = vrot.slane %v4245, %v4271
    %v4273 = vlaneseq
    %v4274 = vshrl.u32 %v4273, 7
    %v4275 = vsub.s32 6, %v4274
    %v4276 = vrot.slane %v4245, %v4275
    %v4277 = vlaneseq
    %v4278 = vshrl.u32 %v4277, 7
    %v4279 = vsub.s32 7, %v4278
    %v4280 = vrot.slane %v4245, %v4279
    %v4281 = vlaneseq
    %v4282 = vshrl.u32 %v4281, 7
    %v4283 = vsub.s32 0, %v4282
    %v4284 = vrot.slane %v4246, %v4283
    %v4285 = vlaneseq
    %v4286 = vshrl.u32 %v4285, 7
    %v4287 = vsub.s32 1, %v4286
    %v4288 = vrot.slane %v4246, %v4287
    %v4289 = vlaneseq
    %v4290 = vshrl.u32 %v4289, 7
    %v4291 = vsub.s32 2, %v4290
    %v4292 = vrot.slane %v4246, %v4291
    %v4293 = vlaneseq
    %v4294 = vshrl.u32 %v4293, 7
    %v4295 = vsub.s32 3, %v4294
    %v4296 = vrot.slane %v4246, %v4295
    %v4297 = vlaneseq
    %v4298 = vshrl.u32 %v4297, 7
    %v4299 = vsub.s32 4, %v4298
    %v4300 = vrot.slane %v4246, %v4299
    %v4301 = vlaneseq
    %v4302 = vshrl.u32 %v4301, 7
    %v4303 = vsub.s32 5, %v4302
    %v4304 = vrot.slane %v4246, %v4303
    %v4305 = vlaneseq
    %v4306 = vshrl.u32 %v4305, 7
    %v4307 = vsub.s32 6, %v4306
    %v4308 = vrot.slane %v4246, %v4307
    %v4309 = vlaneseq
    %v4310 = vshrl.u32 %v4309, 7
    %v4311 = vsub.s32 7, %v4310
    %v4312 = vrot.slane %v4246, %v4311
    %v4841 = vunpack.c.l.b16 %v3733
    %v4842 = vunpack.c.h.b16 %v3733
    %v4843 = vunpack.c.l.b16 %v3734
    %v4844 = vunpack.c.h.b16 %v3734
    %v4845 = vunpack.c.l.b16 %v3735
    %v4846 = vunpack.c.h.b16 %v3735
    %v4847 = vunpack.c.l.b16 %v3736
    %v4848 = vunpack.c.h.b16 %v3736
    %v4849 = vunpack.c.l.b16 %v3737
    %v4850 = vunpack.c.h.b16 %v3737
    %v4851 = vunpack.c.l.b16 %v3738
    %v4852 = vunpack.c.h.b16 %v3738
    %v4853 = vunpack.c.l.b16 %v3739
    %v4854 = vunpack.c.h.b16 %v3739
    %v4855 = vunpack.c.l.b16 %v3740
    %v4856 = vunpack.c.h.b16 %v3740
    %v4857 = vunpack.c.l.b16 %v3741
    %v4858 = vunpack.c.h.b16 %v3741
    %v4859 = vunpack.c.l.b16 %v3742
    %v4860 = vunpack.c.h.b16 %v3742
    %v4861 = vunpack.c.l.b16 %v3743
    %v4862 = vunpack.c.h.b16 %v3743
    %v4863 = vunpack.c.l.b16 %v3744
    %v4864 = vunpack.c.h.b16 %v3744
    %v4865 = vunpack.c.l.b16 %v3745
    %v4866 = vunpack.c.h.b16 %v3745
    %v4867 = vunpack.c.l.b16 %v3746
    %v4868 = vunpack.c.h.b16 %v3746
    %v4869 = vunpack.c.l.b16 %v3747
    %v4870 = vunpack.c.h.b16 %v3747
    %v4871 = vunpack.c.l.b16 %v3748
    %v4872 = vunpack.c.h.b16 %v3748
    %v4873 = vunpack.c.l.b16 %v3749
    %v4874 = vunpack.c.h.b16 %v3749
    %v4875 = vunpack.c.l.b16 %v3750
    %v4876 = vunpack.c.h.b16 %v3750
    %v4877 = vunpack.c.l.b16 %v3751
    %v4878 = vunpack.c.h.b16 %v3751
    %v4879 = vunpack.c.l.b16 %v3752
    %v4880 = vunpack.c.h.b16 %v3752
    %v4881 = vunpack.c.l.b16 %v3753
    %v4882 = vunpack.c.h.b16 %v3753
    %v4883 = vunpack.c.l.b16 %v3754
    %v4884 = vunpack.c.h.b16 %v3754
    %v4885 = vunpack.c.l.b16 %v3755
    %v4886 = vunpack.c.h.b16 %v3755
    %v4887 = vunpack.c.l.b16 %v3756
    %v4888 = vunpack.c.h.b16 %v3756
    %v4889 = vunpack.c.l.b16 %v3757
    %v4890 = vunpack.c.h.b16 %v3757
    %v4891 = vunpack.c.l.b16 %v3758
    %v4892 = vunpack.c.h.b16 %v3758
    %v4893 = vunpack.c.l.b16 %v3759
    %v4894 = vunpack.c.h.b16 %v3759
    %v4895 = vunpack.c.l.b16 %v3760
    %v4896 = vunpack.c.h.b16 %v3760
    %v4897 = vunpack.c.l.b16 %v3761
    %v4898 = vunpack.c.h.b16 %v3761
    %v4899 = vunpack.c.l.b16 %v3762
    %v4900 = vunpack.c.h.b16 %v3762
    %v4901 = vunpack.c.l.b16 %v3763
    %v4902 = vunpack.c.h.b16 %v3763
    %v4903 = vunpack.c.l.b16 %v3764
    %v4904 = vunpack.c.h.b16 %v3764
    %v4905 = vunpack.c.l.b16 %v3765
    %v4906 = vunpack.c.h.b16 %v3765
    %v4907 = vunpack.c.l.b16 %v3766
    %v4908 = vunpack.c.h.b16 %v3766
    %v4909 = vunpack.c.l.b16 %v3767
    %v4910 = vunpack.c.h.b16 %v3767
    %v4911 = vunpack.c.l.b16 %v3768
    %v4912 = vunpack.c.h.b16 %v3768
    %v4913 = vunpack.c.l.b16 %v3769
    %v4914 = vunpack.c.h.b16 %v3769
    %v4915 = vunpack.c.l.b16 %v3770
    %v4916 = vunpack.c.h.b16 %v3770
    %v4917 = vunpack.c.l.b16 %v3771
    %v4918 = vunpack.c.h.b16 %v3771
    %v4919 = vunpack.c.l.b16 %v3772
    %v4920 = vunpack.c.h.b16 %v3772
    %v4921 = vunpack.c.l.b16 %v3773
    %v4922 = vunpack.c.h.b16 %v3773
    %v4923 = vunpack.c.l.b16 %v3774
    %v4924 = vunpack.c.h.b16 %v3774
    %v4925 = vunpack.c.l.b16 %v3775
    %v4926 = vunpack.c.h.b16 %v3775
    %v4927 = vunpack.c.l.b16 %v3776
    %v4928 = vunpack.c.h.b16 %v3776
    %v4929 = vunpack.c.l.b16 %v3777
    %v4930 = vunpack.c.h.b16 %v3777
    %v4931 = vunpack.c.l.b16 %v3778
    %v4932 = vunpack.c.h.b16 %v3778
    %v4933 = vunpack.c.l.b16 %v3779
    %v4934 = vunpack.c.h.b16 %v3779
    %v4935 = vunpack.c.l.b16 %v3780
    %v4936 = vunpack.c.h.b16 %v3780
    %v4937 = vunpack.c.l.b16 %v3781
    %v4938 = vunpack.c.h.b16 %v3781
    %v4939 = vunpack.c.l.b16 %v3782
    %v4940 = vunpack.c.h.b16 %v3782
    %v4941 = vunpack.c.l.b16 %v3783
    %v4942 = vunpack.c.h.b16 %v3783
    %v4943 = vunpack.c.l.b16 %v3784
    %v4944 = vunpack.c.h.b16 %v3784
    %v4945 = vunpack.c.l.b16 %v3785
    %v4946 = vunpack.c.h.b16 %v3785
    %v4947 = vunpack.c.l.b16 %v3786
    %v4948 = vunpack.c.h.b16 %v3786
    %v4949 = vunpack.c.l.b16 %v3787
    %v4950 = vunpack.c.h.b16 %v3787
    %v4951 = vunpack.c.l.b16 %v3788
    %v4952 = vunpack.c.h.b16 %v3788
    %v4953 = vunpack.c.l.b16 %v3789
    %v4954 = vunpack.c.h.b16 %v3789
    %v4955 = vunpack.c.l.b16 %v3790
    %v4956 = vunpack.c.h.b16 %v3790
    %v4957 = vunpack.c.l.b16 %v3791
    %v4958 = vunpack.c.h.b16 %v3791
    %v4959 = vunpack.c.l.b16 %v3792
    %v4960 = vunpack.c.h.b16 %v3792
    %v4961 = vunpack.c.l.b16 %v3793
    %v4962 = vunpack.c.h.b16 %v3793
    %v4963 = vunpack.c.l.b16 %v3794
    %v4964 = vunpack.c.h.b16 %v3794
    %v4965 = vunpack.c.l.b16 %v3795
    %v4966 = vunpack.c.h.b16 %v3795
    %v4967 = vunpack.c.l.b16 %v3796
    %v4968 = vunpack.c.h.b16 %v3796
    %v4969 = vunpack.c.l.b16 %v3797
    %v4970 = vunpack.c.h.b16 %v3797
    %v4971 = vunpack.c.l.b16 %v3798
    %v4972 = vunpack.c.h.b16 %v3798
    %v4973 = vunpack.c.l.b16 %v3799
    %v4974 = vunpack.c.h.b16 %v3799
    %v4975 = vunpack.c.l.b16 %v3800
    %v4976 = vunpack.c.h.b16 %v3800
    %v4977 = vunpack.c.l.b16 %v3801
    %v4978 = vunpack.c.h.b16 %v3801
    %v4979 = vunpack.c.l.b16 %v3802
    %v4980 = vunpack.c.h.b16 %v3802
    %v4981 = vunpack.c.l.b16 %v3803
    %v4982 = vunpack.c.h.b16 %v3803
    %v4983 = vunpack.c.l.b16 %v3804
    %v4984 = vunpack.c.h.b16 %v3804
    %v4985 = vunpack.c.l.b16 %v3805
    %v4986 = vunpack.c.h.b16 %v3805
    %v4987 = vunpack.c.l.b16 %v3806
    %v4988 = vunpack.c.h.b16 %v3806
    %v4989 = vunpack.c.l.b16 %v3807
    %v4990 = vunpack.c.h.b16 %v3807
    %v4991 = vunpack.c.l.b16 %v3808
    %v4992 = vunpack.c.h.b16 %v3808
    %v4993 = vunpack.c.l.b16 %v3809
    %v4994 = vunpack.c.h.b16 %v3809
    %v4995 = vunpack.c.l.b16 %v3810
    %v4996 = vunpack.c.h.b16 %v3810
    %v4997 = vunpack.c.l.b16 %v3811
    %v4998 = vunpack.c.h.b16 %v3811
    %v4999 = vunpack.c.l.b16 %v3812
    %v5000 = vunpack.c.h.b16 %v3812
    %v5001 = vunpack.c.l.b16 %v3813
    %v5002 = vunpack.c.h.b16 %v3813
    %v5003 = vunpack.c.l.b16 %v3814
    %v5004 = vunpack.c.h.b16 %v3814
    %v5005 = vunpack.c.l.b16 %v3815
    %v5006 = vunpack.c.h.b16 %v3815
    %v5007 = vunpack.c.l.b16 %v3816
    %v5008 = vunpack.c.h.b16 %v3816
    %v5009 = vunpack.c.l.b16 %v3817
    %v5010 = vunpack.c.h.b16 %v3817
    %v5011 = vunpack.c.l.b16 %v3818
    %v5012 = vunpack.c.h.b16 %v3818
    %v5013 = vunpack.c.l.b16 %v3819
    %v5014 = vunpack.c.h.b16 %v3819
    %v5015 = vunpack.c.l.b16 %v3820
    %v5016 = vunpack.c.h.b16 %v3820
    %v5017 = vunpack.c.l.b16 %v3821
    %v5018 = vunpack.c.h.b16 %v3821
    %v5019 = vunpack.c.l.b16 %v3822
    %v5020 = vunpack.c.h.b16 %v3822
    %v5021 = vunpack.c.l.b16 %v3823
    %v5022 = vunpack.c.h.b16 %v3823
    %v5023 = vunpack.c.l.b16 %v3824
    %v5024 = vunpack.c.h.b16 %v3824
    %v5025 = vunpack.c.l.b16 %v3825
    %v5026 = vunpack.c.h.b16 %v3825
    %v5027 = vunpack.c.l.b16 %v3826
    %v5028 = vunpack.c.h.b16 %v3826
    %v5029 = vunpack.c.l.b16 %v3827
    %v5030 = vunpack.c.h.b16 %v3827
    %v5031 = vunpack.c.l.b16 %v3828
    %v5032 = vunpack.c.h.b16 %v3828
    %v5033 = vunpack.c.l.b16 %v3829
    %v5034 = vunpack.c.h.b16 %v3829
    %v5035 = vunpack.c.l.b16 %v3830
    %v5036 = vunpack.c.h.b16 %v3830
    %v5037 = vunpack.c.l.b16 %v3831
    %v5038 = vunpack.c.h.b16 %v3831
    %v5039 = vunpack.c.l.b16 %v3832
    %v5040 = vunpack.c.h.b16 %v3832
    %v5041 = vunpack.c.l.b16 %v3833
    %v5042 = vunpack.c.h.b16 %v3833
    %v5043 = vunpack.c.l.b16 %v3834
    %v5044 = vunpack.c.h.b16 %v3834
    %v5045 = vunpack.c.l.b16 %v3835
    %v5046 = vunpack.c.h.b16 %v3835
    %v5047 = vunpack.c.l.b16 %v3836
    %v5048 = vunpack.c.h.b16 %v3836
    %v5049 = vunpack.c.l.b16 %v3837
    %v5050 = vunpack.c.h.b16 %v3837
    %v5051 = vunpack.c.l.b16 %v3838
    %v5052 = vunpack.c.h.b16 %v3838
    %v5053 = vunpack.c.l.b16 %v3839
    %v5054 = vunpack.c.h.b16 %v3839
    %v5055 = vunpack.c.l.b16 %v3840
    %v5056 = vunpack.c.h.b16 %v3840
    %v5057 = vunpack.c.l.b16 %v3841
    %v5058 = vunpack.c.h.b16 %v3841
    %v5059 = vunpack.c.l.b16 %v3842
    %v5060 = vunpack.c.h.b16 %v3842
    %v5061 = vunpack.c.l.b16 %v3843
    %v5062 = vunpack.c.h.b16 %v3843
    %v5063 = vunpack.c.l.b16 %v3844
    %v5064 = vunpack.c.h.b16 %v3844
    %v5065 = vunpack.c.l.b16 %v3845
    %v5066 = vunpack.c.h.b16 %v3845
    %v5067 = vunpack.c.l.b16 %v3846
    %v5068 = vunpack.c.h.b16 %v3846
    %v5069 = vunpack.c.l.b16 %v3847
    %v5070 = vunpack.c.h.b16 %v3847
    %v5071 = vunpack.c.l.b16 %v3848
    %v5072 = vunpack.c.h.b16 %v3848
    %v5073 = vunpack.c.l.b16 %v3849
    %v5074 = vunpack.c.h.b16 %v3849
    %v5075 = vunpack.c.l.b16 %v3850
    %v5076 = vunpack.c.h.b16 %v3850
    %v5077 = vunpack.c.l.b16 %v3851
    %v5078 = vunpack.c.h.b16 %v3851
    %v5079 = vunpack.c.l.b16 %v3852
    %v5080 = vunpack.c.h.b16 %v3852
    %v5081 = vunpack.c.l.b16 %v3853
    %v5082 = vunpack.c.h.b16 %v3853
    %v5083 = vunpack.c.l.b16 %v3854
    %v5084 = vunpack.c.h.b16 %v3854
    %v5085 = vunpack.c.l.b16 %v3855
    %v5086 = vunpack.c.h.b16 %v3855
    %v5087 = vunpack.c.l.b16 %v3856
    %v5088 = vunpack.c.h.b16 %v3856
    %v5089 = vunpack.c.l.b16 %v3857
    %v5090 = vunpack.c.h.b16 %v3857
    %v5091 = vunpack.c.l.b16 %v3858
    %v5092 = vunpack.c.h.b16 %v3858
    %v5093 = vunpack.c.l.b16 %v3859
    %v5094 = vunpack.c.h.b16 %v3859
    %v5095 = vunpack.c.l.b16 %v3860
    %v5096 = vunpack.c.h.b16 %v3860
    %v5097 = vunpack.c.l.b16 %v3861
    %v5098 = vunpack.c.h.b16 %v3861
    %v5099 = vunpack.c.l.b16 %v3862
    %v5100 = vunpack.c.h.b16 %v3862
    %v5101 = vunpack.c.l.b16 %v3863
    %v5102 = vunpack.c.h.b16 %v3863
    %v5103 = vunpack.c.l.b16 %v3864
    %v5104 = vunpack.c.h.b16 %v3864
    %v5105 = vunpack.c.l.b16 %v3865
    %v5106 = vunpack.c.h.b16 %v3865
    %v5107 = vunpack.c.l.b16 %v3866
    %v5108 = vunpack.c.h.b16 %v3866
    %v5109 = vunpack.c.l.b16 %v3867
    %v5110 = vunpack.c.h.b16 %v3867
    %v5111 = vunpack.c.l.b16 %v3868
    %v5112 = vunpack.c.h.b16 %v3868
    %v5113 = vunpack.c.l.b16 %v3869
    %v5114 = vunpack.c.h.b16 %v3869
    %v5115 = vunpack.c.l.b16 %v3870
    %v5116 = vunpack.c.h.b16 %v3870
    %v5117 = vunpack.c.l.b16 %v3871
    %v5118 = vunpack.c.h.b16 %v3871
    %v5119 = vunpack.c.l.b16 %v3872
    %v5120 = vunpack.c.h.b16 %v3872
    %v5121 = vunpack.c.l.b16 %v3873
    %v5122 = vunpack.c.h.b16 %v3873
    %v5123 = vunpack.c.l.b16 %v3874
    %v5124 = vunpack.c.h.b16 %v3874
    %v5125 = vunpack.c.l.b16 %v3875
    %v5126 = vunpack.c.h.b16 %v3875
    %v5127 = vunpack.c.l.b16 %v3876
    %v5128 = vunpack.c.h.b16 %v3876
    %v5129 = vunpack.c.l.b16 %v3877
    %v5130 = vunpack.c.h.b16 %v3877
    %v5131 = vunpack.c.l.b16 %v3878
    %v5132 = vunpack.c.h.b16 %v3878
    %v5133 = vunpack.c.l.b16 %v3879
    %v5134 = vunpack.c.h.b16 %v3879
    %v5135 = vunpack.c.l.b16 %v3880
    %v5136 = vunpack.c.h.b16 %v3880
    %v5137 = vunpack.c.l.b16 %v3881
    %v5138 = vunpack.c.h.b16 %v3881
    %v5139 = vunpack.c.l.b16 %v3882
    %v5140 = vunpack.c.h.b16 %v3882
    %v5141 = vunpack.c.l.b16 %v3883
    %v5142 = vunpack.c.h.b16 %v3883
    %v5143 = vunpack.c.l.b16 %v3884
    %v5144 = vunpack.c.h.b16 %v3884
    %v5145 = vunpack.c.l.b16 %v3885
    %v5146 = vunpack.c.h.b16 %v3885
    %v5147 = vunpack.c.l.b16 %v3886
    %v5148 = vunpack.c.h.b16 %v3886
    %v5149 = vunpack.c.l.b16 %v3887
    %v5150 = vunpack.c.h.b16 %v3887
    %v5151 = vunpack.c.l.b16 %v3888
    %v5152 = vunpack.c.h.b16 %v3888
    %v5153 = vunpack.c.l.b16 %v3889
    %v5154 = vunpack.c.h.b16 %v3889
    %v5155 = vunpack.c.l.b16 %v3890
    %v5156 = vunpack.c.h.b16 %v3890
    %v5157 = vunpack.c.l.b16 %v3891
    %v5158 = vunpack.c.h.b16 %v3891
    %v5159 = vunpack.c.l.b16 %v3892
    %v5160 = vunpack.c.h.b16 %v3892
    %v5161 = vunpack.c.l.b16 %v3893
    %v5162 = vunpack.c.h.b16 %v3893
    %v5163 = vunpack.c.l.b16 %v3894
    %v5164 = vunpack.c.h.b16 %v3894
    %v5165 = vunpack.c.l.b16 %v3895
    %v5166 = vunpack.c.h.b16 %v3895
    %v5167 = vunpack.c.l.b16 %v3896
    %v5168 = vunpack.c.h.b16 %v3896
    %v5169 = vunpack.c.l.b16 %v3897
    %v5170 = vunpack.c.h.b16 %v3897
    %v5171 = vunpack.c.l.b16 %v3898
    %v5172 = vunpack.c.h.b16 %v3898
    %v5173 = vunpack.c.l.b16 %v3899
    %v5174 = vunpack.c.h.b16 %v3899
    %v5175 = vunpack.c.l.b16 %v3900
    %v5176 = vunpack.c.h.b16 %v3900
    %v5177 = vunpack.c.l.b16 %v3901
    %v5178 = vunpack.c.h.b16 %v3901
    %v5179 = vunpack.c.l.b16 %v3902
    %v5180 = vunpack.c.h.b16 %v3902
    %v5181 = vunpack.c.l.b16 %v3903
    %v5182 = vunpack.c.h.b16 %v3903
    %v5183 = vunpack.c.l.b16 %v3904
    %v5184 = vunpack.c.h.b16 %v3904
    %v5185 = vunpack.c.l.b16 %v3905
    %v5186 = vunpack.c.h.b16 %v3905
    %v5187 = vunpack.c.l.b16 %v3906
    %v5188 = vunpack.c.h.b16 %v3906
    %v5189 = vunpack.c.l.b16 %v3907
    %v5190 = vunpack.c.h.b16 %v3907
    %v5191 = vunpack.c.l.b16 %v3908
    %v5192 = vunpack.c.h.b16 %v3908
    %v5193 = vunpack.c.l.b16 %v3909
    %v5194 = vunpack.c.h.b16 %v3909
    %v5195 = vunpack.c.l.b16 %v3910
    %v5196 = vunpack.c.h.b16 %v3910
    %v5197 = vunpack.c.l.b16 %v3911
    %v5198 = vunpack.c.h.b16 %v3911
    %v5199 = vunpack.c.l.b16 %v3912
    %v5200 = vunpack.c.h.b16 %v3912
    %v5201 = vunpack.c.l.b16 %v3913
    %v5202 = vunpack.c.h.b16 %v3913
    %v5203 = vunpack.c.l.b16 %v3914
    %v5204 = vunpack.c.h.b16 %v3914
    %v5205 = vunpack.c.l.b16 %v3915
    %v5206 = vunpack.c.h.b16 %v3915
    %v5207 = vunpack.c.l.b16 %v3916
    %v5208 = vunpack.c.h.b16 %v3916
    %v5209 = vunpack.c.l.b16 %v3917
    %v5210 = vunpack.c.h.b16 %v3917
    %v5211 = vunpack.c.l.b16 %v3918
    %v5212 = vunpack.c.h.b16 %v3918
    %v5213 = vunpack.c.l.b16 %v3919
    %v5214 = vunpack.c.h.b16 %v3919
    %v5215 = vunpack.c.l.b16 %v3920
    %v5216 = vunpack.c.h.b16 %v3920
    %v5217 = vunpack.c.l.b16 %v3921
    %v5218 = vunpack.c.h.b16 %v3921
    %v5219 = vunpack.c.l.b16 %v3922
    %v5220 = vunpack.c.h.b16 %v3922
    %v5221 = vunpack.c.l.b16 %v3923
    %v5222 = vunpack.c.h.b16 %v3923
    %v5223 = vunpack.c.l.b16 %v3924
    %v5224 = vunpack.c.h.b16 %v3924
    %v5225 = vunpack.c.l.b16 %v3925
    %v5226 = vunpack.c.h.b16 %v3925
    %v5227 = vunpack.c.l.b16 %v3926
    %v5228 = vunpack.c.h.b16 %v3926
    %v5229 = vunpack.c.l.b16 %v3927
    %v5230 = vunpack.c.h.b16 %v3927
    %v5231 = vunpack.c.l.b16 %v3928
    %v5232 = vunpack.c.h.b16 %v3928
    %v5233 = vunpack.c.l.b16 %v3929
    %v5234 = vunpack.c.h.b16 %v3929
    %v5235 = vunpack.c.l.b16 %v3930
    %v5236 = vunpack.c.h.b16 %v3930
    %v5237 = vunpack.c.l.b16 %v3931
    %v5238 = vunpack.c.h.b16 %v3931
    %v5239 = vunpack.c.l.b16 %v3932
    %v5240 = vunpack.c.h.b16 %v3932
    %v5241 = vunpack.c.l.b16 %v3933
    %v5242 = vunpack.c.h.b16 %v3933
    %v5243 = vunpack.c.l.b16 %v3934
    %v5244 = vunpack.c.h.b16 %v3934
    %v5245 = vunpack.c.l.b16 %v3935
    %v5246 = vunpack.c.h.b16 %v3935
    %v5247 = vunpack.c.l.b16 %v3936
    %v5248 = vunpack.c.h.b16 %v3936
    %v5249 = vunpack.c.l.b16 %v3937
    %v5250 = vunpack.c.h.b16 %v3937
    %v5251 = vunpack.c.l.b16 %v3938
    %v5252 = vunpack.c.h.b16 %v3938
    %v5253 = vunpack.c.l.b16 %v3939
    %v5254 = vunpack.c.h.b16 %v3939
    %v5255 = vunpack.c.l.b16 %v3940
    %v5256 = vunpack.c.h.b16 %v3940
    %v5257 = vunpack.c.l.b16 %v3941
    %v5258 = vunpack.c.h.b16 %v3941
    %v5259 = vunpack.c.l.b16 %v3942
    %v5260 = vunpack.c.h.b16 %v3942
    %v5261 = vunpack.c.l.b16 %v3943
    %v5262 = vunpack.c.h.b16 %v3943
    %v5263 = vunpack.c.l.b16 %v3944
    %v5264 = vunpack.c.h.b16 %v3944
    %v5265 = vunpack.c.l.b16 %v3945
    %v5266 = vunpack.c.h.b16 %v3945
    %v5267 = vunpack.c.l.b16 %v3946
    %v5268 = vunpack.c.h.b16 %v3946
    %v5269 = vunpack.c.l.b16 %v3947
    %v5270 = vunpack.c.h.b16 %v3947
    %v5271 = vunpack.c.l.b16 %v3948
    %v5272 = vunpack.c.h.b16 %v3948
    %v5273 = vunpack.c.l.b16 %v3949
    %v5274 = vunpack.c.h.b16 %v3949
    %v5275 = vunpack.c.l.b16 %v3950
    %v5276 = vunpack.c.h.b16 %v3950
    %v5277 = vunpack.c.l.b16 %v3951
    %v5278 = vunpack.c.h.b16 %v3951
    %v5279 = vunpack.c.l.b16 %v3952
    %v5280 = vunpack.c.h.b16 %v3952
    %v5281 = vunpack.c.l.b16 %v3953
    %v5282 = vunpack.c.h.b16 %v3953
    %v5283 = vunpack.c.l.b16 %v3954
    %v5284 = vunpack.c.h.b16 %v3954
    %v5285 = vunpack.c.l.b16 %v3955
    %v5286 = vunpack.c.h.b16 %v3955
    %v5287 = vunpack.c.l.b16 %v3956
    %v5288 = vunpack.c.h.b16 %v3956
    %v5289 = vunpack.c.l.b16 %v3957
    %v5290 = vunpack.c.h.b16 %v3957
    %v5291 = vunpack.c.l.b16 %v3958
    %v5292 = vunpack.c.h.b16 %v3958
    %v5293 = vunpack.c.l.b16 %v3959
    %v5294 = vunpack.c.h.b16 %v3959
    %v5295 = vunpack.c.l.b16 %v3960
    %v5296 = vunpack.c.h.b16 %v3960
    %v5297 = vunpack.c.l.b16 %v3961
    %v5298 = vunpack.c.h.b16 %v3961
    %v5299 = vunpack.c.l.b16 %v3962
    %v5300 = vunpack.c.h.b16 %v3962
    %v5301 = vunpack.c.l.b16 %v3963
    %v5302 = vunpack.c.h.b16 %v3963
    %v5303 = vunpack.c.l.b16 %v3964
    %v5304 = vunpack.c.h.b16 %v3964
    %v5305 = vunpack.c.l.b16 %v3965
    %v5306 = vunpack.c.h.b16 %v3965
    %v5307 = vunpack.c.l.b16 %v3966
    %v5308 = vunpack.c.h.b16 %v3966
    %v5309 = vunpack.c.l.b16 %v3967
    %v5310 = vunpack.c.h.b16 %v3967
    %v5311 = vunpack.c.l.b16 %v3968
    %v5312 = vunpack.c.h.b16 %v3968
    %v5313 = vunpack.c.l.b16 %v3969
    %v5314 = vunpack.c.h.b16 %v3969
    %v5315 = vunpack.c.l.b16 %v3970
    %v5316 = vunpack.c.h.b16 %v3970
    %v5317 = vunpack.c.l.b16 %v3971
    %v5318 = vunpack.c.h.b16 %v3971
    %v5319 = vunpack.c.l.b16 %v3972
    %v5320 = vunpack.c.h.b16 %v3972
    %v5321 = vunpack.c.l.b16 %v3973
    %v5322 = vunpack.c.h.b16 %v3973
    %v5323 = vunpack.c.l.b16 %v3974
    %v5324 = vunpack.c.h.b16 %v3974
    %v5325 = vunpack.c.l.b16 %v3975
    %v5326 = vunpack.c.h.b16 %v3975
    %v5327 = vunpack.c.l.b16 %v3976
    %v5328 = vunpack.c.h.b16 %v3976
    %v5329 = vunpack.c.l.b16 %v3977
    %v5330 = vunpack.c.h.b16 %v3977
    %v5331 = vunpack.c.l.b16 %v3978
    %v5332 = vunpack.c.h.b16 %v3978
    %v5333 = vunpack.c.l.b16 %v3979
    %v5334 = vunpack.c.h.b16 %v3979
    %v5335 = vunpack.c.l.b16 %v3980
    %v5336 = vunpack.c.h.b16 %v3980
    %v5337 = vunpack.c.l.b16 %v3981
    %v5338 = vunpack.c.h.b16 %v3981
    %v5339 = vunpack.c.l.b16 %v3982
    %v5340 = vunpack.c.h.b16 %v3982
    %v5341 = vunpack.c.l.b16 %v3983
    %v5342 = vunpack.c.h.b16 %v3983
    %v5343 = vunpack.c.l.b16 %v3984
    %v5344 = vunpack.c.h.b16 %v3984
    %v5345 = vunpack.c.l.b16 %v3985
    %v5346 = vunpack.c.h.b16 %v3985
    %v5347 = vunpack.c.l.b16 %v3986
    %v5348 = vunpack.c.h.b16 %v3986
    %v5349 = vunpack.c.l.b16 %v3987
    %v5350 = vunpack.c.h.b16 %v3987
    %v5351 = vunpack.c.l.b16 %v3988
    %v5352 = vunpack.c.h.b16 %v3988
    %v5353 = vunpack.c.l.b16 %v3989
    %v5354 = vunpack.c.h.b16 %v3989
    %v5355 = vunpack.c.l.b16 %v3990
    %v5356 = vunpack.c.h.b16 %v3990
    %v5357 = vunpack.c.l.b16 %v3991
    %v5358 = vunpack.c.h.b16 %v3991
    %v5359 = vunpack.c.l.b16 %v3992
    %v5360 = vunpack.c.h.b16 %v3992
    %v5361 = vunpack.c.l.b16 %v3993
    %v5362 = vunpack.c.h.b16 %v3993
    %v5363 = vunpack.c.l.b16 %v3994
    %v5364 = vunpack.c.h.b16 %v3994
    %v5365 = vunpack.c.l.b16 %v3995
    %v5366 = vunpack.c.h.b16 %v3995
    %v5367 = vunpack.c.l.b16 %v3996
    %v5368 = vunpack.c.h.b16 %v3996
    %v5369 = vunpack.c.l.b16 %v3997
    %v5370 = vunpack.c.h.b16 %v3997
    %v5371 = vunpack.c.l.b16 %v3998
    %v5372 = vunpack.c.h.b16 %v3998
    %v5373 = vunpack.c.l.b16 %v3999
    %v5374 = vunpack.c.h.b16 %v3999
    %v5375 = vunpack.c.l.b16 %v4000
    %v5376 = vunpack.c.h.b16 %v4000
    %v5377 = vunpack.c.l.b16 %v4001
    %v5378 = vunpack.c.h.b16 %v4001
    %v5379 = vunpack.c.l.b16 %v4002
    %v5380 = vunpack.c.h.b16 %v4002
    %v5381 = vunpack.c.l.b16 %v4003
    %v5382 = vunpack.c.h.b16 %v4003
    %v5383 = vunpack.c.l.b16 %v4004
    %v5384 = vunpack.c.h.b16 %v4004
    %v5385 = vunpack.c.l.b16 %v4005
    %v5386 = vunpack.c.h.b16 %v4005
    %v5387 = vunpack.c.l.b16 %v4006
    %v5388 = vunpack.c.h.b16 %v4006
    %v5389 = vunpack.c.l.b16 %v4007
    %v5390 = vunpack.c.h.b16 %v4007
    %v5391 = vunpack.c.l.b16 %v4008
    %v5392 = vunpack.c.h.b16 %v4008
    %v5393 = vunpack.c.l.b16 %v4009
    %v5394 = vunpack.c.h.b16 %v4009
    %v5395 = vunpack.c.l.b16 %v4010
    %v5396 = vunpack.c.h.b16 %v4010
    %v5397 = vunpack.c.l.b16 %v4011
    %v5398 = vunpack.c.h.b16 %v4011
    %v5399 = vunpack.c.l.b16 %v4012
    %v5400 = vunpack.c.h.b16 %v4012
    %v5401 = vunpack.c.l.b16 %v4013
    %v5402 = vunpack.c.h.b16 %v4013
    %v5403 = vunpack.c.l.b16 %v4014
    %v5404 = vunpack.c.h.b16 %v4014
    %v5405 = vunpack.c.l.b16 %v4015
    %v5406 = vunpack.c.h.b16 %v4015
    %v5407 = vunpack.c.l.b16 %v4016
    %v5408 = vunpack.c.h.b16 %v4016
    %v5409 = vunpack.c.l.b16 %v4017
    %v5410 = vunpack.c.h.b16 %v4017
    %v5411 = vunpack.c.l.b16 %v4018
    %v5412 = vunpack.c.h.b16 %v4018
    %v5413 = vunpack.c.l.b16 %v4019
    %v5414 = vunpack.c.h.b16 %v4019
    %v5415 = vunpack.c.l.b16 %v4020
    %v5416 = vunpack.c.h.b16 %v4020
    %v5417 = vunpack.c.l.b16 %v4021
    %v5418 = vunpack.c.h.b16 %v4021
    %v5419 = vunpack.c.l.b16 %v4022
    %v5420 = vunpack.c.h.b16 %v4022
    %v5421 = vunpack.c.l.b16 %v4023
    %v5422 = vunpack.c.h.b16 %v4023
    %v5423 = vunpack.c.l.b16 %v4024
    %v5424 = vunpack.c.h.b16 %v4024
    %v5425 = vunpack.c.l.b16 %v4025
    %v5426 = vunpack.c.h.b16 %v4025
    %v5427 = vunpack.c.l.b16 %v4026
    %v5428 = vunpack.c.h.b16 %v4026
    %v5429 = vunpack.c.l.b16 %v4027
    %v5430 = vunpack.c.h.b16 %v4027
    %v5431 = vunpack.c.l.b16 %v4028
    %v5432 = vunpack.c.h.b16 %v4028
    %v5433 = vunpack.c.l.b16 %v4029
    %v5434 = vunpack.c.h.b16 %v4029
    %v5435 = vunpack.c.l.b16 %v4030
    %v5436 = vunpack.c.h.b16 %v4030
    %v5437 = vunpack.c.l.b16 %v4031
    %v5438 = vunpack.c.h.b16 %v4031
    %v5439 = vunpack.c.l.b16 %v4032
    %v5440 = vunpack.c.h.b16 %v4032
    %v5441 = vunpack.c.l.b16 %v4033
    %v5442 = vunpack.c.h.b16 %v4033
    %v5443 = vunpack.c.l.b16 %v4034
    %v5444 = vunpack.c.h.b16 %v4034
    %v5445 = vunpack.c.l.b16 %v4035
    %v5446 = vunpack.c.h.b16 %v4035
    %v5447 = vunpack.c.l.b16 %v4036
    %v5448 = vunpack.c.h.b16 %v4036
    %v5449 = vunpack.c.l.b16 %v4037
    %v5450 = vunpack.c.h.b16 %v4037
    %v5451 = vunpack.c.l.b16 %v4038
    %v5452 = vunpack.c.h.b16 %v4038
    %v5453 = vunpack.c.l.b16 %v4039
    %v5454 = vunpack.c.h.b16 %v4039
    %v5455 = vunpack.c.l.b16 %v4040
    %v5456 = vunpack.c.h.b16 %v4040
    %v5457 = vunpack.c.l.b16 %v4041
    %v5458 = vunpack.c.h.b16 %v4041
    %v5459 = vunpack.c.l.b16 %v4042
    %v5460 = vunpack.c.h.b16 %v4042
    %v5461 = vunpack.c.l.b16 %v4043
    %v5462 = vunpack.c.h.b16 %v4043
    %v5463 = vunpack.c.l.b16 %v4044
    %v5464 = vunpack.c.h.b16 %v4044
    %v5465 = vunpack.c.l.b16 %v4045
    %v5466 = vunpack.c.h.b16 %v4045
    %v5467 = vunpack.c.l.b16 %v4046
    %v5468 = vunpack.c.h.b16 %v4046
    %v5469 = vunpack.c.l.b16 %v4047
    %v5470 = vunpack.c.h.b16 %v4047
    %v5471 = vunpack.c.l.b16 %v4048
    %v5472 = vunpack.c.h.b16 %v4048
    %v5473 = vunpack.c.l.b16 %v4049
    %v5474 = vunpack.c.h.b16 %v4049
    %v5475 = vunpack.c.l.b16 %v4050
    %v5476 = vunpack.c.h.b16 %v4050
    %v5477 = vunpack.c.l.b16 %v4051
    %v5478 = vunpack.c.h.b16 %v4051
    %v5479 = vunpack.c.l.b16 %v4052
    %v5480 = vunpack.c.h.b16 %v4052
    %v5481 = vunpack.c.l.b16 %v4053
    %v5482 = vunpack.c.h.b16 %v4053
    %v5483 = vunpack.c.l.b16 %v4054
    %v5484 = vunpack.c.h.b16 %v4054
    %v5485 = vunpack.c.l.b16 %v4055
    %v5486 = vunpack.c.h.b16 %v4055
    %v5487 = vunpack.c.l.b16 %v4056
    %v5488 = vunpack.c.h.b16 %v4056
    %v5489 = vunpack.c.l.b16 %v4057
    %v5490 = vunpack.c.h.b16 %v4057
    %v5491 = vunpack.c.l.b16 %v4058
    %v5492 = vunpack.c.h.b16 %v4058
    %v5493 = vunpack.c.l.b16 %v4059
    %v5494 = vunpack.c.h.b16 %v4059
    %v5495 = vunpack.c.l.b16 %v4060
    %v5496 = vunpack.c.h.b16 %v4060
    %v5497 = vunpack.c.l.b16 %v4061
    %v5498 = vunpack.c.h.b16 %v4061
    %v5499 = vunpack.c.l.b16 %v4062
    %v5500 = vunpack.c.h.b16 %v4062
    %v5501 = vunpack.c.l.b16 %v4063
    %v5502 = vunpack.c.h.b16 %v4063
    %v5503 = vunpack.c.l.b16 %v4064
    %v5504 = vunpack.c.h.b16 %v4064
    %v5505 = vunpack.c.l.b16 %v4065
    %v5506 = vunpack.c.h.b16 %v4065
    %v5507 = vunpack.c.l.b16 %v4066
    %v5508 = vunpack.c.h.b16 %v4066
    %v5509 = vunpack.c.l.b16 %v4067
    %v5510 = vunpack.c.h.b16 %v4067
    %v5511 = vunpack.c.l.b16 %v4068
    %v5512 = vunpack.c.h.b16 %v4068
    %v5513 = vunpack.c.l.b16 %v4069
    %v5514 = vunpack.c.h.b16 %v4069
    %v5515 = vunpack.c.l.b16 %v4070
    %v5516 = vunpack.c.h.b16 %v4070
    %v5517 = vunpack.c.l.b16 %v4071
    %v5518 = vunpack.c.h.b16 %v4071
    %v5519 = vunpack.c.l.b16 %v4072
    %v5520 = vunpack.c.h.b16 %v4072
    %v5521 = vunpack.c.l.b16 %v4073
    %v5522 = vunpack.c.h.b16 %v4073
    %v5523 = vunpack.c.l.b16 %v4074
    %v5524 = vunpack.c.h.b16 %v4074
    %v5525 = vunpack.c.l.b16 %v4075
    %v5526 = vunpack.c.h.b16 %v4075
    %v5527 = vunpack.c.l.b16 %v4076
    %v5528 = vunpack.c.h.b16 %v4076
    %v5529 = vunpack.c.l.b16 %v4077
    %v5530 = vunpack.c.h.b16 %v4077
    %v5531 = vunpack.c.l.b16 %v4078
    %v5532 = vunpack.c.h.b16 %v4078
    %v5533 = vunpack.c.l.b16 %v4079
    %v5534 = vunpack.c.h.b16 %v4079
    %v5535 = vunpack.c.l.b16 %v4080
    %v5536 = vunpack.c.h.b16 %v4080
    %v5537 = vunpack.c.l.b16 %v4081
    %v5538 = vunpack.c.h.b16 %v4081
    %v5539 = vunpack.c.l.b16 %v4082
    %v5540 = vunpack.c.h.b16 %v4082
    %v5541 = vunpack.c.l.b16 %v4083
    %v5542 = vunpack.c.h.b16 %v4083
    %v5543 = vunpack.c.l.b16 %v4084
    %v5544 = vunpack.c.h.b16 %v4084
    %v5545 = vunpack.c.l.b16 %v4085
    %v5546 = vunpack.c.h.b16 %v4085
    %v5547 = vunpack.c.l.b16 %v4086
    %v5548 = vunpack.c.h.b16 %v4086
    %v5549 = vunpack.c.l.b16 %v4087
    %v5550 = vunpack.c.h.b16 %v4087
    %v5551 = vunpack.c.l.b16 %v4088
    %v5552 = vunpack.c.h.b16 %v4088
    %v5553 = vunpack.c.l.b16 %v4089
    %v5554 = vunpack.c.h.b16 %v4089
    %v5555 = vunpack.c.l.b16 %v4090
    %v5556 = vunpack.c.h.b16 %v4090
    %v5557 = vunpack.c.l.b16 %v4091
    %v5558 = vunpack.c.h.b16 %v4091
    %v5559 = vunpack.c.l.b16 %v4092
    %v5560 = vunpack.c.h.b16 %v4092
    %v5561 = vunpack.c.l.b16 %v4093
    %v5562 = vunpack.c.h.b16 %v4093
    %v5563 = vunpack.c.l.b16 %v4094
    %v5564 = vunpack.c.h.b16 %v4094
    %v5565 = vunpack.c.l.b16 %v4095
    %v5566 = vunpack.c.h.b16 %v4095
    %v5567 = vunpack.c.l.b16 %v4096
    %v5568 = vunpack.c.h.b16 %v4096
    %v5569 = vunpack.c.l.b16 %v4097
    %v5570 = vunpack.c.h.b16 %v4097
    %v5571 = vunpack.c.l.b16 %v4098
    %v5572 = vunpack.c.h.b16 %v4098
    %v5573 = vunpack.c.l.b16 %v4099
    %v5574 = vunpack.c.h.b16 %v4099
    %v5575 = vunpack.c.l.b16 %v4100
    %v5576 = vunpack.c.h.b16 %v4100
    %v5577 = vunpack.c.l.b16 %v4101
    %v5578 = vunpack.c.h.b16 %v4101
    %v5579 = vunpack.c.l.b16 %v4102
    %v5580 = vunpack.c.h.b16 %v4102
    %v5581 = vunpack.c.l.b16 %v4103
    %v5582 = vunpack.c.h.b16 %v4103
    %v5583 = vunpack.c.l.b16 %v4104
    %v5584 = vunpack.c.h.b16 %v4104
    %v5585 = vunpack.c.l.b16 %v4105
    %v5586 = vunpack.c.h.b16 %v4105
    %v5587 = vunpack.c.l.b16 %v4106
    %v5588 = vunpack.c.h.b16 %v4106
    %v5589 = vunpack.c.l.b16 %v4107
    %v5590 = vunpack.c.h.b16 %v4107
    %v5591 = vunpack.c.l.b16 %v4108
    %v5592 = vunpack.c.h.b16 %v4108
    %v5593 = vunpack.c.l.b16 %v4109
    %v5594 = vunpack.c.h.b16 %v4109
    %v5595 = vunpack.c.l.b16 %v4110
    %v5596 = vunpack.c.h.b16 %v4110
    %v5597 = vunpack.c.l.b16 %v4111
    %v5598 = vunpack.c.h.b16 %v4111
    %v5599 = vunpack.c.l.b16 %v4112
    %v5600 = vunpack.c.h.b16 %v4112
    %v5601 = vunpack.c.l.b16 %v4113
    %v5602 = vunpack.c.h.b16 %v4113
    %v5603 = vunpack.c.l.b16 %v4114
    %v5604 = vunpack.c.h.b16 %v4114
    %v5605 = vunpack.c.l.b16 %v4115
    %v5606 = vunpack.c.h.b16 %v4115
    %v5607 = vunpack.c.l.b16 %v4116
    %v5608 = vunpack.c.h.b16 %v4116
    %v5609 = vunpack.c.l.b16 %v4117
    %v5610 = vunpack.c.h.b16 %v4117
    %v5611 = vunpack.c.l.b16 %v4118
    %v5612 = vunpack.c.h.b16 %v4118
    %v5613 = vunpack.c.l.b16 %v4119
    %v5614 = vunpack.c.h.b16 %v4119
    %v5615 = vunpack.c.l.b16 %v4120
    %v5616 = vunpack.c.h.b16 %v4120
    %v5617 = vunpack.c.l.b16 %v4121
    %v5618 = vunpack.c.h.b16 %v4121
    %v5619 = vunpack.c.l.b16 %v4122
    %v5620 = vunpack.c.h.b16 %v4122
    %v5621 = vunpack.c.l.b16 %v4123
    %v5622 = vunpack.c.h.b16 %v4123
    %v5623 = vunpack.c.l.b16 %v4124
    %v5624 = vunpack.c.h.b16 %v4124
    %v5625 = vunpack.c.l.b16 %v4125
    %v5626 = vunpack.c.h.b16 %v4125
    %v5627 = vunpack.c.l.b16 %v4126
    %v5628 = vunpack.c.h.b16 %v4126
    %v5629 = vunpack.c.l.b16 %v4127
    %v5630 = vunpack.c.h.b16 %v4127
    %v5631 = vunpack.c.l.b16 %v4128
    %v5632 = vunpack.c.h.b16 %v4128
    %v5633 = vunpack.c.l.b16 %v4129
    %v5634 = vunpack.c.h.b16 %v4129
    %v5635 = vunpack.c.l.b16 %v4130
    %v5636 = vunpack.c.h.b16 %v4130
    %v5637 = vunpack.c.l.b16 %v4131
    %v5638 = vunpack.c.h.b16 %v4131
    %v5639 = vunpack.c.l.b16 %v4132
    %v5640 = vunpack.c.h.b16 %v4132
    %v5641 = vunpack.c.l.b16 %v4133
    %v5642 = vunpack.c.h.b16 %v4133
    %v5643 = vunpack.c.l.b16 %v4134
    %v5644 = vunpack.c.h.b16 %v4134
    %v5645 = vunpack.c.l.b16 %v4135
    %v5646 = vunpack.c.h.b16 %v4135
    %v5647 = vunpack.c.l.b16 %v4136
    %v5648 = vunpack.c.h.b16 %v4136
    %v5649 = vunpack.c.l.b16 %v4137
    %v5650 = vunpack.c.h.b16 %v4137
    %v5651 = vunpack.c.l.b16 %v4138
    %v5652 = vunpack.c.h.b16 %v4138
    %v5653 = vunpack.c.l.b16 %v4139
    %v5654 = vunpack.c.h.b16 %v4139
    %v5655 = vunpack.c.l.b16 %v4140
    %v5656 = vunpack.c.h.b16 %v4140
    %v5657 = vunpack.c.l.b16 %v4141
    %v5658 = vunpack.c.h.b16 %v4141
    %v5659 = vunpack.c.l.b16 %v4142
    %v5660 = vunpack.c.h.b16 %v4142
    %v5661 = vunpack.c.l.b16 %v4143
    %v5662 = vunpack.c.h.b16 %v4143
    %v5663 = vunpack.c.l.b16 %v4144
    %v5664 = vunpack.c.h.b16 %v4144
    %v5665 = vunpack.c.l.b16 %v4145
    %v5666 = vunpack.c.h.b16 %v4145
    %v5667 = vunpack.c.l.b16 %v4146
    %v5668 = vunpack.c.h.b16 %v4146
    %v5669 = vunpack.c.l.b16 %v4147
    %v5670 = vunpack.c.h.b16 %v4147
    %v5671 = vunpack.c.l.b16 %v4148
    %v5672 = vunpack.c.h.b16 %v4148
    %v5673 = vunpack.c.l.b16 %v4149
    %v5674 = vunpack.c.h.b16 %v4149
    %v5675 = vunpack.c.l.b16 %v4150
    %v5676 = vunpack.c.h.b16 %v4150
    %v5677 = vunpack.c.l.b16 %v4151
    %v5678 = vunpack.c.h.b16 %v4151
    %v5679 = vunpack.c.l.b16 %v4152
    %v5680 = vunpack.c.h.b16 %v4152
    %v5681 = vunpack.c.l.b16 %v4153
    %v5682 = vunpack.c.h.b16 %v4153
    %v5683 = vunpack.c.l.b16 %v4154
    %v5684 = vunpack.c.h.b16 %v4154
    %v5685 = vunpack.c.l.b16 %v4155
    %v5686 = vunpack.c.h.b16 %v4155
    %v5687 = vunpack.c.l.b16 %v4156
    %v5688 = vunpack.c.h.b16 %v4156
    %v5689 = vunpack.c.l.b16 %v4157
    %v5690 = vunpack.c.h.b16 %v4157
    %v5691 = vunpack.c.l.b16 %v4158
    %v5692 = vunpack.c.h.b16 %v4158
    %v5693 = vunpack.c.l.b16 %v4159
    %v5694 = vunpack.c.h.b16 %v4159
    %v5695 = vunpack.c.l.b16 %v4160
    %v5696 = vunpack.c.h.b16 %v4160
    %v5697 = vunpack.c.l.b16 %v4161
    %v5698 = vunpack.c.h.b16 %v4161
    %v5699 = vunpack.c.l.b16 %v4162
    %v5700 = vunpack.c.h.b16 %v4162
    %v5701 = vunpack.c.l.b16 %v4163
    %v5702 = vunpack.c.h.b16 %v4163
    %v5703 = vunpack.c.l.b16 %v4164
    %v5704 = vunpack.c.h.b16 %v4164
    %v5705 = vunpack.c.l.b16 %v4165
    %v5706 = vunpack.c.h.b16 %v4165
    %v5707 = vunpack.c.l.b16 %v4166
    %v5708 = vunpack.c.h.b16 %v4166
    %v5709 = vunpack.c.l.b16 %v4167
    %v5710 = vunpack.c.h.b16 %v4167
    %v5711 = vunpack.c.l.b16 %v4168
    %v5712 = vunpack.c.h.b16 %v4168
    %v5713 = vunpack.c.l.b16 %v4169
    %v5714 = vunpack.c.h.b16 %v4169
    %v5715 = vunpack.c.l.b16 %v4170
    %v5716 = vunpack.c.h.b16 %v4170
    %v5717 = vunpack.c.l.b16 %v4171
    %v5718 = vunpack.c.h.b16 %v4171
    %v5719 = vunpack.c.l.b16 %v4172
    %v5720 = vunpack.c.h.b16 %v4172
    %v5721 = vunpack.c.l.b16 %v4173
    %v5722 = vunpack.c.h.b16 %v4173
    %v5723 = vunpack.c.l.b16 %v4174
    %v5724 = vunpack.c.h.b16 %v4174
    %v5725 = vunpack.c.l.b16 %v4175
    %v5726 = vunpack.c.h.b16 %v4175
    %v5727 = vunpack.c.l.b16 %v4176
    %v5728 = vunpack.c.h.b16 %v4176
    %v5729 = vunpack.c.l.b16 %v4177
    %v5730 = vunpack.c.h.b16 %v4177
    %v5731 = vunpack.c.l.b16 %v4178
    %v5732 = vunpack.c.h.b16 %v4178
    %v5733 = vunpack.c.l.b16 %v4179
    %v5734 = vunpack.c.h.b16 %v4179
    %v5735 = vunpack.c.l.b16 %v4180
    %v5736 = vunpack.c.h.b16 %v4180
    %v5737 = vunpack.c.l.b16 %v4181
    %v5738 = vunpack.c.h.b16 %v4181
    %v5739 = vunpack.c.l.b16 %v4182
    %v5740 = vunpack.c.h.b16 %v4182
    %v5741 = vunpack.c.l.b16 %v4183
    %v5742 = vunpack.c.h.b16 %v4183
    %v5743 = vunpack.c.l.b16 %v4184
    %v5744 = vunpack.c.h.b16 %v4184
    %v5745 = vunpack.c.l.b16 %v4185
    %v5746 = vunpack.c.h.b16 %v4185
    %v5747 = vunpack.c.l.b16 %v4186
    %v5748 = vunpack.c.h.b16 %v4186
    %v5749 = vunpack.c.l.b16 %v4187
    %v5750 = vunpack.c.h.b16 %v4187
    %v5751 = vunpack.c.l.b16 %v4188
    %v5752 = vunpack.c.h.b16 %v4188
    %v5753 = vunpack.c.l.b16 %v4189
    %v5754 = vunpack.c.h.b16 %v4189
    %v5755 = vunpack.c.l.b16 %v4190
    %v5756 = vunpack.c.h.b16 %v4190
    %v5757 = vunpack.c.l.b16 %v4191
    %v5758 = vunpack.c.h.b16 %v4191
    %v5759 = vunpack.c.l.b16 %v4192
    %v5760 = vunpack.c.h.b16 %v4192
    %v5761 = vunpack.c.l.b16 %v4193
    %v5762 = vunpack.c.h.b16 %v4193
    %v5763 = vunpack.c.l.b16 %v4194
    %v5764 = vunpack.c.h.b16 %v4194
    %v5765 = vunpack.c.l.b16 %v4195
    %v5766 = vunpack.c.h.b16 %v4195
    %v5767 = vunpack.c.l.b16 %v4196
    %v5768 = vunpack.c.h.b16 %v4196
    %v5769 = vunpack.c.l.b16 %v4197
    %v5770 = vunpack.c.h.b16 %v4197
    %v5771 = vunpack.c.l.b16 %v4198
    %v5772 = vunpack.c.h.b16 %v4198
    %v5773 = vunpack.c.l.b16 %v4199
    %v5774 = vunpack.c.h.b16 %v4199
    %v5775 = vunpack.c.l.b16 %v4200
    %v5776 = vunpack.c.h.b16 %v4200
    %v5777 = vunpack.c.l.b16 %v4201
    %v5778 = vunpack.c.h.b16 %v4201
    %v5779 = vunpack.c.l.b16 %v4202
    %v5780 = vunpack.c.h.b16 %v4202
    %v5781 = vunpack.c.l.b16 %v4203
    %v5782 = vunpack.c.h.b16 %v4203
    %v5783 = vunpack.c.l.b16 %v4204
    %v5784 = vunpack.c.h.b16 %v4204
    %v5785 = vunpack.c.l.b16 %v4205
    %v5786 = vunpack.c.h.b16 %v4205
    %v5787 = vunpack.c.l.b16 %v4206
    %v5788 = vunpack.c.h.b16 %v4206
    %v5789 = vunpack.c.l.b16 %v4207
    %v5790 = vunpack.c.h.b16 %v4207
    %v5791 = vunpack.c.l.b16 %v4208
    %v5792 = vunpack.c.h.b16 %v4208
    %v5793 = vunpack.c.l.b16 %v4209
    %v5794 = vunpack.c.h.b16 %v4209
    %v5795 = vunpack.c.l.b16 %v4210
    %v5796 = vunpack.c.h.b16 %v4210
    %v5797 = vunpack.c.l.b16 %v4211
    %v5798 = vunpack.c.h.b16 %v4211
    %v5799 = vunpack.c.l.b16 %v4212
    %v5800 = vunpack.c.h.b16 %v4212
    %v5801 = vunpack.c.l.b16 %v4213
    %v5802 = vunpack.c.h.b16 %v4213
    %v5803 = vunpack.c.l.b16 %v4214
    %v5804 = vunpack.c.h.b16 %v4214
    %v5805 = vunpack.c.l.b16 %v4215
    %v5806 = vunpack.c.h.b16 %v4215
    %v5807 = vunpack.c.l.b16 %v4216
    %v5808 = vunpack.c.h.b16 %v4216
    %v5809 = vunpack.c.l.b16 %v4217
    %v5810 = vunpack.c.h.b16 %v4217
    %v5811 = vunpack.c.l.b16 %v4218
    %v5812 = vunpack.c.h.b16 %v4218
    %v5813 = vunpack.c.l.b16 %v4219
    %v5814 = vunpack.c.h.b16 %v4219
    %v5815 = vunpack.c.l.b16 %v4220
    %v5816 = vunpack.c.h.b16 %v4220
    %v5817 = vunpack.c.l.b16 %v4221
    %v5818 = vunpack.c.h.b16 %v4221
    %v5819 = vunpack.c.l.b16 %v4222
    %v5820 = vunpack.c.h.b16 %v4222
    %v5821 = vunpack.c.l.b16 %v4223
    %v5822 = vunpack.c.h.b16 %v4223
    %v5823 = vunpack.c.l.b16 %v4224
    %v5824 = vunpack.c.h.b16 %v4224
    %v5825 = vunpack.c.l.b16 %v4225
    %v5826 = vunpack.c.h.b16 %v4225
    %v5827 = vunpack.c.l.b16 %v4226
    %v5828 = vunpack.c.h.b16 %v4226
    %v5829 = vunpack.c.l.b16 %v4227
    %v5830 = vunpack.c.h.b16 %v4227
    %v5831 = vunpack.c.l.b16 %v4228
    %v5832 = vunpack.c.h.b16 %v4228
    %v5833 = vunpack.c.l.b16 %v4229
    %v5834 = vunpack.c.h.b16 %v4229
    %v5835 = vunpack.c.l.b16 %v4230
    %v5836 = vunpack.c.h.b16 %v4230
    %v5837 = vunpack.c.l.b16 %v4231
    %v5838 = vunpack.c.h.b16 %v4231
    %v5839 = vunpack.c.l.b16 %v4232
    %v5840 = vunpack.c.h.b16 %v4232
    %v5841 = vunpack.c.l.b16 %v4233
    %v5842 = vunpack.c.h.b16 %v4233
    %v5843 = vunpack.c.l.b16 %v4234
    %v5844 = vunpack.c.h.b16 %v4234
    %v5845 = vunpack.c.l.b16 %v4235
    %v5846 = vunpack.c.h.b16 %v4235
    %v5847 = vunpack.c.l.b16 %v4236
    %v5848 = vunpack.c.h.b16 %v4236
    %v5849 = vunpack.c.l.b16 %v4237
    %v5850 = vunpack.c.h.b16 %v4237
    %v5851 = vunpack.c.l.b16 %v4238
    %v5852 = vunpack.c.h.b16 %v4238
    %v5853 = vunpack.c.l.b16 %v4239
    %v5854 = vunpack.c.h.b16 %v4239
    %v5855 = vunpack.c.l.b16 %v4240
    %v5856 = vunpack.c.h.b16 %v4240
    %v5857 = vunpack.c.l.b16 %v4241
    %v5858 = vunpack.c.h.b16 %v4241
    %v5859 = vunpack.c.l.b16 %v4242
    %v5860 = vunpack.c.h.b16 %v4242
    %v5861 = vunpack.c.l.b16 %v4243
    %v5862 = vunpack.c.h.b16 %v4243
    %v5863 = vunpack.c.l.b16 %v4244
    %v5864 = vunpack.c.h.b16 %v4244
    %v5865 = vpack.c.b16 %v4857, %v4841
    %v5866 = vpack.c.b16 %v4858, %v4842
    %v5867 = vpack.c.b16 %v4859, %v4843
    %v5868 = vpack.c.b16 %v4860, %v4844
    %v5869 = vpack.c.b16 %v4861, %v4845
    %v5870 = vpack.c.b16 %v4862, %v4846
    %v5871 = vpack.c.b16 %v4863, %v4847
    %v5872 = vpack.c.b16 %v4864, %v4848
    %v5873 = vpack.c.b16 %v4865, %v4849
    %v5874 = vpack.c.b16 %v4866, %v4850
    %v5875 = vpack.c.b16 %v4867, %v4851
    %v5876 = vpack.c.b16 %v4868, %v4852
    %v5877 = vpack.c.b16 %v4869, %v4853
    %v5878 = vpack.c.b16 %v4870, %v4854
    %v5879 = vpack.c.b16 %v4871, %v4855
    %v5880 = vpack.c.b16 %v4872, %v4856
    %v5881 = vpack.c.b16 %v4889, %v4873
    %v5882 = vpack.c.b16 %v4890, %v4874
    %v5883 = vpack.c.b16 %v4891, %v4875
    %v5884 = vpack.c.b16 %v4892, %v4876
    %v5885 = vpack.c.b16 %v4893, %v4877
    %v5886 = vpack.c.b16 %v4894, %v4878
    %v5887 = vpack.c.b16 %v4895, %v4879
    %v5888 = vpack.c.b16 %v4896, %v4880
    %v5889 = vpack.c.b16 %v4897, %v4881
    %v5890 = vpack.c.b16 %v4898, %v4882
    %v5891 = vpack.c.b16 %v4899, %v4883
    %v5892 = vpack.c.b16 %v4900, %v4884
    %v5893 = vpack.c.b16 %v4901, %v4885
    %v5894 = vpack.c.b16 %v4902, %v4886
    %v5895 = vpack.c.b16 %v4903, %v4887
    %v5896 = vpack.c.b16 %v4904, %v4888
    %v5897 = vpack.c.b16 %v4921, %v4905
    %v5898 = vpack.c.b16 %v4922, %v4906
    %v5899 = vpack.c.b16 %v4923, %v4907
    %v5900 = vpack.c.b16 %v4924, %v4908
    %v5901 = vpack.c.b16 %v4925, %v4909
    %v5902 = vpack.c.b16 %v4926, %v4910
    %v5903 = vpack.c.b16 %v4927, %v4911
    %v5904 = vpack.c.b16 %v4928, %v4912
    %v5905 = vpack.c.b16 %v4929, %v4913
    %v5906 = vpack.c.b16 %v4930, %v4914
    %v5907 = vpack.c.b16 %v4931, %v4915
    %v5908 = vpack.c.b16 %v4932, %v4916
    %v5909 = vpack.c.b16 %v4933, %v4917
    %v5910 = vpack.c.b16 %v4934, %v4918
    %v5911 = vpack.c.b16 %v4935, %v4919
    %v5912 = vpack.c.b16 %v4936, %v4920
    %v5913 = vpack.c.b16 %v4953, %v4937
    %v5914 = vpack.c.b16 %v4954, %v4938
    %v5915 = vpack.c.b16 %v4955, %v4939
    %v5916 = vpack.c.b16 %v4956, %v4940
    %v5917 = vpack.c.b16 %v4957, %v4941
    %v5918 = vpack.c.b16 %v4958, %v4942
    %v5919 = vpack.c.b16 %v4959, %v4943
    %v5920 = vpack.c.b16 %v4960, %v4944
    %v5921 = vpack.c.b16 %v4961, %v4945
    %v5922 = vpack.c.b16 %v4962, %v4946
    %v5923 = vpack.c.b16 %v4963, %v4947
    %v5924 = vpack.c.b16 %v4964, %v4948
    %v5925 = vpack.c.b16 %v4965, %v4949
    %v5926 = vpack.c.b16 %v4966, %v4950
    %v5927 = vpack.c.b16 %v4967, %v4951
    %v5928 = vpack.c.b16 %v4968, %v4952
    %v5929 = vpack.c.b16 %v4985, %v4969
    %v5930 = vpack.c.b16 %v4986, %v4970
    %v5931 = vpack.c.b16 %v4987, %v4971
    %v5932 = vpack.c.b16 %v4988, %v4972
    %v5933 = vpack.c.b16 %v4989, %v4973
    %v5934 = vpack.c.b16 %v4990, %v4974
    %v5935 = vpack.c.b16 %v4991, %v4975
    %v5936 = vpack.c.b16 %v4992, %v4976
    %v5937 = vpack.c.b16 %v4993, %v4977
    %v5938 = vpack.c.b16 %v4994, %v4978
    %v5939 = vpack.c.b16 %v4995, %v4979
    %v5940 = vpack.c.b16 %v4996, %v4980
    %v5941 = vpack.c.b16 %v4997, %v4981
    %v5942 = vpack.c.b16 %v4998, %v4982
    %v5943 = vpack.c.b16 %v4999, %v4983
    %v5944 = vpack.c.b16 %v5000, %v4984
    %v5945 = vpack.c.b16 %v5017, %v5001
    %v5946 = vpack.c.b16 %v5018, %v5002
    %v5947 = vpack.c.b16 %v5019, %v5003
    %v5948 = vpack.c.b16 %v5020, %v5004
    %v5949 = vpack.c.b16 %v5021, %v5005
    %v5950 = vpack.c.b16 %v5022, %v5006
    %v5951 = vpack.c.b16 %v5023, %v5007
    %v5952 = vpack.c.b16 %v5024, %v5008
    %v5953 = vpack.c.b16 %v5025, %v5009
    %v5954 = vpack.c.b16 %v5026, %v5010
    %v5955 = vpack.c.b16 %v5027, %v5011
    %v5956 = vpack.c.b16 %v5028, %v5012
    %v5957 = vpack.c.b16 %v5029, %v5013
    %v5958 = vpack.c.b16 %v5030, %v5014
    %v5959 = vpack.c.b16 %v5031, %v5015
    %v5960 = vpack.c.b16 %v5032, %v5016
    %v5961 = vpack.c.b16 %v5049, %v5033
    %v5962 = vpack.c.b16 %v5050, %v5034
    %v5963 = vpack.c.b16 %v5051, %v5035
    %v5964 = vpack.c.b16 %v5052, %v5036
    %v5965 = vpack.c.b16 %v5053, %v5037
    %v5966 = vpack.c.b16 %v5054, %v5038
    %v5967 = vpack.c.b16 %v5055, %v5039
    %v5968 = vpack.c.b16 %v5056, %v5040
    %v5969 = vpack.c.b16 %v5057, %v5041
    %v5970 = vpack.c.b16 %v5058, %v5042
    %v5971 = vpack.c.b16 %v5059, %v5043
    %v5972 = vpack.c.b16 %v5060, %v5044
    %v5973 = vpack.c.b16 %v5061, %v5045
    %v5974 = vpack.c.b16 %v5062, %v5046
    %v5975 = vpack.c.b16 %v5063, %v5047
    %v5976 = vpack.c.b16 %v5064, %v5048
    %v5977 = vpack.c.b16 %v5081, %v5065
    %v5978 = vpack.c.b16 %v5082, %v5066
    %v5979 = vpack.c.b16 %v5083, %v5067
    %v5980 = vpack.c.b16 %v5084, %v5068
    %v5981 = vpack.c.b16 %v5085, %v5069
    %v5982 = vpack.c.b16 %v5086, %v5070
    %v5983 = vpack.c.b16 %v5087, %v5071
    %v5984 = vpack.c.b16 %v5088, %v5072
    %v5985 = vpack.c.b16 %v5089, %v5073
    %v5986 = vpack.c.b16 %v5090, %v5074
    %v5987 = vpack.c.b16 %v5091, %v5075
    %v5988 = vpack.c.b16 %v5092, %v5076
    %v5989 = vpack.c.b16 %v5093, %v5077
    %v5990 = vpack.c.b16 %v5094, %v5078
    %v5991 = vpack.c.b16 %v5095, %v5079
    %v5992 = vpack.c.b16 %v5096, %v5080
    %v5993 = vpack.c.b16 %v5113, %v5097
    %v5994 = vpack.c.b16 %v5114, %v5098
    %v5995 = vpack.c.b16 %v5115, %v5099
    %v5996 = vpack.c.b16 %v5116, %v5100
    %v5997 = vpack.c.b16 %v5117, %v5101
    %v5998 = vpack.c.b16 %v5118, %v5102
    %v5999 = vpack.c.b16 %v5119, %v5103
    %v6000 = vpack.c.b16 %v5120, %v5104
    %v6001 = vpack.c.b16 %v5121, %v5105
    %v6002 = vpack.c.b16 %v5122, %v5106
    %v6003 = vpack.c.b16 %v5123, %v5107
    %v6004 = vpack.c.b16 %v5124, %v5108
    %v6005 = vpack.c.b16 %v5125, %v5109
    %v6006 = vpack.c.b16 %v5126, %v5110
    %v6007 = vpack.c.b16 %v5127, %v5111
    %v6008 = vpack.c.b16 %v5128, %v5112
    %v6009 = vpack.c.b16 %v5145, %v5129
    %v6010 = vpack.c.b16 %v5146, %v5130
    %v6011 = vpack.c.b16 %v5147, %v5131
    %v6012 = vpack.c.b16 %v5148, %v5132
    %v6013 = vpack.c.b16 %v5149, %v5133
    %v6014 = vpack.c.b16 %v5150, %v5134
    %v6015 = vpack.c.b16 %v5151, %v5135
    %v6016 = vpack.c.b16 %v5152, %v5136
    %v6017 = vpack.c.b16 %v5153, %v5137
    %v6018 = vpack.c.b16 %v5154, %v5138
    %v6019 = vpack.c.b16 %v5155, %v5139
    %v6020 = vpack.c.b16 %v5156, %v5140
    %v6021 = vpack.c.b16 %v5157, %v5141
    %v6022 = vpack.c.b16 %v5158, %v5142
    %v6023 = vpack.c.b16 %v5159, %v5143
    %v6024 = vpack.c.b16 %v5160, %v5144
    %v6025 = vpack.c.b16 %v5177, %v5161
    %v6026 = vpack.c.b16 %v5178, %v5162
    %v6027 = vpack.c.b16 %v5179, %v5163
    %v6028 = vpack.c.b16 %v5180, %v5164
    %v6029 = vpack.c.b16 %v5181, %v5165
    %v6030 = vpack.c.b16 %v5182, %v5166
    %v6031 = vpack.c.b16 %v5183, %v5167
    %v6032 = vpack.c.b16 %v5184, %v5168
    %v6033 = vpack.c.b16 %v5185, %v5169
    %v6034 = vpack.c.b16 %v5186, %v5170
    %v6035 = vpack.c.b16 %v5187, %v5171
    %v6036 = vpack.c.b16 %v5188, %v5172
    %v6037 = vpack.c.b16 %v5189, %v5173
    %v6038 = vpack.c.b16 %v5190, %v5174
    %v6039 = vpack.c.b16 %v5191, %v5175
    %v6040 = vpack.c.b16 %v5192, %v5176
    %v6041 = vpack.c.b16 %v5209, %v5193
    %v6042 = vpack.c.b16 %v5210, %v5194
    %v6043 = vpack.c.b16 %v5211, %v5195
    %v6044 = vpack.c.b16 %v5212, %v5196
    %v6045 = vpack.c.b16 %v5213, %v5197
    %v6046 = vpack.c.b16 %v5214, %v5198
    %v6047 = vpack.c.b16 %v5215, %v5199
    %v6048 = vpack.c.b16 %v5216, %v5200
    %v6049 = vpack.c.b16 %v5217, %v5201
    %v6050 = vpack.c.b16 %v5218, %v5202
    %v6051 = vpack.c.b16 %v5219, %v5203
    %v6052 = vpack.c.b16 %v5220, %v5204
    %v6053 = vpack.c.b16 %v5221, %v5205
    %v6054 = vpack.c.b16 %v5222, %v5206
    %v6055 = vpack.c.b16 %v5223, %v5207
    %v6056 = vpack.c.b16 %v5224, %v5208
    %v6057 = vpack.c.b16 %v5241, %v5225
    %v6058 = vpack.c.b16 %v5242, %v5226
    %v6059 = vpack.c.b16 %v5243, %v5227
    %v6060 = vpack.c.b16 %v5244, %v5228
    %v6061 = vpack.c.b16 %v5245, %v5229
    %v6062 = vpack.c.b16 %v5246, %v5230
    %v6063 = vpack.c.b16 %v5247, %v5231
    %v6064 = vpack.c.b16 %v5248, %v5232
    %v6065 = vpack.c.b16 %v5249, %v5233
    %v6066 = vpack.c.b16 %v5250, %v5234
    %v6067 = vpack.c.b16 %v5251, %v5235
    %v6068 = vpack.c.b16 %v5252, %v5236
    %v6069 = vpack.c.b16 %v5253, %v5237
    %v6070 = vpack.c.b16 %v5254, %v5238
    %v6071 = vpack.c.b16 %v5255, %v5239
    %v6072 = vpack.c.b16 %v5256, %v5240
    %v6073 = vpack.c.b16 %v5273, %v5257
    %v6074 = vpack.c.b16 %v5274, %v5258
    %v6075 = vpack.c.b16 %v5275, %v5259
    %v6076 = vpack.c.b16 %v5276, %v5260
    %v6077 = vpack.c.b16 %v5277, %v5261
    %v6078 = vpack.c.b16 %v5278, %v5262
    %v6079 = vpack.c.b16 %v5279, %v5263
    %v6080 = vpack.c.b16 %v5280, %v5264
    %v6081 = vpack.c.b16 %v5281, %v5265
    %v6082 = vpack.c.b16 %v5282, %v5266
    %v6083 = vpack.c.b16 %v5283, %v5267
    %v6084 = vpack.c.b16 %v5284, %v5268
    %v6085 = vpack.c.b16 %v5285, %v5269
    %v6086 = vpack.c.b16 %v5286, %v5270
    %v6087 = vpack.c.b16 %v5287, %v5271
    %v6088 = vpack.c.b16 %v5288, %v5272
    %v6089 = vpack.c.b16 %v5305, %v5289
    %v6090 = vpack.c.b16 %v5306, %v5290
    %v6091 = vpack.c.b16 %v5307, %v5291
    %v6092 = vpack.c.b16 %v5308, %v5292
    %v6093 = vpack.c.b16 %v5309, %v5293
    %v6094 = vpack.c.b16 %v5310, %v5294
    %v6095 = vpack.c.b16 %v5311, %v5295
    %v6096 = vpack.c.b16 %v5312, %v5296
    %v6097 = vpack.c.b16 %v5313, %v5297
    %v6098 = vpack.c.b16 %v5314, %v5298
    %v6099 = vpack.c.b16 %v5315, %v5299
    %v6100 = vpack.c.b16 %v5316, %v5300
    %v6101 = vpack.c.b16 %v5317, %v5301
    %v6102 = vpack.c.b16 %v5318, %v5302
    %v6103 = vpack.c.b16 %v5319, %v5303
    %v6104 = vpack.c.b16 %v5320, %v5304
    %v6105 = vpack.c.b16 %v5337, %v5321
    %v6106 = vpack.c.b16 %v5338, %v5322
    %v6107 = vpack.c.b16 %v5339, %v5323
    %v6108 = vpack.c.b16 %v5340, %v5324
    %v6109 = vpack.c.b16 %v5341, %v5325
    %v6110 = vpack.c.b16 %v5342, %v5326
    %v6111 = vpack.c.b16 %v5343, %v5327
    %v6112 = vpack.c.b16 %v5344, %v5328
    %v6113 = vpack.c.b16 %v5345, %v5329
    %v6114 = vpack.c.b16 %v5346, %v5330
    %v6115 = vpack.c.b16 %v5347, %v5331
    %v6116 = vpack.c.b16 %v5348, %v5332
    %v6117 = vpack.c.b16 %v5349, %v5333
    %v6118 = vpack.c.b16 %v5350, %v5334
    %v6119 = vpack.c.b16 %v5351, %v5335
    %v6120 = vpack.c.b16 %v5352, %v5336
    %v6121 = vpack.c.b16 %v5369, %v5353
    %v6122 = vpack.c.b16 %v5370, %v5354
    %v6123 = vpack.c.b16 %v5371, %v5355
    %v6124 = vpack.c.b16 %v5372, %v5356
    %v6125 = vpack.c.b16 %v5373, %v5357
    %v6126 = vpack.c.b16 %v5374, %v5358
    %v6127 = vpack.c.b16 %v5375, %v5359
    %v6128 = vpack.c.b16 %v5376, %v5360
    %v6129 = vpack.c.b16 %v5377, %v5361
    %v6130 = vpack.c.b16 %v5378, %v5362
    %v6131 = vpack.c.b16 %v5379, %v5363
    %v6132 = vpack.c.b16 %v5380, %v5364
    %v6133 = vpack.c.b16 %v5381, %v5365
    %v6134 = vpack.c.b16 %v5382, %v5366
    %v6135 = vpack.c.b16 %v5383, %v5367
    %v6136 = vpack.c.b16 %v5384, %v5368
    %v6137 = vpack.c.b16 %v5401, %v5385
    %v6138 = vpack.c.b16 %v5402, %v5386
    %v6139 = vpack.c.b16 %v5403, %v5387
    %v6140 = vpack.c.b16 %v5404, %v5388
    %v6141 = vpack.c.b16 %v5405, %v5389
    %v6142 = vpack.c.b16 %v5406, %v5390
    %v6143 = vpack.c.b16 %v5407, %v5391
    %v6144 = vpack.c.b16 %v5408, %v5392
    %v6145 = vpack.c.b16 %v5409, %v5393
    %v6146 = vpack.c.b16 %v5410, %v5394
    %v6147 = vpack.c.b16 %v5411, %v5395
    %v6148 = vpack.c.b16 %v5412, %v5396
    %v6149 = vpack.c.b16 %v5413, %v5397
    %v6150 = vpack.c.b16 %v5414, %v5398
    %v6151 = vpack.c.b16 %v5415, %v5399
    %v6152 = vpack.c.b16 %v5416, %v5400
    %v6153 = vpack.c.b16 %v5433, %v5417
    %v6154 = vpack.c.b16 %v5434, %v5418
    %v6155 = vpack.c.b16 %v5435, %v5419
    %v6156 = vpack.c.b16 %v5436, %v5420
    %v6157 = vpack.c.b16 %v5437, %v5421
    %v6158 = vpack.c.b16 %v5438, %v5422
    %v6159 = vpack.c.b16 %v5439, %v5423
    %v6160 = vpack.c.b16 %v5440, %v5424
    %v6161 = vpack.c.b16 %v5441, %v5425
    %v6162 = vpack.c.b16 %v5442, %v5426
    %v6163 = vpack.c.b16 %v5443, %v5427
    %v6164 = vpack.c.b16 %v5444, %v5428
    %v6165 = vpack.c.b16 %v5445, %v5429
    %v6166 = vpack.c.b16 %v5446, %v5430
    %v6167 = vpack.c.b16 %v5447, %v5431
    %v6168 = vpack.c.b16 %v5448, %v5432
    %v6169 = vpack.c.b16 %v5465, %v5449
    %v6170 = vpack.c.b16 %v5466, %v5450
    %v6171 = vpack.c.b16 %v5467, %v5451
    %v6172 = vpack.c.b16 %v5468, %v5452
    %v6173 = vpack.c.b16 %v5469, %v5453
    %v6174 = vpack.c.b16 %v5470, %v5454
    %v6175 = vpack.c.b16 %v5471, %v5455
    %v6176 = vpack.c.b16 %v5472, %v5456
    %v6177 = vpack.c.b16 %v5473, %v5457
    %v6178 = vpack.c.b16 %v5474, %v5458
    %v6179 = vpack.c.b16 %v5475, %v5459
    %v6180 = vpack.c.b16 %v5476, %v5460
    %v6181 = vpack.c.b16 %v5477, %v5461
    %v6182 = vpack.c.b16 %v5478, %v5462
    %v6183 = vpack.c.b16 %v5479, %v5463
    %v6184 = vpack.c.b16 %v5480, %v5464
    %v6185 = vpack.c.b16 %v5497, %v5481
    %v6186 = vpack.c.b16 %v5498, %v5482
    %v6187 = vpack.c.b16 %v5499, %v5483
    %v6188 = vpack.c.b16 %v5500, %v5484
    %v6189 = vpack.c.b16 %v5501, %v5485
    %v6190 = vpack.c.b16 %v5502, %v5486
    %v6191 = vpack.c.b16 %v5503, %v5487
    %v6192 = vpack.c.b16 %v5504, %v5488
    %v6193 = vpack.c.b16 %v5505, %v5489
    %v6194 = vpack.c.b16 %v5506, %v5490
    %v6195 = vpack.c.b16 %v5507, %v5491
    %v6196 = vpack.c.b16 %v5508, %v5492
    %v6197 = vpack.c.b16 %v5509, %v5493
    %v6198 = vpack.c.b16 %v5510, %v5494
    %v6199 = vpack.c.b16 %v5511, %v5495
    %v6200 = vpack.c.b16 %v5512, %v5496
    %v6201 = vpack.c.b16 %v5529, %v5513
    %v6202 = vpack.c.b16 %v5530, %v5514
    %v6203 = vpack.c.b16 %v5531, %v5515
    %v6204 = vpack.c.b16 %v5532, %v5516
    %v6205 = vpack.c.b16 %v5533, %v5517
    %v6206 = vpack.c.b16 %v5534, %v5518
    %v6207 = vpack.c.b16 %v5535, %v5519
    %v6208 = vpack.c.b16 %v5536, %v5520
    %v6209 = vpack.c.b16 %v5537, %v5521
    %v6210 = vpack.c.b16 %v5538, %v5522
    %v6211 = vpack.c.b16 %v5539, %v5523
    %v6212 = vpack.c.b16 %v5540, %v5524
    %v6213 = vpack.c.b16 %v5541, %v5525
    %v6214 = vpack.c.b16 %v5542, %v5526
    %v6215 = vpack.c.b16 %v5543, %v5527
    %v6216 = vpack.c.b16 %v5544, %v5528
    %v6217 = vpack.c.b16 %v5561, %v5545
    %v6218 = vpack.c.b16 %v5562, %v5546
    %v6219 = vpack.c.b16 %v5563, %v5547
    %v6220 = vpack.c.b16 %v5564, %v5548
    %v6221 = vpack.c.b16 %v5565, %v5549
    %v6222 = vpack.c.b16 %v5566, %v5550
    %v6223 = vpack.c.b16 %v5567, %v5551
    %v6224 = vpack.c.b16 %v5568, %v5552
    %v6225 = vpack.c.b16 %v5569, %v5553
    %v6226 = vpack.c.b16 %v5570, %v5554
    %v6227 = vpack.c.b16 %v5571, %v5555
    %v6228 = vpack.c.b16 %v5572, %v5556
    %v6229 = vpack.c.b16 %v5573, %v5557
    %v6230 = vpack.c.b16 %v5574, %v5558
    %v6231 = vpack.c.b16 %v5575, %v5559
    %v6232 = vpack.c.b16 %v5576, %v5560
    %v6233 = vpack.c.b16 %v5593, %v5577
    %v6234 = vpack.c.b16 %v5594, %v5578
    %v6235 = vpack.c.b16 %v5595, %v5579
    %v6236 = vpack.c.b16 %v5596, %v5580
    %v6237 = vpack.c.b16 %v5597, %v5581
    %v6238 = vpack.c.b16 %v5598, %v5582
    %v6239 = vpack.c.b16 %v5599, %v5583
    %v6240 = vpack.c.b16 %v5600, %v5584
    %v6241 = vpack.c.b16 %v5601, %v5585
    %v6242 = vpack.c.b16 %v5602, %v5586
    %v6243 = vpack.c.b16 %v5603, %v5587
    %v6244 = vpack.c.b16 %v5604, %v5588
    %v6245 = vpack.c.b16 %v5605, %v5589
    %v6246 = vpack.c.b16 %v5606, %v5590
    %v6247 = vpack.c.b16 %v5607, %v5591
    %v6248 = vpack.c.b16 %v5608, %v5592
    %v6249 = vpack.c.b16 %v5625, %v5609
    %v6250 = vpack.c.b16 %v5626, %v5610
    %v6251 = vpack.c.b16 %v5627, %v5611
    %v6252 = vpack.c.b16 %v5628, %v5612
    %v6253 = vpack.c.b16 %v5629, %v5613
    %v6254 = vpack.c.b16 %v5630, %v5614
    %v6255 = vpack.c.b16 %v5631, %v5615
    %v6256 = vpack.c.b16 %v5632, %v5616
    %v6257 = vpack.c.b16 %v5633, %v5617
    %v6258 = vpack.c.b16 %v5634, %v5618
    %v6259 = vpack.c.b16 %v5635, %v5619
    %v6260 = vpack.c.b16 %v5636, %v5620
    %v6261 = vpack.c.b16 %v5637, %v5621
    %v6262 = vpack.c.b16 %v5638, %v5622
    %v6263 = vpack.c.b16 %v5639, %v5623
    %v6264 = vpack.c.b16 %v5640, %v5624
    %v6265 = vpack.c.b16 %v5657, %v5641
    %v6266 = vpack.c.b16 %v5658, %v5642
    %v6267 = vpack.c.b16 %v5659, %v5643
    %v6268 = vpack.c.b16 %v5660, %v5644
    %v6269 = vpack.c.b16 %v5661, %v5645
    %v6270 = vpack.c.b16 %v5662, %v5646
    %v6271 = vpack.c.b16 %v5663, %v5647
    %v6272 = vpack.c.b16 %v5664, %v5648
    %v6273 = vpack.c.b16 %v5665, %v5649
    %v6274 = vpack.c.b16 %v5666, %v5650
    %v6275 = vpack.c.b16 %v5667, %v5651
    %v6276 = vpack.c.b16 %v5668, %v5652
    %v6277 = vpack.c.b16 %v5669, %v5653
    %v6278 = vpack.c.b16 %v5670, %v5654
    %v6279 = vpack.c.b16 %v5671, %v5655
    %v6280 = vpack.c.b16 %v5672, %v5656
    %v6281 = vpack.c.b16 %v5689, %v5673
    %v6282 = vpack.c.b16 %v5690, %v5674
    %v6283 = vpack.c.b16 %v5691, %v5675
    %v6284 = vpack.c.b16 %v5692, %v5676
    %v6285 = vpack.c.b16 %v5693, %v5677
    %v6286 = vpack.c.b16 %v5694, %v5678
    %v6287 = vpack.c.b16 %v5695, %v5679
    %v6288 = vpack.c.b16 %v5696, %v5680
    %v6289 = vpack.c.b16 %v5697, %v5681
    %v6290 = vpack.c.b16 %v5698, %v5682
    %v6291 = vpack.c.b16 %v5699, %v5683
    %v6292 = vpack.c.b16 %v5700, %v5684
    %v6293 = vpack.c.b16 %v5701, %v5685
    %v6294 = vpack.c.b16 %v5702, %v5686
    %v6295 = vpack.c.b16 %v5703, %v5687
    %v6296 = vpack.c.b16 %v5704, %v5688
    %v6297 = vpack.c.b16 %v5721, %v5705
    %v6298 = vpack.c.b16 %v5722, %v5706
    %v6299 = vpack.c.b16 %v5723, %v5707
    %v6300 = vpack.c.b16 %v5724, %v5708
    %v6301 = vpack.c.b16 %v5725, %v5709
    %v6302 = vpack.c.b16 %v5726, %v5710
    %v6303 = vpack.c.b16 %v5727, %v5711
    %v6304 = vpack.c.b16 %v5728, %v5712
    %v6305 = vpack.c.b16 %v5729, %v5713
    %v6306 = vpack.c.b16 %v5730, %v5714
    %v6307 = vpack.c.b16 %v5731, %v5715
    %v6308 = vpack.c.b16 %v5732, %v5716
    %v6309 = vpack.c.b16 %v5733, %v5717
    %v6310 = vpack.c.b16 %v5734, %v5718
    %v6311 = vpack.c.b16 %v5735, %v5719
    %v6312 = vpack.c.b16 %v5736, %v5720
    %v6313 = vpack.c.b16 %v5753, %v5737
    %v6314 = vpack.c.b16 %v5754, %v5738
    %v6315 = vpack.c.b16 %v5755, %v5739
    %v6316 = vpack.c.b16 %v5756, %v5740
    %v6317 = vpack.c.b16 %v5757, %v5741
    %v6318 = vpack.c.b16 %v5758, %v5742
    %v6319 = vpack.c.b16 %v5759, %v5743
    %v6320 = vpack.c.b16 %v5760, %v5744
    %v6321 = vpack.c.b16 %v5761, %v5745
    %v6322 = vpack.c.b16 %v5762, %v5746
    %v6323 = vpack.c.b16 %v5763, %v5747
    %v6324 = vpack.c.b16 %v5764, %v5748
    %v6325 = vpack.c.b16 %v5765, %v5749
    %v6326 = vpack.c.b16 %v5766, %v5750
    %v6327 = vpack.c.b16 %v5767, %v5751
    %v6328 = vpack.c.b16 %v5768, %v5752
    %v6329 = vpack.c.b16 %v5785, %v5769
    %v6330 = vpack.c.b16 %v5786, %v5770
    %v6331 = vpack.c.b16 %v5787, %v5771
    %v6332 = vpack.c.b16 %v5788, %v5772
    %v6333 = vpack.c.b16 %v5789, %v5773
    %v6334 = vpack.c.b16 %v5790, %v5774
    %v6335 = vpack.c.b16 %v5791, %v5775
    %v6336 = vpack.c.b16 %v5792, %v5776
    %v6337 = vpack.c.b16 %v5793, %v5777
    %v6338 = vpack.c.b16 %v5794, %v5778
    %v6339 = vpack.c.b16 %v5795, %v5779
    %v6340 = vpack.c.b16 %v5796, %v5780
    %v6341 = vpack.c.b16 %v5797, %v5781
    %v6342 = vpack.c.b16 %v5798, %v5782
    %v6343 = vpack.c.b16 %v5799, %v5783
    %v6344 = vpack.c.b16 %v5800, %v5784
    %v6345 = vpack.c.b16 %v5817, %v5801
    %v6346 = vpack.c.b16 %v5818, %v5802
    %v6347 = vpack.c.b16 %v5819, %v5803
    %v6348 = vpack.c.b16 %v5820, %v5804
    %v6349 = vpack.c.b16 %v5821, %v5805
    %v6350 = vpack.c.b16 %v5822, %v5806
    %v6351 = vpack.c.b16 %v5823, %v5807
    %v6352 = vpack.c.b16 %v5824, %v5808
    %v6353 = vpack.c.b16 %v5825, %v5809
    %v6354 = vpack.c.b16 %v5826, %v5810
    %v6355 = vpack.c.b16 %v5827, %v5811
    %v6356 = vpack.c.b16 %v5828, %v5812
    %v6357 = vpack.c.b16 %v5829, %v5813
    %v6358 = vpack.c.b16 %v5830, %v5814
    %v6359 = vpack.c.b16 %v5831, %v5815
    %v6360 = vpack.c.b16 %v5832, %v5816
    %v6361 = vpack.c.b16 %v5849, %v5833
    %v6362 = vpack.c.b16 %v5850, %v5834
    %v6363 = vpack.c.b16 %v5851, %v5835
    %v6364 = vpack.c.b16 %v5852, %v5836
    %v6365 = vpack.c.b16 %v5853, %v5837
    %v6366 = vpack.c.b16 %v5854, %v5838
    %v6367 = vpack.c.b16 %v5855, %v5839
    %v6368 = vpack.c.b16 %v5856, %v5840
    %v6369 = vpack.c.b16 %v5857, %v5841
    %v6370 = vpack.c.b16 %v5858, %v5842
    %v6371 = vpack.c.b16 %v5859, %v5843
    %v6372 = vpack.c.b16 %v5860, %v5844
    %v6373 = vpack.c.b16 %v5861, %v5845
    %v6374 = vpack.c.b16 %v5862, %v5846
    %v6375 = vpack.c.b16 %v5863, %v5847
    %v6376 = vpack.c.b16 %v5864, %v5848
    %6889 = vmatprep.subr.bf16.mxu0 %v5866
    %6890 = vmatpush1.bf16.msra.mxu0 %v5865
    %6891 = vmatprep.subr.bf16.mxu0 %v5882
    %6892 = vmatpush1.bf16.msra.mxu0 %v5881
    %6893 = vmatprep.subr.bf16.mxu0 %v5898
    %6894 = vmatpush1.bf16.msra.mxu0 %v5897
    %6895 = vmatprep.subr.bf16.mxu0 %v5914
    %6896 = vmatpush1.bf16.msra.mxu0 %v5913
    %6897 = vmatprep.subr.bf16.mxu0 %v5930
    %6898 = vmatpush1.bf16.msra.mxu0 %v5929
    %6899 = vmatprep.subr.bf16.mxu0 %v5946
    %6900 = vmatpush1.bf16.msra.mxu0 %v5945
    %6901 = vmatprep.subr.bf16.mxu0 %v5962
    %6902 = vmatpush1.bf16.msra.mxu0 %v5961
    %6903 = vmatprep.subr.bf16.mxu0 %v5978
    %6904 = vmatpush1.bf16.msra.mxu0 %v5977
    %6905 = vmatprep.subr.bf16.mxu0 %v5994
    %6906 = vmatpush1.bf16.msra.mxu0 %v5993
    %6907 = vmatprep.subr.bf16.mxu0 %v6010
    %6908 = vmatpush1.bf16.msra.mxu0 %v6009
    %6909 = vmatprep.subr.bf16.mxu0 %v6026
    %6910 = vmatpush1.bf16.msra.mxu0 %v6025
    %6911 = vmatprep.subr.bf16.mxu0 %v6042
    %6912 = vmatpush1.bf16.msra.mxu0 %v6041
    %6913 = vmatprep.subr.bf16.mxu0 %v6058
    %6914 = vmatpush1.bf16.msra.mxu0 %v6057
    %6915 = vmatprep.subr.bf16.mxu0 %v6074
    %6916 = vmatpush1.bf16.msra.mxu0 %v6073
    %6917 = vmatprep.subr.bf16.mxu0 %v6090
    %6918 = vmatpush1.bf16.msra.mxu0 %v6089
    %6919 = vmatprep.subr.bf16.mxu0 %v6106
    %6920 = vmatpush1.bf16.msra.mxu0 %v6105
    %6921 = vmatprep.mubr.bf16.mxu0 %v2040
    %6922 = vmatmul.mubr.bf16.gmra.mrb[0].mxu0 %v2039
    %v6923 = vpop.f32.mrb[0].mxu0
    %v6924 = vadd.f32 %v4252, %v6923
    %v6925 = vpop.f32.mrb[0].mxu0
    %v6926 = vadd.f32 %v4256, %v6925
    %v6927 = vpop.f32.mrb[0].mxu0
    %v6928 = vpop.f32.mrb[0].mxu0
    %6929 = vdwg.mxu0
    %6930 = vmatprep.subr.bf16.mxu0 %v6122
    %6931 = vmatpush1.bf16.msra.mxu0 %v6121
    %6932 = vmatprep.subr.bf16.mxu0 %v6138
    %6933 = vmatpush1.bf16.msra.mxu0 %v6137
    %6934 = vmatprep.subr.bf16.mxu0 %v6154
    %6935 = vmatpush1.bf16.msra.mxu0 %v6153
    %6936 = vmatprep.subr.bf16.mxu0 %v6170
    %6937 = vmatpush1.bf16.msra.mxu0 %v6169
    %6938 = vmatprep.subr.bf16.mxu0 %v6186
    %6939 = vmatpush1.bf16.msra.mxu0 %v6185
    %6940 = vmatprep.subr.bf16.mxu0 %v6202
    %6941 = vmatpush1.bf16.msra.mxu0 %v6201
    %6942 = vmatprep.subr.bf16.mxu0 %v6218
    %6943 = vmatpush1.bf16.msra.mxu0 %v6217
    %6944 = vmatprep.subr.bf16.mxu0 %v6234
    %6945 = vmatpush1.bf16.msra.mxu0 %v6233
    %6946 = vmatprep.subr.bf16.mxu0 %v6250
    %6947 = vmatpush1.bf16.msra.mxu0 %v6249
    %6948 = vmatprep.subr.bf16.mxu0 %v6266
    %6949 = vmatpush1.bf16.msra.mxu0 %v6265
    %6950 = vmatprep.subr.bf16.mxu0 %v6282
    %6951 = vmatpush1.bf16.msra.mxu0 %v6281
    %6952 = vmatprep.subr.bf16.mxu0 %v6298
    %6953 = vmatpush1.bf16.msra.mxu0 %v6297
    %6954 = vmatprep.subr.bf16.mxu0 %v6314
    %6955 = vmatpush1.bf16.msra.mxu0 %v6313
    %6956 = vmatprep.subr.bf16.mxu0 %v6330
    %6957 = vmatpush1.bf16.msra.mxu0 %v6329
    %6958 = vmatprep.subr.bf16.mxu0 %v6346
    %6959 = vmatpush1.bf16.msra.mxu0 %v6345
    %6960 = vmatprep.subr.bf16.mxu0 %v6362
    %6961 = vmatpush1.bf16.msra.mxu0 %v6361
    %6962 = vmatprep.mubr.bf16.mxu0 %v2042
    %6963 = vmatmul.mubr.bf16.gmra.mrb[0].mxu0 %v2041
    %v6964 = vpop.f32.mrb[0].mxu0
    %v6965 = vadd.f32 %v6924, %v6964
    %v6966 = vpop.f32.mrb[0].mxu0
    %v6967 = vadd.f32 %v6926, %v6966
    %v6968 = vpop.f32.mrb[0].mxu0
    %v6969 = vpop.f32.mrb[0].mxu0
    %6970 = vdwg.mxu0
    %6971 = vmatprep.subr.bf16.mxu0 %v5868
    %6972 = vmatpush1.bf16.msra.mxu0 %v5867
    %6973 = vmatprep.subr.bf16.mxu0 %v5884
    %6974 = vmatpush1.bf16.msra.mxu0 %v5883
    %6975 = vmatprep.subr.bf16.mxu0 %v5900
    %6976 = vmatpush1.bf16.msra.mxu0 %v5899
    %6977 = vmatprep.subr.bf16.mxu0 %v5916
    %6978 = vmatpush1.bf16.msra.mxu0 %v5915
    %6979 = vmatprep.subr.bf16.mxu0 %v5932
    %6980 = vmatpush1.bf16.msra.mxu0 %v5931
    %6981 = vmatprep.subr.bf16.mxu0 %v5948
    %6982 = vmatpush1.bf16.msra.mxu0 %v5947
    %6983 = vmatprep.subr.bf16.mxu0 %v5964
    %6984 = vmatpush1.bf16.msra.mxu0 %v5963
    %6985 = vmatprep.subr.bf16.mxu0 %v5980
    %6986 = vmatpush1.bf16.msra.mxu0 %v5979
    %6987 = vmatprep.subr.bf16.mxu0 %v5996
    %6988 = vmatpush1.bf16.msra.mxu0 %v5995
    %6989 = vmatprep.subr.bf16.mxu0 %v6012
    %6990 = vmatpush1.bf16.msra.mxu0 %v6011
    %6991 = vmatprep.subr.bf16.mxu0 %v6028
    %6992 = vmatpush1.bf16.msra.mxu0 %v6027
    %6993 = vmatprep.subr.bf16.mxu0 %v6044
    %6994 = vmatpush1.bf16.msra.mxu0 %v6043
    %6995 = vmatprep.subr.bf16.mxu0 %v6060
    %6996 = vmatpush1.bf16.msra.mxu0 %v6059
    %6997 = vmatprep.subr.bf16.mxu0 %v6076
    %6998 = vmatpush1.bf16.msra.mxu0 %v6075
    %6999 = vmatprep.subr.bf16.mxu0 %v6092
    %7000 = vmatpush1.bf16.msra.mxu0 %v6091
    %7001 = vmatprep.subr.bf16.mxu0 %v6108
    %7002 = vmatpush1.bf16.msra.mxu0 %v6107
    %7003 = vmatprep.mubr.bf16.mxu0 %v2040
    %7004 = vmatmul.mubr.bf16.gmra.mrb[0].mxu0 %v2039
    %v7005 = vpop.f32.mrb[0].mxu0
    %v7006 = vadd.f32 %v4260, %v7005
    %v7007 = vpop.f32.mrb[0].mxu0
    %v7008 = vadd.f32 %v4264, %v7007
    %v7009 = vpop.f32.mrb[0].mxu0
    %v7010 = vpop.f32.mrb[0].mxu0
    %7011 = vdwg.mxu0
    %7012 = vmatprep.subr.bf16.mxu0 %v6124
    %7013 = vmatpush1.bf16.msra.mxu0 %v6123
    %7014 = vmatprep.subr.bf16.mxu0 %v6140
    %7015 = vmatpush1.bf16.msra.mxu0 %v6139
    %7016 = vmatprep.subr.bf16.mxu0 %v6156
    %7017 = vmatpush1.bf16.msra.mxu0 %v6155
    %7018 = vmatprep.subr.bf16.mxu0 %v6172
    %7019 = vmatpush1.bf16.msra.mxu0 %v6171
    %7020 = vmatprep.subr.bf16.mxu0 %v6188
    %7021 = vmatpush1.bf16.msra.mxu0 %v6187
    %7022 = vmatprep.subr.bf16.mxu0 %v6204
    %7023 = vmatpush1.bf16.msra.mxu0 %v6203
    %7024 = vmatprep.subr.bf16.mxu0 %v6220
    %7025 = vmatpush1.bf16.msra.mxu0 %v6219
    %7026 = vmatprep.subr.bf16.mxu0 %v6236
    %7027 = vmatpush1.bf16.msra.mxu0 %v6235
    %7028 = vmatprep.subr.bf16.mxu0 %v6252
    %7029 = vmatpush1.bf16.msra.mxu0 %v6251
    %7030 = vmatprep.subr.bf16.mxu0 %v6268
    %7031 = vmatpush1.bf16.msra.mxu0 %v6267
    %7032 = vmatprep.subr.bf16.mxu0 %v6284
    %7033 = vmatpush1.bf16.msra.mxu0 %v6283
    %7034 = vmatprep.subr.bf16.mxu0 %v6300
    %7035 = vmatpush1.bf16.msra.mxu0 %v6299
    %7036 = vmatprep.subr.bf16.mxu0 %v6316
    %7037 = vmatpush1.bf16.msra.mxu0 %v6315
    %7038 = vmatprep.subr.bf16.mxu0 %v6332
    %7039 = vmatpush1.bf16.msra.mxu0 %v6331
    %7040 = vmatprep.subr.bf16.mxu0 %v6348
    %7041 = vmatpush1.bf16.msra.mxu0 %v6347
    %7042 = vmatprep.subr.bf16.mxu0 %v6364
    %7043 = vmatpush1.bf16.msra.mxu0 %v6363
    %7044 = vmatprep.mubr.bf16.mxu0 %v2042
    %7045 = vmatmul.mubr.bf16.gmra.mrb[0].mxu0 %v2041
    %v7046 = vpop.f32.mrb[0].mxu0
    %v7047 = vadd.f32 %v7006, %v7046
    %v7048 = vpop.f32.mrb[0].mxu0
    %v7049 = vadd.f32 %v7008, %v7048
    %v7050 = vpop.f32.mrb[0].mxu0
    %v7051 = vpop.f32.mrb[0].mxu0
    %7052 = vdwg.mxu0
    %7053 = vmatprep.subr.bf16.mxu0 %v5870
    %7054 = vmatpush1.bf16.msra.mxu0 %v5869
    %7055 = vmatprep.subr.bf16.mxu0 %v5886
    %7056 = vmatpush1.bf16.msra.mxu0 %v5885
    %7057 = vmatprep.subr.bf16.mxu0 %v5902
    %7058 = vmatpush1.bf16.msra.mxu0 %v5901
    %7059 = vmatprep.subr.bf16.mxu0 %v5918
    %7060 = vmatpush1.bf16.msra.mxu0 %v5917
    %7061 = vmatprep.subr.bf16.mxu0 %v5934
    %7062 = vmatpush1.bf16.msra.mxu0 %v5933
    %7063 = vmatprep.subr.bf16.mxu0 %v5950
    %7064 = vmatpush1.bf16.msra.mxu0 %v5949
    %7065 = vmatprep.subr.bf16.mxu0 %v5966
    %7066 = vmatpush1.bf16.msra.mxu0 %v5965
    %7067 = vmatprep.subr.bf16.mxu0 %v5982
    %7068 = vmatpush1.bf16.msra.mxu0 %v5981
    %7069 = vmatprep.subr.bf16.mxu0 %v5998
    %7070 = vmatpush1.bf16.msra.mxu0 %v5997
    %7071 = vmatprep.subr.bf16.mxu0 %v6014
    %7072 = vmatpush1.bf16.msra.mxu0 %v6013
    %7073 = vmatprep.subr.bf16.mxu0 %v6030
    %7074 = vmatpush1.bf16.msra.mxu0 %v6029
    %7075 = vmatprep.subr.bf16.mxu0 %v6046
    %7076 = vmatpush1.bf16.msra.mxu0 %v6045
    %7077 = vmatprep.subr.bf16.mxu0 %v6062
    %7078 = vmatpush1.bf16.msra.mxu0 %v6061
    %7079 = vmatprep.subr.bf16.mxu0 %v6078
    %7080 = vmatpush1.bf16.msra.mxu0 %v6077
    %7081 = vmatprep.subr.bf16.mxu0 %v6094
    %7082 = vmatpush1.bf16.msra.mxu0 %v6093
    %7083 = vmatprep.subr.bf16.mxu0 %v6110
    %7084 = vmatpush1.bf16.msra.mxu0 %v6109
    %7085 = vmatprep.mubr.bf16.mxu0 %v2040
    %7086 = vmatmul.mubr.bf16.gmra.mrb[0].mxu0 %v2039
    %v7087 = vpop.f32.mrb[0].mxu0
    %v7088 = vadd.f32 %v4268, %v7087
    %v7089 = vpop.f32.mrb[0].mxu0
    %v7090 = vadd.f32 %v4272, %v7089
    %v7091 = vpop.f32.mrb[0].mxu0
    %v7092 = vpop.f32.mrb[0].mxu0
    %7093 = vdwg.mxu0
    %7094 = vmatprep.subr.bf16.mxu0 %v6126
    %7095 = vmatpush1.bf16.msra.mxu0 %v6125
    %7096 = vmatprep.subr.bf16.mxu0 %v6142
    %7097 = vmatpush1.bf16.msra.mxu0 %v6141
    %7098 = vmatprep.subr.bf16.mxu0 %v6158
    %7099 = vmatpush1.bf16.msra.mxu0 %v6157
    %7100 = vmatprep.subr.bf16.mxu0 %v6174
    %7101 = vmatpush1.bf16.msra.mxu0 %v6173
    %7102 = vmatprep.subr.bf16.mxu0 %v6190
    %7103 = vmatpush1.bf16.msra.mxu0 %v6189
    %7104 = vmatprep.subr.bf16.mxu0 %v6206
    %7105 = vmatpush1.bf16.msra.mxu0 %v6205
    %7106 = vmatprep.subr.bf16.mxu0 %v6222
    %7107 = vmatpush1.bf16.msra.mxu0 %v6221
    %7108 = vmatprep.subr.bf16.mxu0 %v6238
    %7109 = vmatpush1.bf16.msra.mxu0 %v6237
    %7110 = vmatprep.subr.bf16.mxu0 %v6254
    %7111 = vmatpush1.bf16.msra.mxu0 %v6253
    %7112 = vmatprep.subr.bf16.mxu0 %v6270
    %7113 = vmatpush1.bf16.msra.mxu0 %v6269
    %7114 = vmatprep.subr.bf16.mxu0 %v6286
    %7115 = vmatpush1.bf16.msra.mxu0 %v6285
    %7116 = vmatprep.subr.bf16.mxu0 %v6302
    %7117 = vmatpush1.bf16.msra.mxu0 %v6301
    %7118 = vmatprep.subr.bf16.mxu0 %v6318
    %7119 = vmatpush1.bf16.msra.mxu0 %v6317
    %7120 = vmatprep.subr.bf16.mxu0 %v6334
    %7121 = vmatpush1.bf16.msra.mxu0 %v6333
    %7122 = vmatprep.subr.bf16.mxu0 %v6350
    %7123 = vmatpush1.bf16.msra.mxu0 %v6349
    %7124 = vmatprep.subr.bf16.mxu0 %v6366
    %7125 = vmatpush1.bf16.msra.mxu0 %v6365
    %7126 = vmatprep.mubr.bf16.mxu0 %v2042
    %7127 = vmatmul.mubr.bf16.gmra.mrb[0].mxu0 %v2041
    %v7128 = vpop.f32.mrb[0].mxu0
    %v7129 = vadd.f32 %v7088, %v7128
    %v7130 = vpop.f32.mrb[0].mxu0
    %v7131 = vadd.f32 %v7090, %v7130
    %v7132 = vpop.f32.mrb[0].mxu0
    %v7133 = vpop.f32.mrb[0].mxu0
    %7134 = vdwg.mxu0
    %7135 = vmatprep.subr.bf16.mxu0 %v5872
    %7136 = vmatpush1.bf16.msra.mxu0 %v5871
    %7137 = vmatprep.subr.bf16.mxu0 %v5888
    %7138 = vmatpush1.bf16.msra.mxu0 %v5887
    %7139 = vmatprep.subr.bf16.mxu0 %v5904
    %7140 = vmatpush1.bf16.msra.mxu0 %v5903
    %7141 = vmatprep.subr.bf16.mxu0 %v5920
    %7142 = vmatpush1.bf16.msra.mxu0 %v5919
    %7143 = vmatprep.subr.bf16.mxu0 %v5936
    %7144 = vmatpush1.bf16.msra.mxu0 %v5935
    %7145 = vmatprep.subr.bf16.mxu0 %v5952
    %7146 = vmatpush1.bf16.msra.mxu0 %v5951
    %7147 = vmatprep.subr.bf16.mxu0 %v5968
    %7148 = vmatpush1.bf16.msra.mxu0 %v5967
    %7149 = vmatprep.subr.bf16.mxu0 %v5984
    %7150 = vmatpush1.bf16.msra.mxu0 %v5983
    %7151 = vmatprep.subr.bf16.mxu0 %v6000
    %7152 = vmatpush1.bf16.msra.mxu0 %v5999
    %7153 = vmatprep.subr.bf16.mxu0 %v6016
    %7154 = vmatpush1.bf16.msra.mxu0 %v6015
    %7155 = vmatprep.subr.bf16.mxu0 %v6032
    %7156 = vmatpush1.bf16.msra.mxu0 %v6031
    %7157 = vmatprep.subr.bf16.mxu0 %v6048
    %7158 = vmatpush1.bf16.msra.mxu0 %v6047
    %7159 = vmatprep.subr.bf16.mxu0 %v6064
    %7160 = vmatpush1.bf16.msra.mxu0 %v6063
    %7161 = vmatprep.subr.bf16.mxu0 %v6080
    %7162 = vmatpush1.bf16.msra.mxu0 %v6079
    %7163 = vmatprep.subr.bf16.mxu0 %v6096
    %7164 = vmatpush1.bf16.msra.mxu0 %v6095
    %7165 = vmatprep.subr.bf16.mxu0 %v6112
    %7166 = vmatpush1.bf16.msra.mxu0 %v6111
    %7167 = vmatprep.mubr.bf16.mxu0 %v2040
    %7168 = vmatmul.mubr.bf16.gmra.mrb[0].mxu0 %v2039
    %v7169 = vpop.f32.mrb[0].mxu0
    %v7170 = vadd.f32 %v4276, %v7169
    %v7171 = vpop.f32.mrb[0].mxu0
    %v7172 = vadd.f32 %v4280, %v7171
    %v7173 = vpop.f32.mrb[0].mxu0
    %v7174 = vpop.f32.mrb[0].mxu0
    %7175 = vdwg.mxu0
    %7176 = vmatprep.subr.bf16.mxu0 %v6128
    %7177 = vmatpush1.bf16.msra.mxu0 %v6127
    %7178 = vmatprep.subr.bf16.mxu0 %v6144
    %7179 = vmatpush1.bf16.msra.mxu0 %v6143
    %7180 = vmatprep.subr.bf16.mxu0 %v6160
    %7181 = vmatpush1.bf16.msra.mxu0 %v6159
    %7182 = vmatprep.subr.bf16.mxu0 %v6176
    %7183 = vmatpush1.bf16.msra.mxu0 %v6175
    %7184 = vmatprep.subr.bf16.mxu0 %v6192
    %7185 = vmatpush1.bf16.msra.mxu0 %v6191
    %7186 = vmatprep.subr.bf16.mxu0 %v6208
    %7187 = vmatpush1.bf16.msra.mxu0 %v6207
    %7188 = vmatprep.subr.bf16.mxu0 %v6224
    %7189 = vmatpush1.bf16.msra.mxu0 %v6223
    %7190 = vmatprep.subr.bf16.mxu0 %v6240
    %7191 = vmatpush1.bf16.msra.mxu0 %v6239
    %7192 = vmatprep.subr.bf16.mxu0 %v6256
    %7193 = vmatpush1.bf16.msra.mxu0 %v6255
    %7194 = vmatprep.subr.bf16.mxu0 %v6272
    %7195 = vmatpush1.bf16.msra.mxu0 %v6271
    %7196 = vmatprep.subr.bf16.mxu0 %v6288
    %7197 = vmatpush1.bf16.msra.mxu0 %v6287
    %7198 = vmatprep.subr.bf16.mxu0 %v6304
    %7199 = vmatpush1.bf16.msra.mxu0 %v6303
    %7200 = vmatprep.subr.bf16.mxu0 %v6320
    %7201 = vmatpush1.bf16.msra.mxu0 %v6319
    %7202 = vmatprep.subr.bf16.mxu0 %v6336
    %7203 = vmatpush1.bf16.msra.mxu0 %v6335
    %7204 = vmatprep.subr.bf16.mxu0 %v6352
    %7205 = vmatpush1.bf16.msra.mxu0 %v6351
    %7206 = vmatprep.subr.bf16.mxu0 %v6368
    %7207 = vmatpush1.bf16.msra.mxu0 %v6367
    %7208 = vmatprep.mubr.bf16.mxu0 %v2042
    %7209 = vmatmul.mubr.bf16.gmra.mrb[0].mxu0 %v2041
    %v7210 = vpop.f32.mrb[0].mxu0
    %v7211 = vadd.f32 %v7170, %v7210
    %v7212 = vpop.f32.mrb[0].mxu0
    %v7213 = vadd.f32 %v7172, %v7212
    %v7214 = vpop.f32.mrb[0].mxu0
    %v7215 = vpop.f32.mrb[0].mxu0
    %7216 = vdwg.mxu0
    %7217 = vmatprep.subr.bf16.mxu0 %v5874
    %7218 = vmatpush1.bf16.msra.mxu0 %v5873
    %7219 = vmatprep.subr.bf16.mxu0 %v5890
    %7220 = vmatpush1.bf16.msra.mxu0 %v5889
    %7221 = vmatprep.subr.bf16.mxu0 %v5906
    %7222 = vmatpush1.bf16.msra.mxu0 %v5905
    %7223 = vmatprep.subr.bf16.mxu0 %v5922
    %7224 = vmatpush1.bf16.msra.mxu0 %v5921
    %7225 = vmatprep.subr.bf16.mxu0 %v5938
    %7226 = vmatpush1.bf16.msra.mxu0 %v5937
    %7227 = vmatprep.subr.bf16.mxu0 %v5954
    %7228 = vmatpush1.bf16.msra.mxu0 %v5953
    %7229 = vmatprep.subr.bf16.mxu0 %v5970
    %7230 = vmatpush1.bf16.msra.mxu0 %v5969
    %7231 = vmatprep.subr.bf16.mxu0 %v5986
    %7232 = vmatpush1.bf16.msra.mxu0 %v5985
    %7233 = vmatprep.subr.bf16.mxu0 %v6002
    %7234 = vmatpush1.bf16.msra.mxu0 %v6001
    %7235 = vmatprep.subr.bf16.mxu0 %v6018
    %7236 = vmatpush1.bf16.msra.mxu0 %v6017
    %7237 = vmatprep.subr.bf16.mxu0 %v6034
    %7238 = vmatpush1.bf16.msra.mxu0 %v6033
    %7239 = vmatprep.subr.bf16.mxu0 %v6050
    %7240 = vmatpush1.bf16.msra.mxu0 %v6049
    %7241 = vmatprep.subr.bf16.mxu0 %v6066
    %7242 = vmatpush1.bf16.msra.mxu0 %v6065
    %7243 = vmatprep.subr.bf16.mxu0 %v6082
    %7244 = vmatpush1.bf16.msra.mxu0 %v6081
    %7245 = vmatprep.subr.bf16.mxu0 %v6098
    %7246 = vmatpush1.bf16.msra.mxu0 %v6097
    %7247 = vmatprep.subr.bf16.mxu0 %v6114
    %7248 = vmatpush1.bf16.msra.mxu0 %v6113
    %7249 = vmatprep.mubr.bf16.mxu0 %v2040
    %7250 = vmatmul.mubr.bf16.gmra.mrb[0].mxu0 %v2039
    %v7251 = vpop.f32.mrb[0].mxu0
    %v7252 = vadd.f32 %v4284, %v7251
    %v7253 = vpop.f32.mrb[0].mxu0
    %v7254 = vadd.f32 %v4288, %v7253
    %v7255 = vpop.f32.mrb[0].mxu0
    %v7256 = vpop.f32.mrb[0].mxu0
    %7257 = vdwg.mxu0
    %7258 = vmatprep.subr.bf16.mxu0 %v6130
    %7259 = vmatpush1.bf16.msra.mxu0 %v6129
    %7260 = vmatprep.subr.bf16.mxu0 %v6146
    %7261 = vmatpush1.bf16.msra.mxu0 %v6145
    %7262 = vmatprep.subr.bf16.mxu0 %v6162
    %7263 = vmatpush1.bf16.msra.mxu0 %v6161
    %7264 = vmatprep.subr.bf16.mxu0 %v6178
    %7265 = vmatpush1.bf16.msra.mxu0 %v6177
    %7266 = vmatprep.subr.bf16.mxu0 %v6194
    %7267 = vmatpush1.bf16.msra.mxu0 %v6193
    %7268 = vmatprep.subr.bf16.mxu0 %v6210
    %7269 = vmatpush1.bf16.msra.mxu0 %v6209
    %7270 = vmatprep.subr.bf16.mxu0 %v6226
    %7271 = vmatpush1.bf16.msra.mxu0 %v6225
    %7272 = vmatprep.subr.bf16.mxu0 %v6242
    %7273 = vmatpush1.bf16.msra.mxu0 %v6241
    %7274 = vmatprep.subr.bf16.mxu0 %v6258
    %7275 = vmatpush1.bf16.msra.mxu0 %v6257
    %7276 = vmatprep.subr.bf16.mxu0 %v6274
    %7277 = vmatpush1.bf16.msra.mxu0 %v6273
    %7278 = vmatprep.subr.bf16.mxu0 %v6290
    %7279 = vmatpush1.bf16.msra.mxu0 %v6289
    %7280 = vmatprep.subr.bf16.mxu0 %v6306
    %7281 = vmatpush1.bf16.msra.mxu0 %v6305
    %7282 = vmatprep.subr.bf16.mxu0 %v6322
    %7283 = vmatpush1.bf16.msra.mxu0 %v6321
    %7284 = vmatprep.subr.bf16.mxu0 %v6338
    %7285 = vmatpush1.bf16.msra.mxu0 %v6337
    %7286 = vmatprep.subr.bf16.mxu0 %v6354
    %7287 = vmatpush1.bf16.msra.mxu0 %v6353
    %7288 = vmatprep.subr.bf16.mxu0 %v6370
    %7289 = vmatpush1.bf16.msra.mxu0 %v6369
    %7290 = vmatprep.mubr.bf16.mxu0 %v2042
    %7291 = vmatmul.mubr.bf16.gmra.mrb[0].mxu0 %v2041
    %v7292 = vpop.f32.mrb[0].mxu0
    %v7293 = vadd.f32 %v7252, %v7292
    %v7294 = vpop.f32.mrb[0].mxu0
    %v7295 = vadd.f32 %v7254, %v7294
    %v7296 = vpop.f32.mrb[0].mxu0
    %v7297 = vpop.f32.mrb[0].mxu0
    %7298 = vdwg.mxu0
    %7299 = vmatprep.subr.bf16.mxu0 %v5876
    %7300 = vmatpush1.bf16.msra.mxu0 %v5875
    %7301 = vmatprep.subr.bf16.mxu0 %v5892
    %7302 = vmatpush1.bf16.msra.mxu0 %v5891
    %7303 = vmatprep.subr.bf16.mxu0 %v5908
    %7304 = vmatpush1.bf16.msra.mxu0 %v5907
    %7305 = vmatprep.subr.bf16.mxu0 %v5924
    %7306 = vmatpush1.bf16.msra.mxu0 %v5923
    %7307 = vmatprep.subr.bf16.mxu0 %v5940
    %7308 = vmatpush1.bf16.msra.mxu0 %v5939
    %7309 = vmatprep.subr.bf16.mxu0 %v5956
    %7310 = vmatpush1.bf16.msra.mxu0 %v5955
    %7311 = vmatprep.subr.bf16.mxu0 %v5972
    %7312 = vmatpush1.bf16.msra.mxu0 %v5971
    %7313 = vmatprep.subr.bf16.mxu0 %v5988
    %7314 = vmatpush1.bf16.msra.mxu0 %v5987
    %7315 = vmatprep.subr.bf16.mxu0 %v6004
    %7316 = vmatpush1.bf16.msra.mxu0 %v6003
    %7317 = vmatprep.subr.bf16.mxu0 %v6020
    %7318 = vmatpush1.bf16.msra.mxu0 %v6019
    %7319 = vmatprep.subr.bf16.mxu0 %v6036
    %7320 = vmatpush1.bf16.msra.mxu0 %v6035
    %7321 = vmatprep.subr.bf16.mxu0 %v6052
    %7322 = vmatpush1.bf16.msra.mxu0 %v6051
    %7323 = vmatprep.subr.bf16.mxu0 %v6068
    %7324 = vmatpush1.bf16.msra.mxu0 %v6067
    %7325 = vmatprep.subr.bf16.mxu0 %v6084
    %7326 = vmatpush1.bf16.msra.mxu0 %v6083
    %7327 = vmatprep.subr.bf16.mxu0 %v6100
    %7328 = vmatpush1.bf16.msra.mxu0 %v6099
    %7329 = vmatprep.subr.bf16.mxu0 %v6116
    %7330 = vmatpush1.bf16.msra.mxu0 %v6115
    %7331 = vmatprep.mubr.bf16.mxu0 %v2040
    %7332 = vmatmul.mubr.bf16.gmra.mrb[0].mxu0 %v2039
    %v7333 = vpop.f32.mrb[0].mxu0
    %v7334 = vadd.f32 %v4292, %v7333
    %v7335 = vpop.f32.mrb[0].mxu0
    %v7336 = vadd.f32 %v4296, %v7335
    %v7337 = vpop.f32.mrb[0].mxu0
    %v7338 = vpop.f32.mrb[0].mxu0
    %7339 = vdwg.mxu0
    %7340 = vmatprep.subr.bf16.mxu0 %v6132
    %7341 = vmatpush1.bf16.msra.mxu0 %v6131
    %7342 = vmatprep.subr.bf16.mxu0 %v6148
    %7343 = vmatpush1.bf16.msra.mxu0 %v6147
    %7344 = vmatprep.subr.bf16.mxu0 %v6164
    %7345 = vmatpush1.bf16.msra.mxu0 %v6163
    %7346 = vmatprep.subr.bf16.mxu0 %v6180
    %7347 = vmatpush1.bf16.msra.mxu0 %v6179
    %7348 = vmatprep.subr.bf16.mxu0 %v6196
    %7349 = vmatpush1.bf16.msra.mxu0 %v6195
    %7350 = vmatprep.subr.bf16.mxu0 %v6212
    %7351 = vmatpush1.bf16.msra.mxu0 %v6211
    %7352 = vmatprep.subr.bf16.mxu0 %v6228
    %7353 = vmatpush1.bf16.msra.mxu0 %v6227
    %7354 = vmatprep.subr.bf16.mxu0 %v6244
    %7355 = vmatpush1.bf16.msra.mxu0 %v6243
    %7356 = vmatprep.subr.bf16.mxu0 %v6260
    %7357 = vmatpush1.bf16.msra.mxu0 %v6259
    %7358 = vmatprep.subr.bf16.mxu0 %v6276
    %7359 = vmatpush1.bf16.msra.mxu0 %v6275
    %7360 = vmatprep.subr.bf16.mxu0 %v6292
    %7361 = vmatpush1.bf16.msra.mxu0 %v6291
    %7362 = vmatprep.subr.bf16.mxu0 %v6308
    %7363 = vmatpush1.bf16.msra.mxu0 %v6307
    %7364 = vmatprep.subr.bf16.mxu0 %v6324
    %7365 = vmatpush1.bf16.msra.mxu0 %v6323
    %7366 = vmatprep.subr.bf16.mxu0 %v6340
    %7367 = vmatpush1.bf16.msra.mxu0 %v6339
    %7368 = vmatprep.subr.bf16.mxu0 %v6356
    %7369 = vmatpush1.bf16.msra.mxu0 %v6355
    %7370 = vmatprep.subr.bf16.mxu0 %v6372
    %7371 = vmatpush1.bf16.msra.mxu0 %v6371
    %7372 = vmatprep.mubr.bf16.mxu0 %v2042
    %7373 = vmatmul.mubr.bf16.gmra.mrb[0].mxu0 %v2041
    %v7374 = vpop.f32.mrb[0].mxu0
    %v7375 = vadd.f32 %v7334, %v7374
    %v7376 = vpop.f32.mrb[0].mxu0
    %v7377 = vadd.f32 %v7336, %v7376
    %v7378 = vpop.f32.mrb[0].mxu0
    %v7379 = vpop.f32.mrb[0].mxu0
    %7380 = vdwg.mxu0
    %7381 = vmatprep.subr.bf16.mxu0 %v5878
    %7382 = vmatpush1.bf16.msra.mxu0 %v5877
    %7383 = vmatprep.subr.bf16.mxu0 %v5894
    %7384 = vmatpush1.bf16.msra.mxu0 %v5893
    %7385 = vmatprep.subr.bf16.mxu0 %v5910
    %7386 = vmatpush1.bf16.msra.mxu0 %v5909
    %7387 = vmatprep.subr.bf16.mxu0 %v5926
    %7388 = vmatpush1.bf16.msra.mxu0 %v5925
    %7389 = vmatprep.subr.bf16.mxu0 %v5942
    %7390 = vmatpush1.bf16.msra.mxu0 %v5941
    %7391 = vmatprep.subr.bf16.mxu0 %v5958
    %7392 = vmatpush1.bf16.msra.mxu0 %v5957
    %7393 = vmatprep.subr.bf16.mxu0 %v5974
    %7394 = vmatpush1.bf16.msra.mxu0 %v5973
    %7395 = vmatprep.subr.bf16.mxu0 %v5990
    %7396 = vmatpush1.bf16.msra.mxu0 %v5989
    %7397 = vmatprep.subr.bf16.mxu0 %v6006
    %7398 = vmatpush1.bf16.msra.mxu0 %v6005
    %7399 = vmatprep.subr.bf16.mxu0 %v6022
    %7400 = vmatpush1.bf16.msra.mxu0 %v6021
    %7401 = vmatprep.subr.bf16.mxu0 %v6038
    %7402 = vmatpush1.bf16.msra.mxu0 %v6037
    %7403 = vmatprep.subr.bf16.mxu0 %v6054
    %7404 = vmatpush1.bf16.msra.mxu0 %v6053
    %7405 = vmatprep.subr.bf16.mxu0 %v6070
    %7406 = vmatpush1.bf16.msra.mxu0 %v6069
    %7407 = vmatprep.subr.bf16.mxu0 %v6086
    %7408 = vmatpush1.bf16.msra.mxu0 %v6085
    %7409 = vmatprep.subr.bf16.mxu0 %v6102
    %7410 = vmatpush1.bf16.msra.mxu0 %v6101
    %7411 = vmatprep.subr.bf16.mxu0 %v6118
    %7412 = vmatpush1.bf16.msra.mxu0 %v6117
    %7413 = vmatprep.mubr.bf16.mxu0 %v2040
    %7414 = vmatmul.mubr.bf16.gmra.mrb[0].mxu0 %v2039
    %v7415 = vpop.f32.mrb[0].mxu0
    %v7416 = vadd.f32 %v4300, %v7415
    %v7417 = vpop.f32.mrb[0].mxu0
    %v7418 = vadd.f32 %v4304, %v7417
    %v7419 = vpop.f32.mrb[0].mxu0
    %v7420 = vpop.f32.mrb[0].mxu0
    %7421 = vdwg.mxu0
    %7422 = vmatprep.subr.bf16.mxu0 %v6134
    %7423 = vmatpush1.bf16.msra.mxu0 %v6133
    %7424 = vmatprep.subr.bf16.mxu0 %v6150
    %7425 = vmatpush1.bf16.msra.mxu0 %v6149
    %7426 = vmatprep.subr.bf16.mxu0 %v6166
    %7427 = vmatpush1.bf16.msra.mxu0 %v6165
    %7428 = vmatprep.subr.bf16.mxu0 %v6182
    %7429 = vmatpush1.bf16.msra.mxu0 %v6181
    %7430 = vmatprep.subr.bf16.mxu0 %v6198
    %7431 = vmatpush1.bf16.msra.mxu0 %v6197
    %7432 = vmatprep.subr.bf16.mxu0 %v6214
    %7433 = vmatpush1.bf16.msra.mxu0 %v6213
    %7434 = vmatprep.subr.bf16.mxu0 %v6230
    %7435 = vmatpush1.bf16.msra.mxu0 %v6229
    %7436 = vmatprep.subr.bf16.mxu0 %v6246
    %7437 = vmatpush1.bf16.msra.mxu0 %v6245
    %7438 = vmatprep.subr.bf16.mxu0 %v6262
    %7439 = vmatpush1.bf16.msra.mxu0 %v6261
    %7440 = vmatprep.subr.bf16.mxu0 %v6278
    %7441 = vmatpush1.bf16.msra.mxu0 %v6277
    %7442 = vmatprep.subr.bf16.mxu0 %v6294
    %7443 = vmatpush1.bf16.msra.mxu0 %v6293
    %7444 = vmatprep.subr.bf16.mxu0 %v6310
    %7445 = vmatpush1.bf16.msra.mxu0 %v6309
    %7446 = vmatprep.subr.bf16.mxu0 %v6326
    %7447 = vmatpush1.bf16.msra.mxu0 %v6325
    %7448 = vmatprep.subr.bf16.mxu0 %v6342
    %7449 = vmatpush1.bf16.msra.mxu0 %v6341
    %7450 = vmatprep.subr.bf16.mxu0 %v6358
    %7451 = vmatpush1.bf16.msra.mxu0 %v6357
    %7452 = vmatprep.subr.bf16.mxu0 %v6374
    %7453 = vmatpush1.bf16.msra.mxu0 %v6373
    %7454 = vmatprep.mubr.bf16.mxu0 %v2042
    %7455 = vmatmul.mubr.bf16.gmra.mrb[0].mxu0 %v2041
    %v7456 = vpop.f32.mrb[0].mxu0
    %v7457 = vadd.f32 %v7416, %v7456
    %v7458 = vpop.f32.mrb[0].mxu0
    %v7459 = vadd.f32 %v7418, %v7458
    %v7460 = vpop.f32.mrb[0].mxu0
    %v7461 = vpop.f32.mrb[0].mxu0
    %7462 = vdwg.mxu0
    %7463 = vmatprep.subr.bf16.mxu0 %v5880
    %7464 = vmatpush1.bf16.msra.mxu0 %v5879
    %7465 = vmatprep.subr.bf16.mxu0 %v5896
    %7466 = vmatpush1.bf16.msra.mxu0 %v5895
    %7467 = vmatprep.subr.bf16.mxu0 %v5912
    %7468 = vmatpush1.bf16.msra.mxu0 %v5911
    %7469 = vmatprep.subr.bf16.mxu0 %v5928
    %7470 = vmatpush1.bf16.msra.mxu0 %v5927
    %7471 = vmatprep.subr.bf16.mxu0 %v5944
    %7472 = vmatpush1.bf16.msra.mxu0 %v5943
    %7473 = vmatprep.subr.bf16.mxu0 %v5960
    %7474 = vmatpush1.bf16.msra.mxu0 %v5959
    %7475 = vmatprep.subr.bf16.mxu0 %v5976
    %7476 = vmatpush1.bf16.msra.mxu0 %v5975
    %7477 = vmatprep.subr.bf16.mxu0 %v5992
    %7478 = vmatpush1.bf16.msra.mxu0 %v5991
    %7479 = vmatprep.subr.bf16.mxu0 %v6008
    %7480 = vmatpush1.bf16.msra.mxu0 %v6007
    %7481 = vmatprep.subr.bf16.mxu0 %v6024
    %7482 = vmatpush1.bf16.msra.mxu0 %v6023
    %7483 = vmatprep.subr.bf16.mxu0 %v6040
    %7484 = vmatpush1.bf16.msra.mxu0 %v6039
    %7485 = vmatprep.subr.bf16.mxu0 %v6056
    %7486 = vmatpush1.bf16.msra.mxu0 %v6055
    %7487 = vmatprep.subr.bf16.mxu0 %v6072
    %7488 = vmatpush1.bf16.msra.mxu0 %v6071
    %7489 = vmatprep.subr.bf16.mxu0 %v6088
    %7490 = vmatpush1.bf16.msra.mxu0 %v6087
    %7491 = vmatprep.subr.bf16.mxu0 %v6104
    %7492 = vmatpush1.bf16.msra.mxu0 %v6103
    %7493 = vmatprep.subr.bf16.mxu0 %v6120
    %7494 = vmatpush1.bf16.msra.mxu0 %v6119
    %7495 = vmatprep.mubr.bf16.mxu0 %v2040
    %7496 = vmatmul.mubr.bf16.gmra.mrb[0].mxu0 %v2039
    %v7497 = vpop.f32.mrb[0].mxu0
    %v7498 = vadd.f32 %v4308, %v7497
    %v7499 = vpop.f32.mrb[0].mxu0
    %v7500 = vadd.f32 %v4312, %v7499
    %v7501 = vpop.f32.mrb[0].mxu0
    %v7502 = vpop.f32.mrb[0].mxu0
    %7503 = vdwg.mxu0
    %7504 = vmatprep.subr.bf16.mxu0 %v6136
    %7505 = vmatpush1.bf16.msra.mxu0 %v6135
    %7506 = vmatprep.subr.bf16.mxu0 %v6152
    %7507 = vmatpush1.bf16.msra.mxu0 %v6151
    %7508 = vmatprep.subr.bf16.mxu0 %v6168
    %7509 = vmatpush1.bf16.msra.mxu0 %v6167
    %7510 = vmatprep.subr.bf16.mxu0 %v6184
    %7511 = vmatpush1.bf16.msra.mxu0 %v6183
    %7512 = vmatprep.subr.bf16.mxu0 %v6200
    %7513 = vmatpush1.bf16.msra.mxu0 %v6199
    %7514 = vmatprep.subr.bf16.mxu0 %v6216
    %7515 = vmatpush1.bf16.msra.mxu0 %v6215
    %7516 = vmatprep.subr.bf16.mxu0 %v6232
    %7517 = vmatpush1.bf16.msra.mxu0 %v6231
    %7518 = vmatprep.subr.bf16.mxu0 %v6248
    %7519 = vmatpush1.bf16.msra.mxu0 %v6247
    %7520 = vmatprep.subr.bf16.mxu0 %v6264
    %7521 = vmatpush1.bf16.msra.mxu0 %v6263
    %7522 = vmatprep.subr.bf16.mxu0 %v6280
    %7523 = vmatpush1.bf16.msra.mxu0 %v6279
    %7524 = vmatprep.subr.bf16.mxu0 %v6296
    %7525 = vmatpush1.bf16.msra.mxu0 %v6295
    %7526 = vmatprep.subr.bf16.mxu0 %v6312
    %7527 = vmatpush1.bf16.msra.mxu0 %v6311
    %7528 = vmatprep.subr.bf16.mxu0 %v6328
    %7529 = vmatpush1.bf16.msra.mxu0 %v6327
    %7530 = vmatprep.subr.bf16.mxu0 %v6344
    %7531 = vmatpush1.bf16.msra.mxu0 %v6343
    %7532 = vmatprep.subr.bf16.mxu0 %v6360
    %7533 = vmatpush1.bf16.msra.mxu0 %v6359
    %7534 = vmatprep.subr.bf16.mxu0 %v6376
    %7535 = vmatpush1.bf16.msra.mxu0 %v6375
    %7536 = vmatprep.mubr.bf16.mxu0 %v2042
    %7537 = vmatmul.mubr.bf16.gmra.mrb[0].mxu0 %v2041
    %v7538 = vpop.f32.mrb[0].mxu0
    %v7539 = vadd.f32 %v7498, %v7538
    %v7540 = vpop.f32.mrb[0].mxu0
    %v7541 = vadd.f32 %v7500, %v7540
    %v7542 = vpop.f32.mrb[0].mxu0
    %v7543 = vpop.f32.mrb[0].mxu0
    %7544 = vdwg.mxu0
    %v7545 = vmax.f32 %v6965, 0.0
    %v7546 = vmax.f32 %v6967, 0.0
    %v7547 = vmax.f32 %v7047, 0.0
    %v7548 = vmax.f32 %v7049, 0.0
    %v7549 = vmax.f32 %v7129, 0.0
    %v7550 = vmax.f32 %v7131, 0.0
    %v7551 = vmax.f32 %v7211, 0.0
    %v7552 = vmax.f32 %v7213, 0.0
    %v7553 = vmax.f32 %v7293, 0.0
    %v7554 = vmax.f32 %v7295, 0.0
    %v7555 = vmax.f32 %v7375, 0.0
    %v7556 = vmax.f32 %v7377, 0.0
    %v7557 = vmax.f32 %v7457, 0.0
    %v7558 = vmax.f32 %v7459, 0.0
    %v7559 = vmax.f32 %v7539, 0.0
    %v7560 = vmax.f32 %v7541, 0.0
    %v7561 = vpack.c.bf16 %v7545, %v7545
    %v7562 = vpack.c.bf16 %v7546, %v7546
    %v7563 = vpack.c.bf16 %v7547, %v7547
    %v7564 = vpack.c.bf16 %v7548, %v7548
    %v7565 = vpack.c.bf16 %v7549, %v7549
    %v7566 = vpack.c.bf16 %v7550, %v7550
    %v7567 = vpack.c.bf16 %v7551, %v7551
    %v7568 = vpack.c.bf16 %v7552, %v7552
    %v7569 = vpack.c.bf16 %v7553, %v7553
    %v7570 = vpack.c.bf16 %v7554, %v7554
    %v7571 = vpack.c.bf16 %v7555, %v7555
    %v7572 = vpack.c.bf16 %v7556, %v7556
    %v7573 = vpack.c.bf16 %v7557, %v7557
    %v7574 = vpack.c.bf16 %v7558, %v7558
    %v7575 = vpack.c.bf16 %v7559, %v7559
    %v7576 = vpack.c.bf16 %v7560, %v7560
    %v7577 = vld [vmem:[%s4] sm:$0xf]
    %v7578 = vld [vmem:[%s4 + $0x4] sm:$0xf]
    %v7579 = vld [vmem:[%s4 + $0x8] sm:$0xf]
    %v7580 = vld [vmem:[%s4 + $0xc] sm:$0xf]
    %v7581 = vld [vmem:[%s4 + $0x10] sm:$0xf]
    %v7582 = vld [vmem:[%s4 + $0x14] sm:$0xf]
    %v7583 = vld [vmem:[%s4 + $0x18] sm:$0xf]
    %v7584 = vld [vmem:[%s4 + $0x1c] sm:$0xf]
    %v7585 = vld [vmem:[%s4 + $0x20] sm:$0xf]
    %v7586 = vld [vmem:[%s4 + $0x24] sm:$0xf]
    %v7587 = vld [vmem:[%s4 + $0x28] sm:$0xf]
    %v7588 = vld [vmem:[%s4 + $0x2c] sm:$0xf]
    %v7589 = vld [vmem:[%s4 + $0x30] sm:$0xf]
    %v7590 = vld [vmem:[%s4 + $0x34] sm:$0xf]
    %v7591 = vld [vmem:[%s4 + $0x38] sm:$0xf]
    %v7592 = vld [vmem:[%s4 + $0x3c] sm:$0xf]
    %v7593 = vld [vmem:[%s4 + $0x40] sm:$0xf]
    %v7594 = vld [vmem:[%s4 + $0x44] sm:$0xf]
    %v7595 = vld [vmem:[%s4 + $0x48] sm:$0xf]
    %v7596 = vld [vmem:[%s4 + $0x4c] sm:$0xf]
    %v7597 = vld [vmem:[%s4 + $0x50] sm:$0xf]
    %v7598 = vld [vmem:[%s4 + $0x54] sm:$0xf]
    %v7599 = vld [vmem:[%s4 + $0x58] sm:$0xf]
    %v7600 = vld [vmem:[%s4 + $0x5c] sm:$0xf]
    %v7601 = vld [vmem:[%s4 + $0x60] sm:$0xf]
    %v7602 = vld [vmem:[%s4 + $0x64] sm:$0xf]
    %v7603 = vld [vmem:[%s4 + $0x68] sm:$0xf]
    %v7604 = vld [vmem:[%s4 + $0x6c] sm:$0xf]
    %v7605 = vld [vmem:[%s4 + $0x70] sm:$0xf]
    %v7606 = vld [vmem:[%s4 + $0x74] sm:$0xf]
    %v7607 = vld [vmem:[%s4 + $0x78] sm:$0xf]
    %v7608 = vld [vmem:[%s4 + $0x7c] sm:$0xf]
    %v7609 = vld [vmem:[%s4 + $0x80] sm:$0xf]
    %v7610 = vld [vmem:[%s4 + $0x84] sm:$0xf]
    %v7611 = vld [vmem:[%s4 + $0x88] sm:$0xf]
    %v7612 = vld [vmem:[%s4 + $0x8c] sm:$0xf]
    %v7613 = vld [vmem:[%s4 + $0x90] sm:$0xf]
    %v7614 = vld [vmem:[%s4 + $0x94] sm:$0xf]
    %v7615 = vld [vmem:[%s4 + $0x98] sm:$0xf]
    %v7616 = vld [vmem:[%s4 + $0x9c] sm:$0xf]
    %v7617 = vld [vmem:[%s4 + $0xa0] sm:$0xf]
    %v7618 = vld [vmem:[%s4 + $0xa4] sm:$0xf]
    %v7619 = vld [vmem:[%s4 + $0xa8] sm:$0xf]
    %v7620 = vld [vmem:[%s4 + $0xac] sm:$0xf]
    %v7621 = vld [vmem:[%s4 + $0xb0] sm:$0xf]
    %v7622 = vld [vmem:[%s4 + $0xb4] sm:$0xf]
    %v7623 = vld [vmem:[%s4 + $0xb8] sm:$0xf]
    %v7624 = vld [vmem:[%s4 + $0xbc] sm:$0xf]
    %v7625 = vld [vmem:[%s4 + $0xc0] sm:$0xf]
    %v7626 = vld [vmem:[%s4 + $0xc4] sm:$0xf]
    %v7627 = vld [vmem:[%s4 + $0xc8] sm:$0xf]
    %v7628 = vld [vmem:[%s4 + $0xcc] sm:$0xf]
    %v7629 = vld [vmem:[%s4 + $0xd0] sm:$0xf]
    %v7630 = vld [vmem:[%s4 + $0xd4] sm:$0xf]
    %v7631 = vld [vmem:[%s4 + $0xd8] sm:$0xf]
    %v7632 = vld [vmem:[%s4 + $0xdc] sm:$0xf]
    %v7633 = vld [vmem:[%s4 + $0xe0] sm:$0xf]
    %v7634 = vld [vmem:[%s4 + $0xe4] sm:$0xf]
    %v7635 = vld [vmem:[%s4 + $0xe8] sm:$0xf]
    %v7636 = vld [vmem:[%s4 + $0xec] sm:$0xf]
    %v7637 = vld [vmem:[%s4 + $0xf0] sm:$0xf]
    %v7638 = vld [vmem:[%s4 + $0xf4] sm:$0xf]
    %v7639 = vld [vmem:[%s4 + $0xf8] sm:$0xf]
    %v7640 = vld [vmem:[%s4 + $0xfc] sm:$0xf]
    %v7641 = vld [vmem:[#allocation10 + $0x1c] sm:$0x1]
    %v7643 = vlaneseq
    %v7644 = vshrl.u32 %v7643, 7
    %v7645 = vsub.s32 0, %v7644
    %v7646 = vrot.slane %v7641, %v7645
    %v7712 = vunpack.c.l.b16 %v7577
    %v7713 = vunpack.c.l.b16 %v7578
    %v7714 = vunpack.c.l.b16 %v7579
    %v7715 = vunpack.c.l.b16 %v7580
    %v7716 = vunpack.c.l.b16 %v7581
    %v7717 = vunpack.c.l.b16 %v7582
    %v7718 = vunpack.c.l.b16 %v7583
    %v7719 = vunpack.c.l.b16 %v7584
    %v7720 = vunpack.c.l.b16 %v7585
    %v7721 = vunpack.c.l.b16 %v7586
    %v7722 = vunpack.c.l.b16 %v7587
    %v7723 = vunpack.c.l.b16 %v7588
    %v7724 = vunpack.c.l.b16 %v7589
    %v7725 = vunpack.c.l.b16 %v7590
    %v7726 = vunpack.c.l.b16 %v7591
    %v7727 = vunpack.c.l.b16 %v7592
    %v7728 = vunpack.c.l.b16 %v7593
    %v7729 = vunpack.c.l.b16 %v7594
    %v7730 = vunpack.c.l.b16 %v7595
    %v7731 = vunpack.c.l.b16 %v7596
    %v7732 = vunpack.c.l.b16 %v7597
    %v7733 = vunpack.c.l.b16 %v7598
    %v7734 = vunpack.c.l.b16 %v7599
    %v7735 = vunpack.c.l.b16 %v7600
    %v7736 = vunpack.c.l.b16 %v7601
    %v7737 = vunpack.c.l.b16 %v7602
    %v7738 = vunpack.c.l.b16 %v7603
    %v7739 = vunpack.c.l.b16 %v7604
    %v7740 = vunpack.c.l.b16 %v7605
    %v7741 = vunpack.c.l.b16 %v7606
    %v7742 = vunpack.c.l.b16 %v7607
    %v7743 = vunpack.c.l.b16 %v7608
    %v7744 = vunpack.c.l.b16 %v7609
    %v7745 = vunpack.c.l.b16 %v7610
    %v7746 = vunpack.c.l.b16 %v7611
    %v7747 = vunpack.c.l.b16 %v7612
    %v7748 = vunpack.c.l.b16 %v7613
    %v7749 = vunpack.c.l.b16 %v7614
    %v7750 = vunpack.c.l.b16 %v7615
    %v7751 = vunpack.c.l.b16 %v7616
    %v7752 = vunpack.c.l.b16 %v7617
    %v7753 = vunpack.c.l.b16 %v7618
    %v7754 = vunpack.c.l.b16 %v7619
    %v7755 = vunpack.c.l.b16 %v7620
    %v7756 = vunpack.c.l.b16 %v7621
    %v7757 = vunpack.c.l.b16 %v7622
    %v7758 = vunpack.c.l.b16 %v7623
    %v7759 = vunpack.c.l.b16 %v7624
    %v7760 = vunpack.c.l.b16 %v7625
    %v7761 = vunpack.c.l.b16 %v7626
    %v7762 = vunpack.c.l.b16 %v7627
    %v7763 = vunpack.c.l.b16 %v7628
    %v7764 = vunpack.c.l.b16 %v7629
    %v7765 = vunpack.c.l.b16 %v7630
    %v7766 = vunpack.c.l.b16 %v7631
    %v7767 = vunpack.c.l.b16 %v7632
    %v7768 = vunpack.c.l.b16 %v7633
    %v7769 = vunpack.c.l.b16 %v7634
    %v7770 = vunpack.c.l.b16 %v7635
    %v7771 = vunpack.c.l.b16 %v7636
    %v7772 = vunpack.c.l.b16 %v7637
    %v7773 = vunpack.c.l.b16 %v7638
    %v7774 = vunpack.c.l.b16 %v7639
    %v7775 = vunpack.c.l.b16 %v7640
    %v7776 = vpack.c.b16 %v7713, %v7712
    %v7777 = vpack.c.b16 %v7715, %v7714
    %v7778 = vpack.c.b16 %v7717, %v7716
    %v7779 = vpack.c.b16 %v7719, %v7718
    %v7780 = vpack.c.b16 %v7721, %v7720
    %v7781 = vpack.c.b16 %v7723, %v7722
    %v7782 = vpack.c.b16 %v7725, %v7724
    %v7783 = vpack.c.b16 %v7727, %v7726
    %v7784 = vpack.c.b16 %v7729, %v7728
    %v7785 = vpack.c.b16 %v7731, %v7730
    %v7786 = vpack.c.b16 %v7733, %v7732
    %v7787 = vpack.c.b16 %v7735, %v7734
    %v7788 = vpack.c.b16 %v7737, %v7736
    %v7789 = vpack.c.b16 %v7739, %v7738
    %v7790 = vpack.c.b16 %v7741, %v7740
    %v7791 = vpack.c.b16 %v7743, %v7742
    %v7792 = vpack.c.b16 %v7745, %v7744
    %v7793 = vpack.c.b16 %v7747, %v7746
    %v7794 = vpack.c.b16 %v7749, %v7748
    %v7795 = vpack.c.b16 %v7751, %v7750
    %v7796 = vpack.c.b16 %v7753, %v7752
    %v7797 = vpack.c.b16 %v7755, %v7754
    %v7798 = vpack.c.b16 %v7757, %v7756
    %v7799 = vpack.c.b16 %v7759, %v7758
    %v7800 = vpack.c.b16 %v7761, %v7760
    %v7801 = vpack.c.b16 %v7763, %v7762
    %v7802 = vpack.c.b16 %v7765, %v7764
    %v7803 = vpack.c.b16 %v7767, %v7766
    %v7804 = vpack.c.b16 %v7769, %v7768
    %v7805 = vpack.c.b16 %v7771, %v7770
    %v7806 = vpack.c.b16 %v7773, %v7772
    %v7807 = vpack.c.b16 %v7775, %v7774
    %7840 = vmatprep.subr.bf16.mxu0 0
    %7841 = vmatpush1.bf16.msra.mxu0 %v7776
    %7842 = vmatprep.subr.bf16.mxu0 0
    %7843 = vmatpush1.bf16.msra.mxu0 %v7777
    %7844 = vmatprep.subr.bf16.mxu0 0
    %7845 = vmatpush1.bf16.msra.mxu0 %v7778
    %7846 = vmatprep.subr.bf16.mxu0 0
    %7847 = vmatpush1.bf16.msra.mxu0 %v7779
    %7848 = vmatprep.subr.bf16.mxu0 0
    %7849 = vmatpush1.bf16.msra.mxu0 %v7780
    %7850 = vmatprep.subr.bf16.mxu0 0
    %7851 = vmatpush1.bf16.msra.mxu0 %v7781
    %7852 = vmatprep.subr.bf16.mxu0 0
    %7853 = vmatpush1.bf16.msra.mxu0 %v7782
    %7854 = vmatprep.subr.bf16.mxu0 0
    %7855 = vmatpush1.bf16.msra.mxu0 %v7783
    %7856 = vmatprep.subr.bf16.mxu0 0
    %7857 = vmatpush1.bf16.msra.mxu0 %v7784
    %7858 = vmatprep.subr.bf16.mxu0 0
    %7859 = vmatpush1.bf16.msra.mxu0 %v7785
    %7860 = vmatprep.subr.bf16.mxu0 0
    %7861 = vmatpush1.bf16.msra.mxu0 %v7786
    %7862 = vmatprep.subr.bf16.mxu0 0
    %7863 = vmatpush1.bf16.msra.mxu0 %v7787
    %7864 = vmatprep.subr.bf16.mxu0 0
    %7865 = vmatpush1.bf16.msra.mxu0 %v7788
    %7866 = vmatprep.subr.bf16.mxu0 0
    %7867 = vmatpush1.bf16.msra.mxu0 %v7789
    %7868 = vmatprep.subr.bf16.mxu0 0
    %7869 = vmatpush1.bf16.msra.mxu0 %v7790
    %7870 = vmatprep.subr.bf16.mxu0 0
    %7871 = vmatpush1.bf16.msra.mxu0 %v7791
    %7872 = vmatprep.mubr.bf16.mxu0 %v7562
    %7873 = vmatmul.mubr.bf16.gmra.mrb[0].mxu0 %v7561
    %v7874 = vpop.f32.mrb[0].mxu0
    %v7875 = vadd.f32 %v7646, %v7874
    %v7876 = vpop.f32.mrb[0].mxu0
    %v7877 = vpop.f32.mrb[0].mxu0
    %v7878 = vpop.f32.mrb[0].mxu0
    %7879 = vdwg.mxu0
    %7880 = vmatprep.subr.bf16.mxu0 0
    %7881 = vmatpush1.bf16.msra.mxu0 %v7792
    %7882 = vmatprep.subr.bf16.mxu0 0
    %7883 = vmatpush1.bf16.msra.mxu0 %v7793
    %7884 = vmatprep.subr.bf16.mxu0 0
    %7885 = vmatpush1.bf16.msra.mxu0 %v7794
    %7886 = vmatprep.subr.bf16.mxu0 0
    %7887 = vmatpush1.bf16.msra.mxu0 %v7795
    %7888 = vmatprep.subr.bf16.mxu0 0
    %7889 = vmatpush1.bf16.msra.mxu0 %v7796
    %7890 = vmatprep.subr.bf16.mxu0 0
    %7891 = vmatpush1.bf16.msra.mxu0 %v7797
    %7892 = vmatprep.subr.bf16.mxu0 0
    %7893 = vmatpush1.bf16.msra.mxu0 %v7798
    %7894 = vmatprep.subr.bf16.mxu0 0
    %7895 = vmatpush1.bf16.msra.mxu0 %v7799
    %7896 = vmatprep.subr.bf16.mxu0 0
    %7897 = vmatpush1.bf16.msra.mxu0 %v7800
    %7898 = vmatprep.subr.bf16.mxu0 0
    %7899 = vmatpush1.bf16.msra.mxu0 %v7801
    %7900 = vmatprep.subr.bf16.mxu0 0
    %7901 = vmatpush1.bf16.msra.mxu0 %v7802
    %7902 = vmatprep.subr.bf16.mxu0 0
    %7903 = vmatpush1.bf16.msra.mxu0 %v7803
    %7904 = vmatprep.subr.bf16.mxu0 0
    %7905 = vmatpush1.bf16.msra.mxu0 %v7804
    %7906 = vmatprep.subr.bf16.mxu0 0
    %7907 = vmatpush1.bf16.msra.mxu0 %v7805
    %7908 = vmatprep.subr.bf16.mxu0 0
    %7909 = vmatpush1.bf16.msra.mxu0 %v7806
    %7910 = vmatprep.subr.bf16.mxu0 0
    %7911 = vmatpush1.bf16.msra.mxu0 %v7807
    %7912 = vmatprep.mubr.bf16.mxu0 %v7564
    %7913 = vmatmul.mubr.bf16.gmra.mrb[0].mxu0 %v7563
    %v7914 = vpop.f32.mrb[0].mxu0
    %v7915 = vadd.f32 %v7875, %v7914
    %v7916 = vpop.f32.mrb[0].mxu0
    %v7917 = vpop.f32.mrb[0].mxu0
    %v7918 = vpop.f32.mrb[0].mxu0
    %7919 = vdwg.mxu0
    %vm7920 = vcmask 48128
    %v7921 = vsel %vm7920, %v7915, -inf
    %7922 = vmax.xlane.f32.xlu0 %v7921
    %v7923 = vpop.xlane.xlu0 %7922
    %v7924 = vsub.f32 %v7915, %v7923
    %v7925 = vmul.f32 %v7924, 1.442695
    %v7926 = vpow.pop %v7925
    %v7927 = vsel %vm7920, %v7926, 0.0
    %7928 = vadd.xlane.f32.xlu0 %v7927
    %v7929 = vpop.xlane.xlu0 %7928
    %v7930 = vrcp.pop %v7929
    %v7931 = vmul.f32 %v7926, %v7930
    %vm7932 = vcmp.ge.f32.partialorder %v7915, %v7923
    %v7933 = vsel %vm7932, %v3699, 6
    %v7934 = vsel %vm7920, %v7933, 2147483647
    %v7935 = vand.u32 %v7934, 65535
    %v7936 = vshra.s32 %v7934, 16
    %v7937 = vcvt.s32.f32 %v7935
    %v7938 = vcvt.s32.f32 %v7936
    %7939 = vmin.xlane.f32.xlu0 %v7938
    %v7940 = vpop.xlane.xlu0 %7939
    %vm7941 = vcmp.eq.f32.partialorder %v7938, %v7940
    %v7942 = vsel %vm7941, %v7937, inf
    %7943 = vmin.xlane.f32.xlu0 %v7942
    %v7944 = vpop.xlane.xlu0 %7943
    %v7945 = vcvt.f32.s32 %v7944
    %v7946 = vcvt.f32.s32 %v7940
    %v7947 = vshll.u32 %v7946, 16
    %v7948 = vadd.s32 %v7947, %v7945
    %vm7949 = vcmp.eq.s32.totalorder %v3699, %v7948
    %v7950 = vsel %vm7949, 1.0, 0.0
    %7951 = vst.msk [vmem:[%s8 + $0x8] sm:$0xff] %vm7920, %v7950
    %7952 = vst.msk [vmem:[%s8 + $0x28] sm:$0xff] %vm7920, %v7931
    %s7953 = scalar_lea.vmem %s4, 256
    %v7954 = vld [vmem:[%s7953] sm:$0xf]
    %v7955 = vld [vmem:[%s7953 + $0x4] sm:$0xf]
    %v7956 = vld [vmem:[%s7953 + $0x8] sm:$0xf]
    %v7957 = vld [vmem:[%s7953 + $0xc] sm:$0xf]
    %v7958 = vld [vmem:[%s7953 + $0x10] sm:$0xf]
    %v7959 = vld [vmem:[%s7953 + $0x14] sm:$0xf]
    %v7960 = vld [vmem:[%s7953 + $0x18] sm:$0xf]
    %v7961 = vld [vmem:[%s7953 + $0x1c] sm:$0xf]
    %v7962 = vld [vmem:[%s7953 + $0x20] sm:$0xf]
    %v7963 = vld [vmem:[%s7953 + $0x24] sm:$0xf]
    %v7964 = vld [vmem:[%s7953 + $0x28] sm:$0xf]
    %v7965 = vld [vmem:[%s7953 + $0x2c] sm:$0xf]
    %v7966 = vld [vmem:[%s7953 + $0x30] sm:$0xf]
    %v7967 = vld [vmem:[%s7953 + $0x34] sm:$0xf]
    %v7968 = vld [vmem:[%s7953 + $0x38] sm:$0xf]
    %v7969 = vld [vmem:[%s7953 + $0x3c] sm:$0xf]
    %v7970 = vld [vmem:[%s7953 + $0x40] sm:$0xf]
    %v7971 = vld [vmem:[%s7953 + $0x44] sm:$0xf]
    %v7972 = vld [vmem:[%s7953 + $0x48] sm:$0xf]
    %v7973 = vld [vmem:[%s7953 + $0x4c] sm:$0xf]
    %v7974 = vld [vmem:[%s7953 + $0x50] sm:$0xf]
    %v7975 = vld [vmem:[%s7953 + $0x54] sm:$0xf]
    %v7976 = vld [vmem:[%s7953 + $0x58] sm:$0xf]
    %v7977 = vld [vmem:[%s7953 + $0x5c] sm:$0xf]
    %v7978 = vld [vmem:[%s7953 + $0x60] sm:$0xf]
    %v7979 = vld [vmem:[%s7953 + $0x64] sm:$0xf]
    %v7980 = vld [vmem:[%s7953 + $0x68] sm:$0xf]
    %v7981 = vld [vmem:[%s7953 + $0x6c] sm:$0xf]
    %v7982 = vld [vmem:[%s7953 + $0x70] sm:$0xf]
    %v7983 = vld [vmem:[%s7953 + $0x74] sm:$0xf]
    %v7984 = vld [vmem:[%s7953 + $0x78] sm:$0xf]
    %v7985 = vld [vmem:[%s7953 + $0x7c] sm:$0xf]
    %v7986 = vld [vmem:[%s7953 + $0x80] sm:$0xf]
    %v7987 = vld [vmem:[%s7953 + $0x84] sm:$0xf]
    %v7988 = vld [vmem:[%s7953 + $0x88] sm:$0xf]
    %v7989 = vld [vmem:[%s7953 + $0x8c] sm:$0xf]
    %v7990 = vld [vmem:[%s7953 + $0x90] sm:$0xf]
    %v7991 = vld [vmem:[%s7953 + $0x94] sm:$0xf]
    %v7992 = vld [vmem:[%s7953 + $0x98] sm:$0xf]
    %v7993 = vld [vmem:[%s7953 + $0x9c] sm:$0xf]
    %v7994 = vld [vmem:[%s7953 + $0xa0] sm:$0xf]
    %v7995 = vld [vmem:[%s7953 + $0xa4] sm:$0xf]
    %v7996 = vld [vmem:[%s7953 + $0xa8] sm:$0xf]
    %v7997 = vld [vmem:[%s7953 + $0xac] sm:$0xf]
    %v7998 = vld [vmem:[%s7953 + $0xb0] sm:$0xf]
    %v7999 = vld [vmem:[%s7953 + $0xb4] sm:$0xf]
    %v8000 = vld [vmem:[%s7953 + $0xb8] sm:$0xf]
    %v8001 = vld [vmem:[%s7953 + $0xbc] sm:$0xf]
    %v8002 = vld [vmem:[%s7953 + $0xc0] sm:$0xf]
    %v8003 = vld [vmem:[%s7953 + $0xc4] sm:$0xf]
    %v8004 = vld [vmem:[%s7953 + $0xc8] sm:$0xf]
    %v8005 = vld [vmem:[%s7953 + $0xcc] sm:$0xf]
    %v8006 = vld [vmem:[%s7953 + $0xd0] sm:$0xf]
    %v8007 = vld [vmem:[%s7953 + $0xd4] sm:$0xf]
    %v8008 = vld [vmem:[%s7953 + $0xd8] sm:$0xf]
    %v8009 = vld [vmem:[%s7953 + $0xdc] sm:$0xf]
    %v8010 = vld [vmem:[%s7953 + $0xe0] sm:$0xf]
    %v8011 = vld [vmem:[%s7953 + $0xe4] sm:$0xf]
    %v8012 = vld [vmem:[%s7953 + $0xe8] sm:$0xf]
    %v8013 = vld [vmem:[%s7953 + $0xec] sm:$0xf]
    %v8014 = vld [vmem:[%s7953 + $0xf0] sm:$0xf]
    %v8015 = vld [vmem:[%s7953 + $0xf4] sm:$0xf]
    %v8016 = vld [vmem:[%s7953 + $0xf8] sm:$0xf]
    %v8017 = vld [vmem:[%s7953 + $0xfc] sm:$0xf]
    %v8018 = vld [vmem:[#allocation10 + $0x1d] sm:$0x1]
    %v8020 = vlaneseq
    %v8021 = vshrl.u32 %v8020, 7
    %v8022 = vsub.s32 0, %v8021
    %v8023 = vrot.slane %v8018, %v8022
    %v8089 = vunpack.c.l.b16 %v7954
    %v8090 = vunpack.c.l.b16 %v7955
    %v8091 = vunpack.c.l.b16 %v7956
    %v8092 = vunpack.c.l.b16 %v7957
    %v8093 = vunpack.c.l.b16 %v7958
    %v8094 = vunpack.c.l.b16 %v7959
    %v8095 = vunpack.c.l.b16 %v7960
    %v8096 = vunpack.c.l.b16 %v7961
    %v8097 = vunpack.c.l.b16 %v7962
    %v8098 = vunpack.c.l.b16 %v7963
    %v8099 = vunpack.c.l.b16 %v7964
    %v8100 = vunpack.c.l.b16 %v7965
    %v8101 = vunpack.c.l.b16 %v7966
    %v8102 = vunpack.c.l.b16 %v7967
    %v8103 = vunpack.c.l.b16 %v7968
    %v8104 = vunpack.c.l.b16 %v7969
    %v8105 = vunpack.c.l.b16 %v7970
    %v8106 = vunpack.c.l.b16 %v7971
    %v8107 = vunpack.c.l.b16 %v7972
    %v8108 = vunpack.c.l.b16 %v7973
    %v8109 = vunpack.c.l.b16 %v7974
    %v8110 = vunpack.c.l.b16 %v7975
    %v8111 = vunpack.c.l.b16 %v7976
    %v8112 = vunpack.c.l.b16 %v7977
    %v8113 = vunpack.c.l.b16 %v7978
    %v8114 = vunpack.c.l.b16 %v7979
    %v8115 = vunpack.c.l.b16 %v7980
    %v8116 = vunpack.c.l.b16 %v7981
    %v8117 = vunpack.c.l.b16 %v7982
    %v8118 = vunpack.c.l.b16 %v7983
    %v8119 = vunpack.c.l.b16 %v7984
    %v8120 = vunpack.c.l.b16 %v7985
    %v8121 = vunpack.c.l.b16 %v7986
    %v8122 = vunpack.c.l.b16 %v7987
    %v8123 = vunpack.c.l.b16 %v7988
    %v8124 = vunpack.c.l.b16 %v7989
    %v8125 = vunpack.c.l.b16 %v7990
    %v8126 = vunpack.c.l.b16 %v7991
    %v8127 = vunpack.c.l.b16 %v7992
    %v8128 = vunpack.c.l.b16 %v7993
    %v8129 = vunpack.c.l.b16 %v7994
    %v8130 = vunpack.c.l.b16 %v7995
    %v8131 = vunpack.c.l.b16 %v7996
    %v8132 = vunpack.c.l.b16 %v7997
    %v8133 = vunpack.c.l.b16 %v7998
    %v8134 = vunpack.c.l.b16 %v7999
    %v8135 = vunpack.c.l.b16 %v8000
    %v8136 = vunpack.c.l.b16 %v8001
    %v8137 = vunpack.c.l.b16 %v8002
    %v8138 = vunpack.c.l.b16 %v8003
    %v8139 = vunpack.c.l.b16 %v8004
    %v8140 = vunpack.c.l.b16 %v8005
    %v8141 = vunpack.c.l.b16 %v8006
    %v8142 = vunpack.c.l.b16 %v8007
    %v8143 = vunpack.c.l.b16 %v8008
    %v8144 = vunpack.c.l.b16 %v8009
    %v8145 = vunpack.c.l.b16 %v8010
    %v8146 = vunpack.c.l.b16 %v8011
    %v8147 = vunpack.c.l.b16 %v8012
    %v8148 = vunpack.c.l.b16 %v8013
    %v8149 = vunpack.c.l.b16 %v8014
    %v8150 = vunpack.c.l.b16 %v8015
    %v8151 = vunpack.c.l.b16 %v8016
    %v8152 = vunpack.c.l.b16 %v8017
    %v8153 = vpack.c.b16 %v8090, %v8089
    %v8154 = vpack.c.b16 %v8092, %v8091
    %v8155 = vpack.c.b16 %v8094, %v8093
    %v8156 = vpack.c.b16 %v8096, %v8095
    %v8157 = vpack.c.b16 %v8098, %v8097
    %v8158 = vpack.c.b16 %v8100, %v8099
    %v8159 = vpack.c.b16 %v8102, %v8101
    %v8160 = vpack.c.b16 %v8104, %v8103
    %v8161 = vpack.c.b16 %v8106, %v8105
    %v8162 = vpack.c.b16 %v8108, %v8107
    %v8163 = vpack.c.b16 %v8110, %v8109
    %v8164 = vpack.c.b16 %v8112, %v8111
    %v8165 = vpack.c.b16 %v8114, %v8113
    %v8166 = vpack.c.b16 %v8116, %v8115
    %v8167 = vpack.c.b16 %v8118, %v8117
    %v8168 = vpack.c.b16 %v8120, %v8119
    %v8169 = vpack.c.b16 %v8122, %v8121
    %v8170 = vpack.c.b16 %v8124, %v8123
    %v8171 = vpack.c.b16 %v8126, %v8125
    %v8172 = vpack.c.b16 %v8128, %v8127
    %v8173 = vpack.c.b16 %v8130, %v8129
    %v8174 = vpack.c.b16 %v8132, %v8131
    %v8175 = vpack.c.b16 %v8134, %v8133
    %v8176 = vpack.c.b16 %v8136, %v8135
    %v8177 = vpack.c.b16 %v8138, %v8137
    %v8178 = vpack.c.b16 %v8140, %v8139
    %v8179 = vpack.c.b16 %v8142, %v8141
    %v8180 = vpack.c.b16 %v8144, %v8143
    %v8181 = vpack.c.b16 %v8146, %v8145
    %v8182 = vpack.c.b16 %v8148, %v8147
    %v8183 = vpack.c.b16 %v8150, %v8149
    %v8184 = vpack.c.b16 %v8152, %v8151
    %8217 = vmatprep.subr.bf16.mxu0 0
    %8218 = vmatpush1.bf16.msra.mxu0 %v8153
    %8219 = vmatprep.subr.bf16.mxu0 0
    %8220 = vmatpush1.bf16.msra.mxu0 %v8154
    %8221 = vmatprep.subr.bf16.mxu0 0
    %8222 = vmatpush1.bf16.msra.mxu0 %v8155
    %8223 = vmatprep.subr.bf16.mxu0 0
    %8224 = vmatpush1.bf16.msra.mxu0 %v8156
    %8225 = vmatprep.subr.bf16.mxu0 0
    %8226 = vmatpush1.bf16.msra.mxu0 %v8157
    %8227 = vmatprep.subr.bf16.mxu0 0
    %8228 = vmatpush1.bf16.msra.mxu0 %v8158
    %8229 = vmatprep.subr.bf16.mxu0 0
    %8230 = vmatpush1.bf16.msra.mxu0 %v8159
    %8231 = vmatprep.subr.bf16.mxu0 0
    %8232 = vmatpush1.bf16.msra.mxu0 %v8160
    %8233 = vmatprep.subr.bf16.mxu0 0
    %8234 = vmatpush1.bf16.msra.mxu0 %v8161
    %8235 = vmatprep.subr.bf16.mxu0 0
    %8236 = vmatpush1.bf16.msra.mxu0 %v8162
    %8237 = vmatprep.subr.bf16.mxu0 0
    %8238 = vmatpush1.bf16.msra.mxu0 %v8163
    %8239 = vmatprep.subr.bf16.mxu0 0
    %8240 = vmatpush1.bf16.msra.mxu0 %v8164
    %8241 = vmatprep.subr.bf16.mxu0 0
    %8242 = vmatpush1.bf16.msra.mxu0 %v8165
    %8243 = vmatprep.subr.bf16.mxu0 0
    %8244 = vmatpush1.bf16.msra.mxu0 %v8166
    %8245 = vmatprep.subr.bf16.mxu0 0
    %8246 = vmatpush1.bf16.msra.mxu0 %v8167
    %8247 = vmatprep.subr.bf16.mxu0 0
    %8248 = vmatpush1.bf16.msra.mxu0 %v8168
    %8249 = vmatprep.mubr.bf16.mxu0 %v7566
    %8250 = vmatmul.mubr.bf16.gmra.mrb[0].mxu0 %v7565
    %v8251 = vpop.f32.mrb[0].mxu0
    %v8252 = vadd.f32 %v8023, %v8251
    %v8253 = vpop.f32.mrb[0].mxu0
    %v8254 = vpop.f32.mrb[0].mxu0
    %v8255 = vpop.f32.mrb[0].mxu0
    %8256 = vdwg.mxu0
    %8257 = vmatprep.subr.bf16.mxu0 0
    %8258 = vmatpush1.bf16.msra.mxu0 %v8169
    %8259 = vmatprep.subr.bf16.mxu0 0
    %8260 = vmatpush1.bf16.msra.mxu0 %v8170
    %8261 = vmatprep.subr.bf16.mxu0 0
    %8262 = vmatpush1.bf16.msra.mxu0 %v8171
    %8263 = vmatprep.subr.bf16.mxu0 0
    %8264 = vmatpush1.bf16.msra.mxu0 %v8172
    %8265 = vmatprep.subr.bf16.mxu0 0
    %8266 = vmatpush1.bf16.msra.mxu0 %v8173
    %8267 = vmatprep.subr.bf16.mxu0 0
    %8268 = vmatpush1.bf16.msra.mxu0 %v8174
    %8269 = vmatprep.subr.bf16.mxu0 0
    %8270 = vmatpush1.bf16.msra.mxu0 %v8175
    %8271 = vmatprep.subr.bf16.mxu0 0
    %8272 = vmatpush1.bf16.msra.mxu0 %v8176
    %8273 = vmatprep.subr.bf16.mxu0 0
    %8274 = vmatpush1.bf16.msra.mxu0 %v8177
    %8275 = vmatprep.subr.bf16.mxu0 0
    %8276 = vmatpush1.bf16.msra.mxu0 %v8178
    %8277 = vmatprep.subr.bf16.mxu0 0
    %8278 = vmatpush1.bf16.msra.mxu0 %v8179
    %8279 = vmatprep.subr.bf16.mxu0 0
    %8280 = vmatpush1.bf16.msra.mxu0 %v8180
    %8281 = vmatprep.subr.bf16.mxu0 0
    %8282 = vmatpush1.bf16.msra.mxu0 %v8181
    %8283 = vmatprep.subr.bf16.mxu0 0
    %8284 = vmatpush1.bf16.msra.mxu0 %v8182
    %8285 = vmatprep.subr.bf16.mxu0 0
    %8286 = vmatpush1.bf16.msra.mxu0 %v8183
    %8287 = vmatprep.subr.bf16.mxu0 0
    %8288 = vmatpush1.bf16.msra.mxu0 %v8184
    %8289 = vmatprep.mubr.bf16.mxu0 %v7568
    %8290 = vmatmul.mubr.bf16.gmra.mrb[0].mxu0 %v7567
    %v8291 = vpop.f32.mrb[0].mxu0
    %v8292 = vadd.f32 %v8252, %v8291
    %v8293 = vpop.f32.mrb[0].mxu0
    %v8294 = vpop.f32.mrb[0].mxu0
    %v8295 = vpop.f32.mrb[0].mxu0
    %8296 = vdwg.mxu0
    %v8297 = vsel %vm7920, %v8292, -inf
    %8298 = vmax.xlane.f32.xlu0 %v8297
    %v8299 = vpop.xlane.xlu0 %8298
    %v8300 = vsub.f32 %v8292, %v8299
    %v8301 = vmul.f32 %v8300, 1.442695
    %v8302 = vpow.pop %v8301
    %v8303 = vsel %vm7920, %v8302, 0.0
    %8304 = vadd.xlane.f32.xlu0 %v8303
    %v8305 = vpop.xlane.xlu0 %8304
    %v8306 = vrcp.pop %v8305
    %v8307 = vmul.f32 %v8302, %v8306
    %vm8308 = vcmp.ge.f32.partialorder %v8292, %v8299
    %v8309 = vsel %vm8308, %v3699, 6
    %v8310 = vsel %vm7920, %v8309, 2147483647
    %v8311 = vand.u32 %v8310, 65535
    %v8312 = vshra.s32 %v8310, 16
    %v8313 = vcvt.s32.f32 %v8311
    %v8314 = vcvt.s32.f32 %v8312
    %8315 = vmin.xlane.f32.xlu0 %v8314
    %v8316 = vpop.xlane.xlu0 %8315
    %vm8317 = vcmp.eq.f32.partialorder %v8314, %v8316
    %v8318 = vsel %vm8317, %v8313, inf
    %8319 = vmin.xlane.f32.xlu0 %v8318
    %v8320 = vpop.xlane.xlu0 %8319
    %v8321 = vcvt.f32.s32 %v8320
    %v8322 = vcvt.f32.s32 %v8316
    %v8323 = vshll.u32 %v8322, 16
    %v8324 = vadd.s32 %v8323, %v8321
    %vm8325 = vcmp.eq.s32.totalorder %v3699, %v8324
    %v8326 = vsel %vm8325, 1.0, 0.0
    %8327 = vst.msk [vmem:[%s8 + $0x10] sm:$0xff] %vm7920, %v8326
    %8328 = vst.msk [vmem:[%s8 + $0x30] sm:$0xff] %vm7920, %v8307
    %s8329 = scalar_lea.vmem %s4, 512
    %v8330 = vld [vmem:[%s8329] sm:$0xf]
    %v8331 = vld [vmem:[%s8329 + $0x4] sm:$0xf]
    %v8332 = vld [vmem:[%s8329 + $0x8] sm:$0xf]
    %v8333 = vld [vmem:[%s8329 + $0xc] sm:$0xf]
    %v8334 = vld [vmem:[%s8329 + $0x10] sm:$0xf]
    %v8335 = vld [vmem:[%s8329 + $0x14] sm:$0xf]
    %v8336 = vld [vmem:[%s8329 + $0x18] sm:$0xf]
    %v8337 = vld [vmem:[%s8329 + $0x1c] sm:$0xf]
    %v8338 = vld [vmem:[%s8329 + $0x20] sm:$0xf]
    %v8339 = vld [vmem:[%s8329 + $0x24] sm:$0xf]
    %v8340 = vld [vmem:[%s8329 + $0x28] sm:$0xf]
    %v8341 = vld [vmem:[%s8329 + $0x2c] sm:$0xf]
    %v8342 = vld [vmem:[%s8329 + $0x30] sm:$0xf]
    %v8343 = vld [vmem:[%s8329 + $0x34] sm:$0xf]
    %v8344 = vld [vmem:[%s8329 + $0x38] sm:$0xf]
    %v8345 = vld [vmem:[%s8329 + $0x3c] sm:$0xf]
    %v8346 = vld [vmem:[%s8329 + $0x40] sm:$0xf]
    %v8347 = vld [vmem:[%s8329 + $0x44] sm:$0xf]
    %v8348 = vld [vmem:[%s8329 + $0x48] sm:$0xf]
    %v8349 = vld [vmem:[%s8329 + $0x4c] sm:$0xf]
    %v8350 = vld [vmem:[%s8329 + $0x50] sm:$0xf]
    %v8351 = vld [vmem:[%s8329 + $0x54] sm:$0xf]
    %v8352 = vld [vmem:[%s8329 + $0x58] sm:$0xf]
    %v8353 = vld [vmem:[%s8329 + $0x5c] sm:$0xf]
    %v8354 = vld [vmem:[%s8329 + $0x60] sm:$0xf]
    %v8355 = vld [vmem:[%s8329 + $0x64] sm:$0xf]
    %v8356 = vld [vmem:[%s8329 + $0x68] sm:$0xf]
    %v8357 = vld [vmem:[%s8329 + $0x6c] sm:$0xf]
    %v8358 = vld [vmem:[%s8329 + $0x70] sm:$0xf]
    %v8359 = vld [vmem:[%s8329 + $0x74] sm:$0xf]
    %v8360 = vld [vmem:[%s8329 + $0x78] sm:$0xf]
    %v8361 = vld [vmem:[%s8329 + $0x7c] sm:$0xf]
    %v8362 = vld [vmem:[%s8329 + $0x80] sm:$0xf]
    %v8363 = vld [vmem:[%s8329 + $0x84] sm:$0xf]
    %v8364 = vld [vmem:[%s8329 + $0x88] sm:$0xf]
    %v8365 = vld [vmem:[%s8329 + $0x8c] sm:$0xf]
    %v8366 = vld [vmem:[%s8329 + $0x90] sm:$0xf]
    %v8367 = vld [vmem:[%s8329 + $0x94] sm:$0xf]
    %v8368 = vld [vmem:[%s8329 + $0x98] sm:$0xf]
    %v8369 = vld [vmem:[%s8329 + $0x9c] sm:$0xf]
    %v8370 = vld [vmem:[%s8329 + $0xa0] sm:$0xf]
    %v8371 = vld [vmem:[%s8329 + $0xa4] sm:$0xf]
    %v8372 = vld [vmem:[%s8329 + $0xa8] sm:$0xf]
    %v8373 = vld [vmem:[%s8329 + $0xac] sm:$0xf]
    %v8374 = vld [vmem:[%s8329 + $0xb0] sm:$0xf]
    %v8375 = vld [vmem:[%s8329 + $0xb4] sm:$0xf]
    %v8376 = vld [vmem:[%s8329 + $0xb8] sm:$0xf]
    %v8377 = vld [vmem:[%s8329 + $0xbc] sm:$0xf]
    %v8378 = vld [vmem:[%s8329 + $0xc0] sm:$0xf]
    %v8379 = vld [vmem:[%s8329 + $0xc4] sm:$0xf]
    %v8380 = vld [vmem:[%s8329 + $0xc8] sm:$0xf]
    %v8381 = vld [vmem:[%s8329 + $0xcc] sm:$0xf]
    %v8382 = vld [vmem:[%s8329 + $0xd0] sm:$0xf]
    %v8383 = vld [vmem:[%s8329 + $0xd4] sm:$0xf]
    %v8384 = vld [vmem:[%s8329 + $0xd8] sm:$0xf]
    %v8385 = vld [vmem:[%s8329 + $0xdc] sm:$0xf]
    %v8386 = vld [vmem:[%s8329 + $0xe0] sm:$0xf]
    %v8387 = vld [vmem:[%s8329 + $0xe4] sm:$0xf]
    %v8388 = vld [vmem:[%s8329 + $0xe8] sm:$0xf]
    %v8389 = vld [vmem:[%s8329 + $0xec] sm:$0xf]
    %v8390 = vld [vmem:[%s8329 + $0xf0] sm:$0xf]
    %v8391 = vld [vmem:[%s8329 + $0xf4] sm:$0xf]
    %v8392 = vld [vmem:[%s8329 + $0xf8] sm:$0xf]
    %v8393 = vld [vmem:[%s8329 + $0xfc] sm:$0xf]
    %v8394 = vld [vmem:[#allocation10 + $0x1e] sm:$0x1]
    %v8396 = vlaneseq
    %v8397 = vshrl.u32 %v8396, 7
    %v8398 = vsub.s32 0, %v8397
    %v8399 = vrot.slane %v8394, %v8398
    %v8465 = vunpack.c.l.b16 %v8330
    %v8466 = vunpack.c.l.b16 %v8331
    %v8467 = vunpack.c.l.b16 %v8332
    %v8468 = vunpack.c.l.b16 %v8333
    %v8469 = vunpack.c.l.b16 %v8334
    %v8470 = vunpack.c.l.b16 %v8335
    %v8471 = vunpack.c.l.b16 %v8336
    %v8472 = vunpack.c.l.b16 %v8337
    %v8473 = vunpack.c.l.b16 %v8338
    %v8474 = vunpack.c.l.b16 %v8339
    %v8475 = vunpack.c.l.b16 %v8340
    %v8476 = vunpack.c.l.b16 %v8341
    %v8477 = vunpack.c.l.b16 %v8342
    %v8478 = vunpack.c.l.b16 %v8343
    %v8479 = vunpack.c.l.b16 %v8344
    %v8480 = vunpack.c.l.b16 %v8345
    %v8481 = vunpack.c.l.b16 %v8346
    %v8482 = vunpack.c.l.b16 %v8347
    %v8483 = vunpack.c.l.b16 %v8348
    %v8484 = vunpack.c.l.b16 %v8349
    %v8485 = vunpack.c.l.b16 %v8350
    %v8486 = vunpack.c.l.b16 %v8351
    %v8487 = vunpack.c.l.b16 %v8352
    %v8488 = vunpack.c.l.b16 %v8353
    %v8489 = vunpack.c.l.b16 %v8354
    %v8490 = vunpack.c.l.b16 %v8355
    %v8491 = vunpack.c.l.b16 %v8356
    %v8492 = vunpack.c.l.b16 %v8357
    %v8493 = vunpack.c.l.b16 %v8358
    %v8494 = vunpack.c.l.b16 %v8359
    %v8495 = vunpack.c.l.b16 %v8360
    %v8496 = vunpack.c.l.b16 %v8361
    %v8497 = vunpack.c.l.b16 %v8362
    %v8498 = vunpack.c.l.b16 %v8363
    %v8499 = vunpack.c.l.b16 %v8364
    %v8500 = vunpack.c.l.b16 %v8365
    %v8501 = vunpack.c.l.b16 %v8366
    %v8502 = vunpack.c.l.b16 %v8367
    %v8503 = vunpack.c.l.b16 %v8368
    %v8504 = vunpack.c.l.b16 %v8369
    %v8505 = vunpack.c.l.b16 %v8370
    %v8506 = vunpack.c.l.b16 %v8371
    %v8507 = vunpack.c.l.b16 %v8372
    %v8508 = vunpack.c.l.b16 %v8373
    %v8509 = vunpack.c.l.b16 %v8374
    %v8510 = vunpack.c.l.b16 %v8375
    %v8511 = vunpack.c.l.b16 %v8376
    %v8512 = vunpack.c.l.b16 %v8377
    %v8513 = vunpack.c.l.b16 %v8378
    %v8514 = vunpack.c.l.b16 %v8379
    %v8515 = vunpack.c.l.b16 %v8380
    %v8516 = vunpack.c.l.b16 %v8381
    %v8517 = vunpack.c.l.b16 %v8382
    %v8518 = vunpack.c.l.b16 %v8383
    %v8519 = vunpack.c.l.b16 %v8384
    %v8520 = vunpack.c.l.b16 %v8385
    %v8521 = vunpack.c.l.b16 %v8386
    %v8522 = vunpack.c.l.b16 %v8387
    %v8523 = vunpack.c.l.b16 %v8388
    %v8524 = vunpack.c.l.b16 %v8389
    %v8525 = vunpack.c.l.b16 %v8390
    %v8526 = vunpack.c.l.b16 %v8391
    %v8527 = vunpack.c.l.b16 %v8392
    %v8528 = vunpack.c.l.b16 %v8393
    %v8529 = vpack.c.b16 %v8466, %v8465
    %v8530 = vpack.c.b16 %v8468, %v8467
    %v8531 = vpack.c.b16 %v8470, %v8469
    %v8532 = vpack.c.b16 %v8472, %v8471
    %v8533 = vpack.c.b16 %v8474, %v8473
    %v8534 = vpack.c.b16 %v8476, %v8475
    %v8535 = vpack.c.b16 %v8478, %v8477
    %v8536 = vpack.c.b16 %v8480, %v8479
    %v8537 = vpack.c.b16 %v8482, %v8481
    %v8538 = vpack.c.b16 %v8484, %v8483
    %v8539 = vpack.c.b16 %v8486, %v8485
    %v8540 = vpack.c.b16 %v8488, %v8487
    %v8541 = vpack.c.b16 %v8490, %v8489
    %v8542 = vpack.c.b16 %v8492, %v8491
    %v8543 = vpack.c.b16 %v8494, %v8493
    %v8544 = vpack.c.b16 %v8496, %v8495
    %v8545 = vpack.c.b16 %v8498, %v8497
    %v8546 = vpack.c.b16 %v8500, %v8499
    %v8547 = vpack.c.b16 %v8502, %v8501
    %v8548 = vpack.c.b16 %v8504, %v8503
    %v8549 = vpack.c.b16 %v8506, %v8505
    %v8550 = vpack.c.b16 %v8508, %v8507
    %v8551 = vpack.c.b16 %v8510, %v8509
    %v8552 = vpack.c.b16 %v8512, %v8511
    %v8553 = vpack.c.b16 %v8514, %v8513
    %v8554 = vpack.c.b16 %v8516, %v8515
    %v8555 = vpack.c.b16 %v8518, %v8517
    %v8556 = vpack.c.b16 %v8520, %v8519
    %v8557 = vpack.c.b16 %v8522, %v8521
    %v8558 = vpack.c.b16 %v8524, %v8523
    %v8559 = vpack.c.b16 %v8526, %v8525
    %v8560 = vpack.c.b16 %v8528, %v8527
    %8593 = vmatprep.subr.bf16.mxu0 0
    %8594 = vmatpush1.bf16.msra.mxu0 %v8529
    %8595 = vmatprep.subr.bf16.mxu0 0
    %8596 = vmatpush1.bf16.msra.mxu0 %v8530
    %8597 = vmatprep.subr.bf16.mxu0 0
    %8598 = vmatpush1.bf16.msra.mxu0 %v8531
    %8599 = vmatprep.subr.bf16.mxu0 0
    %8600 = vmatpush1.bf16.msra.mxu0 %v8532
    %8601 = vmatprep.subr.bf16.mxu0 0
    %8602 = vmatpush1.bf16.msra.mxu0 %v8533
    %8603 = vmatprep.subr.bf16.mxu0 0
    %8604 = vmatpush1.bf16.msra.mxu0 %v8534
    %8605 = vmatprep.subr.bf16.mxu0 0
    %8606 = vmatpush1.bf16.msra.mxu0 %v8535
    %8607 = vmatprep.subr.bf16.mxu0 0
    %8608 = vmatpush1.bf16.msra.mxu0 %v8536
    %8609 = vmatprep.subr.bf16.mxu0 0
    %8610 = vmatpush1.bf16.msra.mxu0 %v8537
    %8611 = vmatprep.subr.bf16.mxu0 0
    %8612 = vmatpush1.bf16.msra.mxu0 %v8538
    %8613 = vmatprep.subr.bf16.mxu0 0
    %8614 = vmatpush1.bf16.msra.mxu0 %v8539
    %8615 = vmatprep.subr.bf16.mxu0 0
    %8616 = vmatpush1.bf16.msra.mxu0 %v8540
    %8617 = vmatprep.subr.bf16.mxu0 0
    %8618 = vmatpush1.bf16.msra.mxu0 %v8541
    %8619 = vmatprep.subr.bf16.mxu0 0
    %8620 = vmatpush1.bf16.msra.mxu0 %v8542
    %8621 = vmatprep.subr.bf16.mxu0 0
    %8622 = vmatpush1.bf16.msra.mxu0 %v8543
    %8623 = vmatprep.subr.bf16.mxu0 0
    %8624 = vmatpush1.bf16.msra.mxu0 %v8544
    %8625 = vmatprep.mubr.bf16.mxu0 %v7570
    %8626 = vmatmul.mubr.bf16.gmra.mrb[0].mxu0 %v7569
    %v8627 = vpop.f32.mrb[0].mxu0
    %v8628 = vadd.f32 %v8399, %v8627
    %v8629 = vpop.f32.mrb[0].mxu0
    %v8630 = vpop.f32.mrb[0].mxu0
    %v8631 = vpop.f32.mrb[0].mxu0
    %8632 = vdwg.mxu0
    %8633 = vmatprep.subr.bf16.mxu0 0
    %8634 = vmatpush1.bf16.msra.mxu0 %v8545
    %8635 = vmatprep.subr.bf16.mxu0 0
    %8636 = vmatpush1.bf16.msra.mxu0 %v8546
    %8637 = vmatprep.subr.bf16.mxu0 0
    %8638 = vmatpush1.bf16.msra.mxu0 %v8547
    %8639 = vmatprep.subr.bf16.mxu0 0
    %8640 = vmatpush1.bf16.msra.mxu0 %v8548
    %8641 = vmatprep.subr.bf16.mxu0 0
    %8642 = vmatpush1.bf16.msra.mxu0 %v8549
    %8643 = vmatprep.subr.bf16.mxu0 0
    %8644 = vmatpush1.bf16.msra.mxu0 %v8550
    %8645 = vmatprep.subr.bf16.mxu0 0
    %8646 = vmatpush1.bf16.msra.mxu0 %v8551
    %8647 = vmatprep.subr.bf16.mxu0 0
    %8648 = vmatpush1.bf16.msra.mxu0 %v8552
    %8649 = vmatprep.subr.bf16.mxu0 0
    %8650 = vmatpush1.bf16.msra.mxu0 %v8553
    %8651 = vmatprep.subr.bf16.mxu0 0
    %8652 = vmatpush1.bf16.msra.mxu0 %v8554
    %8653 = vmatprep.subr.bf16.mxu0 0
    %8654 = vmatpush1.bf16.msra.mxu0 %v8555
    %8655 = vmatprep.subr.bf16.mxu0 0
    %8656 = vmatpush1.bf16.msra.mxu0 %v8556
    %8657 = vmatprep.subr.bf16.mxu0 0
    %8658 = vmatpush1.bf16.msra.mxu0 %v8557
    %8659 = vmatprep.subr.bf16.mxu0 0
    %8660 = vmatpush1.bf16.msra.mxu0 %v8558
    %8661 = vmatprep.subr.bf16.mxu0 0
    %8662 = vmatpush1.bf16.msra.mxu0 %v8559
    %8663 = vmatprep.subr.bf16.mxu0 0
    %8664 = vmatpush1.bf16.msra.mxu0 %v8560
    %8665 = vmatprep.mubr.bf16.mxu0 %v7572
    %8666 = vmatmul.mubr.bf16.gmra.mrb[0].mxu0 %v7571
    %v8667 = vpop.f32.mrb[0].mxu0
    %v8668 = vadd.f32 %v8628, %v8667
    %v8669 = vpop.f32.mrb[0].mxu0
    %v8670 = vpop.f32.mrb[0].mxu0
    %v8671 = vpop.f32.mrb[0].mxu0
    %8672 = vdwg.mxu0
    %v8673 = vsel %vm7920, %v8668, -inf
    %8674 = vmax.xlane.f32.xlu0 %v8673
    %v8675 = vpop.xlane.xlu0 %8674
    %v8676 = vsub.f32 %v8668, %v8675
    %v8677 = vmul.f32 %v8676, 1.442695
    %v8678 = vpow.pop %v8677
    %v8679 = vsel %vm7920, %v8678, 0.0
    %8680 = vadd.xlane.f32.xlu0 %v8679
    %v8681 = vpop.xlane.xlu0 %8680
    %v8682 = vrcp.pop %v8681
    %v8683 = vmul.f32 %v8678, %v8682
    %vm8684 = vcmp.ge.f32.partialorder %v8668, %v8675
    %v8685 = vsel %vm8684, %v3699, 6
    %v8686 = vsel %vm7920, %v8685, 2147483647
    %v8687 = vand.u32 %v8686, 65535
    %v8688 = vshra.s32 %v8686, 16
    %v8689 = vcvt.s32.f32 %v8687
    %v8690 = vcvt.s32.f32 %v8688
    %8691 = vmin.xlane.f32.xlu0 %v8690
    %v8692 = vpop.xlane.xlu0 %8691
    %vm8693 = vcmp.eq.f32.partialorder %v8690, %v8692
    %v8694 = vsel %vm8693, %v8689, inf
    %8695 = vmin.xlane.f32.xlu0 %v8694
    %v8696 = vpop.xlane.xlu0 %8695
    %v8697 = vcvt.f32.s32 %v8696
    %v8698 = vcvt.f32.s32 %v8692
    %v8699 = vshll.u32 %v8698, 16
    %v8700 = vadd.s32 %v8699, %v8697
    %vm8701 = vcmp.eq.s32.totalorder %v3699, %v8700
    %v8702 = vsel %vm8701, 1.0, 0.0
    %8703 = vst.msk [vmem:[%s8 + $0x18] sm:$0xff] %vm7920, %v8702
    %8704 = vst.msk [vmem:[%s8 + $0x38] sm:$0xff] %vm7920, %v8683
    %s8705 = scalar_lea.vmem %s4, 768
    %v8706 = vld [vmem:[%s8705] sm:$0xf]
    %v8707 = vld [vmem:[%s8705 + $0x4] sm:$0xf]
    %v8708 = vld [vmem:[%s8705 + $0x8] sm:$0xf]
    %v8709 = vld [vmem:[%s8705 + $0xc] sm:$0xf]
    %v8710 = vld [vmem:[%s8705 + $0x10] sm:$0xf]
    %v8711 = vld [vmem:[%s8705 + $0x14] sm:$0xf]
    %v8712 = vld [vmem:[%s8705 + $0x18] sm:$0xf]
    %v8713 = vld [vmem:[%s8705 + $0x1c] sm:$0xf]
    %v8714 = vld [vmem:[%s8705 + $0x20] sm:$0xf]
    %v8715 = vld [vmem:[%s8705 + $0x24] sm:$0xf]
    %v8716 = vld [vmem:[%s8705 + $0x28] sm:$0xf]
    %v8717 = vld [vmem:[%s8705 + $0x2c] sm:$0xf]
    %v8718 = vld [vmem:[%s8705 + $0x30] sm:$0xf]
    %v8719 = vld [vmem:[%s8705 + $0x34] sm:$0xf]
    %v8720 = vld [vmem:[%s8705 + $0x38] sm:$0xf]
    %v8721 = vld [vmem:[%s8705 + $0x3c] sm:$0xf]
    %v8722 = vld [vmem:[%s8705 + $0x40] sm:$0xf]
    %v8723 = vld [vmem:[%s8705 + $0x44] sm:$0xf]
    %v8724 = vld [vmem:[%s8705 + $0x48] sm:$0xf]
    %v8725 = vld [vmem:[%s8705 + $0x4c] sm:$0xf]
    %v8726 = vld [vmem:[%s8705 + $0x50] sm:$0xf]
    %v8727 = vld [vmem:[%s8705 + $0x54] sm:$0xf]
    %v8728 = vld [vmem:[%s8705 + $0x58] sm:$0xf]
    %v8729 = vld [vmem:[%s8705 + $0x5c] sm:$0xf]
    %v8730 = vld [vmem:[%s8705 + $0x60] sm:$0xf]
    %v8731 = vld [vmem:[%s8705 + $0x64] sm:$0xf]
    %v8732 = vld [vmem:[%s8705 + $0x68] sm:$0xf]
    %v8733 = vld [vmem:[%s8705 + $0x6c] sm:$0xf]
    %v8734 = vld [vmem:[%s8705 + $0x70] sm:$0xf]
    %v8735 = vld [vmem:[%s8705 + $0x74] sm:$0xf]
    %v8736 = vld [vmem:[%s8705 + $0x78] sm:$0xf]
    %v8737 = vld [vmem:[%s8705 + $0x7c] sm:$0xf]
    %v8738 = vld [vmem:[%s8705 + $0x80] sm:$0xf]
    %v8739 = vld [vmem:[%s8705 + $0x84] sm:$0xf]
    %v8740 = vld [vmem:[%s8705 + $0x88] sm:$0xf]
    %v8741 = vld [vmem:[%s8705 + $0x8c] sm:$0xf]
    %v8742 = vld [vmem:[%s8705 + $0x90] sm:$0xf]
    %v8743 = vld [vmem:[%s8705 + $0x94] sm:$0xf]
    %v8744 = vld [vmem:[%s8705 + $0x98] sm:$0xf]
    %v8745 = vld [vmem:[%s8705 + $0x9c] sm:$0xf]
    %v8746 = vld [vmem:[%s8705 + $0xa0] sm:$0xf]
    %v8747 = vld [vmem:[%s8705 + $0xa4] sm:$0xf]
    %v8748 = vld [vmem:[%s8705 + $0xa8] sm:$0xf]
    %v8749 = vld [vmem:[%s8705 + $0xac] sm:$0xf]
    %v8750 = vld [vmem:[%s8705 + $0xb0] sm:$0xf]
    %v8751 = vld [vmem:[%s8705 + $0xb4] sm:$0xf]
    %v8752 = vld [vmem:[%s8705 + $0xb8] sm:$0xf]
    %v8753 = vld [vmem:[%s8705 + $0xbc] sm:$0xf]
    %v8754 = vld [vmem:[%s8705 + $0xc0] sm:$0xf]
    %v8755 = vld [vmem:[%s8705 + $0xc4] sm:$0xf]
    %v8756 = vld [vmem:[%s8705 + $0xc8] sm:$0xf]
    %v8757 = vld [vmem:[%s8705 + $0xcc] sm:$0xf]
    %v8758 = vld [vmem:[%s8705 + $0xd0] sm:$0xf]
    %v8759 = vld [vmem:[%s8705 + $0xd4] sm:$0xf]
    %v8760 = vld [vmem:[%s8705 + $0xd8] sm:$0xf]
    %v8761 = vld [vmem:[%s8705 + $0xdc] sm:$0xf]
    %v8762 = vld [vmem:[%s8705 + $0xe0] sm:$0xf]
    %v8763 = vld [vmem:[%s8705 + $0xe4] sm:$0xf]
    %v8764 = vld [vmem:[%s8705 + $0xe8] sm:$0xf]
    %v8765 = vld [vmem:[%s8705 + $0xec] sm:$0xf]
    %v8766 = vld [vmem:[%s8705 + $0xf0] sm:$0xf]
    %v8767 = vld [vmem:[%s8705 + $0xf4] sm:$0xf]
    %v8768 = vld [vmem:[%s8705 + $0xf8] sm:$0xf]
    %v8769 = vld [vmem:[%s8705 + $0xfc] sm:$0xf]
    %v8770 = vld [vmem:[#allocation10 + $0x1f] sm:$0x1]
    %v8772 = vlaneseq
    %v8773 = vshrl.u32 %v8772, 7
    %v8774 = vsub.s32 0, %v8773
    %v8775 = vrot.slane %v8770, %v8774
    %v8841 = vunpack.c.l.b16 %v8706
    %v8842 = vunpack.c.l.b16 %v8707
    %v8843 = vunpack.c.l.b16 %v8708
    %v8844 = vunpack.c.l.b16 %v8709
    %v8845 = vunpack.c.l.b16 %v8710
    %v8846 = vunpack.c.l.b16 %v8711
    %v8847 = vunpack.c.l.b16 %v8712
    %v8848 = vunpack.c.l.b16 %v8713
    %v8849 = vunpack.c.l.b16 %v8714
    %v8850 = vunpack.c.l.b16 %v8715
    %v8851 = vunpack.c.l.b16 %v8716
    %v8852 = vunpack.c.l.b16 %v8717
    %v8853 = vunpack.c.l.b16 %v8718
    %v8854 = vunpack.c.l.b16 %v8719
    %v8855 = vunpack.c.l.b16 %v8720
    %v8856 = vunpack.c.l.b16 %v8721
    %v8857 = vunpack.c.l.b16 %v8722
    %v8858 = vunpack.c.l.b16 %v8723
    %v8859 = vunpack.c.l.b16 %v8724
    %v8860 = vunpack.c.l.b16 %v8725
    %v8861 = vunpack.c.l.b16 %v8726
    %v8862 = vunpack.c.l.b16 %v8727
    %v8863 = vunpack.c.l.b16 %v8728
    %v8864 = vunpack.c.l.b16 %v8729
    %v8865 = vunpack.c.l.b16 %v8730
    %v8866 = vunpack.c.l.b16 %v8731
    %v8867 = vunpack.c.l.b16 %v8732
    %v8868 = vunpack.c.l.b16 %v8733
    %v8869 = vunpack.c.l.b16 %v8734
    %v8870 = vunpack.c.l.b16 %v8735
    %v8871 = vunpack.c.l.b16 %v8736
    %v8872 = vunpack.c.l.b16 %v8737
    %v8873 = vunpack.c.l.b16 %v8738
    %v8874 = vunpack.c.l.b16 %v8739
    %v8875 = vunpack.c.l.b16 %v8740
    %v8876 = vunpack.c.l.b16 %v8741
    %v8877 = vunpack.c.l.b16 %v8742
    %v8878 = vunpack.c.l.b16 %v8743
    %v8879 = vunpack.c.l.b16 %v8744
    %v8880 = vunpack.c.l.b16 %v8745
    %v8881 = vunpack.c.l.b16 %v8746
    %v8882 = vunpack.c.l.b16 %v8747
    %v8883 = vunpack.c.l.b16 %v8748
    %v8884 = vunpack.c.l.b16 %v8749
    %v8885 = vunpack.c.l.b16 %v8750
    %v8886 = vunpack.c.l.b16 %v8751
    %v8887 = vunpack.c.l.b16 %v8752
    %v8888 = vunpack.c.l.b16 %v8753
    %v8889 = vunpack.c.l.b16 %v8754
    %v8890 = vunpack.c.l.b16 %v8755
    %v8891 = vunpack.c.l.b16 %v8756
    %v8892 = vunpack.c.l.b16 %v8757
    %v8893 = vunpack.c.l.b16 %v8758
    %v8894 = vunpack.c.l.b16 %v8759
    %v8895 = vunpack.c.l.b16 %v8760
    %v8896 = vunpack.c.l.b16 %v8761
    %v8897 = vunpack.c.l.b16 %v8762
    %v8898 = vunpack.c.l.b16 %v8763
    %v8899 = vunpack.c.l.b16 %v8764
    %v8900 = vunpack.c.l.b16 %v8765
    %v8901 = vunpack.c.l.b16 %v8766
    %v8902 = vunpack.c.l.b16 %v8767
    %v8903 = vunpack.c.l.b16 %v8768
    %v8904 = vunpack.c.l.b16 %v8769
    %v8905 = vpack.c.b16 %v8842, %v8841
    %v8906 = vpack.c.b16 %v8844, %v8843
    %v8907 = vpack.c.b16 %v8846, %v8845
    %v8908 = vpack.c.b16 %v8848, %v8847
    %v8909 = vpack.c.b16 %v8850, %v8849
    %v8910 = vpack.c.b16 %v8852, %v8851
    %v8911 = vpack.c.b16 %v8854, %v8853
    %v8912 = vpack.c.b16 %v8856, %v8855
    %v8913 = vpack.c.b16 %v8858, %v8857
    %v8914 = vpack.c.b16 %v8860, %v8859
    %v8915 = vpack.c.b16 %v8862, %v8861
    %v8916 = vpack.c.b16 %v8864, %v8863
    %v8917 = vpack.c.b16 %v8866, %v8865
    %v8918 = vpack.c.b16 %v8868, %v8867
    %v8919 = vpack.c.b16 %v8870, %v8869
    %v8920 = vpack.c.b16 %v8872, %v8871
    %v8921 = vpack.c.b16 %v8874, %v8873
    %v8922 = vpack.c.b16 %v8876, %v8875
    %v8923 = vpack.c.b16 %v8878, %v8877
    %v8924 = vpack.c.b16 %v8880, %v8879
    %v8925 = vpack.c.b16 %v8882, %v8881
    %v8926 = vpack.c.b16 %v8884, %v8883
    %v8927 = vpack.c.b16 %v8886, %v8885
    %v8928 = vpack.c.b16 %v8888, %v8887
    %v8929 = vpack.c.b16 %v8890, %v8889
    %v8930 = vpack.c.b16 %v8892, %v8891
    %v8931 = vpack.c.b16 %v8894, %v8893
    %v8932 = vpack.c.b16 %v8896, %v8895
    %v8933 = vpack.c.b16 %v8898, %v8897
    %v8934 = vpack.c.b16 %v8900, %v8899
    %v8935 = vpack.c.b16 %v8902, %v8901
    %v8936 = vpack.c.b16 %v8904, %v8903
    %8969 = vmatprep.subr.bf16.mxu0 0
    %8970 = vmatpush1.bf16.msra.mxu0 %v8905
    %8971 = vmatprep.subr.bf16.mxu0 0
    %8972 = vmatpush1.bf16.msra.mxu0 %v8906
    %8973 = vmatprep.subr.bf16.mxu0 0
    %8974 = vmatpush1.bf16.msra.mxu0 %v8907
    %8975 = vmatprep.subr.bf16.mxu0 0
    %8976 = vmatpush1.bf16.msra.mxu0 %v8908
    %8977 = vmatprep.subr.bf16.mxu0 0
    %8978 = vmatpush1.bf16.msra.mxu0 %v8909
    %8979 = vmatprep.subr.bf16.mxu0 0
    %8980 = vmatpush1.bf16.msra.mxu0 %v8910
    %8981 = vmatprep.subr.bf16.mxu0 0
    %8982 = vmatpush1.bf16.msra.mxu0 %v8911
    %8983 = vmatprep.subr.bf16.mxu0 0
    %8984 = vmatpush1.bf16.msra.mxu0 %v8912
    %8985 = vmatprep.subr.bf16.mxu0 0
    %8986 = vmatpush1.bf16.msra.mxu0 %v8913
    %8987 = vmatprep.subr.bf16.mxu0 0
    %8988 = vmatpush1.bf16.msra.mxu0 %v8914
    %8989 = vmatprep.subr.bf16.mxu0 0
    %8990 = vmatpush1.bf16.msra.mxu0 %v8915
    %8991 = vmatprep.subr.bf16.mxu0 0
    %8992 = vmatpush1.bf16.msra.mxu0 %v8916
    %8993 = vmatprep.subr.bf16.mxu0 0
    %8994 = vmatpush1.bf16.msra.mxu0 %v8917
    %8995 = vmatprep.subr.bf16.mxu0 0
    %8996 = vmatpush1.bf16.msra.mxu0 %v8918
    %8997 = vmatprep.subr.bf16.mxu0 0
    %8998 = vmatpush1.bf16.msra.mxu0 %v8919
    %8999 = vmatprep.subr.bf16.mxu0 0
    %9000 = vmatpush1.bf16.msra.mxu0 %v8920
    %9001 = vmatprep.mubr.bf16.mxu0 %v7574
    %9002 = vmatmul.mubr.bf16.gmra.mrb[0].mxu0 %v7573
    %v9003 = vpop.f32.mrb[0].mxu0
    %v9004 = vadd.f32 %v8775, %v9003
    %v9005 = vpop.f32.mrb[0].mxu0
    %v9006 = vpop.f32.mrb[0].mxu0
    %v9007 = vpop.f32.mrb[0].mxu0
    %9008 = vdwg.mxu0
    %9009 = vmatprep.subr.bf16.mxu0 0
    %9010 = vmatpush1.bf16.msra.mxu0 %v8921
    %9011 = vmatprep.subr.bf16.mxu0 0
    %9012 = vmatpush1.bf16.msra.mxu0 %v8922
    %9013 = vmatprep.subr.bf16.mxu0 0
    %9014 = vmatpush1.bf16.msra.mxu0 %v8923
    %9015 = vmatprep.subr.bf16.mxu0 0
    %9016 = vmatpush1.bf16.msra.mxu0 %v8924
    %9017 = vmatprep.subr.bf16.mxu0 0
    %9018 = vmatpush1.bf16.msra.mxu0 %v8925
    %9019 = vmatprep.subr.bf16.mxu0 0
    %9020 = vmatpush1.bf16.msra.mxu0 %v8926
    %9021 = vmatprep.subr.bf16.mxu0 0
    %9022 = vmatpush1.bf16.msra.mxu0 %v8927
    %9023 = vmatprep.subr.bf16.mxu0 0
    %9024 = vmatpush1.bf16.msra.mxu0 %v8928
    %9025 = vmatprep.subr.bf16.mxu0 0
    %9026 = vmatpush1.bf16.msra.mxu0 %v8929
    %9027 = vmatprep.subr.bf16.mxu0 0
    %9028 = vmatpush1.bf16.msra.mxu0 %v8930
    %9029 = vmatprep.subr.bf16.mxu0 0
    %9030 = vmatpush1.bf16.msra.mxu0 %v8931
    %9031 = vmatprep.subr.bf16.mxu0 0
    %9032 = vmatpush1.bf16.msra.mxu0 %v8932
    %9033 = vmatprep.subr.bf16.mxu0 0
    %9034 = vmatpush1.bf16.msra.mxu0 %v8933
    %9035 = vmatprep.subr.bf16.mxu0 0
    %9036 = vmatpush1.bf16.msra.mxu0 %v8934
    %9037 = vmatprep.subr.bf16.mxu0 0
    %9038 = vmatpush1.bf16.msra.mxu0 %v8935
    %9039 = vmatprep.subr.bf16.mxu0 0
    %9040 = vmatpush1.bf16.msra.mxu0 %v8936
    %9041 = vmatprep.mubr.bf16.mxu0 %v7576
    %9042 = vmatmul.mubr.bf16.gmra.mrb[0].mxu0 %v7575
    %v9043 = vpop.f32.mrb[0].mxu0
    %v9044 = vadd.f32 %v9004, %v9043
    %v9045 = vpop.f32.mrb[0].mxu0
    %v9046 = vpop.f32.mrb[0].mxu0
    %v9047 = vpop.f32.mrb[0].mxu0
    %9048 = vdwg.mxu0
    %v9049 = vsel %vm7920, %v9044, -inf
    %9050 = vmax.xlane.f32.xlu0 %v9049
    %v9051 = vpop.xlane.xlu0 %9050
    %v9052 = vsub.f32 %v9044, %v9051
    %v9053 = vmul.f32 %v9052, 1.442695
    %v9054 = vpow.pop %v9053
    %v9055 = vsel %vm7920, %v9054, 0.0
    %9056 = vadd.xlane.f32.xlu0 %v9055
    %v9057 = vpop.xlane.xlu0 %9056
    %v9058 = vrcp.pop %v9057
    %v9059 = vmul.f32 %v9054, %v9058
    %vm9060 = vcmp.ge.f32.partialorder %v9044, %v9051
    %v9061 = vsel %vm9060, %v3699, 6
    %v9062 = vsel %vm7920, %v9061, 2147483647
    %v9063 = vand.u32 %v9062, 65535
    %v9064 = vshra.s32 %v9062, 16
    %v9065 = vcvt.s32.f32 %v9063
    %v9066 = vcvt.s32.f32 %v9064
    %9067 = vmin.xlane.f32.xlu0 %v9066
    %v9068 = vpop.xlane.xlu0 %9067
    %vm9069 = vcmp.eq.f32.partialorder %v9066, %v9068
    %v9070 = vsel %vm9069, %v9065, inf
    %9071 = vmin.xlane.f32.xlu0 %v9070
    %v9072 = vpop.xlane.xlu0 %9071
    %v9073 = vcvt.f32.s32 %v9072
    %v9074 = vcvt.f32.s32 %v9068
    %v9075 = vshll.u32 %v9074, 16
    %v9076 = vadd.s32 %v9075, %v9073
    %vm9077 = vcmp.eq.s32.totalorder %v3699, %v9076
    %v9078 = vsel %vm9077, 1.0, 0.0
    %9079 = vst.msk [vmem:[%s8 + $0x20] sm:$0xff] %vm7920, %v9078
    %9080 = vst.msk [vmem:[%s8 + $0x40] sm:$0xff] %vm7920, %v9059
    // Predicated region
    $region58: #{ppo_atari_dop_forward.1} parent=1 // pred_check
      _
    $region59: #{ppo_atari_dop_forward.1} parent=1 // pred_check_branch
      %9082 = sbr.rel (0) target = $region61
    $region60: #{ppo_atari_dop_forward.1} parent=1 // pred_region
      _
    $region61: #{ppo_atari_dop_forward.1} parent=1 // pred_fallthru
      _
    // Predicated region
    $region62: #{ppo_atari_dop_forward.1} parent=1 // pred_check
      _
    $region63: #{ppo_atari_dop_forward.1} parent=1 // pred_check_branch
      %9084 = sbr.rel (0) target = $region65
    $region64: #{ppo_atari_dop_forward.1} parent=1 // pred_region
      _
    $region65: #{ppo_atari_dop_forward.1} parent=1 // pred_fallthru
      _
    %9085 = vsyncpa [#allocation3], 1
    %9086 = vsyncpa [#allocation5], 1
    %9087 = vsyncpa [#allocation8], 1
    %9088 = vsyncpa [#allocation11], 1

</llo_original>
